<compile_context>
chip_gen: v7x
topology: tpu7x:2x2x1
jax: 0.10.0
libtpu: 0.0.40
codegen_flags: <defaults>
</compile_context>

<pallas_src>
import math
from functools import partial

import jax
import jax.numpy as jnp
from jax.experimental import pallas as pl
from jax.experimental.pallas import tpu as pltpu

WIN = 7                          # window size of WindowAttention(7, False, 1)
VMEM_LIMIT = 32 * 1024 * 1024    # explicit scoped-VMEM cap (safe on all gens)

# stacked-weight / stacked-vector row indices (kernel operand packing)
W_FC1, W_FC2, W_FC3, W_FC4, W_FC5A, W_FC5B, W_FC6A, W_FC6B = range(8)
(V_B1, V_B2, V_B3, V_B4, V_B5, V_B6,
 V_LNW_A, V_LNW_B, V_LNB_A, V_LNB_B,
 V_BN1G, V_BN1B, V_BN2G, V_BN2B) = range(14)


# --------------------------------------------------------------------------
# elementwise helpers (inside kernel)
# --------------------------------------------------------------------------
def _erf(x):
    # Abramowitz & Stegun 7.1.26 polynomial erf (|err| < 1.5e-7 ~ f32 eps).
    # Kept (instead of a tanh-approx GELU) to preserve nn.GELU's exact-erf
    # semantics; the exp() lands on the EUP slot, the few VALU mul/adds are
    # negligible at this size.
    a1, a2, a3, a4, a5 = (0.254829592, -0.284496736, 1.421413741,
                          -1.453152027, 1.061405429)
    p = 0.3275911
    s = jnp.where(x >= 0.0, 1.0, -1.0)
    z = jnp.abs(x)
    t = 1.0 / (1.0 + p * z)
    poly = ((((a5 * t + a4) * t + a3) * t + a2) * t + a1) * t
    return s * (1.0 - poly * jnp.exp(-z * z))


def _gelu_exact(x):
    # nn.GELU default (erf form)
    return 0.5 * x * (1.0 + _erf(x * 0.7071067811865476))


# --------------------------------------------------------------------------
# in-kernel per-channel spatial rolls (channels-first (C, N) tiles, N = H*W
# row-major).  All static slices/concats -> lane rotations, no gathers.
# --------------------------------------------------------------------------
def _rot_lanes(row, k, n):
    """row: (r, n).  out[..., i] = row[..., (i - k) % n]  (torch.roll by +k)."""
    k = k % n
    if k == 0:
        return row
    return jnp.concatenate([row[:, n - k:], row[:, :n - k]], axis=1)


def _roll_h(x_cn, sign, C, H, W):
    """torch.roll(channel c, sign*c, dim=H): flat roll by sign*c*W per channel."""
    N = H * W
    rows = [_rot_lanes(x_cn[c:c + 1, :], sign * c * W, N) for c in range(C)]
    return jnp.concatenate(rows, axis=0)


def _roll_w(x_cn, sign, C, H, W, w_pos):
    """torch.roll(channel c, sign*c, dim=W) on the row-major flat N axis.

    For shift s in [1, W): out[n] = roll(x, s)[n] where (n % W) >= s, else
    roll(x, s - W)[n]  (fixes the elements that wrapped across a row edge).
    """
    N = H * W
    rows = []
    for c in range(C):
        s = (sign * c) % W
        row = x_cn[c:c + 1, :]
        if s == 0:
            rows.append(row)
        else:
            ok = _rot_lanes(row, s, N)
            fix = _rot_lanes(row, s - W, N)
            rows.append(jnp.where(w_pos >= s, ok, fix))
    return jnp.concatenate(rows, axis=0)


# --------------------------------------------------------------------------
# in-kernel 7x7 non-overlapping window attention on channels-first qkv
# --------------------------------------------------------------------------
def _window_attention(qkv, C, H, W):
    """qkv: (3C, N) channels-first, q rows pre-scaled.  Returns (C, N)."""
    nh, nw = H // WIN, W // WIN
    outs = {}
    for wh in range(nh):
        for ww in range(nw):
            pieces = []
            for r in range(WIN):
                base = (wh * WIN + r) * W + ww * WIN
                pieces.append(qkv[:, base:base + WIN])
            qkv_w = jnp.concatenate(pieces, axis=1)            # (3C, T)
            q = qkv_w[0:C, :]
            k = qkv_w[C:2 * C, :]
            v = qkv_w[2 * C:3 * C, :]
            s = jnp.dot(q.T, k, preferred_element_type=jnp.float32)   # (T, T)
            s = s - jnp.max(s, axis=-1, keepdims=True)
            p = jnp.exp(s)
            p = p / jnp.sum(p, axis=-1, keepdims=True)         # exact softmax
            # out[c, t] = sum_s v[c, s] * p[t, s]   (A @ B^T form)
            outs[(wh, ww)] = jax.lax.dot_general(
                v, p, (((1,), (1,)), ((), ())),
                preferred_element_type=jnp.float32)            # (C, T)
    # inverse window partition back to the row-major flat N ordering
    cols = []
    for h in range(H):
        wh, r = h // WIN, h % WIN
        for ww in range(nw):
            cols.append(outs[(wh, ww)][:, r * WIN:(r + 1) * WIN])
    return jnp.concatenate(cols, axis=1)                       # (C, N)


# --------------------------------------------------------------------------
# the single fused kernel (no grid; everything VMEM resident)
# --------------------------------------------------------------------------
def _lla_kernel(x_ref, wmat_ref, wqkv_ref, bqkv_ref, vec_ref, o_ref, *,
                B, C, H, W):
    N = H * W
    f32 = jnp.float32

    # lane position within a spatial row (n % W), built from W-length iotas
    row_iota = jax.lax.broadcasted_iota(jnp.int32, (1, W), 1)
    w_pos = jnp.concatenate([row_iota] * H, axis=1)            # (1, N)

    w1, w2 = wmat_ref[W_FC1], wmat_ref[W_FC2]
    w3, w4 = wmat_ref[W_FC3], wmat_ref[W_FC4]
    w5a, w5b = wmat_ref[W_FC5A], wmat_ref[W_FC5B]
    w6a, w6b = wmat_ref[W_FC6A], wmat_ref[W_FC6B]
    b1, b2, b3 = vec_ref[V_B1], vec_ref[V_B2], vec_ref[V_B3]
    b4, b5, b6 = vec_ref[V_B4], vec_ref[V_B5], vec_ref[V_B6]
    lnw_a, lnw_b = vec_ref[V_LNW_A], vec_ref[V_LNW_B]
    lnb_a, lnb_b = vec_ref[V_LNB_A], vec_ref[V_LNB_B]
    g1, be1 = vec_ref[V_BN1G], vec_ref[V_BN1B]
    g2, be2 = vec_ref[V_BN2G], vec_ref[V_BN2B]
    wqkv = wqkv_ref[...]                                       # (3C, C)
    bqkv = bqkv_ref[...]                                       # (3C, 1)

    def mm(wm, xm):
        return jnp.dot(wm, xm, preferred_element_type=f32)

    x1_l, attn_l = [], []
    for b in range(B):                                         # static unroll
        x_cn = x_ref[b]                                        # (C, N) lane-dense

        # ---- branch 1: roll_H(+c) -> fc1 -> GELU -> roll_W(+c) -> fc2 ----
        h1 = _gelu_exact(mm(w1, _roll_h(x_cn, +1, C, H, W)) + b1)
        xa = mm(w2, _roll_w(h1, +1, C, H, W, w_pos)) + b2 + x_cn
        # ---- branch 2: roll_W(-c) -> fc3 -> GELU -> roll_H(+c) -> fc4 ----
        h2 = _gelu_exact(mm(w3, _roll_w(x_cn, -1, C, H, W, w_pos)) + b3)
        xb = mm(w4, _roll_h(h2, +1, C, H, W)) + b4 + x_cn

        # ---- LayerNorm over the (virtual) 2C concat, fc5, residual --------
        tot = 2.0 * C
        mu = (jnp.sum(xa, 0, keepdims=True)
              + jnp.sum(xb, 0, keepdims=True)) / tot
        var = (jnp.sum((xa - mu) ** 2, 0, keepdims=True)
               + jnp.sum((xb - mu) ** 2, 0, keepdims=True)) / tot
        inv = jax.lax.rsqrt(var + 1e-5)
        ah = (xa - mu) * inv * lnw_a + lnb_a
        bh = (xb - mu) * inv * lnw_b + lnb_b
        x1_l.append(mm(w5a, ah) + mm(w5b, bh) + b5 + x_cn)

        # ---- merged q/k/v 1x1 projection + 7x7 window attention -----------
        qkv = mm(wqkv, x_cn) + bqkv                            # (3C, N)
        attn_l.append(_window_attention(qkv, C, H, W))

    # ---- BatchNorm1 (batch stats, biased var) -> ReLU -> BatchNorm2 -------
    inv_m = 1.0 / float(B * N)
    mean1 = sum(jnp.sum(a, 1, keepdims=True) for a in attn_l) * inv_m
    var1 = sum(jnp.sum((a - mean1) ** 2, 1, keepdims=True)
               for a in attn_l) * inv_m                        # two-pass var
    inv1 = jax.lax.rsqrt(var1 + 1e-5)
    y_l = [jnp.maximum((a - mean1) * inv1 * g1 + be1, 0.0) for a in attn_l]
    mean2 = sum(jnp.sum(y, 1, keepdims=True) for y in y_l) * inv_m
    var2 = sum(jnp.sum((y - mean2) ** 2, 1, keepdims=True)
               for y in y_l) * inv_m
    inv2 = jax.lax.rsqrt(var2 + 1e-5)

    # ---- fc6 on the (virtual) [x1 ; x2] concat + output --------------------
    for b in range(B):
        x2 = (y_l[b] - mean2) * inv2 * g2 + be2
        o_ref[b] = mm(w6a, x1_l[b]) + mm(w6b, x2) + b6


# --------------------------------------------------------------------------
# wrapper: weight packing (channels-first, splits, folded scale) + transposes
# --------------------------------------------------------------------------
def lla_forward(x, H, W, p):
    B, N, C = x.shape
    assert N == H * W
    assert H % WIN == 0 and W % WIN == 0
    # TODO(synk): padding for H, W not multiples of 7 is not implemented.

    scale = float(C) ** -0.5
    # channels-first weights W(out, in); stored params are (in, out)
    wmat = jnp.stack([p["w1"].T, p["w2"].T, p["w3"].T, p["w4"].T,
                      p["w5"][:C].T, p["w5"][C:].T,
                      p["w6"][:C].T, p["w6"][C:].T], axis=0)          # (8,C,C)
    wqkv = jnp.concatenate([p["wq"].T * scale, p["wk"].T, p["wv"].T],
                           axis=0)                                    # (3C,C)
    bqkv = jnp.concatenate([p["bq"] * scale, p["bk"], p["bv"]]
                           ).reshape(3 * C, 1)
    vecs = jnp.stack([p["b1"], p["b2"], p["b3"], p["b4"], p["b5"], p["b6"],
                      p["ln_w"][:C], p["ln_w"][C:],
                      p["ln_b"][:C], p["ln_b"][C:],
                      p["bn1_g"], p["bn1_b"], p["bn2_g"], p["bn2_b"]],
                     axis=0).reshape(14, C, 1)                        # (14,C,1)

    x_cf = jnp.transpose(x, (0, 2, 1))          # (B, C, N): N on lanes (dense)

    out_cf = pl.pallas_call(
        partial(_lla_kernel, B=B, C=C, H=H, W=W),
        out_shape=jax.ShapeDtypeStruct((B, C, N), jnp.float32),
        compiler_params=pltpu.CompilerParams(vmem_limit_bytes=VMEM_LIMIT),
    )(x_cf, wmat, wqkv, bqkv, vecs)

    return jnp.transpose(out_cf, (0, 2, 1))     # back to the module's (B,N,C)


# --------------------------------------------------------------------------
# deterministic parameter init (shapes follow the torch module, hidden=out=C)
# Linear weights stored as (in, out) == torch weight transposed.
# --------------------------------------------------------------------------
def init_params(key, C):
    ks = jax.random.split(key, 9)

    def tn(k, shape, std=0.02):
        return (std * jax.random.truncated_normal(k, -2.0, 2.0, shape)
                ).astype(jnp.float32)

    zeros = lambda n: jnp.zeros((n,), jnp.float32)
    ones = lambda n: jnp.ones((n,), jnp.float32)
    conv_std = math.sqrt(2.0 / C)  # fan_out = 1*1*C / groups(=1)

    return dict(
        w1=tn(ks[0], (C, C)), b1=zeros(C),
        w2=tn(ks[1], (C, C)), b2=zeros(C),
        w3=tn(ks[2], (C, C)), b3=zeros(C),
        w4=tn(ks[3], (C, C)), b4=zeros(C),
        w5=tn(ks[4], (2 * C, C)), b5=zeros(C),
        w6=tn(ks[5], (2 * C, C)), b6=zeros(C),
        wq=(conv_std * jax.random.normal(ks[6], (C, C))).astype(jnp.float32),
        bq=zeros(C),
        wk=(conv_std * jax.random.normal(ks[7], (C, C))).astype(jnp.float32),
        bk=zeros(C),
        wv=(conv_std * jax.random.normal(ks[8], (C, C))).astype(jnp.float32),
        bv=zeros(C),
        ln_w=ones(2 * C), ln_b=zeros(2 * C),
        bn1_g=ones(C), bn1_b=zeros(C),
        bn2_g=ones(C), bn2_b=zeros(C),
    )


if __name__ == "__main__":
    B, C, H, W = 2, 8, 14, 14          # H, W multiples of the 7x7 window
    N = H * W
    key = jax.random.PRNGKey(0)
    kx, kp = jax.random.split(key)
    x = jax.random.normal(kx, (B, N, C), jnp.float32)
    params = init_params(kp, C)

    fwd = jax.jit(lambda xx: lla_forward(xx, H, W, params))
    out = fwd(x)
    jax.block_until_ready(out)
    assert out.shape == (B, N, C) and out.dtype == jnp.float32
    assert bool(jnp.all(jnp.isfinite(out)))
    print("KERNEL_OK")
</pallas_src>

<mosaic_0001>
module attributes {stable_mosaic.version = 11 : i64} {
  func.func @_lla_kernel(%arg0: memref<2x8x196xf32, #tpu.memory_space<vmem>>, %arg1: memref<8x8x8xf32, #tpu.memory_space<vmem>>, %arg2: memref<24x8xf32, #tpu.memory_space<vmem>>, %arg3: memref<24x1xf32, #tpu.memory_space<vmem>>, %arg4: memref<14x8x1xf32, #tpu.memory_space<vmem>>, %arg5: memref<2x8x196xf32, #tpu.memory_space<vmem>>) attributes {dimension_semantics = [], scalar_prefetch = 0 : i64, scratch_operands = 0 : i64, tpu.core_type = #tpu.core_type<tc>} {
    %0 = tpu.iota {dimensions = array<i32: 1>} : vector<1x14xi32>
    %1 = tpu.concatenate %0, %0, %0, %0, %0, %0, %0, %0, %0, %0, %0, %0, %0, %0 in 1 : vector<1x14xi32>, vector<1x14xi32>, vector<1x14xi32>, vector<1x14xi32>, vector<1x14xi32>, vector<1x14xi32>, vector<1x14xi32>, vector<1x14xi32>, vector<1x14xi32>, vector<1x14xi32>, vector<1x14xi32>, vector<1x14xi32>, vector<1x14xi32>, vector<1x14xi32> -> vector<1x196xi32>
    %c0 = arith.constant 0 : index
    %c0_0 = arith.constant 0 : index
    %c0_1 = arith.constant 0 : index
    %2 = vector.load %arg1[%c0, %c0_0, %c0_1] : memref<8x8x8xf32, #tpu.memory_space<vmem>>, vector<1x8x8xf32>
    %3 = vector.shape_cast %2 : vector<1x8x8xf32> to vector<8x8xf32>
    %c1 = arith.constant 1 : index
    %c0_2 = arith.constant 0 : index
    %c0_3 = arith.constant 0 : index
    %4 = vector.load %arg1[%c1, %c0_2, %c0_3] : memref<8x8x8xf32, #tpu.memory_space<vmem>>, vector<1x8x8xf32>
    %5 = vector.shape_cast %4 : vector<1x8x8xf32> to vector<8x8xf32>
    %c2 = arith.constant 2 : index
    %c0_4 = arith.constant 0 : index
    %c0_5 = arith.constant 0 : index
    %6 = vector.load %arg1[%c2, %c0_4, %c0_5] : memref<8x8x8xf32, #tpu.memory_space<vmem>>, vector<1x8x8xf32>
    %7 = vector.shape_cast %6 : vector<1x8x8xf32> to vector<8x8xf32>
    %c3 = arith.constant 3 : index
    %c0_6 = arith.constant 0 : index
    %c0_7 = arith.constant 0 : index
    %8 = vector.load %arg1[%c3, %c0_6, %c0_7] : memref<8x8x8xf32, #tpu.memory_space<vmem>>, vector<1x8x8xf32>
    %9 = vector.shape_cast %8 : vector<1x8x8xf32> to vector<8x8xf32>
    %c4 = arith.constant 4 : index
    %c0_8 = arith.constant 0 : index
    %c0_9 = arith.constant 0 : index
    %10 = vector.load %arg1[%c4, %c0_8, %c0_9] : memref<8x8x8xf32, #tpu.memory_space<vmem>>, vector<1x8x8xf32>
    %11 = vector.shape_cast %10 : vector<1x8x8xf32> to vector<8x8xf32>
    %c5 = arith.constant 5 : index
    %c0_10 = arith.constant 0 : index
    %c0_11 = arith.constant 0 : index
    %12 = vector.load %arg1[%c5, %c0_10, %c0_11] : memref<8x8x8xf32, #tpu.memory_space<vmem>>, vector<1x8x8xf32>
    %13 = vector.shape_cast %12 : vector<1x8x8xf32> to vector<8x8xf32>
    %c6 = arith.constant 6 : index
    %c0_12 = arith.constant 0 : index
    %c0_13 = arith.constant 0 : index
    %14 = vector.load %arg1[%c6, %c0_12, %c0_13] : memref<8x8x8xf32, #tpu.memory_space<vmem>>, vector<1x8x8xf32>
    %15 = vector.shape_cast %14 : vector<1x8x8xf32> to vector<8x8xf32>
    %c7 = arith.constant 7 : index
    %c0_14 = arith.constant 0 : index
    %c0_15 = arith.constant 0 : index
    %16 = vector.load %arg1[%c7, %c0_14, %c0_15] : memref<8x8x8xf32, #tpu.memory_space<vmem>>, vector<1x8x8xf32>
    %17 = vector.shape_cast %16 : vector<1x8x8xf32> to vector<8x8xf32>
    %c0_16 = arith.constant 0 : index
    %c0_17 = arith.constant 0 : index
    %c0_18 = arith.constant 0 : index
    %18 = vector.load %arg4[%c0_16, %c0_17, %c0_18] : memref<14x8x1xf32, #tpu.memory_space<vmem>>, vector<1x8x1xf32>
    %19 = vector.shape_cast %18 : vector<1x8x1xf32> to vector<8x1xf32>
    %c1_19 = arith.constant 1 : index
    %c0_20 = arith.constant 0 : index
    %c0_21 = arith.constant 0 : index
    %20 = vector.load %arg4[%c1_19, %c0_20, %c0_21] : memref<14x8x1xf32, #tpu.memory_space<vmem>>, vector<1x8x1xf32>
    %21 = vector.shape_cast %20 : vector<1x8x1xf32> to vector<8x1xf32>
    %c2_22 = arith.constant 2 : index
    %c0_23 = arith.constant 0 : index
    %c0_24 = arith.constant 0 : index
    %22 = vector.load %arg4[%c2_22, %c0_23, %c0_24] : memref<14x8x1xf32, #tpu.memory_space<vmem>>, vector<1x8x1xf32>
    %23 = vector.shape_cast %22 : vector<1x8x1xf32> to vector<8x1xf32>
    %c3_25 = arith.constant 3 : index
    %c0_26 = arith.constant 0 : index
    %c0_27 = arith.constant 0 : index
    %24 = vector.load %arg4[%c3_25, %c0_26, %c0_27] : memref<14x8x1xf32, #tpu.memory_space<vmem>>, vector<1x8x1xf32>
    %25 = vector.shape_cast %24 : vector<1x8x1xf32> to vector<8x1xf32>
    %c4_28 = arith.constant 4 : index
    %c0_29 = arith.constant 0 : index
    %c0_30 = arith.constant 0 : index
    %26 = vector.load %arg4[%c4_28, %c0_29, %c0_30] : memref<14x8x1xf32, #tpu.memory_space<vmem>>, vector<1x8x1xf32>
    %27 = vector.shape_cast %26 : vector<1x8x1xf32> to vector<8x1xf32>
    %c5_31 = arith.constant 5 : index
    %c0_32 = arith.constant 0 : index
    %c0_33 = arith.constant 0 : index
    %28 = vector.load %arg4[%c5_31, %c0_32, %c0_33] : memref<14x8x1xf32, #tpu.memory_space<vmem>>, vector<1x8x1xf32>
    %29 = vector.shape_cast %28 : vector<1x8x1xf32> to vector<8x1xf32>
    %c6_34 = arith.constant 6 : index
    %c0_35 = arith.constant 0 : index
    %c0_36 = arith.constant 0 : index
    %30 = vector.load %arg4[%c6_34, %c0_35, %c0_36] : memref<14x8x1xf32, #tpu.memory_space<vmem>>, vector<1x8x1xf32>
    %31 = vector.shape_cast %30 : vector<1x8x1xf32> to vector<8x1xf32>
    %c7_37 = arith.constant 7 : index
    %c0_38 = arith.constant 0 : index
    %c0_39 = arith.constant 0 : index
    %32 = vector.load %arg4[%c7_37, %c0_38, %c0_39] : memref<14x8x1xf32, #tpu.memory_space<vmem>>, vector<1x8x1xf32>
    %33 = vector.shape_cast %32 : vector<1x8x1xf32> to vector<8x1xf32>
    %c8 = arith.constant 8 : index
    %c0_40 = arith.constant 0 : index
    %c0_41 = arith.constant 0 : index
    %34 = vector.load %arg4[%c8, %c0_40, %c0_41] : memref<14x8x1xf32, #tpu.memory_space<vmem>>, vector<1x8x1xf32>
    %35 = vector.shape_cast %34 : vector<1x8x1xf32> to vector<8x1xf32>
    %c9 = arith.constant 9 : index
    %c0_42 = arith.constant 0 : index
    %c0_43 = arith.constant 0 : index
    %36 = vector.load %arg4[%c9, %c0_42, %c0_43] : memref<14x8x1xf32, #tpu.memory_space<vmem>>, vector<1x8x1xf32>
    %37 = vector.shape_cast %36 : vector<1x8x1xf32> to vector<8x1xf32>
    %c10 = arith.constant 10 : index
    %c0_44 = arith.constant 0 : index
    %c0_45 = arith.constant 0 : index
    %38 = vector.load %arg4[%c10, %c0_44, %c0_45] : memref<14x8x1xf32, #tpu.memory_space<vmem>>, vector<1x8x1xf32>
    %39 = vector.shape_cast %38 : vector<1x8x1xf32> to vector<8x1xf32>
    %c11 = arith.constant 11 : index
    %c0_46 = arith.constant 0 : index
    %c0_47 = arith.constant 0 : index
    %40 = vector.load %arg4[%c11, %c0_46, %c0_47] : memref<14x8x1xf32, #tpu.memory_space<vmem>>, vector<1x8x1xf32>
    %41 = vector.shape_cast %40 : vector<1x8x1xf32> to vector<8x1xf32>
    %c12 = arith.constant 12 : index
    %c0_48 = arith.constant 0 : index
    %c0_49 = arith.constant 0 : index
    %42 = vector.load %arg4[%c12, %c0_48, %c0_49] : memref<14x8x1xf32, #tpu.memory_space<vmem>>, vector<1x8x1xf32>
    %43 = vector.shape_cast %42 : vector<1x8x1xf32> to vector<8x1xf32>
    %c13 = arith.constant 13 : index
    %c0_50 = arith.constant 0 : index
    %c0_51 = arith.constant 0 : index
    %44 = vector.load %arg4[%c13, %c0_50, %c0_51] : memref<14x8x1xf32, #tpu.memory_space<vmem>>, vector<1x8x1xf32>
    %45 = vector.shape_cast %44 : vector<1x8x1xf32> to vector<8x1xf32>
    %c0_52 = arith.constant 0 : index
    %c0_53 = arith.constant 0 : index
    %46 = vector.load %arg2[%c0_52, %c0_53] : memref<24x8xf32, #tpu.memory_space<vmem>>, vector<24x8xf32>
    %c0_54 = arith.constant 0 : index
    %c0_55 = arith.constant 0 : index
    %47 = vector.load %arg3[%c0_54, %c0_55] : memref<24x1xf32, #tpu.memory_space<vmem>>, vector<24x1xf32>
    %c0_56 = arith.constant 0 : index
    %c0_57 = arith.constant 0 : index
    %c0_58 = arith.constant 0 : index
    %48 = vector.load %arg0[%c0_56, %c0_57, %c0_58] : memref<2x8x196xf32, #tpu.memory_space<vmem>>, vector<1x8x196xf32>
    %49 = vector.shape_cast %48 : vector<1x8x196xf32> to vector<8x196xf32>
    %50 = vector.extract_strided_slice %49 {offsets = [0, 0], sizes = [1, 196], strides = [1, 1]} : vector<8x196xf32> to vector<1x196xf32>
    %51 = vector.extract_strided_slice %49 {offsets = [1, 0], sizes = [1, 196], strides = [1, 1]} : vector<8x196xf32> to vector<1x196xf32>
    %52 = vector.extract_strided_slice %51 {offsets = [0, 182], sizes = [1, 14], strides = [1, 1]} : vector<1x196xf32> to vector<1x14xf32>
    %53 = vector.extract_strided_slice %51 {offsets = [0, 0], sizes = [1, 182], strides = [1, 1]} : vector<1x196xf32> to vector<1x182xf32>
    %54 = tpu.concatenate %52, %53 in 1 : vector<1x14xf32>, vector<1x182xf32> -> vector<1x196xf32>
    %55 = vector.extract_strided_slice %49 {offsets = [2, 0], sizes = [1, 196], strides = [1, 1]} : vector<8x196xf32> to vector<1x196xf32>
    %56 = vector.extract_strided_slice %55 {offsets = [0, 168], sizes = [1, 28], strides = [1, 1]} : vector<1x196xf32> to vector<1x28xf32>
    %57 = vector.extract_strided_slice %55 {offsets = [0, 0], sizes = [1, 168], strides = [1, 1]} : vector<1x196xf32> to vector<1x168xf32>
    %58 = tpu.concatenate %56, %57 in 1 : vector<1x28xf32>, vector<1x168xf32> -> vector<1x196xf32>
    %59 = vector.extract_strided_slice %49 {offsets = [3, 0], sizes = [1, 196], strides = [1, 1]} : vector<8x196xf32> to vector<1x196xf32>
    %60 = vector.extract_strided_slice %59 {offsets = [0, 154], sizes = [1, 42], strides = [1, 1]} : vector<1x196xf32> to vector<1x42xf32>
    %61 = vector.extract_strided_slice %59 {offsets = [0, 0], sizes = [1, 154], strides = [1, 1]} : vector<1x196xf32> to vector<1x154xf32>
    %62 = tpu.concatenate %60, %61 in 1 : vector<1x42xf32>, vector<1x154xf32> -> vector<1x196xf32>
    %63 = vector.extract_strided_slice %49 {offsets = [4, 0], sizes = [1, 196], strides = [1, 1]} : vector<8x196xf32> to vector<1x196xf32>
    %64 = vector.extract_strided_slice %63 {offsets = [0, 140], sizes = [1, 56], strides = [1, 1]} : vector<1x196xf32> to vector<1x56xf32>
    %65 = vector.extract_strided_slice %63 {offsets = [0, 0], sizes = [1, 140], strides = [1, 1]} : vector<1x196xf32> to vector<1x140xf32>
    %66 = tpu.concatenate %64, %65 in 1 : vector<1x56xf32>, vector<1x140xf32> -> vector<1x196xf32>
    %67 = vector.extract_strided_slice %49 {offsets = [5, 0], sizes = [1, 196], strides = [1, 1]} : vector<8x196xf32> to vector<1x196xf32>
    %68 = vector.extract_strided_slice %67 {offsets = [0, 126], sizes = [1, 70], strides = [1, 1]} : vector<1x196xf32> to vector<1x70xf32>
    %69 = vector.extract_strided_slice %67 {offsets = [0, 0], sizes = [1, 126], strides = [1, 1]} : vector<1x196xf32> to vector<1x126xf32>
    %70 = tpu.concatenate %68, %69 in 1 : vector<1x70xf32>, vector<1x126xf32> -> vector<1x196xf32>
    %71 = vector.extract_strided_slice %49 {offsets = [6, 0], sizes = [1, 196], strides = [1, 1]} : vector<8x196xf32> to vector<1x196xf32>
    %72 = vector.extract_strided_slice %71 {offsets = [0, 112], sizes = [1, 84], strides = [1, 1]} : vector<1x196xf32> to vector<1x84xf32>
    %73 = vector.extract_strided_slice %71 {offsets = [0, 0], sizes = [1, 112], strides = [1, 1]} : vector<1x196xf32> to vector<1x112xf32>
    %74 = tpu.concatenate %72, %73 in 1 : vector<1x84xf32>, vector<1x112xf32> -> vector<1x196xf32>
    %75 = vector.extract_strided_slice %49 {offsets = [7, 0], sizes = [1, 196], strides = [1, 1]} : vector<8x196xf32> to vector<1x196xf32>
    %76 = vector.extract_strided_slice %75 {offsets = [0, 98], sizes = [1, 98], strides = [1, 1]} : vector<1x196xf32> to vector<1x98xf32>
    %77 = vector.extract_strided_slice %75 {offsets = [0, 0], sizes = [1, 98], strides = [1, 1]} : vector<1x196xf32> to vector<1x98xf32>
    %78 = tpu.concatenate %76, %77 in 1 : vector<1x98xf32>, vector<1x98xf32> -> vector<1x196xf32>
    %79 = tpu.concatenate %50, %54, %58, %62, %66, %70, %74, %78 in 0 : vector<1x196xf32>, vector<1x196xf32>, vector<1x196xf32>, vector<1x196xf32>, vector<1x196xf32>, vector<1x196xf32>, vector<1x196xf32>, vector<1x196xf32> -> vector<8x196xf32>
    %cst = arith.constant dense<0.000000e+00> : vector<8x196xf32>
    %80 = tpu.matmul %3, %79, %cst {dimension_numbers = #tpu.dot_dimension_numbers<[1], [0], [0], [1], [0, 0, 1, 1], [], []>} : vector<8x8xf32>, vector<8x196xf32>, vector<8x196xf32> -> vector<8x196xf32>
    %81 = vector.broadcast %19 : vector<8x1xf32> to vector<8x196xf32>
    %82 = arith.addf %80, %81 : vector<8x196xf32>
    %cst_59 = arith.constant 5.000000e-01 : f32
    %83 = vector.broadcast %cst_59 : f32 to vector<8x196xf32>
    %84 = arith.mulf %83, %82 : vector<8x196xf32>
    %cst_60 = arith.constant 0.707106769 : f32
    %85 = vector.broadcast %cst_60 : f32 to vector<8x196xf32>
    %86 = arith.mulf %82, %85 : vector<8x196xf32>
    %cst_61 = arith.constant 0.000000e+00 : f32
    %87 = vector.broadcast %cst_61 : f32 to vector<8x196xf32>
    %88 = arith.cmpf oge, %86, %87 : vector<8x196xf32>
    %cst_62 = arith.constant 1.000000e+00 : f32
    %cst_63 = arith.constant -1.000000e+00 : f32
    %89 = vector.broadcast %cst_62 : f32 to vector<8x196xf32>
    %90 = vector.broadcast %cst_63 : f32 to vector<8x196xf32>
    %91 = arith.select %88, %89, %90 : vector<8x196xi1>, vector<8x196xf32>
    %92 = math.absf %86 : vector<8x196xf32>
    %cst_64 = arith.constant 0.327591091 : f32
    %93 = vector.broadcast %cst_64 : f32 to vector<8x196xf32>
    %94 = arith.mulf %93, %92 : vector<8x196xf32>
    %cst_65 = arith.constant 1.000000e+00 : f32
    %95 = vector.broadcast %cst_65 : f32 to vector<8x196xf32>
    %96 = arith.addf %95, %94 : vector<8x196xf32>
    %cst_66 = arith.constant 1.000000e+00 : f32
    %97 = vector.broadcast %cst_66 : f32 to vector<8x196xf32>
    %98 = arith.divf %97, %96 : vector<8x196xf32>
    %cst_67 = arith.constant 1.06140542 : f32
    %99 = vector.broadcast %cst_67 : f32 to vector<8x196xf32>
    %100 = arith.mulf %99, %98 : vector<8x196xf32>
    %cst_68 = arith.constant -1.45315206 : f32
    %101 = vector.broadcast %cst_68 : f32 to vector<8x196xf32>
    %102 = arith.addf %100, %101 : vector<8x196xf32>
    %103 = arith.mulf %102, %98 : vector<8x196xf32>
    %cst_69 = arith.constant 1.42141378 : f32
    %104 = vector.broadcast %cst_69 : f32 to vector<8x196xf32>
    %105 = arith.addf %103, %104 : vector<8x196xf32>
    %106 = arith.mulf %105, %98 : vector<8x196xf32>
    %cst_70 = arith.constant -0.284496725 : f32
    %107 = vector.broadcast %cst_70 : f32 to vector<8x196xf32>
    %108 = arith.addf %106, %107 : vector<8x196xf32>
    %109 = arith.mulf %108, %98 : vector<8x196xf32>
    %cst_71 = arith.constant 0.254829586 : f32
    %110 = vector.broadcast %cst_71 : f32 to vector<8x196xf32>
    %111 = arith.addf %109, %110 : vector<8x196xf32>
    %112 = arith.mulf %111, %98 : vector<8x196xf32>
    %cst_72 = arith.constant 0.000000e+00 : f32
    %113 = vector.broadcast %cst_72 : f32 to vector<8x196xf32>
    %114 = arith.subf %113, %92 : vector<8x196xf32>
    %115 = arith.mulf %114, %92 : vector<8x196xf32>
    %116 = math.exp %115 : vector<8x196xf32>
    %117 = arith.mulf %112, %116 : vector<8x196xf32>
    %cst_73 = arith.constant 1.000000e+00 : f32
    %118 = vector.broadcast %cst_73 : f32 to vector<8x196xf32>
    %119 = arith.subf %118, %117 : vector<8x196xf32>
    %120 = arith.mulf %91, %119 : vector<8x196xf32>
    %cst_74 = arith.constant 1.000000e+00 : f32
    %121 = vector.broadcast %cst_74 : f32 to vector<8x196xf32>
    %122 = arith.addf %121, %120 : vector<8x196xf32>
    %123 = arith.mulf %84, %122 : vector<8x196xf32>
    %124 = vector.extract_strided_slice %123 {offsets = [0, 0], sizes = [1, 196], strides = [1, 1]} : vector<8x196xf32> to vector<1x196xf32>
    %125 = vector.extract_strided_slice %123 {offsets = [1, 0], sizes = [1, 196], strides = [1, 1]} : vector<8x196xf32> to vector<1x196xf32>
    %126 = vector.extract_strided_slice %125 {offsets = [0, 195], sizes = [1, 1], strides = [1, 1]} : vector<1x196xf32> to vector<1x1xf32>
    %127 = vector.extract_strided_slice %125 {offsets = [0, 0], sizes = [1, 195], strides = [1, 1]} : vector<1x196xf32> to vector<1x195xf32>
    %128 = tpu.concatenate %126, %127 in 1 : vector<1x1xf32>, vector<1x195xf32> -> vector<1x196xf32>
    %129 = vector.extract_strided_slice %125 {offsets = [0, 13], sizes = [1, 183], strides = [1, 1]} : vector<1x196xf32> to vector<1x183xf32>
    %130 = vector.extract_strided_slice %125 {offsets = [0, 0], sizes = [1, 13], strides = [1, 1]} : vector<1x196xf32> to vector<1x13xf32>
    %131 = tpu.concatenate %129, %130 in 1 : vector<1x183xf32>, vector<1x13xf32> -> vector<1x196xf32>
    %c1_i32 = arith.constant 1 : i32
    %132 = vector.broadcast %c1_i32 : i32 to vector<1x196xi32>
    %133 = arith.cmpi sge, %1, %132 : vector<1x196xi32>
    %134 = arith.select %133, %128, %131 : vector<1x196xi1>, vector<1x196xf32>
    %135 = vector.extract_strided_slice %123 {offsets = [2, 0], sizes = [1, 196], strides = [1, 1]} : vector<8x196xf32> to vector<1x196xf32>
    %136 = vector.extract_strided_slice %135 {offsets = [0, 194], sizes = [1, 2], strides = [1, 1]} : vector<1x196xf32> to vector<1x2xf32>
    %137 = vector.extract_strided_slice %135 {offsets = [0, 0], sizes = [1, 194], strides = [1, 1]} : vector<1x196xf32> to vector<1x194xf32>
    %138 = tpu.concatenate %136, %137 in 1 : vector<1x2xf32>, vector<1x194xf32> -> vector<1x196xf32>
    %139 = vector.extract_strided_slice %135 {offsets = [0, 12], sizes = [1, 184], strides = [1, 1]} : vector<1x196xf32> to vector<1x184xf32>
    %140 = vector.extract_strided_slice %135 {offsets = [0, 0], sizes = [1, 12], strides = [1, 1]} : vector<1x196xf32> to vector<1x12xf32>
    %141 = tpu.concatenate %139, %140 in 1 : vector<1x184xf32>, vector<1x12xf32> -> vector<1x196xf32>
    %c2_i32 = arith.constant 2 : i32
    %142 = vector.broadcast %c2_i32 : i32 to vector<1x196xi32>
    %143 = arith.cmpi sge, %1, %142 : vector<1x196xi32>
    %144 = arith.select %143, %138, %141 : vector<1x196xi1>, vector<1x196xf32>
    %145 = vector.extract_strided_slice %123 {offsets = [3, 0], sizes = [1, 196], strides = [1, 1]} : vector<8x196xf32> to vector<1x196xf32>
    %146 = vector.extract_strided_slice %145 {offsets = [0, 193], sizes = [1, 3], strides = [1, 1]} : vector<1x196xf32> to vector<1x3xf32>
    %147 = vector.extract_strided_slice %145 {offsets = [0, 0], sizes = [1, 193], strides = [1, 1]} : vector<1x196xf32> to vector<1x193xf32>
    %148 = tpu.concatenate %146, %147 in 1 : vector<1x3xf32>, vector<1x193xf32> -> vector<1x196xf32>
    %149 = vector.extract_strided_slice %145 {offsets = [0, 11], sizes = [1, 185], strides = [1, 1]} : vector<1x196xf32> to vector<1x185xf32>
    %150 = vector.extract_strided_slice %145 {offsets = [0, 0], sizes = [1, 11], strides = [1, 1]} : vector<1x196xf32> to vector<1x11xf32>
    %151 = tpu.concatenate %149, %150 in 1 : vector<1x185xf32>, vector<1x11xf32> -> vector<1x196xf32>
    %c3_i32 = arith.constant 3 : i32
    %152 = vector.broadcast %c3_i32 : i32 to vector<1x196xi32>
    %153 = arith.cmpi sge, %1, %152 : vector<1x196xi32>
    %154 = arith.select %153, %148, %151 : vector<1x196xi1>, vector<1x196xf32>
    %155 = vector.extract_strided_slice %123 {offsets = [4, 0], sizes = [1, 196], strides = [1, 1]} : vector<8x196xf32> to vector<1x196xf32>
    %156 = vector.extract_strided_slice %155 {offsets = [0, 192], sizes = [1, 4], strides = [1, 1]} : vector<1x196xf32> to vector<1x4xf32>
    %157 = vector.extract_strided_slice %155 {offsets = [0, 0], sizes = [1, 192], strides = [1, 1]} : vector<1x196xf32> to vector<1x192xf32>
    %158 = tpu.concatenate %156, %157 in 1 : vector<1x4xf32>, vector<1x192xf32> -> vector<1x196xf32>
    %159 = vector.extract_strided_slice %155 {offsets = [0, 10], sizes = [1, 186], strides = [1, 1]} : vector<1x196xf32> to vector<1x186xf32>
    %160 = vector.extract_strided_slice %155 {offsets = [0, 0], sizes = [1, 10], strides = [1, 1]} : vector<1x196xf32> to vector<1x10xf32>
    %161 = tpu.concatenate %159, %160 in 1 : vector<1x186xf32>, vector<1x10xf32> -> vector<1x196xf32>
    %c4_i32 = arith.constant 4 : i32
    %162 = vector.broadcast %c4_i32 : i32 to vector<1x196xi32>
    %163 = arith.cmpi sge, %1, %162 : vector<1x196xi32>
    %164 = arith.select %163, %158, %161 : vector<1x196xi1>, vector<1x196xf32>
    %165 = vector.extract_strided_slice %123 {offsets = [5, 0], sizes = [1, 196], strides = [1, 1]} : vector<8x196xf32> to vector<1x196xf32>
    %166 = vector.extract_strided_slice %165 {offsets = [0, 191], sizes = [1, 5], strides = [1, 1]} : vector<1x196xf32> to vector<1x5xf32>
    %167 = vector.extract_strided_slice %165 {offsets = [0, 0], sizes = [1, 191], strides = [1, 1]} : vector<1x196xf32> to vector<1x191xf32>
    %168 = tpu.concatenate %166, %167 in 1 : vector<1x5xf32>, vector<1x191xf32> -> vector<1x196xf32>
    %169 = vector.extract_strided_slice %165 {offsets = [0, 9], sizes = [1, 187], strides = [1, 1]} : vector<1x196xf32> to vector<1x187xf32>
    %170 = vector.extract_strided_slice %165 {offsets = [0, 0], sizes = [1, 9], strides = [1, 1]} : vector<1x196xf32> to vector<1x9xf32>
    %171 = tpu.concatenate %169, %170 in 1 : vector<1x187xf32>, vector<1x9xf32> -> vector<1x196xf32>
    %c5_i32 = arith.constant 5 : i32
    %172 = vector.broadcast %c5_i32 : i32 to vector<1x196xi32>
    %173 = arith.cmpi sge, %1, %172 : vector<1x196xi32>
    %174 = arith.select %173, %168, %171 : vector<1x196xi1>, vector<1x196xf32>
    %175 = vector.extract_strided_slice %123 {offsets = [6, 0], sizes = [1, 196], strides = [1, 1]} : vector<8x196xf32> to vector<1x196xf32>
    %176 = vector.extract_strided_slice %175 {offsets = [0, 190], sizes = [1, 6], strides = [1, 1]} : vector<1x196xf32> to vector<1x6xf32>
    %177 = vector.extract_strided_slice %175 {offsets = [0, 0], sizes = [1, 190], strides = [1, 1]} : vector<1x196xf32> to vector<1x190xf32>
    %178 = tpu.concatenate %176, %177 in 1 : vector<1x6xf32>, vector<1x190xf32> -> vector<1x196xf32>
    %179 = vector.extract_strided_slice %175 {offsets = [0, 8], sizes = [1, 188], strides = [1, 1]} : vector<1x196xf32> to vector<1x188xf32>
    %180 = vector.extract_strided_slice %175 {offsets = [0, 0], sizes = [1, 8], strides = [1, 1]} : vector<1x196xf32> to vector<1x8xf32>
    %181 = tpu.concatenate %179, %180 in 1 : vector<1x188xf32>, vector<1x8xf32> -> vector<1x196xf32>
    %c6_i32 = arith.constant 6 : i32
    %182 = vector.broadcast %c6_i32 : i32 to vector<1x196xi32>
    %183 = arith.cmpi sge, %1, %182 : vector<1x196xi32>
    %184 = arith.select %183, %178, %181 : vector<1x196xi1>, vector<1x196xf32>
    %185 = vector.extract_strided_slice %123 {offsets = [7, 0], sizes = [1, 196], strides = [1, 1]} : vector<8x196xf32> to vector<1x196xf32>
    %186 = vector.extract_strided_slice %185 {offsets = [0, 189], sizes = [1, 7], strides = [1, 1]} : vector<1x196xf32> to vector<1x7xf32>
    %187 = vector.extract_strided_slice %185 {offsets = [0, 0], sizes = [1, 189], strides = [1, 1]} : vector<1x196xf32> to vector<1x189xf32>
    %188 = tpu.concatenate %186, %187 in 1 : vector<1x7xf32>, vector<1x189xf32> -> vector<1x196xf32>
    %189 = vector.extract_strided_slice %185 {offsets = [0, 7], sizes = [1, 189], strides = [1, 1]} : vector<1x196xf32> to vector<1x189xf32>
    %190 = vector.extract_strided_slice %185 {offsets = [0, 0], sizes = [1, 7], strides = [1, 1]} : vector<1x196xf32> to vector<1x7xf32>
    %191 = tpu.concatenate %189, %190 in 1 : vector<1x189xf32>, vector<1x7xf32> -> vector<1x196xf32>
    %c7_i32 = arith.constant 7 : i32
    %192 = vector.broadcast %c7_i32 : i32 to vector<1x196xi32>
    %193 = arith.cmpi sge, %1, %192 : vector<1x196xi32>
    %194 = arith.select %193, %188, %191 : vector<1x196xi1>, vector<1x196xf32>
    %195 = tpu.concatenate %124, %134, %144, %154, %164, %174, %184, %194 in 0 : vector<1x196xf32>, vector<1x196xf32>, vector<1x196xf32>, vector<1x196xf32>, vector<1x196xf32>, vector<1x196xf32>, vector<1x196xf32>, vector<1x196xf32> -> vector<8x196xf32>
    %cst_75 = arith.constant dense<0.000000e+00> : vector<8x196xf32>
    %196 = tpu.matmul %5, %195, %cst_75 {dimension_numbers = #tpu.dot_dimension_numbers<[1], [0], [0], [1], [0, 0, 1, 1], [], []>} : vector<8x8xf32>, vector<8x196xf32>, vector<8x196xf32> -> vector<8x196xf32>
    %197 = vector.broadcast %21 : vector<8x1xf32> to vector<8x196xf32>
    %198 = arith.addf %196, %197 : vector<8x196xf32>
    %199 = arith.addf %198, %49 : vector<8x196xf32>
    %200 = vector.extract_strided_slice %49 {offsets = [0, 0], sizes = [1, 196], strides = [1, 1]} : vector<8x196xf32> to vector<1x196xf32>
    %201 = vector.extract_strided_slice %49 {offsets = [1, 0], sizes = [1, 196], strides = [1, 1]} : vector<8x196xf32> to vector<1x196xf32>
    %202 = vector.extract_strided_slice %201 {offsets = [0, 183], sizes = [1, 13], strides = [1, 1]} : vector<1x196xf32> to vector<1x13xf32>
    %203 = vector.extract_strided_slice %201 {offsets = [0, 0], sizes = [1, 183], strides = [1, 1]} : vector<1x196xf32> to vector<1x183xf32>
    %204 = tpu.concatenate %202, %203 in 1 : vector<1x13xf32>, vector<1x183xf32> -> vector<1x196xf32>
    %205 = vector.extract_strided_slice %201 {offsets = [0, 1], sizes = [1, 195], strides = [1, 1]} : vector<1x196xf32> to vector<1x195xf32>
    %206 = vector.extract_strided_slice %201 {offsets = [0, 0], sizes = [1, 1], strides = [1, 1]} : vector<1x196xf32> to vector<1x1xf32>
    %207 = tpu.concatenate %205, %206 in 1 : vector<1x195xf32>, vector<1x1xf32> -> vector<1x196xf32>
    %c13_i32 = arith.constant 13 : i32
    %208 = vector.broadcast %c13_i32 : i32 to vector<1x196xi32>
    %209 = arith.cmpi sge, %1, %208 : vector<1x196xi32>
    %210 = arith.select %209, %204, %207 : vector<1x196xi1>, vector<1x196xf32>
    %211 = vector.extract_strided_slice %49 {offsets = [2, 0], sizes = [1, 196], strides = [1, 1]} : vector<8x196xf32> to vector<1x196xf32>
    %212 = vector.extract_strided_slice %211 {offsets = [0, 184], sizes = [1, 12], strides = [1, 1]} : vector<1x196xf32> to vector<1x12xf32>
    %213 = vector.extract_strided_slice %211 {offsets = [0, 0], sizes = [1, 184], strides = [1, 1]} : vector<1x196xf32> to vector<1x184xf32>
    %214 = tpu.concatenate %212, %213 in 1 : vector<1x12xf32>, vector<1x184xf32> -> vector<1x196xf32>
    %215 = vector.extract_strided_slice %211 {offsets = [0, 2], sizes = [1, 194], strides = [1, 1]} : vector<1x196xf32> to vector<1x194xf32>
    %216 = vector.extract_strided_slice %211 {offsets = [0, 0], sizes = [1, 2], strides = [1, 1]} : vector<1x196xf32> to vector<1x2xf32>
    %217 = tpu.concatenate %215, %216 in 1 : vector<1x194xf32>, vector<1x2xf32> -> vector<1x196xf32>
    %c12_i32 = arith.constant 12 : i32
    %218 = vector.broadcast %c12_i32 : i32 to vector<1x196xi32>
    %219 = arith.cmpi sge, %1, %218 : vector<1x196xi32>
    %220 = arith.select %219, %214, %217 : vector<1x196xi1>, vector<1x196xf32>
    %221 = vector.extract_strided_slice %49 {offsets = [3, 0], sizes = [1, 196], strides = [1, 1]} : vector<8x196xf32> to vector<1x196xf32>
    %222 = vector.extract_strided_slice %221 {offsets = [0, 185], sizes = [1, 11], strides = [1, 1]} : vector<1x196xf32> to vector<1x11xf32>
    %223 = vector.extract_strided_slice %221 {offsets = [0, 0], sizes = [1, 185], strides = [1, 1]} : vector<1x196xf32> to vector<1x185xf32>
    %224 = tpu.concatenate %222, %223 in 1 : vector<1x11xf32>, vector<1x185xf32> -> vector<1x196xf32>
    %225 = vector.extract_strided_slice %221 {offsets = [0, 3], sizes = [1, 193], strides = [1, 1]} : vector<1x196xf32> to vector<1x193xf32>
    %226 = vector.extract_strided_slice %221 {offsets = [0, 0], sizes = [1, 3], strides = [1, 1]} : vector<1x196xf32> to vector<1x3xf32>
    %227 = tpu.concatenate %225, %226 in 1 : vector<1x193xf32>, vector<1x3xf32> -> vector<1x196xf32>
    %c11_i32 = arith.constant 11 : i32
    %228 = vector.broadcast %c11_i32 : i32 to vector<1x196xi32>
    %229 = arith.cmpi sge, %1, %228 : vector<1x196xi32>
    %230 = arith.select %229, %224, %227 : vector<1x196xi1>, vector<1x196xf32>
    %231 = vector.extract_strided_slice %49 {offsets = [4, 0], sizes = [1, 196], strides = [1, 1]} : vector<8x196xf32> to vector<1x196xf32>
    %232 = vector.extract_strided_slice %231 {offsets = [0, 186], sizes = [1, 10], strides = [1, 1]} : vector<1x196xf32> to vector<1x10xf32>
    %233 = vector.extract_strided_slice %231 {offsets = [0, 0], sizes = [1, 186], strides = [1, 1]} : vector<1x196xf32> to vector<1x186xf32>
    %234 = tpu.concatenate %232, %233 in 1 : vector<1x10xf32>, vector<1x186xf32> -> vector<1x196xf32>
    %235 = vector.extract_strided_slice %231 {offsets = [0, 4], sizes = [1, 192], strides = [1, 1]} : vector<1x196xf32> to vector<1x192xf32>
    %236 = vector.extract_strided_slice %231 {offsets = [0, 0], sizes = [1, 4], strides = [1, 1]} : vector<1x196xf32> to vector<1x4xf32>
    %237 = tpu.concatenate %235, %236 in 1 : vector<1x192xf32>, vector<1x4xf32> -> vector<1x196xf32>
    %c10_i32 = arith.constant 10 : i32
    %238 = vector.broadcast %c10_i32 : i32 to vector<1x196xi32>
    %239 = arith.cmpi sge, %1, %238 : vector<1x196xi32>
    %240 = arith.select %239, %234, %237 : vector<1x196xi1>, vector<1x196xf32>
    %241 = vector.extract_strided_slice %49 {offsets = [5, 0], sizes = [1, 196], strides = [1, 1]} : vector<8x196xf32> to vector<1x196xf32>
    %242 = vector.extract_strided_slice %241 {offsets = [0, 187], sizes = [1, 9], strides = [1, 1]} : vector<1x196xf32> to vector<1x9xf32>
    %243 = vector.extract_strided_slice %241 {offsets = [0, 0], sizes = [1, 187], strides = [1, 1]} : vector<1x196xf32> to vector<1x187xf32>
    %244 = tpu.concatenate %242, %243 in 1 : vector<1x9xf32>, vector<1x187xf32> -> vector<1x196xf32>
    %245 = vector.extract_strided_slice %241 {offsets = [0, 5], sizes = [1, 191], strides = [1, 1]} : vector<1x196xf32> to vector<1x191xf32>
    %246 = vector.extract_strided_slice %241 {offsets = [0, 0], sizes = [1, 5], strides = [1, 1]} : vector<1x196xf32> to vector<1x5xf32>
    %247 = tpu.concatenate %245, %246 in 1 : vector<1x191xf32>, vector<1x5xf32> -> vector<1x196xf32>
    %c9_i32 = arith.constant 9 : i32
    %248 = vector.broadcast %c9_i32 : i32 to vector<1x196xi32>
    %249 = arith.cmpi sge, %1, %248 : vector<1x196xi32>
    %250 = arith.select %249, %244, %247 : vector<1x196xi1>, vector<1x196xf32>
    %251 = vector.extract_strided_slice %49 {offsets = [6, 0], sizes = [1, 196], strides = [1, 1]} : vector<8x196xf32> to vector<1x196xf32>
    %252 = vector.extract_strided_slice %251 {offsets = [0, 188], sizes = [1, 8], strides = [1, 1]} : vector<1x196xf32> to vector<1x8xf32>
    %253 = vector.extract_strided_slice %251 {offsets = [0, 0], sizes = [1, 188], strides = [1, 1]} : vector<1x196xf32> to vector<1x188xf32>
    %254 = tpu.concatenate %252, %253 in 1 : vector<1x8xf32>, vector<1x188xf32> -> vector<1x196xf32>
    %255 = vector.extract_strided_slice %251 {offsets = [0, 6], sizes = [1, 190], strides = [1, 1]} : vector<1x196xf32> to vector<1x190xf32>
    %256 = vector.extract_strided_slice %251 {offsets = [0, 0], sizes = [1, 6], strides = [1, 1]} : vector<1x196xf32> to vector<1x6xf32>
    %257 = tpu.concatenate %255, %256 in 1 : vector<1x190xf32>, vector<1x6xf32> -> vector<1x196xf32>
    %c8_i32 = arith.constant 8 : i32
    %258 = vector.broadcast %c8_i32 : i32 to vector<1x196xi32>
    %259 = arith.cmpi sge, %1, %258 : vector<1x196xi32>
    %260 = arith.select %259, %254, %257 : vector<1x196xi1>, vector<1x196xf32>
    %261 = vector.extract_strided_slice %49 {offsets = [7, 0], sizes = [1, 196], strides = [1, 1]} : vector<8x196xf32> to vector<1x196xf32>
    %262 = vector.extract_strided_slice %261 {offsets = [0, 189], sizes = [1, 7], strides = [1, 1]} : vector<1x196xf32> to vector<1x7xf32>
    %263 = vector.extract_strided_slice %261 {offsets = [0, 0], sizes = [1, 189], strides = [1, 1]} : vector<1x196xf32> to vector<1x189xf32>
    %264 = tpu.concatenate %262, %263 in 1 : vector<1x7xf32>, vector<1x189xf32> -> vector<1x196xf32>
    %265 = vector.extract_strided_slice %261 {offsets = [0, 7], sizes = [1, 189], strides = [1, 1]} : vector<1x196xf32> to vector<1x189xf32>
    %266 = vector.extract_strided_slice %261 {offsets = [0, 0], sizes = [1, 7], strides = [1, 1]} : vector<1x196xf32> to vector<1x7xf32>
    %267 = tpu.concatenate %265, %266 in 1 : vector<1x189xf32>, vector<1x7xf32> -> vector<1x196xf32>
    %c7_i32_76 = arith.constant 7 : i32
    %268 = vector.broadcast %c7_i32_76 : i32 to vector<1x196xi32>
    %269 = arith.cmpi sge, %1, %268 : vector<1x196xi32>
    %270 = arith.select %269, %264, %267 : vector<1x196xi1>, vector<1x196xf32>
    %271 = tpu.concatenate %200, %210, %220, %230, %240, %250, %260, %270 in 0 : vector<1x196xf32>, vector<1x196xf32>, vector<1x196xf32>, vector<1x196xf32>, vector<1x196xf32>, vector<1x196xf32>, vector<1x196xf32>, vector<1x196xf32> -> vector<8x196xf32>
    %cst_77 = arith.constant dense<0.000000e+00> : vector<8x196xf32>
    %272 = tpu.matmul %7, %271, %cst_77 {dimension_numbers = #tpu.dot_dimension_numbers<[1], [0], [0], [1], [0, 0, 1, 1], [], []>} : vector<8x8xf32>, vector<8x196xf32>, vector<8x196xf32> -> vector<8x196xf32>
    %273 = vector.broadcast %23 : vector<8x1xf32> to vector<8x196xf32>
    %274 = arith.addf %272, %273 : vector<8x196xf32>
    %cst_78 = arith.constant 5.000000e-01 : f32
    %275 = vector.broadcast %cst_78 : f32 to vector<8x196xf32>
    %276 = arith.mulf %275, %274 : vector<8x196xf32>
    %cst_79 = arith.constant 0.707106769 : f32
    %277 = vector.broadcast %cst_79 : f32 to vector<8x196xf32>
    %278 = arith.mulf %274, %277 : vector<8x196xf32>
    %cst_80 = arith.constant 0.000000e+00 : f32
    %279 = vector.broadcast %cst_80 : f32 to vector<8x196xf32>
    %280 = arith.cmpf oge, %278, %279 : vector<8x196xf32>
    %cst_81 = arith.constant 1.000000e+00 : f32
    %cst_82 = arith.constant -1.000000e+00 : f32
    %281 = vector.broadcast %cst_81 : f32 to vector<8x196xf32>
    %282 = vector.broadcast %cst_82 : f32 to vector<8x196xf32>
    %283 = arith.select %280, %281, %282 : vector<8x196xi1>, vector<8x196xf32>
    %284 = math.absf %278 : vector<8x196xf32>
    %cst_83 = arith.constant 0.327591091 : f32
    %285 = vector.broadcast %cst_83 : f32 to vector<8x196xf32>
    %286 = arith.mulf %285, %284 : vector<8x196xf32>
    %cst_84 = arith.constant 1.000000e+00 : f32
    %287 = vector.broadcast %cst_84 : f32 to vector<8x196xf32>
    %288 = arith.addf %287, %286 : vector<8x196xf32>
    %cst_85 = arith.constant 1.000000e+00 : f32
    %289 = vector.broadcast %cst_85 : f32 to vector<8x196xf32>
    %290 = arith.divf %289, %288 : vector<8x196xf32>
    %cst_86 = arith.constant 1.06140542 : f32
    %291 = vector.broadcast %cst_86 : f32 to vector<8x196xf32>
    %292 = arith.mulf %291, %290 : vector<8x196xf32>
    %cst_87 = arith.constant -1.45315206 : f32
    %293 = vector.broadcast %cst_87 : f32 to vector<8x196xf32>
    %294 = arith.addf %292, %293 : vector<8x196xf32>
    %295 = arith.mulf %294, %290 : vector<8x196xf32>
    %cst_88 = arith.constant 1.42141378 : f32
    %296 = vector.broadcast %cst_88 : f32 to vector<8x196xf32>
    %297 = arith.addf %295, %296 : vector<8x196xf32>
    %298 = arith.mulf %297, %290 : vector<8x196xf32>
    %cst_89 = arith.constant -0.284496725 : f32
    %299 = vector.broadcast %cst_89 : f32 to vector<8x196xf32>
    %300 = arith.addf %298, %299 : vector<8x196xf32>
    %301 = arith.mulf %300, %290 : vector<8x196xf32>
    %cst_90 = arith.constant 0.254829586 : f32
    %302 = vector.broadcast %cst_90 : f32 to vector<8x196xf32>
    %303 = arith.addf %301, %302 : vector<8x196xf32>
    %304 = arith.mulf %303, %290 : vector<8x196xf32>
    %cst_91 = arith.constant 0.000000e+00 : f32
    %305 = vector.broadcast %cst_91 : f32 to vector<8x196xf32>
    %306 = arith.subf %305, %284 : vector<8x196xf32>
    %307 = arith.mulf %306, %284 : vector<8x196xf32>
    %308 = math.exp %307 : vector<8x196xf32>
    %309 = arith.mulf %304, %308 : vector<8x196xf32>
    %cst_92 = arith.constant 1.000000e+00 : f32
    %310 = vector.broadcast %cst_92 : f32 to vector<8x196xf32>
    %311 = arith.subf %310, %309 : vector<8x196xf32>
    %312 = arith.mulf %283, %311 : vector<8x196xf32>
    %cst_93 = arith.constant 1.000000e+00 : f32
    %313 = vector.broadcast %cst_93 : f32 to vector<8x196xf32>
    %314 = arith.addf %313, %312 : vector<8x196xf32>
    %315 = arith.mulf %276, %314 : vector<8x196xf32>
    %316 = vector.extract_strided_slice %315 {offsets = [0, 0], sizes = [1, 196], strides = [1, 1]} : vector<8x196xf32> to vector<1x196xf32>
    %317 = vector.extract_strided_slice %315 {offsets = [1, 0], sizes = [1, 196], strides = [1, 1]} : vector<8x196xf32> to vector<1x196xf32>
    %318 = vector.extract_strided_slice %317 {offsets = [0, 182], sizes = [1, 14], strides = [1, 1]} : vector<1x196xf32> to vector<1x14xf32>
    %319 = vector.extract_strided_slice %317 {offsets = [0, 0], sizes = [1, 182], strides = [1, 1]} : vector<1x196xf32> to vector<1x182xf32>
    %320 = tpu.concatenate %318, %319 in 1 : vector<1x14xf32>, vector<1x182xf32> -> vector<1x196xf32>
    %321 = vector.extract_strided_slice %315 {offsets = [2, 0], sizes = [1, 196], strides = [1, 1]} : vector<8x196xf32> to vector<1x196xf32>
    %322 = vector.extract_strided_slice %321 {offsets = [0, 168], sizes = [1, 28], strides = [1, 1]} : vector<1x196xf32> to vector<1x28xf32>
    %323 = vector.extract_strided_slice %321 {offsets = [0, 0], sizes = [1, 168], strides = [1, 1]} : vector<1x196xf32> to vector<1x168xf32>
    %324 = tpu.concatenate %322, %323 in 1 : vector<1x28xf32>, vector<1x168xf32> -> vector<1x196xf32>
    %325 = vector.extract_strided_slice %315 {offsets = [3, 0], sizes = [1, 196], strides = [1, 1]} : vector<8x196xf32> to vector<1x196xf32>
    %326 = vector.extract_strided_slice %325 {offsets = [0, 154], sizes = [1, 42], strides = [1, 1]} : vector<1x196xf32> to vector<1x42xf32>
    %327 = vector.extract_strided_slice %325 {offsets = [0, 0], sizes = [1, 154], strides = [1, 1]} : vector<1x196xf32> to vector<1x154xf32>
    %328 = tpu.concatenate %326, %327 in 1 : vector<1x42xf32>, vector<1x154xf32> -> vector<1x196xf32>
    %329 = vector.extract_strided_slice %315 {offsets = [4, 0], sizes = [1, 196], strides = [1, 1]} : vector<8x196xf32> to vector<1x196xf32>
    %330 = vector.extract_strided_slice %329 {offsets = [0, 140], sizes = [1, 56], strides = [1, 1]} : vector<1x196xf32> to vector<1x56xf32>
    %331 = vector.extract_strided_slice %329 {offsets = [0, 0], sizes = [1, 140], strides = [1, 1]} : vector<1x196xf32> to vector<1x140xf32>
    %332 = tpu.concatenate %330, %331 in 1 : vector<1x56xf32>, vector<1x140xf32> -> vector<1x196xf32>
    %333 = vector.extract_strided_slice %315 {offsets = [5, 0], sizes = [1, 196], strides = [1, 1]} : vector<8x196xf32> to vector<1x196xf32>
    %334 = vector.extract_strided_slice %333 {offsets = [0, 126], sizes = [1, 70], strides = [1, 1]} : vector<1x196xf32> to vector<1x70xf32>
    %335 = vector.extract_strided_slice %333 {offsets = [0, 0], sizes = [1, 126], strides = [1, 1]} : vector<1x196xf32> to vector<1x126xf32>
    %336 = tpu.concatenate %334, %335 in 1 : vector<1x70xf32>, vector<1x126xf32> -> vector<1x196xf32>
    %337 = vector.extract_strided_slice %315 {offsets = [6, 0], sizes = [1, 196], strides = [1, 1]} : vector<8x196xf32> to vector<1x196xf32>
    %338 = vector.extract_strided_slice %337 {offsets = [0, 112], sizes = [1, 84], strides = [1, 1]} : vector<1x196xf32> to vector<1x84xf32>
    %339 = vector.extract_strided_slice %337 {offsets = [0, 0], sizes = [1, 112], strides = [1, 1]} : vector<1x196xf32> to vector<1x112xf32>
    %340 = tpu.concatenate %338, %339 in 1 : vector<1x84xf32>, vector<1x112xf32> -> vector<1x196xf32>
    %341 = vector.extract_strided_slice %315 {offsets = [7, 0], sizes = [1, 196], strides = [1, 1]} : vector<8x196xf32> to vector<1x196xf32>
    %342 = vector.extract_strided_slice %341 {offsets = [0, 98], sizes = [1, 98], strides = [1, 1]} : vector<1x196xf32> to vector<1x98xf32>
    %343 = vector.extract_strided_slice %341 {offsets = [0, 0], sizes = [1, 98], strides = [1, 1]} : vector<1x196xf32> to vector<1x98xf32>
    %344 = tpu.concatenate %342, %343 in 1 : vector<1x98xf32>, vector<1x98xf32> -> vector<1x196xf32>
    %345 = tpu.concatenate %316, %320, %324, %328, %332, %336, %340, %344 in 0 : vector<1x196xf32>, vector<1x196xf32>, vector<1x196xf32>, vector<1x196xf32>, vector<1x196xf32>, vector<1x196xf32>, vector<1x196xf32>, vector<1x196xf32> -> vector<8x196xf32>
    %cst_94 = arith.constant dense<0.000000e+00> : vector<8x196xf32>
    %346 = tpu.matmul %9, %345, %cst_94 {dimension_numbers = #tpu.dot_dimension_numbers<[1], [0], [0], [1], [0, 0, 1, 1], [], []>} : vector<8x8xf32>, vector<8x196xf32>, vector<8x196xf32> -> vector<8x196xf32>
    %347 = vector.broadcast %25 : vector<8x1xf32> to vector<8x196xf32>
    %348 = arith.addf %346, %347 : vector<8x196xf32>
    %349 = arith.addf %348, %49 : vector<8x196xf32>
    %cst_95 = arith.constant dense<0.000000e+00> : vector<196xf32>
    %350 = vector.multi_reduction <add>, %199, %cst_95 [0] : vector<8x196xf32> to vector<196xf32>
    %351 = vector.shape_cast %350 : vector<196xf32> to vector<1x196xf32>
    %cst_96 = arith.constant dense<0.000000e+00> : vector<196xf32>
    %352 = vector.multi_reduction <add>, %349, %cst_96 [0] : vector<8x196xf32> to vector<196xf32>
    %353 = vector.shape_cast %352 : vector<196xf32> to vector<1x196xf32>
    %354 = arith.addf %351, %353 : vector<1x196xf32>
    %cst_97 = arith.constant 1.600000e+01 : f32
    %355 = vector.broadcast %cst_97 : f32 to vector<1x196xf32>
    %356 = arith.divf %354, %355 : vector<1x196xf32>
    %357 = vector.broadcast %356 : vector<1x196xf32> to vector<8x196xf32>
    %358 = arith.subf %199, %357 : vector<8x196xf32>
    %359 = arith.mulf %358, %358 : vector<8x196xf32>
    %cst_98 = arith.constant dense<0.000000e+00> : vector<196xf32>
    %360 = vector.multi_reduction <add>, %359, %cst_98 [0] : vector<8x196xf32> to vector<196xf32>
    %361 = vector.shape_cast %360 : vector<196xf32> to vector<1x196xf32>
    %362 = vector.broadcast %356 : vector<1x196xf32> to vector<8x196xf32>
    %363 = arith.subf %349, %362 : vector<8x196xf32>
    %364 = arith.mulf %363, %363 : vector<8x196xf32>
    %cst_99 = arith.constant dense<0.000000e+00> : vector<196xf32>
    %365 = vector.multi_reduction <add>, %364, %cst_99 [0] : vector<8x196xf32> to vector<196xf32>
    %366 = vector.shape_cast %365 : vector<196xf32> to vector<1x196xf32>
    %367 = arith.addf %361, %366 : vector<1x196xf32>
    %cst_100 = arith.constant 1.600000e+01 : f32
    %368 = vector.broadcast %cst_100 : f32 to vector<1x196xf32>
    %369 = arith.divf %367, %368 : vector<1x196xf32>
    %cst_101 = arith.constant 9.99999974E-6 : f32
    %370 = vector.broadcast %cst_101 : f32 to vector<1x196xf32>
    %371 = arith.addf %369, %370 : vector<1x196xf32>
    %372 = math.rsqrt %371 : vector<1x196xf32>
    %373 = vector.broadcast %356 : vector<1x196xf32> to vector<8x196xf32>
    %374 = arith.subf %199, %373 : vector<8x196xf32>
    %375 = vector.broadcast %372 : vector<1x196xf32> to vector<8x196xf32>
    %376 = arith.mulf %374, %375 : vector<8x196xf32>
    %377 = vector.broadcast %31 : vector<8x1xf32> to vector<8x196xf32>
    %378 = arith.mulf %376, %377 : vector<8x196xf32>
    %379 = vector.broadcast %35 : vector<8x1xf32> to vector<8x196xf32>
    %380 = arith.addf %378, %379 : vector<8x196xf32>
    %381 = vector.broadcast %356 : vector<1x196xf32> to vector<8x196xf32>
    %382 = arith.subf %349, %381 : vector<8x196xf32>
    %383 = vector.broadcast %372 : vector<1x196xf32> to vector<8x196xf32>
    %384 = arith.mulf %382, %383 : vector<8x196xf32>
    %385 = vector.broadcast %33 : vector<8x1xf32> to vector<8x196xf32>
    %386 = arith.mulf %384, %385 : vector<8x196xf32>
    %387 = vector.broadcast %37 : vector<8x1xf32> to vector<8x196xf32>
    %388 = arith.addf %386, %387 : vector<8x196xf32>
    %cst_102 = arith.constant dense<0.000000e+00> : vector<8x196xf32>
    %389 = tpu.matmul %11, %380, %cst_102 {dimension_numbers = #tpu.dot_dimension_numbers<[1], [0], [0], [1], [0, 0, 1, 1], [], []>} : vector<8x8xf32>, vector<8x196xf32>, vector<8x196xf32> -> vector<8x196xf32>
    %cst_103 = arith.constant dense<0.000000e+00> : vector<8x196xf32>
    %390 = tpu.matmul %13, %388, %cst_103 {dimension_numbers = #tpu.dot_dimension_numbers<[1], [0], [0], [1], [0, 0, 1, 1], [], []>} : vector<8x8xf32>, vector<8x196xf32>, vector<8x196xf32> -> vector<8x196xf32>
    %391 = arith.addf %389, %390 : vector<8x196xf32>
    %392 = vector.broadcast %27 : vector<8x1xf32> to vector<8x196xf32>
    %393 = arith.addf %391, %392 : vector<8x196xf32>
    %394 = arith.addf %393, %49 : vector<8x196xf32>
    %cst_104 = arith.constant dense<0.000000e+00> : vector<24x196xf32>
    %395 = tpu.matmul %46, %49, %cst_104 {dimension_numbers = #tpu.dot_dimension_numbers<[1], [0], [0], [1], [0, 0, 1, 1], [], []>} : vector<24x8xf32>, vector<8x196xf32>, vector<24x196xf32> -> vector<24x196xf32>
    %396 = vector.broadcast %47 : vector<24x1xf32> to vector<24x196xf32>
    %397 = arith.addf %395, %396 : vector<24x196xf32>
    %398 = vector.extract_strided_slice %397 {offsets = [0, 0], sizes = [24, 7], strides = [1, 1]} : vector<24x196xf32> to vector<24x7xf32>
    %399 = vector.extract_strided_slice %397 {offsets = [0, 14], sizes = [24, 7], strides = [1, 1]} : vector<24x196xf32> to vector<24x7xf32>
    %400 = vector.extract_strided_slice %397 {offsets = [0, 28], sizes = [24, 7], strides = [1, 1]} : vector<24x196xf32> to vector<24x7xf32>
    %401 = vector.extract_strided_slice %397 {offsets = [0, 42], sizes = [24, 7], strides = [1, 1]} : vector<24x196xf32> to vector<24x7xf32>
    %402 = vector.extract_strided_slice %397 {offsets = [0, 56], sizes = [24, 7], strides = [1, 1]} : vector<24x196xf32> to vector<24x7xf32>
    %403 = vector.extract_strided_slice %397 {offsets = [0, 70], sizes = [24, 7], strides = [1, 1]} : vector<24x196xf32> to vector<24x7xf32>
    %404 = vector.extract_strided_slice %397 {offsets = [0, 84], sizes = [24, 7], strides = [1, 1]} : vector<24x196xf32> to vector<24x7xf32>
    %405 = tpu.concatenate %398, %399, %400, %401, %402, %403, %404 in 1 : vector<24x7xf32>, vector<24x7xf32>, vector<24x7xf32>, vector<24x7xf32>, vector<24x7xf32>, vector<24x7xf32>, vector<24x7xf32> -> vector<24x49xf32>
    %406 = vector.extract_strided_slice %405 {offsets = [0, 0], sizes = [8, 49], strides = [1, 1]} : vector<24x49xf32> to vector<8x49xf32>
    %407 = vector.extract_strided_slice %405 {offsets = [8, 0], sizes = [8, 49], strides = [1, 1]} : vector<24x49xf32> to vector<8x49xf32>
    %408 = vector.extract_strided_slice %405 {offsets = [16, 0], sizes = [8, 49], strides = [1, 1]} : vector<24x49xf32> to vector<8x49xf32>
    %409 = tpu.transpose %406, [1, 0] : vector<8x49xf32> -> vector<49x8xf32>
    %cst_105 = arith.constant dense<0.000000e+00> : vector<49x49xf32>
    %410 = tpu.matmul %409, %407, %cst_105 {dimension_numbers = #tpu.dot_dimension_numbers<[1], [0], [0], [1], [0, 0, 1, 1], [], []>} : vector<49x8xf32>, vector<8x49xf32>, vector<49x49xf32> -> vector<49x49xf32>
    %cst_106 = arith.constant dense<0xFF800000> : vector<49xf32>
    %411 = vector.multi_reduction <maximumf>, %410, %cst_106 [1] : vector<49x49xf32> to vector<49xf32>
    %412 = vector.shape_cast %411 : vector<49xf32> to vector<49x1xf32>
    %413 = vector.broadcast %412 : vector<49x1xf32> to vector<49x49xf32>
    %414 = arith.subf %410, %413 : vector<49x49xf32>
    %415 = math.exp %414 : vector<49x49xf32>
    %cst_107 = arith.constant dense<0.000000e+00> : vector<49xf32>
    %416 = vector.multi_reduction <add>, %415, %cst_107 [1] : vector<49x49xf32> to vector<49xf32>
    %417 = vector.shape_cast %416 : vector<49xf32> to vector<49x1xf32>
    %418 = vector.broadcast %417 : vector<49x1xf32> to vector<49x49xf32>
    %419 = arith.divf %415, %418 : vector<49x49xf32>
    %cst_108 = arith.constant dense<0.000000e+00> : vector<8x49xf32>
    %420 = tpu.matmul %408, %419, %cst_108 {dimension_numbers = #tpu.dot_dimension_numbers<[1], [1], [0], [0], [0, 0, 1, 0], [], []>} : vector<8x49xf32>, vector<49x49xf32>, vector<8x49xf32> -> vector<8x49xf32>
    %421 = vector.extract_strided_slice %397 {offsets = [0, 7], sizes = [24, 7], strides = [1, 1]} : vector<24x196xf32> to vector<24x7xf32>
    %422 = vector.extract_strided_slice %397 {offsets = [0, 21], sizes = [24, 7], strides = [1, 1]} : vector<24x196xf32> to vector<24x7xf32>
    %423 = vector.extract_strided_slice %397 {offsets = [0, 35], sizes = [24, 7], strides = [1, 1]} : vector<24x196xf32> to vector<24x7xf32>
    %424 = vector.extract_strided_slice %397 {offsets = [0, 49], sizes = [24, 7], strides = [1, 1]} : vector<24x196xf32> to vector<24x7xf32>
    %425 = vector.extract_strided_slice %397 {offsets = [0, 63], sizes = [24, 7], strides = [1, 1]} : vector<24x196xf32> to vector<24x7xf32>
    %426 = vector.extract_strided_slice %397 {offsets = [0, 77], sizes = [24, 7], strides = [1, 1]} : vector<24x196xf32> to vector<24x7xf32>
    %427 = vector.extract_strided_slice %397 {offsets = [0, 91], sizes = [24, 7], strides = [1, 1]} : vector<24x196xf32> to vector<24x7xf32>
    %428 = tpu.concatenate %421, %422, %423, %424, %425, %426, %427 in 1 : vector<24x7xf32>, vector<24x7xf32>, vector<24x7xf32>, vector<24x7xf32>, vector<24x7xf32>, vector<24x7xf32>, vector<24x7xf32> -> vector<24x49xf32>
    %429 = vector.extract_strided_slice %428 {offsets = [0, 0], sizes = [8, 49], strides = [1, 1]} : vector<24x49xf32> to vector<8x49xf32>
    %430 = vector.extract_strided_slice %428 {offsets = [8, 0], sizes = [8, 49], strides = [1, 1]} : vector<24x49xf32> to vector<8x49xf32>
    %431 = vector.extract_strided_slice %428 {offsets = [16, 0], sizes = [8, 49], strides = [1, 1]} : vector<24x49xf32> to vector<8x49xf32>
    %432 = tpu.transpose %429, [1, 0] : vector<8x49xf32> -> vector<49x8xf32>
    %cst_109 = arith.constant dense<0.000000e+00> : vector<49x49xf32>
    %433 = tpu.matmul %432, %430, %cst_109 {dimension_numbers = #tpu.dot_dimension_numbers<[1], [0], [0], [1], [0, 0, 1, 1], [], []>} : vector<49x8xf32>, vector<8x49xf32>, vector<49x49xf32> -> vector<49x49xf32>
    %cst_110 = arith.constant dense<0xFF800000> : vector<49xf32>
    %434 = vector.multi_reduction <maximumf>, %433, %cst_110 [1] : vector<49x49xf32> to vector<49xf32>
    %435 = vector.shape_cast %434 : vector<49xf32> to vector<49x1xf32>
    %436 = vector.broadcast %435 : vector<49x1xf32> to vector<49x49xf32>
    %437 = arith.subf %433, %436 : vector<49x49xf32>
    %438 = math.exp %437 : vector<49x49xf32>
    %cst_111 = arith.constant dense<0.000000e+00> : vector<49xf32>
    %439 = vector.multi_reduction <add>, %438, %cst_111 [1] : vector<49x49xf32> to vector<49xf32>
    %440 = vector.shape_cast %439 : vector<49xf32> to vector<49x1xf32>
    %441 = vector.broadcast %440 : vector<49x1xf32> to vector<49x49xf32>
    %442 = arith.divf %438, %441 : vector<49x49xf32>
    %cst_112 = arith.constant dense<0.000000e+00> : vector<8x49xf32>
    %443 = tpu.matmul %431, %442, %cst_112 {dimension_numbers = #tpu.dot_dimension_numbers<[1], [1], [0], [0], [0, 0, 1, 0], [], []>} : vector<8x49xf32>, vector<49x49xf32>, vector<8x49xf32> -> vector<8x49xf32>
    %444 = vector.extract_strided_slice %397 {offsets = [0, 98], sizes = [24, 7], strides = [1, 1]} : vector<24x196xf32> to vector<24x7xf32>
    %445 = vector.extract_strided_slice %397 {offsets = [0, 112], sizes = [24, 7], strides = [1, 1]} : vector<24x196xf32> to vector<24x7xf32>
    %446 = vector.extract_strided_slice %397 {offsets = [0, 126], sizes = [24, 7], strides = [1, 1]} : vector<24x196xf32> to vector<24x7xf32>
    %447 = vector.extract_strided_slice %397 {offsets = [0, 140], sizes = [24, 7], strides = [1, 1]} : vector<24x196xf32> to vector<24x7xf32>
    %448 = vector.extract_strided_slice %397 {offsets = [0, 154], sizes = [24, 7], strides = [1, 1]} : vector<24x196xf32> to vector<24x7xf32>
    %449 = vector.extract_strided_slice %397 {offsets = [0, 168], sizes = [24, 7], strides = [1, 1]} : vector<24x196xf32> to vector<24x7xf32>
    %450 = vector.extract_strided_slice %397 {offsets = [0, 182], sizes = [24, 7], strides = [1, 1]} : vector<24x196xf32> to vector<24x7xf32>
    %451 = tpu.concatenate %444, %445, %446, %447, %448, %449, %450 in 1 : vector<24x7xf32>, vector<24x7xf32>, vector<24x7xf32>, vector<24x7xf32>, vector<24x7xf32>, vector<24x7xf32>, vector<24x7xf32> -> vector<24x49xf32>
    %452 = vector.extract_strided_slice %451 {offsets = [0, 0], sizes = [8, 49], strides = [1, 1]} : vector<24x49xf32> to vector<8x49xf32>
    %453 = vector.extract_strided_slice %451 {offsets = [8, 0], sizes = [8, 49], strides = [1, 1]} : vector<24x49xf32> to vector<8x49xf32>
    %454 = vector.extract_strided_slice %451 {offsets = [16, 0], sizes = [8, 49], strides = [1, 1]} : vector<24x49xf32> to vector<8x49xf32>
    %455 = tpu.transpose %452, [1, 0] : vector<8x49xf32> -> vector<49x8xf32>
    %cst_113 = arith.constant dense<0.000000e+00> : vector<49x49xf32>
    %456 = tpu.matmul %455, %453, %cst_113 {dimension_numbers = #tpu.dot_dimension_numbers<[1], [0], [0], [1], [0, 0, 1, 1], [], []>} : vector<49x8xf32>, vector<8x49xf32>, vector<49x49xf32> -> vector<49x49xf32>
    %cst_114 = arith.constant dense<0xFF800000> : vector<49xf32>
    %457 = vector.multi_reduction <maximumf>, %456, %cst_114 [1] : vector<49x49xf32> to vector<49xf32>
    %458 = vector.shape_cast %457 : vector<49xf32> to vector<49x1xf32>
    %459 = vector.broadcast %458 : vector<49x1xf32> to vector<49x49xf32>
    %460 = arith.subf %456, %459 : vector<49x49xf32>
    %461 = math.exp %460 : vector<49x49xf32>
    %cst_115 = arith.constant dense<0.000000e+00> : vector<49xf32>
    %462 = vector.multi_reduction <add>, %461, %cst_115 [1] : vector<49x49xf32> to vector<49xf32>
    %463 = vector.shape_cast %462 : vector<49xf32> to vector<49x1xf32>
    %464 = vector.broadcast %463 : vector<49x1xf32> to vector<49x49xf32>
    %465 = arith.divf %461, %464 : vector<49x49xf32>
    %cst_116 = arith.constant dense<0.000000e+00> : vector<8x49xf32>
    %466 = tpu.matmul %454, %465, %cst_116 {dimension_numbers = #tpu.dot_dimension_numbers<[1], [1], [0], [0], [0, 0, 1, 0], [], []>} : vector<8x49xf32>, vector<49x49xf32>, vector<8x49xf32> -> vector<8x49xf32>
    %467 = vector.extract_strided_slice %397 {offsets = [0, 105], sizes = [24, 7], strides = [1, 1]} : vector<24x196xf32> to vector<24x7xf32>
    %468 = vector.extract_strided_slice %397 {offsets = [0, 119], sizes = [24, 7], strides = [1, 1]} : vector<24x196xf32> to vector<24x7xf32>
    %469 = vector.extract_strided_slice %397 {offsets = [0, 133], sizes = [24, 7], strides = [1, 1]} : vector<24x196xf32> to vector<24x7xf32>
    %470 = vector.extract_strided_slice %397 {offsets = [0, 147], sizes = [24, 7], strides = [1, 1]} : vector<24x196xf32> to vector<24x7xf32>
    %471 = vector.extract_strided_slice %397 {offsets = [0, 161], sizes = [24, 7], strides = [1, 1]} : vector<24x196xf32> to vector<24x7xf32>
    %472 = vector.extract_strided_slice %397 {offsets = [0, 175], sizes = [24, 7], strides = [1, 1]} : vector<24x196xf32> to vector<24x7xf32>
    %473 = vector.extract_strided_slice %397 {offsets = [0, 189], sizes = [24, 7], strides = [1, 1]} : vector<24x196xf32> to vector<24x7xf32>
    %474 = tpu.concatenate %467, %468, %469, %470, %471, %472, %473 in 1 : vector<24x7xf32>, vector<24x7xf32>, vector<24x7xf32>, vector<24x7xf32>, vector<24x7xf32>, vector<24x7xf32>, vector<24x7xf32> -> vector<24x49xf32>
    %475 = vector.extract_strided_slice %474 {offsets = [0, 0], sizes = [8, 49], strides = [1, 1]} : vector<24x49xf32> to vector<8x49xf32>
    %476 = vector.extract_strided_slice %474 {offsets = [8, 0], sizes = [8, 49], strides = [1, 1]} : vector<24x49xf32> to vector<8x49xf32>
    %477 = vector.extract_strided_slice %474 {offsets = [16, 0], sizes = [8, 49], strides = [1, 1]} : vector<24x49xf32> to vector<8x49xf32>
    %478 = tpu.transpose %475, [1, 0] : vector<8x49xf32> -> vector<49x8xf32>
    %cst_117 = arith.constant dense<0.000000e+00> : vector<49x49xf32>
    %479 = tpu.matmul %478, %476, %cst_117 {dimension_numbers = #tpu.dot_dimension_numbers<[1], [0], [0], [1], [0, 0, 1, 1], [], []>} : vector<49x8xf32>, vector<8x49xf32>, vector<49x49xf32> -> vector<49x49xf32>
    %cst_118 = arith.constant dense<0xFF800000> : vector<49xf32>
    %480 = vector.multi_reduction <maximumf>, %479, %cst_118 [1] : vector<49x49xf32> to vector<49xf32>
    %481 = vector.shape_cast %480 : vector<49xf32> to vector<49x1xf32>
    %482 = vector.broadcast %481 : vector<49x1xf32> to vector<49x49xf32>
    %483 = arith.subf %479, %482 : vector<49x49xf32>
    %484 = math.exp %483 : vector<49x49xf32>
    %cst_119 = arith.constant dense<0.000000e+00> : vector<49xf32>
    %485 = vector.multi_reduction <add>, %484, %cst_119 [1] : vector<49x49xf32> to vector<49xf32>
    %486 = vector.shape_cast %485 : vector<49xf32> to vector<49x1xf32>
    %487 = vector.broadcast %486 : vector<49x1xf32> to vector<49x49xf32>
    %488 = arith.divf %484, %487 : vector<49x49xf32>
    %cst_120 = arith.constant dense<0.000000e+00> : vector<8x49xf32>
    %489 = tpu.matmul %477, %488, %cst_120 {dimension_numbers = #tpu.dot_dimension_numbers<[1], [1], [0], [0], [0, 0, 1, 0], [], []>} : vector<8x49xf32>, vector<49x49xf32>, vector<8x49xf32> -> vector<8x49xf32>
    %490 = vector.extract_strided_slice %420 {offsets = [0, 0], sizes = [8, 7], strides = [1, 1]} : vector<8x49xf32> to vector<8x7xf32>
    %491 = vector.extract_strided_slice %443 {offsets = [0, 0], sizes = [8, 7], strides = [1, 1]} : vector<8x49xf32> to vector<8x7xf32>
    %492 = vector.extract_strided_slice %420 {offsets = [0, 7], sizes = [8, 7], strides = [1, 1]} : vector<8x49xf32> to vector<8x7xf32>
    %493 = vector.extract_strided_slice %443 {offsets = [0, 7], sizes = [8, 7], strides = [1, 1]} : vector<8x49xf32> to vector<8x7xf32>
    %494 = vector.extract_strided_slice %420 {offsets = [0, 14], sizes = [8, 7], strides = [1, 1]} : vector<8x49xf32> to vector<8x7xf32>
    %495 = vector.extract_strided_slice %443 {offsets = [0, 14], sizes = [8, 7], strides = [1, 1]} : vector<8x49xf32> to vector<8x7xf32>
    %496 = vector.extract_strided_slice %420 {offsets = [0, 21], sizes = [8, 7], strides = [1, 1]} : vector<8x49xf32> to vector<8x7xf32>
    %497 = vector.extract_strided_slice %443 {offsets = [0, 21], sizes = [8, 7], strides = [1, 1]} : vector<8x49xf32> to vector<8x7xf32>
    %498 = vector.extract_strided_slice %420 {offsets = [0, 28], sizes = [8, 7], strides = [1, 1]} : vector<8x49xf32> to vector<8x7xf32>
    %499 = vector.extract_strided_slice %443 {offsets = [0, 28], sizes = [8, 7], strides = [1, 1]} : vector<8x49xf32> to vector<8x7xf32>
    %500 = vector.extract_strided_slice %420 {offsets = [0, 35], sizes = [8, 7], strides = [1, 1]} : vector<8x49xf32> to vector<8x7xf32>
    %501 = vector.extract_strided_slice %443 {offsets = [0, 35], sizes = [8, 7], strides = [1, 1]} : vector<8x49xf32> to vector<8x7xf32>
    %502 = vector.extract_strided_slice %420 {offsets = [0, 42], sizes = [8, 7], strides = [1, 1]} : vector<8x49xf32> to vector<8x7xf32>
    %503 = vector.extract_strided_slice %443 {offsets = [0, 42], sizes = [8, 7], strides = [1, 1]} : vector<8x49xf32> to vector<8x7xf32>
    %504 = vector.extract_strided_slice %466 {offsets = [0, 0], sizes = [8, 7], strides = [1, 1]} : vector<8x49xf32> to vector<8x7xf32>
    %505 = vector.extract_strided_slice %489 {offsets = [0, 0], sizes = [8, 7], strides = [1, 1]} : vector<8x49xf32> to vector<8x7xf32>
    %506 = vector.extract_strided_slice %466 {offsets = [0, 7], sizes = [8, 7], strides = [1, 1]} : vector<8x49xf32> to vector<8x7xf32>
    %507 = vector.extract_strided_slice %489 {offsets = [0, 7], sizes = [8, 7], strides = [1, 1]} : vector<8x49xf32> to vector<8x7xf32>
    %508 = vector.extract_strided_slice %466 {offsets = [0, 14], sizes = [8, 7], strides = [1, 1]} : vector<8x49xf32> to vector<8x7xf32>
    %509 = vector.extract_strided_slice %489 {offsets = [0, 14], sizes = [8, 7], strides = [1, 1]} : vector<8x49xf32> to vector<8x7xf32>
    %510 = vector.extract_strided_slice %466 {offsets = [0, 21], sizes = [8, 7], strides = [1, 1]} : vector<8x49xf32> to vector<8x7xf32>
    %511 = vector.extract_strided_slice %489 {offsets = [0, 21], sizes = [8, 7], strides = [1, 1]} : vector<8x49xf32> to vector<8x7xf32>
    %512 = vector.extract_strided_slice %466 {offsets = [0, 28], sizes = [8, 7], strides = [1, 1]} : vector<8x49xf32> to vector<8x7xf32>
    %513 = vector.extract_strided_slice %489 {offsets = [0, 28], sizes = [8, 7], strides = [1, 1]} : vector<8x49xf32> to vector<8x7xf32>
    %514 = vector.extract_strided_slice %466 {offsets = [0, 35], sizes = [8, 7], strides = [1, 1]} : vector<8x49xf32> to vector<8x7xf32>
    %515 = vector.extract_strided_slice %489 {offsets = [0, 35], sizes = [8, 7], strides = [1, 1]} : vector<8x49xf32> to vector<8x7xf32>
    %516 = vector.extract_strided_slice %466 {offsets = [0, 42], sizes = [8, 7], strides = [1, 1]} : vector<8x49xf32> to vector<8x7xf32>
    %517 = vector.extract_strided_slice %489 {offsets = [0, 42], sizes = [8, 7], strides = [1, 1]} : vector<8x49xf32> to vector<8x7xf32>
    %518 = tpu.concatenate %490, %491, %492, %493, %494, %495, %496, %497, %498, %499, %500, %501, %502, %503, %504, %505 in 1 : vector<8x7xf32>, vector<8x7xf32>, vector<8x7xf32>, vector<8x7xf32>, vector<8x7xf32>, vector<8x7xf32>, vector<8x7xf32>, vector<8x7xf32>, vector<8x7xf32>, vector<8x7xf32>, vector<8x7xf32>, vector<8x7xf32>, vector<8x7xf32>, vector<8x7xf32>, vector<8x7xf32>, vector<8x7xf32> -> vector<8x112xf32>
    %519 = tpu.concatenate %506, %507, %508, %509, %510, %511, %512, %513, %514, %515, %516, %517 in 1 : vector<8x7xf32>, vector<8x7xf32>, vector<8x7xf32>, vector<8x7xf32>, vector<8x7xf32>, vector<8x7xf32>, vector<8x7xf32>, vector<8x7xf32>, vector<8x7xf32>, vector<8x7xf32>, vector<8x7xf32>, vector<8x7xf32> -> vector<8x84xf32>
    %520 = tpu.concatenate %518, %519 in 1 : vector<8x112xf32>, vector<8x84xf32> -> vector<8x196xf32>
    %c1_121 = arith.constant 1 : index
    %c0_122 = arith.constant 0 : index
    %c0_123 = arith.constant 0 : index
    %521 = vector.load %arg0[%c1_121, %c0_122, %c0_123] : memref<2x8x196xf32, #tpu.memory_space<vmem>>, vector<1x8x196xf32>
    %522 = vector.shape_cast %521 : vector<1x8x196xf32> to vector<8x196xf32>
    %523 = vector.extract_strided_slice %522 {offsets = [0, 0], sizes = [1, 196], strides = [1, 1]} : vector<8x196xf32> to vector<1x196xf32>
    %524 = vector.extract_strided_slice %522 {offsets = [1, 0], sizes = [1, 196], strides = [1, 1]} : vector<8x196xf32> to vector<1x196xf32>
    %525 = vector.extract_strided_slice %524 {offsets = [0, 182], sizes = [1, 14], strides = [1, 1]} : vector<1x196xf32> to vector<1x14xf32>
    %526 = vector.extract_strided_slice %524 {offsets = [0, 0], sizes = [1, 182], strides = [1, 1]} : vector<1x196xf32> to vector<1x182xf32>
    %527 = tpu.concatenate %525, %526 in 1 : vector<1x14xf32>, vector<1x182xf32> -> vector<1x196xf32>
    %528 = vector.extract_strided_slice %522 {offsets = [2, 0], sizes = [1, 196], strides = [1, 1]} : vector<8x196xf32> to vector<1x196xf32>
    %529 = vector.extract_strided_slice %528 {offsets = [0, 168], sizes = [1, 28], strides = [1, 1]} : vector<1x196xf32> to vector<1x28xf32>
    %530 = vector.extract_strided_slice %528 {offsets = [0, 0], sizes = [1, 168], strides = [1, 1]} : vector<1x196xf32> to vector<1x168xf32>
    %531 = tpu.concatenate %529, %530 in 1 : vector<1x28xf32>, vector<1x168xf32> -> vector<1x196xf32>
    %532 = vector.extract_strided_slice %522 {offsets = [3, 0], sizes = [1, 196], strides = [1, 1]} : vector<8x196xf32> to vector<1x196xf32>
    %533 = vector.extract_strided_slice %532 {offsets = [0, 154], sizes = [1, 42], strides = [1, 1]} : vector<1x196xf32> to vector<1x42xf32>
    %534 = vector.extract_strided_slice %532 {offsets = [0, 0], sizes = [1, 154], strides = [1, 1]} : vector<1x196xf32> to vector<1x154xf32>
    %535 = tpu.concatenate %533, %534 in 1 : vector<1x42xf32>, vector<1x154xf32> -> vector<1x196xf32>
    %536 = vector.extract_strided_slice %522 {offsets = [4, 0], sizes = [1, 196], strides = [1, 1]} : vector<8x196xf32> to vector<1x196xf32>
    %537 = vector.extract_strided_slice %536 {offsets = [0, 140], sizes = [1, 56], strides = [1, 1]} : vector<1x196xf32> to vector<1x56xf32>
    %538 = vector.extract_strided_slice %536 {offsets = [0, 0], sizes = [1, 140], strides = [1, 1]} : vector<1x196xf32> to vector<1x140xf32>
    %539 = tpu.concatenate %537, %538 in 1 : vector<1x56xf32>, vector<1x140xf32> -> vector<1x196xf32>
    %540 = vector.extract_strided_slice %522 {offsets = [5, 0], sizes = [1, 196], strides = [1, 1]} : vector<8x196xf32> to vector<1x196xf32>
    %541 = vector.extract_strided_slice %540 {offsets = [0, 126], sizes = [1, 70], strides = [1, 1]} : vector<1x196xf32> to vector<1x70xf32>
    %542 = vector.extract_strided_slice %540 {offsets = [0, 0], sizes = [1, 126], strides = [1, 1]} : vector<1x196xf32> to vector<1x126xf32>
    %543 = tpu.concatenate %541, %542 in 1 : vector<1x70xf32>, vector<1x126xf32> -> vector<1x196xf32>
    %544 = vector.extract_strided_slice %522 {offsets = [6, 0], sizes = [1, 196], strides = [1, 1]} : vector<8x196xf32> to vector<1x196xf32>
    %545 = vector.extract_strided_slice %544 {offsets = [0, 112], sizes = [1, 84], strides = [1, 1]} : vector<1x196xf32> to vector<1x84xf32>
    %546 = vector.extract_strided_slice %544 {offsets = [0, 0], sizes = [1, 112], strides = [1, 1]} : vector<1x196xf32> to vector<1x112xf32>
    %547 = tpu.concatenate %545, %546 in 1 : vector<1x84xf32>, vector<1x112xf32> -> vector<1x196xf32>
    %548 = vector.extract_strided_slice %522 {offsets = [7, 0], sizes = [1, 196], strides = [1, 1]} : vector<8x196xf32> to vector<1x196xf32>
    %549 = vector.extract_strided_slice %548 {offsets = [0, 98], sizes = [1, 98], strides = [1, 1]} : vector<1x196xf32> to vector<1x98xf32>
    %550 = vector.extract_strided_slice %548 {offsets = [0, 0], sizes = [1, 98], strides = [1, 1]} : vector<1x196xf32> to vector<1x98xf32>
    %551 = tpu.concatenate %549, %550 in 1 : vector<1x98xf32>, vector<1x98xf32> -> vector<1x196xf32>
    %552 = tpu.concatenate %523, %527, %531, %535, %539, %543, %547, %551 in 0 : vector<1x196xf32>, vector<1x196xf32>, vector<1x196xf32>, vector<1x196xf32>, vector<1x196xf32>, vector<1x196xf32>, vector<1x196xf32>, vector<1x196xf32> -> vector<8x196xf32>
    %cst_124 = arith.constant dense<0.000000e+00> : vector<8x196xf32>
    %553 = tpu.matmul %3, %552, %cst_124 {dimension_numbers = #tpu.dot_dimension_numbers<[1], [0], [0], [1], [0, 0, 1, 1], [], []>} : vector<8x8xf32>, vector<8x196xf32>, vector<8x196xf32> -> vector<8x196xf32>
    %554 = vector.broadcast %19 : vector<8x1xf32> to vector<8x196xf32>
    %555 = arith.addf %553, %554 : vector<8x196xf32>
    %cst_125 = arith.constant 5.000000e-01 : f32
    %556 = vector.broadcast %cst_125 : f32 to vector<8x196xf32>
    %557 = arith.mulf %556, %555 : vector<8x196xf32>
    %cst_126 = arith.constant 0.707106769 : f32
    %558 = vector.broadcast %cst_126 : f32 to vector<8x196xf32>
    %559 = arith.mulf %555, %558 : vector<8x196xf32>
    %cst_127 = arith.constant 0.000000e+00 : f32
    %560 = vector.broadcast %cst_127 : f32 to vector<8x196xf32>
    %561 = arith.cmpf oge, %559, %560 : vector<8x196xf32>
    %cst_128 = arith.constant 1.000000e+00 : f32
    %cst_129 = arith.constant -1.000000e+00 : f32
    %562 = vector.broadcast %cst_128 : f32 to vector<8x196xf32>
    %563 = vector.broadcast %cst_129 : f32 to vector<8x196xf32>
    %564 = arith.select %561, %562, %563 : vector<8x196xi1>, vector<8x196xf32>
    %565 = math.absf %559 : vector<8x196xf32>
    %cst_130 = arith.constant 0.327591091 : f32
    %566 = vector.broadcast %cst_130 : f32 to vector<8x196xf32>
    %567 = arith.mulf %566, %565 : vector<8x196xf32>
    %cst_131 = arith.constant 1.000000e+00 : f32
    %568 = vector.broadcast %cst_131 : f32 to vector<8x196xf32>
    %569 = arith.addf %568, %567 : vector<8x196xf32>
    %cst_132 = arith.constant 1.000000e+00 : f32
    %570 = vector.broadcast %cst_132 : f32 to vector<8x196xf32>
    %571 = arith.divf %570, %569 : vector<8x196xf32>
    %cst_133 = arith.constant 1.06140542 : f32
    %572 = vector.broadcast %cst_133 : f32 to vector<8x196xf32>
    %573 = arith.mulf %572, %571 : vector<8x196xf32>
    %cst_134 = arith.constant -1.45315206 : f32
    %574 = vector.broadcast %cst_134 : f32 to vector<8x196xf32>
    %575 = arith.addf %573, %574 : vector<8x196xf32>
    %576 = arith.mulf %575, %571 : vector<8x196xf32>
    %cst_135 = arith.constant 1.42141378 : f32
    %577 = vector.broadcast %cst_135 : f32 to vector<8x196xf32>
    %578 = arith.addf %576, %577 : vector<8x196xf32>
    %579 = arith.mulf %578, %571 : vector<8x196xf32>
    %cst_136 = arith.constant -0.284496725 : f32
    %580 = vector.broadcast %cst_136 : f32 to vector<8x196xf32>
    %581 = arith.addf %579, %580 : vector<8x196xf32>
    %582 = arith.mulf %581, %571 : vector<8x196xf32>
    %cst_137 = arith.constant 0.254829586 : f32
    %583 = vector.broadcast %cst_137 : f32 to vector<8x196xf32>
    %584 = arith.addf %582, %583 : vector<8x196xf32>
    %585 = arith.mulf %584, %571 : vector<8x196xf32>
    %cst_138 = arith.constant 0.000000e+00 : f32
    %586 = vector.broadcast %cst_138 : f32 to vector<8x196xf32>
    %587 = arith.subf %586, %565 : vector<8x196xf32>
    %588 = arith.mulf %587, %565 : vector<8x196xf32>
    %589 = math.exp %588 : vector<8x196xf32>
    %590 = arith.mulf %585, %589 : vector<8x196xf32>
    %cst_139 = arith.constant 1.000000e+00 : f32
    %591 = vector.broadcast %cst_139 : f32 to vector<8x196xf32>
    %592 = arith.subf %591, %590 : vector<8x196xf32>
    %593 = arith.mulf %564, %592 : vector<8x196xf32>
    %cst_140 = arith.constant 1.000000e+00 : f32
    %594 = vector.broadcast %cst_140 : f32 to vector<8x196xf32>
    %595 = arith.addf %594, %593 : vector<8x196xf32>
    %596 = arith.mulf %557, %595 : vector<8x196xf32>
    %597 = vector.extract_strided_slice %596 {offsets = [0, 0], sizes = [1, 196], strides = [1, 1]} : vector<8x196xf32> to vector<1x196xf32>
    %598 = vector.extract_strided_slice %596 {offsets = [1, 0], sizes = [1, 196], strides = [1, 1]} : vector<8x196xf32> to vector<1x196xf32>
    %599 = vector.extract_strided_slice %598 {offsets = [0, 195], sizes = [1, 1], strides = [1, 1]} : vector<1x196xf32> to vector<1x1xf32>
    %600 = vector.extract_strided_slice %598 {offsets = [0, 0], sizes = [1, 195], strides = [1, 1]} : vector<1x196xf32> to vector<1x195xf32>
    %601 = tpu.concatenate %599, %600 in 1 : vector<1x1xf32>, vector<1x195xf32> -> vector<1x196xf32>
    %602 = vector.extract_strided_slice %598 {offsets = [0, 13], sizes = [1, 183], strides = [1, 1]} : vector<1x196xf32> to vector<1x183xf32>
    %603 = vector.extract_strided_slice %598 {offsets = [0, 0], sizes = [1, 13], strides = [1, 1]} : vector<1x196xf32> to vector<1x13xf32>
    %604 = tpu.concatenate %602, %603 in 1 : vector<1x183xf32>, vector<1x13xf32> -> vector<1x196xf32>
    %c1_i32_141 = arith.constant 1 : i32
    %605 = vector.broadcast %c1_i32_141 : i32 to vector<1x196xi32>
    %606 = arith.cmpi sge, %1, %605 : vector<1x196xi32>
    %607 = arith.select %606, %601, %604 : vector<1x196xi1>, vector<1x196xf32>
    %608 = vector.extract_strided_slice %596 {offsets = [2, 0], sizes = [1, 196], strides = [1, 1]} : vector<8x196xf32> to vector<1x196xf32>
    %609 = vector.extract_strided_slice %608 {offsets = [0, 194], sizes = [1, 2], strides = [1, 1]} : vector<1x196xf32> to vector<1x2xf32>
    %610 = vector.extract_strided_slice %608 {offsets = [0, 0], sizes = [1, 194], strides = [1, 1]} : vector<1x196xf32> to vector<1x194xf32>
    %611 = tpu.concatenate %609, %610 in 1 : vector<1x2xf32>, vector<1x194xf32> -> vector<1x196xf32>
    %612 = vector.extract_strided_slice %608 {offsets = [0, 12], sizes = [1, 184], strides = [1, 1]} : vector<1x196xf32> to vector<1x184xf32>
    %613 = vector.extract_strided_slice %608 {offsets = [0, 0], sizes = [1, 12], strides = [1, 1]} : vector<1x196xf32> to vector<1x12xf32>
    %614 = tpu.concatenate %612, %613 in 1 : vector<1x184xf32>, vector<1x12xf32> -> vector<1x196xf32>
    %c2_i32_142 = arith.constant 2 : i32
    %615 = vector.broadcast %c2_i32_142 : i32 to vector<1x196xi32>
    %616 = arith.cmpi sge, %1, %615 : vector<1x196xi32>
    %617 = arith.select %616, %611, %614 : vector<1x196xi1>, vector<1x196xf32>
    %618 = vector.extract_strided_slice %596 {offsets = [3, 0], sizes = [1, 196], strides = [1, 1]} : vector<8x196xf32> to vector<1x196xf32>
    %619 = vector.extract_strided_slice %618 {offsets = [0, 193], sizes = [1, 3], strides = [1, 1]} : vector<1x196xf32> to vector<1x3xf32>
    %620 = vector.extract_strided_slice %618 {offsets = [0, 0], sizes = [1, 193], strides = [1, 1]} : vector<1x196xf32> to vector<1x193xf32>
    %621 = tpu.concatenate %619, %620 in 1 : vector<1x3xf32>, vector<1x193xf32> -> vector<1x196xf32>
    %622 = vector.extract_strided_slice %618 {offsets = [0, 11], sizes = [1, 185], strides = [1, 1]} : vector<1x196xf32> to vector<1x185xf32>
    %623 = vector.extract_strided_slice %618 {offsets = [0, 0], sizes = [1, 11], strides = [1, 1]} : vector<1x196xf32> to vector<1x11xf32>
    %624 = tpu.concatenate %622, %623 in 1 : vector<1x185xf32>, vector<1x11xf32> -> vector<1x196xf32>
    %c3_i32_143 = arith.constant 3 : i32
    %625 = vector.broadcast %c3_i32_143 : i32 to vector<1x196xi32>
    %626 = arith.cmpi sge, %1, %625 : vector<1x196xi32>
    %627 = arith.select %626, %621, %624 : vector<1x196xi1>, vector<1x196xf32>
    %628 = vector.extract_strided_slice %596 {offsets = [4, 0], sizes = [1, 196], strides = [1, 1]} : vector<8x196xf32> to vector<1x196xf32>
    %629 = vector.extract_strided_slice %628 {offsets = [0, 192], sizes = [1, 4], strides = [1, 1]} : vector<1x196xf32> to vector<1x4xf32>
    %630 = vector.extract_strided_slice %628 {offsets = [0, 0], sizes = [1, 192], strides = [1, 1]} : vector<1x196xf32> to vector<1x192xf32>
    %631 = tpu.concatenate %629, %630 in 1 : vector<1x4xf32>, vector<1x192xf32> -> vector<1x196xf32>
    %632 = vector.extract_strided_slice %628 {offsets = [0, 10], sizes = [1, 186], strides = [1, 1]} : vector<1x196xf32> to vector<1x186xf32>
    %633 = vector.extract_strided_slice %628 {offsets = [0, 0], sizes = [1, 10], strides = [1, 1]} : vector<1x196xf32> to vector<1x10xf32>
    %634 = tpu.concatenate %632, %633 in 1 : vector<1x186xf32>, vector<1x10xf32> -> vector<1x196xf32>
    %c4_i32_144 = arith.constant 4 : i32
    %635 = vector.broadcast %c4_i32_144 : i32 to vector<1x196xi32>
    %636 = arith.cmpi sge, %1, %635 : vector<1x196xi32>
    %637 = arith.select %636, %631, %634 : vector<1x196xi1>, vector<1x196xf32>
    %638 = vector.extract_strided_slice %596 {offsets = [5, 0], sizes = [1, 196], strides = [1, 1]} : vector<8x196xf32> to vector<1x196xf32>
    %639 = vector.extract_strided_slice %638 {offsets = [0, 191], sizes = [1, 5], strides = [1, 1]} : vector<1x196xf32> to vector<1x5xf32>
    %640 = vector.extract_strided_slice %638 {offsets = [0, 0], sizes = [1, 191], strides = [1, 1]} : vector<1x196xf32> to vector<1x191xf32>
    %641 = tpu.concatenate %639, %640 in 1 : vector<1x5xf32>, vector<1x191xf32> -> vector<1x196xf32>
    %642 = vector.extract_strided_slice %638 {offsets = [0, 9], sizes = [1, 187], strides = [1, 1]} : vector<1x196xf32> to vector<1x187xf32>
    %643 = vector.extract_strided_slice %638 {offsets = [0, 0], sizes = [1, 9], strides = [1, 1]} : vector<1x196xf32> to vector<1x9xf32>
    %644 = tpu.concatenate %642, %643 in 1 : vector<1x187xf32>, vector<1x9xf32> -> vector<1x196xf32>
    %c5_i32_145 = arith.constant 5 : i32
    %645 = vector.broadcast %c5_i32_145 : i32 to vector<1x196xi32>
    %646 = arith.cmpi sge, %1, %645 : vector<1x196xi32>
    %647 = arith.select %646, %641, %644 : vector<1x196xi1>, vector<1x196xf32>
    %648 = vector.extract_strided_slice %596 {offsets = [6, 0], sizes = [1, 196], strides = [1, 1]} : vector<8x196xf32> to vector<1x196xf32>
    %649 = vector.extract_strided_slice %648 {offsets = [0, 190], sizes = [1, 6], strides = [1, 1]} : vector<1x196xf32> to vector<1x6xf32>
    %650 = vector.extract_strided_slice %648 {offsets = [0, 0], sizes = [1, 190], strides = [1, 1]} : vector<1x196xf32> to vector<1x190xf32>
    %651 = tpu.concatenate %649, %650 in 1 : vector<1x6xf32>, vector<1x190xf32> -> vector<1x196xf32>
    %652 = vector.extract_strided_slice %648 {offsets = [0, 8], sizes = [1, 188], strides = [1, 1]} : vector<1x196xf32> to vector<1x188xf32>
    %653 = vector.extract_strided_slice %648 {offsets = [0, 0], sizes = [1, 8], strides = [1, 1]} : vector<1x196xf32> to vector<1x8xf32>
    %654 = tpu.concatenate %652, %653 in 1 : vector<1x188xf32>, vector<1x8xf32> -> vector<1x196xf32>
    %c6_i32_146 = arith.constant 6 : i32
    %655 = vector.broadcast %c6_i32_146 : i32 to vector<1x196xi32>
    %656 = arith.cmpi sge, %1, %655 : vector<1x196xi32>
    %657 = arith.select %656, %651, %654 : vector<1x196xi1>, vector<1x196xf32>
    %658 = vector.extract_strided_slice %596 {offsets = [7, 0], sizes = [1, 196], strides = [1, 1]} : vector<8x196xf32> to vector<1x196xf32>
    %659 = vector.extract_strided_slice %658 {offsets = [0, 189], sizes = [1, 7], strides = [1, 1]} : vector<1x196xf32> to vector<1x7xf32>
    %660 = vector.extract_strided_slice %658 {offsets = [0, 0], sizes = [1, 189], strides = [1, 1]} : vector<1x196xf32> to vector<1x189xf32>
    %661 = tpu.concatenate %659, %660 in 1 : vector<1x7xf32>, vector<1x189xf32> -> vector<1x196xf32>
    %662 = vector.extract_strided_slice %658 {offsets = [0, 7], sizes = [1, 189], strides = [1, 1]} : vector<1x196xf32> to vector<1x189xf32>
    %663 = vector.extract_strided_slice %658 {offsets = [0, 0], sizes = [1, 7], strides = [1, 1]} : vector<1x196xf32> to vector<1x7xf32>
    %664 = tpu.concatenate %662, %663 in 1 : vector<1x189xf32>, vector<1x7xf32> -> vector<1x196xf32>
    %c7_i32_147 = arith.constant 7 : i32
    %665 = vector.broadcast %c7_i32_147 : i32 to vector<1x196xi32>
    %666 = arith.cmpi sge, %1, %665 : vector<1x196xi32>
    %667 = arith.select %666, %661, %664 : vector<1x196xi1>, vector<1x196xf32>
    %668 = tpu.concatenate %597, %607, %617, %627, %637, %647, %657, %667 in 0 : vector<1x196xf32>, vector<1x196xf32>, vector<1x196xf32>, vector<1x196xf32>, vector<1x196xf32>, vector<1x196xf32>, vector<1x196xf32>, vector<1x196xf32> -> vector<8x196xf32>
    %cst_148 = arith.constant dense<0.000000e+00> : vector<8x196xf32>
    %669 = tpu.matmul %5, %668, %cst_148 {dimension_numbers = #tpu.dot_dimension_numbers<[1], [0], [0], [1], [0, 0, 1, 1], [], []>} : vector<8x8xf32>, vector<8x196xf32>, vector<8x196xf32> -> vector<8x196xf32>
    %670 = vector.broadcast %21 : vector<8x1xf32> to vector<8x196xf32>
    %671 = arith.addf %669, %670 : vector<8x196xf32>
    %672 = arith.addf %671, %522 : vector<8x196xf32>
    %673 = vector.extract_strided_slice %522 {offsets = [0, 0], sizes = [1, 196], strides = [1, 1]} : vector<8x196xf32> to vector<1x196xf32>
    %674 = vector.extract_strided_slice %522 {offsets = [1, 0], sizes = [1, 196], strides = [1, 1]} : vector<8x196xf32> to vector<1x196xf32>
    %675 = vector.extract_strided_slice %674 {offsets = [0, 183], sizes = [1, 13], strides = [1, 1]} : vector<1x196xf32> to vector<1x13xf32>
    %676 = vector.extract_strided_slice %674 {offsets = [0, 0], sizes = [1, 183], strides = [1, 1]} : vector<1x196xf32> to vector<1x183xf32>
    %677 = tpu.concatenate %675, %676 in 1 : vector<1x13xf32>, vector<1x183xf32> -> vector<1x196xf32>
    %678 = vector.extract_strided_slice %674 {offsets = [0, 1], sizes = [1, 195], strides = [1, 1]} : vector<1x196xf32> to vector<1x195xf32>
    %679 = vector.extract_strided_slice %674 {offsets = [0, 0], sizes = [1, 1], strides = [1, 1]} : vector<1x196xf32> to vector<1x1xf32>
    %680 = tpu.concatenate %678, %679 in 1 : vector<1x195xf32>, vector<1x1xf32> -> vector<1x196xf32>
    %c13_i32_149 = arith.constant 13 : i32
    %681 = vector.broadcast %c13_i32_149 : i32 to vector<1x196xi32>
    %682 = arith.cmpi sge, %1, %681 : vector<1x196xi32>
    %683 = arith.select %682, %677, %680 : vector<1x196xi1>, vector<1x196xf32>
    %684 = vector.extract_strided_slice %522 {offsets = [2, 0], sizes = [1, 196], strides = [1, 1]} : vector<8x196xf32> to vector<1x196xf32>
    %685 = vector.extract_strided_slice %684 {offsets = [0, 184], sizes = [1, 12], strides = [1, 1]} : vector<1x196xf32> to vector<1x12xf32>
    %686 = vector.extract_strided_slice %684 {offsets = [0, 0], sizes = [1, 184], strides = [1, 1]} : vector<1x196xf32> to vector<1x184xf32>
    %687 = tpu.concatenate %685, %686 in 1 : vector<1x12xf32>, vector<1x184xf32> -> vector<1x196xf32>
    %688 = vector.extract_strided_slice %684 {offsets = [0, 2], sizes = [1, 194], strides = [1, 1]} : vector<1x196xf32> to vector<1x194xf32>
    %689 = vector.extract_strided_slice %684 {offsets = [0, 0], sizes = [1, 2], strides = [1, 1]} : vector<1x196xf32> to vector<1x2xf32>
    %690 = tpu.concatenate %688, %689 in 1 : vector<1x194xf32>, vector<1x2xf32> -> vector<1x196xf32>
    %c12_i32_150 = arith.constant 12 : i32
    %691 = vector.broadcast %c12_i32_150 : i32 to vector<1x196xi32>
    %692 = arith.cmpi sge, %1, %691 : vector<1x196xi32>
    %693 = arith.select %692, %687, %690 : vector<1x196xi1>, vector<1x196xf32>
    %694 = vector.extract_strided_slice %522 {offsets = [3, 0], sizes = [1, 196], strides = [1, 1]} : vector<8x196xf32> to vector<1x196xf32>
    %695 = vector.extract_strided_slice %694 {offsets = [0, 185], sizes = [1, 11], strides = [1, 1]} : vector<1x196xf32> to vector<1x11xf32>
    %696 = vector.extract_strided_slice %694 {offsets = [0, 0], sizes = [1, 185], strides = [1, 1]} : vector<1x196xf32> to vector<1x185xf32>
    %697 = tpu.concatenate %695, %696 in 1 : vector<1x11xf32>, vector<1x185xf32> -> vector<1x196xf32>
    %698 = vector.extract_strided_slice %694 {offsets = [0, 3], sizes = [1, 193], strides = [1, 1]} : vector<1x196xf32> to vector<1x193xf32>
    %699 = vector.extract_strided_slice %694 {offsets = [0, 0], sizes = [1, 3], strides = [1, 1]} : vector<1x196xf32> to vector<1x3xf32>
    %700 = tpu.concatenate %698, %699 in 1 : vector<1x193xf32>, vector<1x3xf32> -> vector<1x196xf32>
    %c11_i32_151 = arith.constant 11 : i32
    %701 = vector.broadcast %c11_i32_151 : i32 to vector<1x196xi32>
    %702 = arith.cmpi sge, %1, %701 : vector<1x196xi32>
    %703 = arith.select %702, %697, %700 : vector<1x196xi1>, vector<1x196xf32>
    %704 = vector.extract_strided_slice %522 {offsets = [4, 0], sizes = [1, 196], strides = [1, 1]} : vector<8x196xf32> to vector<1x196xf32>
    %705 = vector.extract_strided_slice %704 {offsets = [0, 186], sizes = [1, 10], strides = [1, 1]} : vector<1x196xf32> to vector<1x10xf32>
    %706 = vector.extract_strided_slice %704 {offsets = [0, 0], sizes = [1, 186], strides = [1, 1]} : vector<1x196xf32> to vector<1x186xf32>
    %707 = tpu.concatenate %705, %706 in 1 : vector<1x10xf32>, vector<1x186xf32> -> vector<1x196xf32>
    %708 = vector.extract_strided_slice %704 {offsets = [0, 4], sizes = [1, 192], strides = [1, 1]} : vector<1x196xf32> to vector<1x192xf32>
    %709 = vector.extract_strided_slice %704 {offsets = [0, 0], sizes = [1, 4], strides = [1, 1]} : vector<1x196xf32> to vector<1x4xf32>
    %710 = tpu.concatenate %708, %709 in 1 : vector<1x192xf32>, vector<1x4xf32> -> vector<1x196xf32>
    %c10_i32_152 = arith.constant 10 : i32
    %711 = vector.broadcast %c10_i32_152 : i32 to vector<1x196xi32>
    %712 = arith.cmpi sge, %1, %711 : vector<1x196xi32>
    %713 = arith.select %712, %707, %710 : vector<1x196xi1>, vector<1x196xf32>
    %714 = vector.extract_strided_slice %522 {offsets = [5, 0], sizes = [1, 196], strides = [1, 1]} : vector<8x196xf32> to vector<1x196xf32>
    %715 = vector.extract_strided_slice %714 {offsets = [0, 187], sizes = [1, 9], strides = [1, 1]} : vector<1x196xf32> to vector<1x9xf32>
    %716 = vector.extract_strided_slice %714 {offsets = [0, 0], sizes = [1, 187], strides = [1, 1]} : vector<1x196xf32> to vector<1x187xf32>
    %717 = tpu.concatenate %715, %716 in 1 : vector<1x9xf32>, vector<1x187xf32> -> vector<1x196xf32>
    %718 = vector.extract_strided_slice %714 {offsets = [0, 5], sizes = [1, 191], strides = [1, 1]} : vector<1x196xf32> to vector<1x191xf32>
    %719 = vector.extract_strided_slice %714 {offsets = [0, 0], sizes = [1, 5], strides = [1, 1]} : vector<1x196xf32> to vector<1x5xf32>
    %720 = tpu.concatenate %718, %719 in 1 : vector<1x191xf32>, vector<1x5xf32> -> vector<1x196xf32>
    %c9_i32_153 = arith.constant 9 : i32
    %721 = vector.broadcast %c9_i32_153 : i32 to vector<1x196xi32>
    %722 = arith.cmpi sge, %1, %721 : vector<1x196xi32>
    %723 = arith.select %722, %717, %720 : vector<1x196xi1>, vector<1x196xf32>
    %724 = vector.extract_strided_slice %522 {offsets = [6, 0], sizes = [1, 196], strides = [1, 1]} : vector<8x196xf32> to vector<1x196xf32>
    %725 = vector.extract_strided_slice %724 {offsets = [0, 188], sizes = [1, 8], strides = [1, 1]} : vector<1x196xf32> to vector<1x8xf32>
    %726 = vector.extract_strided_slice %724 {offsets = [0, 0], sizes = [1, 188], strides = [1, 1]} : vector<1x196xf32> to vector<1x188xf32>
    %727 = tpu.concatenate %725, %726 in 1 : vector<1x8xf32>, vector<1x188xf32> -> vector<1x196xf32>
    %728 = vector.extract_strided_slice %724 {offsets = [0, 6], sizes = [1, 190], strides = [1, 1]} : vector<1x196xf32> to vector<1x190xf32>
    %729 = vector.extract_strided_slice %724 {offsets = [0, 0], sizes = [1, 6], strides = [1, 1]} : vector<1x196xf32> to vector<1x6xf32>
    %730 = tpu.concatenate %728, %729 in 1 : vector<1x190xf32>, vector<1x6xf32> -> vector<1x196xf32>
    %c8_i32_154 = arith.constant 8 : i32
    %731 = vector.broadcast %c8_i32_154 : i32 to vector<1x196xi32>
    %732 = arith.cmpi sge, %1, %731 : vector<1x196xi32>
    %733 = arith.select %732, %727, %730 : vector<1x196xi1>, vector<1x196xf32>
    %734 = vector.extract_strided_slice %522 {offsets = [7, 0], sizes = [1, 196], strides = [1, 1]} : vector<8x196xf32> to vector<1x196xf32>
    %735 = vector.extract_strided_slice %734 {offsets = [0, 189], sizes = [1, 7], strides = [1, 1]} : vector<1x196xf32> to vector<1x7xf32>
    %736 = vector.extract_strided_slice %734 {offsets = [0, 0], sizes = [1, 189], strides = [1, 1]} : vector<1x196xf32> to vector<1x189xf32>
    %737 = tpu.concatenate %735, %736 in 1 : vector<1x7xf32>, vector<1x189xf32> -> vector<1x196xf32>
    %738 = vector.extract_strided_slice %734 {offsets = [0, 7], sizes = [1, 189], strides = [1, 1]} : vector<1x196xf32> to vector<1x189xf32>
    %739 = vector.extract_strided_slice %734 {offsets = [0, 0], sizes = [1, 7], strides = [1, 1]} : vector<1x196xf32> to vector<1x7xf32>
    %740 = tpu.concatenate %738, %739 in 1 : vector<1x189xf32>, vector<1x7xf32> -> vector<1x196xf32>
    %c7_i32_155 = arith.constant 7 : i32
    %741 = vector.broadcast %c7_i32_155 : i32 to vector<1x196xi32>
    %742 = arith.cmpi sge, %1, %741 : vector<1x196xi32>
    %743 = arith.select %742, %737, %740 : vector<1x196xi1>, vector<1x196xf32>
    %744 = tpu.concatenate %673, %683, %693, %703, %713, %723, %733, %743 in 0 : vector<1x196xf32>, vector<1x196xf32>, vector<1x196xf32>, vector<1x196xf32>, vector<1x196xf32>, vector<1x196xf32>, vector<1x196xf32>, vector<1x196xf32> -> vector<8x196xf32>
    %cst_156 = arith.constant dense<0.000000e+00> : vector<8x196xf32>
    %745 = tpu.matmul %7, %744, %cst_156 {dimension_numbers = #tpu.dot_dimension_numbers<[1], [0], [0], [1], [0, 0, 1, 1], [], []>} : vector<8x8xf32>, vector<8x196xf32>, vector<8x196xf32> -> vector<8x196xf32>
    %746 = vector.broadcast %23 : vector<8x1xf32> to vector<8x196xf32>
    %747 = arith.addf %745, %746 : vector<8x196xf32>
    %cst_157 = arith.constant 5.000000e-01 : f32
    %748 = vector.broadcast %cst_157 : f32 to vector<8x196xf32>
    %749 = arith.mulf %748, %747 : vector<8x196xf32>
    %cst_158 = arith.constant 0.707106769 : f32
    %750 = vector.broadcast %cst_158 : f32 to vector<8x196xf32>
    %751 = arith.mulf %747, %750 : vector<8x196xf32>
    %cst_159 = arith.constant 0.000000e+00 : f32
    %752 = vector.broadcast %cst_159 : f32 to vector<8x196xf32>
    %753 = arith.cmpf oge, %751, %752 : vector<8x196xf32>
    %cst_160 = arith.constant 1.000000e+00 : f32
    %cst_161 = arith.constant -1.000000e+00 : f32
    %754 = vector.broadcast %cst_160 : f32 to vector<8x196xf32>
    %755 = vector.broadcast %cst_161 : f32 to vector<8x196xf32>
    %756 = arith.select %753, %754, %755 : vector<8x196xi1>, vector<8x196xf32>
    %757 = math.absf %751 : vector<8x196xf32>
    %cst_162 = arith.constant 0.327591091 : f32
    %758 = vector.broadcast %cst_162 : f32 to vector<8x196xf32>
    %759 = arith.mulf %758, %757 : vector<8x196xf32>
    %cst_163 = arith.constant 1.000000e+00 : f32
    %760 = vector.broadcast %cst_163 : f32 to vector<8x196xf32>
    %761 = arith.addf %760, %759 : vector<8x196xf32>
    %cst_164 = arith.constant 1.000000e+00 : f32
    %762 = vector.broadcast %cst_164 : f32 to vector<8x196xf32>
    %763 = arith.divf %762, %761 : vector<8x196xf32>
    %cst_165 = arith.constant 1.06140542 : f32
    %764 = vector.broadcast %cst_165 : f32 to vector<8x196xf32>
    %765 = arith.mulf %764, %763 : vector<8x196xf32>
    %cst_166 = arith.constant -1.45315206 : f32
    %766 = vector.broadcast %cst_166 : f32 to vector<8x196xf32>
    %767 = arith.addf %765, %766 : vector<8x196xf32>
    %768 = arith.mulf %767, %763 : vector<8x196xf32>
    %cst_167 = arith.constant 1.42141378 : f32
    %769 = vector.broadcast %cst_167 : f32 to vector<8x196xf32>
    %770 = arith.addf %768, %769 : vector<8x196xf32>
    %771 = arith.mulf %770, %763 : vector<8x196xf32>
    %cst_168 = arith.constant -0.284496725 : f32
    %772 = vector.broadcast %cst_168 : f32 to vector<8x196xf32>
    %773 = arith.addf %771, %772 : vector<8x196xf32>
    %774 = arith.mulf %773, %763 : vector<8x196xf32>
    %cst_169 = arith.constant 0.254829586 : f32
    %775 = vector.broadcast %cst_169 : f32 to vector<8x196xf32>
    %776 = arith.addf %774, %775 : vector<8x196xf32>
    %777 = arith.mulf %776, %763 : vector<8x196xf32>
    %cst_170 = arith.constant 0.000000e+00 : f32
    %778 = vector.broadcast %cst_170 : f32 to vector<8x196xf32>
    %779 = arith.subf %778, %757 : vector<8x196xf32>
    %780 = arith.mulf %779, %757 : vector<8x196xf32>
    %781 = math.exp %780 : vector<8x196xf32>
    %782 = arith.mulf %777, %781 : vector<8x196xf32>
    %cst_171 = arith.constant 1.000000e+00 : f32
    %783 = vector.broadcast %cst_171 : f32 to vector<8x196xf32>
    %784 = arith.subf %783, %782 : vector<8x196xf32>
    %785 = arith.mulf %756, %784 : vector<8x196xf32>
    %cst_172 = arith.constant 1.000000e+00 : f32
    %786 = vector.broadcast %cst_172 : f32 to vector<8x196xf32>
    %787 = arith.addf %786, %785 : vector<8x196xf32>
    %788 = arith.mulf %749, %787 : vector<8x196xf32>
    %789 = vector.extract_strided_slice %788 {offsets = [0, 0], sizes = [1, 196], strides = [1, 1]} : vector<8x196xf32> to vector<1x196xf32>
    %790 = vector.extract_strided_slice %788 {offsets = [1, 0], sizes = [1, 196], strides = [1, 1]} : vector<8x196xf32> to vector<1x196xf32>
    %791 = vector.extract_strided_slice %790 {offsets = [0, 182], sizes = [1, 14], strides = [1, 1]} : vector<1x196xf32> to vector<1x14xf32>
    %792 = vector.extract_strided_slice %790 {offsets = [0, 0], sizes = [1, 182], strides = [1, 1]} : vector<1x196xf32> to vector<1x182xf32>
    %793 = tpu.concatenate %791, %792 in 1 : vector<1x14xf32>, vector<1x182xf32> -> vector<1x196xf32>
    %794 = vector.extract_strided_slice %788 {offsets = [2, 0], sizes = [1, 196], strides = [1, 1]} : vector<8x196xf32> to vector<1x196xf32>
    %795 = vector.extract_strided_slice %794 {offsets = [0, 168], sizes = [1, 28], strides = [1, 1]} : vector<1x196xf32> to vector<1x28xf32>
    %796 = vector.extract_strided_slice %794 {offsets = [0, 0], sizes = [1, 168], strides = [1, 1]} : vector<1x196xf32> to vector<1x168xf32>
    %797 = tpu.concatenate %795, %796 in 1 : vector<1x28xf32>, vector<1x168xf32> -> vector<1x196xf32>
    %798 = vector.extract_strided_slice %788 {offsets = [3, 0], sizes = [1, 196], strides = [1, 1]} : vector<8x196xf32> to vector<1x196xf32>
    %799 = vector.extract_strided_slice %798 {offsets = [0, 154], sizes = [1, 42], strides = [1, 1]} : vector<1x196xf32> to vector<1x42xf32>
    %800 = vector.extract_strided_slice %798 {offsets = [0, 0], sizes = [1, 154], strides = [1, 1]} : vector<1x196xf32> to vector<1x154xf32>
    %801 = tpu.concatenate %799, %800 in 1 : vector<1x42xf32>, vector<1x154xf32> -> vector<1x196xf32>
    %802 = vector.extract_strided_slice %788 {offsets = [4, 0], sizes = [1, 196], strides = [1, 1]} : vector<8x196xf32> to vector<1x196xf32>
    %803 = vector.extract_strided_slice %802 {offsets = [0, 140], sizes = [1, 56], strides = [1, 1]} : vector<1x196xf32> to vector<1x56xf32>
    %804 = vector.extract_strided_slice %802 {offsets = [0, 0], sizes = [1, 140], strides = [1, 1]} : vector<1x196xf32> to vector<1x140xf32>
    %805 = tpu.concatenate %803, %804 in 1 : vector<1x56xf32>, vector<1x140xf32> -> vector<1x196xf32>
    %806 = vector.extract_strided_slice %788 {offsets = [5, 0], sizes = [1, 196], strides = [1, 1]} : vector<8x196xf32> to vector<1x196xf32>
    %807 = vector.extract_strided_slice %806 {offsets = [0, 126], sizes = [1, 70], strides = [1, 1]} : vector<1x196xf32> to vector<1x70xf32>
    %808 = vector.extract_strided_slice %806 {offsets = [0, 0], sizes = [1, 126], strides = [1, 1]} : vector<1x196xf32> to vector<1x126xf32>
    %809 = tpu.concatenate %807, %808 in 1 : vector<1x70xf32>, vector<1x126xf32> -> vector<1x196xf32>
    %810 = vector.extract_strided_slice %788 {offsets = [6, 0], sizes = [1, 196], strides = [1, 1]} : vector<8x196xf32> to vector<1x196xf32>
    %811 = vector.extract_strided_slice %810 {offsets = [0, 112], sizes = [1, 84], strides = [1, 1]} : vector<1x196xf32> to vector<1x84xf32>
    %812 = vector.extract_strided_slice %810 {offsets = [0, 0], sizes = [1, 112], strides = [1, 1]} : vector<1x196xf32> to vector<1x112xf32>
    %813 = tpu.concatenate %811, %812 in 1 : vector<1x84xf32>, vector<1x112xf32> -> vector<1x196xf32>
    %814 = vector.extract_strided_slice %788 {offsets = [7, 0], sizes = [1, 196], strides = [1, 1]} : vector<8x196xf32> to vector<1x196xf32>
    %815 = vector.extract_strided_slice %814 {offsets = [0, 98], sizes = [1, 98], strides = [1, 1]} : vector<1x196xf32> to vector<1x98xf32>
    %816 = vector.extract_strided_slice %814 {offsets = [0, 0], sizes = [1, 98], strides = [1, 1]} : vector<1x196xf32> to vector<1x98xf32>
    %817 = tpu.concatenate %815, %816 in 1 : vector<1x98xf32>, vector<1x98xf32> -> vector<1x196xf32>
    %818 = tpu.concatenate %789, %793, %797, %801, %805, %809, %813, %817 in 0 : vector<1x196xf32>, vector<1x196xf32>, vector<1x196xf32>, vector<1x196xf32>, vector<1x196xf32>, vector<1x196xf32>, vector<1x196xf32>, vector<1x196xf32> -> vector<8x196xf32>
    %cst_173 = arith.constant dense<0.000000e+00> : vector<8x196xf32>
    %819 = tpu.matmul %9, %818, %cst_173 {dimension_numbers = #tpu.dot_dimension_numbers<[1], [0], [0], [1], [0, 0, 1, 1], [], []>} : vector<8x8xf32>, vector<8x196xf32>, vector<8x196xf32> -> vector<8x196xf32>
    %820 = vector.broadcast %25 : vector<8x1xf32> to vector<8x196xf32>
    %821 = arith.addf %819, %820 : vector<8x196xf32>
    %822 = arith.addf %821, %522 : vector<8x196xf32>
    %cst_174 = arith.constant dense<0.000000e+00> : vector<196xf32>
    %823 = vector.multi_reduction <add>, %672, %cst_174 [0] : vector<8x196xf32> to vector<196xf32>
    %824 = vector.shape_cast %823 : vector<196xf32> to vector<1x196xf32>
    %cst_175 = arith.constant dense<0.000000e+00> : vector<196xf32>
    %825 = vector.multi_reduction <add>, %822, %cst_175 [0] : vector<8x196xf32> to vector<196xf32>
    %826 = vector.shape_cast %825 : vector<196xf32> to vector<1x196xf32>
    %827 = arith.addf %824, %826 : vector<1x196xf32>
    %cst_176 = arith.constant 1.600000e+01 : f32
    %828 = vector.broadcast %cst_176 : f32 to vector<1x196xf32>
    %829 = arith.divf %827, %828 : vector<1x196xf32>
    %830 = vector.broadcast %829 : vector<1x196xf32> to vector<8x196xf32>
    %831 = arith.subf %672, %830 : vector<8x196xf32>
    %832 = arith.mulf %831, %831 : vector<8x196xf32>
    %cst_177 = arith.constant dense<0.000000e+00> : vector<196xf32>
    %833 = vector.multi_reduction <add>, %832, %cst_177 [0] : vector<8x196xf32> to vector<196xf32>
    %834 = vector.shape_cast %833 : vector<196xf32> to vector<1x196xf32>
    %835 = vector.broadcast %829 : vector<1x196xf32> to vector<8x196xf32>
    %836 = arith.subf %822, %835 : vector<8x196xf32>
    %837 = arith.mulf %836, %836 : vector<8x196xf32>
    %cst_178 = arith.constant dense<0.000000e+00> : vector<196xf32>
    %838 = vector.multi_reduction <add>, %837, %cst_178 [0] : vector<8x196xf32> to vector<196xf32>
    %839 = vector.shape_cast %838 : vector<196xf32> to vector<1x196xf32>
    %840 = arith.addf %834, %839 : vector<1x196xf32>
    %cst_179 = arith.constant 1.600000e+01 : f32
    %841 = vector.broadcast %cst_179 : f32 to vector<1x196xf32>
    %842 = arith.divf %840, %841 : vector<1x196xf32>
    %cst_180 = arith.constant 9.99999974E-6 : f32
    %843 = vector.broadcast %cst_180 : f32 to vector<1x196xf32>
    %844 = arith.addf %842, %843 : vector<1x196xf32>
    %845 = math.rsqrt %844 : vector<1x196xf32>
    %846 = vector.broadcast %829 : vector<1x196xf32> to vector<8x196xf32>
    %847 = arith.subf %672, %846 : vector<8x196xf32>
    %848 = vector.broadcast %845 : vector<1x196xf32> to vector<8x196xf32>
    %849 = arith.mulf %847, %848 : vector<8x196xf32>
    %850 = vector.broadcast %31 : vector<8x1xf32> to vector<8x196xf32>
    %851 = arith.mulf %849, %850 : vector<8x196xf32>
    %852 = vector.broadcast %35 : vector<8x1xf32> to vector<8x196xf32>
    %853 = arith.addf %851, %852 : vector<8x196xf32>
    %854 = vector.broadcast %829 : vector<1x196xf32> to vector<8x196xf32>
    %855 = arith.subf %822, %854 : vector<8x196xf32>
    %856 = vector.broadcast %845 : vector<1x196xf32> to vector<8x196xf32>
    %857 = arith.mulf %855, %856 : vector<8x196xf32>
    %858 = vector.broadcast %33 : vector<8x1xf32> to vector<8x196xf32>
    %859 = arith.mulf %857, %858 : vector<8x196xf32>
    %860 = vector.broadcast %37 : vector<8x1xf32> to vector<8x196xf32>
    %861 = arith.addf %859, %860 : vector<8x196xf32>
    %cst_181 = arith.constant dense<0.000000e+00> : vector<8x196xf32>
    %862 = tpu.matmul %11, %853, %cst_181 {dimension_numbers = #tpu.dot_dimension_numbers<[1], [0], [0], [1], [0, 0, 1, 1], [], []>} : vector<8x8xf32>, vector<8x196xf32>, vector<8x196xf32> -> vector<8x196xf32>
    %cst_182 = arith.constant dense<0.000000e+00> : vector<8x196xf32>
    %863 = tpu.matmul %13, %861, %cst_182 {dimension_numbers = #tpu.dot_dimension_numbers<[1], [0], [0], [1], [0, 0, 1, 1], [], []>} : vector<8x8xf32>, vector<8x196xf32>, vector<8x196xf32> -> vector<8x196xf32>
    %864 = arith.addf %862, %863 : vector<8x196xf32>
    %865 = vector.broadcast %27 : vector<8x1xf32> to vector<8x196xf32>
    %866 = arith.addf %864, %865 : vector<8x196xf32>
    %867 = arith.addf %866, %522 : vector<8x196xf32>
    %cst_183 = arith.constant dense<0.000000e+00> : vector<24x196xf32>
    %868 = tpu.matmul %46, %522, %cst_183 {dimension_numbers = #tpu.dot_dimension_numbers<[1], [0], [0], [1], [0, 0, 1, 1], [], []>} : vector<24x8xf32>, vector<8x196xf32>, vector<24x196xf32> -> vector<24x196xf32>
    %869 = vector.broadcast %47 : vector<24x1xf32> to vector<24x196xf32>
    %870 = arith.addf %868, %869 : vector<24x196xf32>
    %871 = vector.extract_strided_slice %870 {offsets = [0, 0], sizes = [24, 7], strides = [1, 1]} : vector<24x196xf32> to vector<24x7xf32>
    %872 = vector.extract_strided_slice %870 {offsets = [0, 14], sizes = [24, 7], strides = [1, 1]} : vector<24x196xf32> to vector<24x7xf32>
    %873 = vector.extract_strided_slice %870 {offsets = [0, 28], sizes = [24, 7], strides = [1, 1]} : vector<24x196xf32> to vector<24x7xf32>
    %874 = vector.extract_strided_slice %870 {offsets = [0, 42], sizes = [24, 7], strides = [1, 1]} : vector<24x196xf32> to vector<24x7xf32>
    %875 = vector.extract_strided_slice %870 {offsets = [0, 56], sizes = [24, 7], strides = [1, 1]} : vector<24x196xf32> to vector<24x7xf32>
    %876 = vector.extract_strided_slice %870 {offsets = [0, 70], sizes = [24, 7], strides = [1, 1]} : vector<24x196xf32> to vector<24x7xf32>
    %877 = vector.extract_strided_slice %870 {offsets = [0, 84], sizes = [24, 7], strides = [1, 1]} : vector<24x196xf32> to vector<24x7xf32>
    %878 = tpu.concatenate %871, %872, %873, %874, %875, %876, %877 in 1 : vector<24x7xf32>, vector<24x7xf32>, vector<24x7xf32>, vector<24x7xf32>, vector<24x7xf32>, vector<24x7xf32>, vector<24x7xf32> -> vector<24x49xf32>
    %879 = vector.extract_strided_slice %878 {offsets = [0, 0], sizes = [8, 49], strides = [1, 1]} : vector<24x49xf32> to vector<8x49xf32>
    %880 = vector.extract_strided_slice %878 {offsets = [8, 0], sizes = [8, 49], strides = [1, 1]} : vector<24x49xf32> to vector<8x49xf32>
    %881 = vector.extract_strided_slice %878 {offsets = [16, 0], sizes = [8, 49], strides = [1, 1]} : vector<24x49xf32> to vector<8x49xf32>
    %882 = tpu.transpose %879, [1, 0] : vector<8x49xf32> -> vector<49x8xf32>
    %cst_184 = arith.constant dense<0.000000e+00> : vector<49x49xf32>
    %883 = tpu.matmul %882, %880, %cst_184 {dimension_numbers = #tpu.dot_dimension_numbers<[1], [0], [0], [1], [0, 0, 1, 1], [], []>} : vector<49x8xf32>, vector<8x49xf32>, vector<49x49xf32> -> vector<49x49xf32>
    %cst_185 = arith.constant dense<0xFF800000> : vector<49xf32>
    %884 = vector.multi_reduction <maximumf>, %883, %cst_185 [1] : vector<49x49xf32> to vector<49xf32>
    %885 = vector.shape_cast %884 : vector<49xf32> to vector<49x1xf32>
    %886 = vector.broadcast %885 : vector<49x1xf32> to vector<49x49xf32>
    %887 = arith.subf %883, %886 : vector<49x49xf32>
    %888 = math.exp %887 : vector<49x49xf32>
    %cst_186 = arith.constant dense<0.000000e+00> : vector<49xf32>
    %889 = vector.multi_reduction <add>, %888, %cst_186 [1] : vector<49x49xf32> to vector<49xf32>
    %890 = vector.shape_cast %889 : vector<49xf32> to vector<49x1xf32>
    %891 = vector.broadcast %890 : vector<49x1xf32> to vector<49x49xf32>
    %892 = arith.divf %888, %891 : vector<49x49xf32>
    %cst_187 = arith.constant dense<0.000000e+00> : vector<8x49xf32>
    %893 = tpu.matmul %881, %892, %cst_187 {dimension_numbers = #tpu.dot_dimension_numbers<[1], [1], [0], [0], [0, 0, 1, 0], [], []>} : vector<8x49xf32>, vector<49x49xf32>, vector<8x49xf32> -> vector<8x49xf32>
    %894 = vector.extract_strided_slice %870 {offsets = [0, 7], sizes = [24, 7], strides = [1, 1]} : vector<24x196xf32> to vector<24x7xf32>
    %895 = vector.extract_strided_slice %870 {offsets = [0, 21], sizes = [24, 7], strides = [1, 1]} : vector<24x196xf32> to vector<24x7xf32>
    %896 = vector.extract_strided_slice %870 {offsets = [0, 35], sizes = [24, 7], strides = [1, 1]} : vector<24x196xf32> to vector<24x7xf32>
    %897 = vector.extract_strided_slice %870 {offsets = [0, 49], sizes = [24, 7], strides = [1, 1]} : vector<24x196xf32> to vector<24x7xf32>
    %898 = vector.extract_strided_slice %870 {offsets = [0, 63], sizes = [24, 7], strides = [1, 1]} : vector<24x196xf32> to vector<24x7xf32>
    %899 = vector.extract_strided_slice %870 {offsets = [0, 77], sizes = [24, 7], strides = [1, 1]} : vector<24x196xf32> to vector<24x7xf32>
    %900 = vector.extract_strided_slice %870 {offsets = [0, 91], sizes = [24, 7], strides = [1, 1]} : vector<24x196xf32> to vector<24x7xf32>
    %901 = tpu.concatenate %894, %895, %896, %897, %898, %899, %900 in 1 : vector<24x7xf32>, vector<24x7xf32>, vector<24x7xf32>, vector<24x7xf32>, vector<24x7xf32>, vector<24x7xf32>, vector<24x7xf32> -> vector<24x49xf32>
    %902 = vector.extract_strided_slice %901 {offsets = [0, 0], sizes = [8, 49], strides = [1, 1]} : vector<24x49xf32> to vector<8x49xf32>
    %903 = vector.extract_strided_slice %901 {offsets = [8, 0], sizes = [8, 49], strides = [1, 1]} : vector<24x49xf32> to vector<8x49xf32>
    %904 = vector.extract_strided_slice %901 {offsets = [16, 0], sizes = [8, 49], strides = [1, 1]} : vector<24x49xf32> to vector<8x49xf32>
    %905 = tpu.transpose %902, [1, 0] : vector<8x49xf32> -> vector<49x8xf32>
    %cst_188 = arith.constant dense<0.000000e+00> : vector<49x49xf32>
    %906 = tpu.matmul %905, %903, %cst_188 {dimension_numbers = #tpu.dot_dimension_numbers<[1], [0], [0], [1], [0, 0, 1, 1], [], []>} : vector<49x8xf32>, vector<8x49xf32>, vector<49x49xf32> -> vector<49x49xf32>
    %cst_189 = arith.constant dense<0xFF800000> : vector<49xf32>
    %907 = vector.multi_reduction <maximumf>, %906, %cst_189 [1] : vector<49x49xf32> to vector<49xf32>
    %908 = vector.shape_cast %907 : vector<49xf32> to vector<49x1xf32>
    %909 = vector.broadcast %908 : vector<49x1xf32> to vector<49x49xf32>
    %910 = arith.subf %906, %909 : vector<49x49xf32>
    %911 = math.exp %910 : vector<49x49xf32>
    %cst_190 = arith.constant dense<0.000000e+00> : vector<49xf32>
    %912 = vector.multi_reduction <add>, %911, %cst_190 [1] : vector<49x49xf32> to vector<49xf32>
    %913 = vector.shape_cast %912 : vector<49xf32> to vector<49x1xf32>
    %914 = vector.broadcast %913 : vector<49x1xf32> to vector<49x49xf32>
    %915 = arith.divf %911, %914 : vector<49x49xf32>
    %cst_191 = arith.constant dense<0.000000e+00> : vector<8x49xf32>
    %916 = tpu.matmul %904, %915, %cst_191 {dimension_numbers = #tpu.dot_dimension_numbers<[1], [1], [0], [0], [0, 0, 1, 0], [], []>} : vector<8x49xf32>, vector<49x49xf32>, vector<8x49xf32> -> vector<8x49xf32>
    %917 = vector.extract_strided_slice %870 {offsets = [0, 98], sizes = [24, 7], strides = [1, 1]} : vector<24x196xf32> to vector<24x7xf32>
    %918 = vector.extract_strided_slice %870 {offsets = [0, 112], sizes = [24, 7], strides = [1, 1]} : vector<24x196xf32> to vector<24x7xf32>
    %919 = vector.extract_strided_slice %870 {offsets = [0, 126], sizes = [24, 7], strides = [1, 1]} : vector<24x196xf32> to vector<24x7xf32>
    %920 = vector.extract_strided_slice %870 {offsets = [0, 140], sizes = [24, 7], strides = [1, 1]} : vector<24x196xf32> to vector<24x7xf32>
    %921 = vector.extract_strided_slice %870 {offsets = [0, 154], sizes = [24, 7], strides = [1, 1]} : vector<24x196xf32> to vector<24x7xf32>
    %922 = vector.extract_strided_slice %870 {offsets = [0, 168], sizes = [24, 7], strides = [1, 1]} : vector<24x196xf32> to vector<24x7xf32>
    %923 = vector.extract_strided_slice %870 {offsets = [0, 182], sizes = [24, 7], strides = [1, 1]} : vector<24x196xf32> to vector<24x7xf32>
    %924 = tpu.concatenate %917, %918, %919, %920, %921, %922, %923 in 1 : vector<24x7xf32>, vector<24x7xf32>, vector<24x7xf32>, vector<24x7xf32>, vector<24x7xf32>, vector<24x7xf32>, vector<24x7xf32> -> vector<24x49xf32>
    %925 = vector.extract_strided_slice %924 {offsets = [0, 0], sizes = [8, 49], strides = [1, 1]} : vector<24x49xf32> to vector<8x49xf32>
    %926 = vector.extract_strided_slice %924 {offsets = [8, 0], sizes = [8, 49], strides = [1, 1]} : vector<24x49xf32> to vector<8x49xf32>
    %927 = vector.extract_strided_slice %924 {offsets = [16, 0], sizes = [8, 49], strides = [1, 1]} : vector<24x49xf32> to vector<8x49xf32>
    %928 = tpu.transpose %925, [1, 0] : vector<8x49xf32> -> vector<49x8xf32>
    %cst_192 = arith.constant dense<0.000000e+00> : vector<49x49xf32>
    %929 = tpu.matmul %928, %926, %cst_192 {dimension_numbers = #tpu.dot_dimension_numbers<[1], [0], [0], [1], [0, 0, 1, 1], [], []>} : vector<49x8xf32>, vector<8x49xf32>, vector<49x49xf32> -> vector<49x49xf32>
    %cst_193 = arith.constant dense<0xFF800000> : vector<49xf32>
    %930 = vector.multi_reduction <maximumf>, %929, %cst_193 [1] : vector<49x49xf32> to vector<49xf32>
    %931 = vector.shape_cast %930 : vector<49xf32> to vector<49x1xf32>
    %932 = vector.broadcast %931 : vector<49x1xf32> to vector<49x49xf32>
    %933 = arith.subf %929, %932 : vector<49x49xf32>
    %934 = math.exp %933 : vector<49x49xf32>
    %cst_194 = arith.constant dense<0.000000e+00> : vector<49xf32>
    %935 = vector.multi_reduction <add>, %934, %cst_194 [1] : vector<49x49xf32> to vector<49xf32>
    %936 = vector.shape_cast %935 : vector<49xf32> to vector<49x1xf32>
    %937 = vector.broadcast %936 : vector<49x1xf32> to vector<49x49xf32>
    %938 = arith.divf %934, %937 : vector<49x49xf32>
    %cst_195 = arith.constant dense<0.000000e+00> : vector<8x49xf32>
    %939 = tpu.matmul %927, %938, %cst_195 {dimension_numbers = #tpu.dot_dimension_numbers<[1], [1], [0], [0], [0, 0, 1, 0], [], []>} : vector<8x49xf32>, vector<49x49xf32>, vector<8x49xf32> -> vector<8x49xf32>
    %940 = vector.extract_strided_slice %870 {offsets = [0, 105], sizes = [24, 7], strides = [1, 1]} : vector<24x196xf32> to vector<24x7xf32>
    %941 = vector.extract_strided_slice %870 {offsets = [0, 119], sizes = [24, 7], strides = [1, 1]} : vector<24x196xf32> to vector<24x7xf32>
    %942 = vector.extract_strided_slice %870 {offsets = [0, 133], sizes = [24, 7], strides = [1, 1]} : vector<24x196xf32> to vector<24x7xf32>
    %943 = vector.extract_strided_slice %870 {offsets = [0, 147], sizes = [24, 7], strides = [1, 1]} : vector<24x196xf32> to vector<24x7xf32>
    %944 = vector.extract_strided_slice %870 {offsets = [0, 161], sizes = [24, 7], strides = [1, 1]} : vector<24x196xf32> to vector<24x7xf32>
    %945 = vector.extract_strided_slice %870 {offsets = [0, 175], sizes = [24, 7], strides = [1, 1]} : vector<24x196xf32> to vector<24x7xf32>
    %946 = vector.extract_strided_slice %870 {offsets = [0, 189], sizes = [24, 7], strides = [1, 1]} : vector<24x196xf32> to vector<24x7xf32>
    %947 = tpu.concatenate %940, %941, %942, %943, %944, %945, %946 in 1 : vector<24x7xf32>, vector<24x7xf32>, vector<24x7xf32>, vector<24x7xf32>, vector<24x7xf32>, vector<24x7xf32>, vector<24x7xf32> -> vector<24x49xf32>
    %948 = vector.extract_strided_slice %947 {offsets = [0, 0], sizes = [8, 49], strides = [1, 1]} : vector<24x49xf32> to vector<8x49xf32>
    %949 = vector.extract_strided_slice %947 {offsets = [8, 0], sizes = [8, 49], strides = [1, 1]} : vector<24x49xf32> to vector<8x49xf32>
    %950 = vector.extract_strided_slice %947 {offsets = [16, 0], sizes = [8, 49], strides = [1, 1]} : vector<24x49xf32> to vector<8x49xf32>
    %951 = tpu.transpose %948, [1, 0] : vector<8x49xf32> -> vector<49x8xf32>
    %cst_196 = arith.constant dense<0.000000e+00> : vector<49x49xf32>
    %952 = tpu.matmul %951, %949, %cst_196 {dimension_numbers = #tpu.dot_dimension_numbers<[1], [0], [0], [1], [0, 0, 1, 1], [], []>} : vector<49x8xf32>, vector<8x49xf32>, vector<49x49xf32> -> vector<49x49xf32>
    %cst_197 = arith.constant dense<0xFF800000> : vector<49xf32>
    %953 = vector.multi_reduction <maximumf>, %952, %cst_197 [1] : vector<49x49xf32> to vector<49xf32>
    %954 = vector.shape_cast %953 : vector<49xf32> to vector<49x1xf32>
    %955 = vector.broadcast %954 : vector<49x1xf32> to vector<49x49xf32>
    %956 = arith.subf %952, %955 : vector<49x49xf32>
    %957 = math.exp %956 : vector<49x49xf32>
    %cst_198 = arith.constant dense<0.000000e+00> : vector<49xf32>
    %958 = vector.multi_reduction <add>, %957, %cst_198 [1] : vector<49x49xf32> to vector<49xf32>
    %959 = vector.shape_cast %958 : vector<49xf32> to vector<49x1xf32>
    %960 = vector.broadcast %959 : vector<49x1xf32> to vector<49x49xf32>
    %961 = arith.divf %957, %960 : vector<49x49xf32>
    %cst_199 = arith.constant dense<0.000000e+00> : vector<8x49xf32>
    %962 = tpu.matmul %950, %961, %cst_199 {dimension_numbers = #tpu.dot_dimension_numbers<[1], [1], [0], [0], [0, 0, 1, 0], [], []>} : vector<8x49xf32>, vector<49x49xf32>, vector<8x49xf32> -> vector<8x49xf32>
    %963 = vector.extract_strided_slice %893 {offsets = [0, 0], sizes = [8, 7], strides = [1, 1]} : vector<8x49xf32> to vector<8x7xf32>
    %964 = vector.extract_strided_slice %916 {offsets = [0, 0], sizes = [8, 7], strides = [1, 1]} : vector<8x49xf32> to vector<8x7xf32>
    %965 = vector.extract_strided_slice %893 {offsets = [0, 7], sizes = [8, 7], strides = [1, 1]} : vector<8x49xf32> to vector<8x7xf32>
    %966 = vector.extract_strided_slice %916 {offsets = [0, 7], sizes = [8, 7], strides = [1, 1]} : vector<8x49xf32> to vector<8x7xf32>
    %967 = vector.extract_strided_slice %893 {offsets = [0, 14], sizes = [8, 7], strides = [1, 1]} : vector<8x49xf32> to vector<8x7xf32>
    %968 = vector.extract_strided_slice %916 {offsets = [0, 14], sizes = [8, 7], strides = [1, 1]} : vector<8x49xf32> to vector<8x7xf32>
    %969 = vector.extract_strided_slice %893 {offsets = [0, 21], sizes = [8, 7], strides = [1, 1]} : vector<8x49xf32> to vector<8x7xf32>
    %970 = vector.extract_strided_slice %916 {offsets = [0, 21], sizes = [8, 7], strides = [1, 1]} : vector<8x49xf32> to vector<8x7xf32>
    %971 = vector.extract_strided_slice %893 {offsets = [0, 28], sizes = [8, 7], strides = [1, 1]} : vector<8x49xf32> to vector<8x7xf32>
    %972 = vector.extract_strided_slice %916 {offsets = [0, 28], sizes = [8, 7], strides = [1, 1]} : vector<8x49xf32> to vector<8x7xf32>
    %973 = vector.extract_strided_slice %893 {offsets = [0, 35], sizes = [8, 7], strides = [1, 1]} : vector<8x49xf32> to vector<8x7xf32>
    %974 = vector.extract_strided_slice %916 {offsets = [0, 35], sizes = [8, 7], strides = [1, 1]} : vector<8x49xf32> to vector<8x7xf32>
    %975 = vector.extract_strided_slice %893 {offsets = [0, 42], sizes = [8, 7], strides = [1, 1]} : vector<8x49xf32> to vector<8x7xf32>
    %976 = vector.extract_strided_slice %916 {offsets = [0, 42], sizes = [8, 7], strides = [1, 1]} : vector<8x49xf32> to vector<8x7xf32>
    %977 = vector.extract_strided_slice %939 {offsets = [0, 0], sizes = [8, 7], strides = [1, 1]} : vector<8x49xf32> to vector<8x7xf32>
    %978 = vector.extract_strided_slice %962 {offsets = [0, 0], sizes = [8, 7], strides = [1, 1]} : vector<8x49xf32> to vector<8x7xf32>
    %979 = vector.extract_strided_slice %939 {offsets = [0, 7], sizes = [8, 7], strides = [1, 1]} : vector<8x49xf32> to vector<8x7xf32>
    %980 = vector.extract_strided_slice %962 {offsets = [0, 7], sizes = [8, 7], strides = [1, 1]} : vector<8x49xf32> to vector<8x7xf32>
    %981 = vector.extract_strided_slice %939 {offsets = [0, 14], sizes = [8, 7], strides = [1, 1]} : vector<8x49xf32> to vector<8x7xf32>
    %982 = vector.extract_strided_slice %962 {offsets = [0, 14], sizes = [8, 7], strides = [1, 1]} : vector<8x49xf32> to vector<8x7xf32>
    %983 = vector.extract_strided_slice %939 {offsets = [0, 21], sizes = [8, 7], strides = [1, 1]} : vector<8x49xf32> to vector<8x7xf32>
    %984 = vector.extract_strided_slice %962 {offsets = [0, 21], sizes = [8, 7], strides = [1, 1]} : vector<8x49xf32> to vector<8x7xf32>
    %985 = vector.extract_strided_slice %939 {offsets = [0, 28], sizes = [8, 7], strides = [1, 1]} : vector<8x49xf32> to vector<8x7xf32>
    %986 = vector.extract_strided_slice %962 {offsets = [0, 28], sizes = [8, 7], strides = [1, 1]} : vector<8x49xf32> to vector<8x7xf32>
    %987 = vector.extract_strided_slice %939 {offsets = [0, 35], sizes = [8, 7], strides = [1, 1]} : vector<8x49xf32> to vector<8x7xf32>
    %988 = vector.extract_strided_slice %962 {offsets = [0, 35], sizes = [8, 7], strides = [1, 1]} : vector<8x49xf32> to vector<8x7xf32>
    %989 = vector.extract_strided_slice %939 {offsets = [0, 42], sizes = [8, 7], strides = [1, 1]} : vector<8x49xf32> to vector<8x7xf32>
    %990 = vector.extract_strided_slice %962 {offsets = [0, 42], sizes = [8, 7], strides = [1, 1]} : vector<8x49xf32> to vector<8x7xf32>
    %991 = tpu.concatenate %963, %964, %965, %966, %967, %968, %969, %970, %971, %972, %973, %974, %975, %976, %977, %978 in 1 : vector<8x7xf32>, vector<8x7xf32>, vector<8x7xf32>, vector<8x7xf32>, vector<8x7xf32>, vector<8x7xf32>, vector<8x7xf32>, vector<8x7xf32>, vector<8x7xf32>, vector<8x7xf32>, vector<8x7xf32>, vector<8x7xf32>, vector<8x7xf32>, vector<8x7xf32>, vector<8x7xf32>, vector<8x7xf32> -> vector<8x112xf32>
    %992 = tpu.concatenate %979, %980, %981, %982, %983, %984, %985, %986, %987, %988, %989, %990 in 1 : vector<8x7xf32>, vector<8x7xf32>, vector<8x7xf32>, vector<8x7xf32>, vector<8x7xf32>, vector<8x7xf32>, vector<8x7xf32>, vector<8x7xf32>, vector<8x7xf32>, vector<8x7xf32>, vector<8x7xf32>, vector<8x7xf32> -> vector<8x84xf32>
    %993 = tpu.concatenate %991, %992 in 1 : vector<8x112xf32>, vector<8x84xf32> -> vector<8x196xf32>
    %cst_200 = arith.constant dense<0.000000e+00> : vector<8xf32>
    %994 = vector.multi_reduction <add>, %520, %cst_200 [1] : vector<8x196xf32> to vector<8xf32>
    %995 = vector.shape_cast %994 : vector<8xf32> to vector<8x1xf32>
    %cst_201 = arith.constant 0.000000e+00 : f32
    %996 = vector.broadcast %cst_201 : f32 to vector<8x1xf32>
    %997 = arith.addf %996, %995 : vector<8x1xf32>
    %cst_202 = arith.constant dense<0.000000e+00> : vector<8xf32>
    %998 = vector.multi_reduction <add>, %993, %cst_202 [1] : vector<8x196xf32> to vector<8xf32>
    %999 = vector.shape_cast %998 : vector<8xf32> to vector<8x1xf32>
    %1000 = arith.addf %997, %999 : vector<8x1xf32>
    %cst_203 = arith.constant 0.00255102036 : f32
    %1001 = vector.broadcast %cst_203 : f32 to vector<8x1xf32>
    %1002 = arith.mulf %1000, %1001 : vector<8x1xf32>
    %1003 = vector.broadcast %1002 : vector<8x1xf32> to vector<8x196xf32>
    %1004 = arith.subf %520, %1003 : vector<8x196xf32>
    %1005 = arith.mulf %1004, %1004 : vector<8x196xf32>
    %cst_204 = arith.constant dense<0.000000e+00> : vector<8xf32>
    %1006 = vector.multi_reduction <add>, %1005, %cst_204 [1] : vector<8x196xf32> to vector<8xf32>
    %1007 = vector.shape_cast %1006 : vector<8xf32> to vector<8x1xf32>
    %cst_205 = arith.constant 0.000000e+00 : f32
    %1008 = vector.broadcast %cst_205 : f32 to vector<8x1xf32>
    %1009 = arith.addf %1008, %1007 : vector<8x1xf32>
    %1010 = vector.broadcast %1002 : vector<8x1xf32> to vector<8x196xf32>
    %1011 = arith.subf %993, %1010 : vector<8x196xf32>
    %1012 = arith.mulf %1011, %1011 : vector<8x196xf32>
    %cst_206 = arith.constant dense<0.000000e+00> : vector<8xf32>
    %1013 = vector.multi_reduction <add>, %1012, %cst_206 [1] : vector<8x196xf32> to vector<8xf32>
    %1014 = vector.shape_cast %1013 : vector<8xf32> to vector<8x1xf32>
    %1015 = arith.addf %1009, %1014 : vector<8x1xf32>
    %cst_207 = arith.constant 0.00255102036 : f32
    %1016 = vector.broadcast %cst_207 : f32 to vector<8x1xf32>
    %1017 = arith.mulf %1015, %1016 : vector<8x1xf32>
    %cst_208 = arith.constant 9.99999974E-6 : f32
    %1018 = vector.broadcast %cst_208 : f32 to vector<8x1xf32>
    %1019 = arith.addf %1017, %1018 : vector<8x1xf32>
    %1020 = math.rsqrt %1019 : vector<8x1xf32>
    %1021 = vector.broadcast %1002 : vector<8x1xf32> to vector<8x196xf32>
    %1022 = arith.subf %520, %1021 : vector<8x196xf32>
    %1023 = vector.broadcast %1020 : vector<8x1xf32> to vector<8x196xf32>
    %1024 = arith.mulf %1022, %1023 : vector<8x196xf32>
    %1025 = vector.broadcast %39 : vector<8x1xf32> to vector<8x196xf32>
    %1026 = arith.mulf %1024, %1025 : vector<8x196xf32>
    %1027 = vector.broadcast %41 : vector<8x1xf32> to vector<8x196xf32>
    %1028 = arith.addf %1026, %1027 : vector<8x196xf32>
    %cst_209 = arith.constant 0.000000e+00 : f32
    %1029 = vector.broadcast %cst_209 : f32 to vector<8x196xf32>
    %1030 = arith.maximumf %1028, %1029 : vector<8x196xf32>
    %1031 = vector.broadcast %1002 : vector<8x1xf32> to vector<8x196xf32>
    %1032 = arith.subf %993, %1031 : vector<8x196xf32>
    %1033 = vector.broadcast %1020 : vector<8x1xf32> to vector<8x196xf32>
    %1034 = arith.mulf %1032, %1033 : vector<8x196xf32>
    %1035 = vector.broadcast %39 : vector<8x1xf32> to vector<8x196xf32>
    %1036 = arith.mulf %1034, %1035 : vector<8x196xf32>
    %1037 = vector.broadcast %41 : vector<8x1xf32> to vector<8x196xf32>
    %1038 = arith.addf %1036, %1037 : vector<8x196xf32>
    %cst_210 = arith.constant 0.000000e+00 : f32
    %1039 = vector.broadcast %cst_210 : f32 to vector<8x196xf32>
    %1040 = arith.maximumf %1038, %1039 : vector<8x196xf32>
    %cst_211 = arith.constant dense<0.000000e+00> : vector<8xf32>
    %1041 = vector.multi_reduction <add>, %1030, %cst_211 [1] : vector<8x196xf32> to vector<8xf32>
    %1042 = vector.shape_cast %1041 : vector<8xf32> to vector<8x1xf32>
    %cst_212 = arith.constant 0.000000e+00 : f32
    %1043 = vector.broadcast %cst_212 : f32 to vector<8x1xf32>
    %1044 = arith.addf %1043, %1042 : vector<8x1xf32>
    %cst_213 = arith.constant dense<0.000000e+00> : vector<8xf32>
    %1045 = vector.multi_reduction <add>, %1040, %cst_213 [1] : vector<8x196xf32> to vector<8xf32>
    %1046 = vector.shape_cast %1045 : vector<8xf32> to vector<8x1xf32>
    %1047 = arith.addf %1044, %1046 : vector<8x1xf32>
    %cst_214 = arith.constant 0.00255102036 : f32
    %1048 = vector.broadcast %cst_214 : f32 to vector<8x1xf32>
    %1049 = arith.mulf %1047, %1048 : vector<8x1xf32>
    %1050 = vector.broadcast %1049 : vector<8x1xf32> to vector<8x196xf32>
    %1051 = arith.subf %1030, %1050 : vector<8x196xf32>
    %1052 = arith.mulf %1051, %1051 : vector<8x196xf32>
    %cst_215 = arith.constant dense<0.000000e+00> : vector<8xf32>
    %1053 = vector.multi_reduction <add>, %1052, %cst_215 [1] : vector<8x196xf32> to vector<8xf32>
    %1054 = vector.shape_cast %1053 : vector<8xf32> to vector<8x1xf32>
    %cst_216 = arith.constant 0.000000e+00 : f32
    %1055 = vector.broadcast %cst_216 : f32 to vector<8x1xf32>
    %1056 = arith.addf %1055, %1054 : vector<8x1xf32>
    %1057 = vector.broadcast %1049 : vector<8x1xf32> to vector<8x196xf32>
    %1058 = arith.subf %1040, %1057 : vector<8x196xf32>
    %1059 = arith.mulf %1058, %1058 : vector<8x196xf32>
    %cst_217 = arith.constant dense<0.000000e+00> : vector<8xf32>
    %1060 = vector.multi_reduction <add>, %1059, %cst_217 [1] : vector<8x196xf32> to vector<8xf32>
    %1061 = vector.shape_cast %1060 : vector<8xf32> to vector<8x1xf32>
    %1062 = arith.addf %1056, %1061 : vector<8x1xf32>
    %cst_218 = arith.constant 0.00255102036 : f32
    %1063 = vector.broadcast %cst_218 : f32 to vector<8x1xf32>
    %1064 = arith.mulf %1062, %1063 : vector<8x1xf32>
    %cst_219 = arith.constant 9.99999974E-6 : f32
    %1065 = vector.broadcast %cst_219 : f32 to vector<8x1xf32>
    %1066 = arith.addf %1064, %1065 : vector<8x1xf32>
    %1067 = math.rsqrt %1066 : vector<8x1xf32>
    %1068 = vector.broadcast %1049 : vector<8x1xf32> to vector<8x196xf32>
    %1069 = arith.subf %1030, %1068 : vector<8x196xf32>
    %1070 = vector.broadcast %1067 : vector<8x1xf32> to vector<8x196xf32>
    %1071 = arith.mulf %1069, %1070 : vector<8x196xf32>
    %1072 = vector.broadcast %43 : vector<8x1xf32> to vector<8x196xf32>
    %1073 = arith.mulf %1071, %1072 : vector<8x196xf32>
    %1074 = vector.broadcast %45 : vector<8x1xf32> to vector<8x196xf32>
    %1075 = arith.addf %1073, %1074 : vector<8x196xf32>
    %cst_220 = arith.constant dense<0.000000e+00> : vector<8x196xf32>
    %1076 = tpu.matmul %15, %394, %cst_220 {dimension_numbers = #tpu.dot_dimension_numbers<[1], [0], [0], [1], [0, 0, 1, 1], [], []>} : vector<8x8xf32>, vector<8x196xf32>, vector<8x196xf32> -> vector<8x196xf32>
    %cst_221 = arith.constant dense<0.000000e+00> : vector<8x196xf32>
    %1077 = tpu.matmul %17, %1075, %cst_221 {dimension_numbers = #tpu.dot_dimension_numbers<[1], [0], [0], [1], [0, 0, 1, 1], [], []>} : vector<8x8xf32>, vector<8x196xf32>, vector<8x196xf32> -> vector<8x196xf32>
    %1078 = arith.addf %1076, %1077 : vector<8x196xf32>
    %1079 = vector.broadcast %29 : vector<8x1xf32> to vector<8x196xf32>
    %1080 = arith.addf %1078, %1079 : vector<8x196xf32>
    %c0_222 = arith.constant 0 : index
    %c0_223 = arith.constant 0 : index
    %c0_224 = arith.constant 0 : index
    %1081 = vector.load %arg5[%c0_222, %c0_223, %c0_224] : memref<2x8x196xf32, #tpu.memory_space<vmem>>, vector<1x8x196xf32>
    %1082 = vector.shape_cast %1081 : vector<1x8x196xf32> to vector<8x196xf32>
    %1083 = vector.shape_cast %1080 : vector<8x196xf32> to vector<1x8x196xf32>
    tpu.vector_store %arg5[%c0_222, %c0_223, %c0_224], %1083 {strides = array<i32>} : memref<2x8x196xf32, #tpu.memory_space<vmem>>, vector<1x8x196xf32>,
    %1084 = vector.broadcast %1049 : vector<8x1xf32> to vector<8x196xf32>
    %1085 = arith.subf %1040, %1084 : vector<8x196xf32>
    %1086 = vector.broadcast %1067 : vector<8x1xf32> to vector<8x196xf32>
    %1087 = arith.mulf %1085, %1086 : vector<8x196xf32>
    %1088 = vector.broadcast %43 : vector<8x1xf32> to vector<8x196xf32>
    %1089 = arith.mulf %1087, %1088 : vector<8x196xf32>
    %1090 = vector.broadcast %45 : vector<8x1xf32> to vector<8x196xf32>
    %1091 = arith.addf %1089, %1090 : vector<8x196xf32>
    %cst_225 = arith.constant dense<0.000000e+00> : vector<8x196xf32>
    %1092 = tpu.matmul %15, %867, %cst_225 {dimension_numbers = #tpu.dot_dimension_numbers<[1], [0], [0], [1], [0, 0, 1, 1], [], []>} : vector<8x8xf32>, vector<8x196xf32>, vector<8x196xf32> -> vector<8x196xf32>
    %cst_226 = arith.constant dense<0.000000e+00> : vector<8x196xf32>
    %1093 = tpu.matmul %17, %1091, %cst_226 {dimension_numbers = #tpu.dot_dimension_numbers<[1], [0], [0], [1], [0, 0, 1, 1], [], []>} : vector<8x8xf32>, vector<8x196xf32>, vector<8x196xf32> -> vector<8x196xf32>
    %1094 = arith.addf %1092, %1093 : vector<8x196xf32>
    %1095 = vector.broadcast %29 : vector<8x1xf32> to vector<8x196xf32>
    %1096 = arith.addf %1094, %1095 : vector<8x196xf32>
    %c1_227 = arith.constant 1 : index
    %c0_228 = arith.constant 0 : index
    %c0_229 = arith.constant 0 : index
    %1097 = vector.load %arg5[%c1_227, %c0_228, %c0_229] : memref<2x8x196xf32, #tpu.memory_space<vmem>>, vector<1x8x196xf32>
    %1098 = vector.shape_cast %1097 : vector<1x8x196xf32> to vector<8x196xf32>
    %1099 = vector.shape_cast %1096 : vector<8x196xf32> to vector<1x8x196xf32>
    tpu.vector_store %arg5[%c1_227, %c0_228, %c0_229], %1099 {strides = array<i32>} : memref<2x8x196xf32, #tpu.memory_space<vmem>>, vector<1x8x196xf32>,
    return
  }
}

</mosaic_0001>

<llo_original>
// kernel: _lambda_.1
$region0: #{_lambda_.1}
  #allocation0 [shape = 'u32[]', space=smem, size = 0x4, offset = 0x4, fixed_abs, tag = 'smem constant byte address 0x4 - core index']
  #allocation1 [shape = 'u32[144,128]{1,0:T(1,128)}', space=vmem, size = 0x12000, scoped, tag = 'internal scratch']
  %s0 = inlined_call_operand.hbm [shape: f32[2,8,196], index: 0, kind: input, shape index: {}]
  %s1 = inlined_call_operand.hbm [shape: f32[8,8,8], index: 1, kind: input, shape index: {}]
  %s2 = inlined_call_operand.vmem [shape: f32[24,8], index: 2, kind: input, shape index: {}]
  %s3 = inlined_call_operand.vmem [shape: f32[24,1], index: 3, kind: input, shape index: {}]
  %s4 = inlined_call_operand.hbm [shape: f32[14,8,1], index: 4, kind: input, shape index: {}]
  %s5 = inlined_call_operand.hbm [shape: f32[2,8,196], index: 5, kind: output, shape index: {}]
  %s6 = sld [smem:[#allocation0]]
  $region42: #{_lambda_.1} parent=0
    _
  %s8 = ssub.s32 1, %s6
  %s9 = scalar_select 0, %s8, %s6
  $region1: #{_lambda_.1} parent=0
    #allocation2 [shape = 'u8[16384]{0}', space=vmem, size = 0x4000, scoped, tag = 'input window, operand 0, single buffered']
    #allocation3 [shape = 's32[1]{0}', space=sflag, size = 0x4, scoped, tag = 'scoped memory for _lambda_.1']
    #allocation4 [shape = 's32[1]{0}', space=sflag, size = 0x4, scoped, tag = 'scoped memory for _lambda_.1']
    #allocation5 [shape = 'u8[32768]{0}', space=vmem, size = 0x8000, scoped, tag = 'input window, operand 1, single buffered']
    #allocation6 [shape = 's32[1]{0}', space=sflag, size = 0x4, scoped, tag = 'scoped memory for _lambda_.1']
    #allocation7 [shape = 'u8[57344]{0}', space=vmem, size = 0xe000, scoped, tag = 'input window, operand 4, single buffered']
    #allocation8 [shape = 'u8[16384]{0}', space=vmem, size = 0x4000, scoped, tag = 'output window, operand 0, single buffered']
    %10 = vsyncpa [#allocation3], 0
    %11 = vsyncpa [#allocation6], 0
    %12 = vsyncpa [#allocation4], 0
    // Predicated region
    $region2: #{_lambda_.1} parent=1 // pred_check
      _
    $region3: #{_lambda_.1} parent=1 // pred_check_branch
      %14 = sbr.rel (0) target = $region5
    $region4: #{_lambda_.1} parent=1 // pred_region
      %s16 = ssub.s32 512, 512
      %17 = vsyncadd [#allocation3], %s16
      %s18 = sshll.u32 [#allocation2], 4
      %s19 = int_to_ptr.vmem [resolvable:$true] %s18
      %24 = dma.hbm_to_vmem [thread:$0]  %s0, 512, %s19, [#allocation3], 256, 256, 16
    $region5: #{_lambda_.1} parent=1 // pred_fallthru
      _
    // Predicated region
    $region6: #{_lambda_.1} parent=1 // pred_check
      _
    $region7: #{_lambda_.1} parent=1 // pred_check_branch
      %26 = sbr.rel (0) target = $region9
    $region8: #{_lambda_.1} parent=1 // pred_region
      %s28 = ssub.s32 1024, 1024
      %29 = vsyncadd [#allocation6], %s28
      %s30 = sshll.u32 [#allocation5], 4
      %s31 = int_to_ptr.vmem [resolvable:$true] %s30
      %36 = dma.hbm_to_vmem [thread:$0]  %s1, 1024, %s31, [#allocation6], 128, 128, 8
    $region9: #{_lambda_.1} parent=1 // pred_fallthru
      _
    // Predicated region
    $region10: #{_lambda_.1} parent=1 // pred_check
      _
    $region11: #{_lambda_.1} parent=1 // pred_check_branch
      %38 = sbr.rel (0) target = $region13
    $region12: #{_lambda_.1} parent=1 // pred_region
      _
    $region13: #{_lambda_.1} parent=1 // pred_fallthru
      _
    // Predicated region
    $region14: #{_lambda_.1} parent=1 // pred_check
      _
    $region15: #{_lambda_.1} parent=1 // pred_check_branch
      %40 = sbr.rel (0) target = $region17
    $region16: #{_lambda_.1} parent=1 // pred_region
      _
    $region17: #{_lambda_.1} parent=1 // pred_fallthru
      _
    // Predicated region
    $region18: #{_lambda_.1} parent=1 // pred_check
      _
    $region19: #{_lambda_.1} parent=1 // pred_check_branch
      %42 = sbr.rel (0) target = $region21
    $region20: #{_lambda_.1} parent=1 // pred_region
      %s44 = ssub.s32 1792, 1792
      %45 = vsyncadd [#allocation6], %s44
      %s46 = sshll.u32 [#allocation7], 4
      %s47 = int_to_ptr.vmem [resolvable:$true] %s46
      %52 = dma.hbm_to_vmem [thread:$0]  %s4, 1792, %s47, [#allocation6], 128, 128, 8
    $region21: #{_lambda_.1} parent=1 // pred_fallthru
      _
    // Predicated region
    $region22: #{_lambda_.1} parent=1 // pred_check
      _
    $region23: #{_lambda_.1} parent=1 // pred_check_branch
      %54 = sbr.rel (0) target = $region25
    $region24: #{_lambda_.1} parent=1 // pred_region
      %55 = dma.done [#allocation3], 512
    $region25: #{_lambda_.1} parent=1 // pred_fallthru
      _
    // Predicated region
    $region26: #{_lambda_.1} parent=1 // pred_check
      _
    $region27: #{_lambda_.1} parent=1 // pred_check_branch
      %57 = sbr.rel (0) target = $region29
    $region28: #{_lambda_.1} parent=1 // pred_region
      %58 = dma.done [#allocation6], 1024
    $region29: #{_lambda_.1} parent=1 // pred_fallthru
      _
    // Predicated region
    $region30: #{_lambda_.1} parent=1 // pred_check
      _
    $region31: #{_lambda_.1} parent=1 // pred_check_branch
      %60 = sbr.rel (0) target = $region33
    $region32: #{_lambda_.1} parent=1 // pred_region
      %61 = dma.done [#allocation6], 1792
    $region33: #{_lambda_.1} parent=1 // pred_fallthru
      _
    %v62 = vlaneseq
    %v63 = vand.u32 %v62, 127
    %64 = vrot.lane.b32.xlu0 %v63, 14
    %v65 = vpop.permute.xlu0 %64
    %66 = vrot.lane.b32.xlu0 %v63, 28
    %v67 = vpop.permute.xlu0 %66
    %68 = vrot.lane.b32.xlu0 %v63, 42
    %v69 = vpop.permute.xlu0 %68
    %70 = vrot.lane.b32.xlu0 %v63, 56
    %v71 = vpop.permute.xlu0 %70
    %72 = vrot.lane.b32.xlu0 %v63, 70
    %v73 = vpop.permute.xlu0 %72
    %74 = vrot.lane.b32.xlu0 %v63, 84
    %v75 = vpop.permute.xlu0 %74
    %76 = vrot.lane.b32.xlu0 %v63, 98
    %v77 = vpop.permute.xlu0 %76
    %78 = vrot.lane.b32.xlu0 %v63, 112
    %v79 = vpop.permute.xlu0 %78
    %80 = vrot.lane.b32.xlu0 %v63, 126
    %v81 = vpop.permute.xlu0 %80
    %82 = vrot.lane.b32.xlu0 %v63, 12
    %v83 = vpop.permute.xlu0 %82
    %84 = vrot.lane.b32.xlu0 %v63, 26
    %v85 = vpop.permute.xlu0 %84
    %86 = vrot.lane.b32.xlu0 %v63, 40
    %v87 = vpop.permute.xlu0 %86
    %88 = vrot.lane.b32.xlu0 %v63, 54
    %v89 = vpop.permute.xlu0 %88
    %vm90 = vcmask 113664
    %v91 = vsel %vm90, %v63, %v65
    %vm92 = vcmask 228352
    %v93 = vsel %vm92, %v91, %v67
    %vm94 = vcmask 343040
    %v95 = vsel %vm94, %v93, %v69
    %vm96 = vcmask 457728
    %v97 = vsel %vm96, %v95, %v71
    %vm98 = vcmask 572416
    %v99 = vsel %vm98, %v97, %v73
    %vm100 = vcmask 687104
    %v101 = vsel %vm100, %v99, %v75
    %vm102 = vcmask 801792
    %v103 = vsel %vm102, %v101, %v77
    %vm104 = vcmask 916480
    %v105 = vsel %vm104, %v103, %v79
    %vm106 = vcmask 1031168
    %v107 = vsel %vm106, %v105, %v81
    %vm108 = vcmask 97280
    %v109 = vsel %vm108, %v81, %v83
    %vm110 = vcmask 211968
    %v111 = vsel %vm110, %v109, %v85
    %vm112 = vcmask 326656
    %v113 = vsel %vm112, %v111, %v87
    %vm114 = vcmask 441344
    %v115 = vsel %vm114, %v113, %v89
    %v116 = vld [vmem:[#allocation5] sm:$0xff]
    %s117 = scalar_lea.vmem [#allocation5], 8
    %v118 = vld [vmem:[%s117] sm:$0xff]
    %s119 = scalar_lea.vmem [#allocation5], 16
    %v120 = vld [vmem:[%s119] sm:$0xff]
    %s121 = scalar_lea.vmem [#allocation5], 24
    %v122 = vld [vmem:[%s121] sm:$0xff]
    %s123 = scalar_lea.vmem [#allocation5], 32
    %v124 = vld [vmem:[%s123] sm:$0xff]
    %s125 = scalar_lea.vmem [#allocation5], 40
    %v126 = vld [vmem:[%s125] sm:$0xff]
    %s127 = scalar_lea.vmem [#allocation5], 48
    %v128 = vld [vmem:[%s127] sm:$0xff]
    %s129 = scalar_lea.vmem [#allocation5], 56
    %v130 = vld [vmem:[%s129] sm:$0xff]
    %v131 = vld [vmem:[#allocation7] sm:$0xff]
    %s132 = scalar_lea.vmem [#allocation7], 8
    %v133 = vld [vmem:[%s132] sm:$0xff]
    %s134 = scalar_lea.vmem [#allocation7], 16
    %v135 = vld [vmem:[%s134] sm:$0xff]
    %s136 = scalar_lea.vmem [#allocation7], 24
    %v137 = vld [vmem:[%s136] sm:$0xff]
    %s138 = scalar_lea.vmem [#allocation7], 32
    %v139 = vld [vmem:[%s138] sm:$0xff]
    %s140 = scalar_lea.vmem [#allocation7], 40
    %v141 = vld [vmem:[%s140] sm:$0xff]
    %s142 = scalar_lea.vmem [#allocation7], 48
    %v143 = vld [vmem:[%s142] sm:$0xff]
    %s144 = scalar_lea.vmem [#allocation7], 56
    %v145 = vld [vmem:[%s144] sm:$0xff]
    %s146 = scalar_lea.vmem [#allocation7], 64
    %v147 = vld [vmem:[%s146] sm:$0xff]
    %s148 = scalar_lea.vmem [#allocation7], 72
    %v149 = vld [vmem:[%s148] sm:$0xff]
    %s150 = scalar_lea.vmem [#allocation7], 80
    %v151 = vld [vmem:[%s150] sm:$0xff]
    %s152 = scalar_lea.vmem [#allocation7], 88
    %v153 = vld [vmem:[%s152] sm:$0xff]
    %s154 = scalar_lea.vmem [#allocation7], 96
    %v155 = vld [vmem:[%s154] sm:$0xff]
    %s156 = scalar_lea.vmem [#allocation7], 104
    %v157 = vld [vmem:[%s156] sm:$0xff]
    %v158 = vld [vmem:[%s2] sm:$0xff]
    %v159 = vld [vmem:[%s2 + $0x8] sm:$0xff]
    %v160 = vld [vmem:[%s2 + $0x10] sm:$0xff]
    %v161 = vld [vmem:[%s3] sm:$0xff]
    %v162 = vld [vmem:[%s3 + $0x8] sm:$0xff]
    %v163 = vld [vmem:[%s3 + $0x10] sm:$0xff]
    %v164 = vld [vmem:[#allocation2] sm:$0xff]
    %v165 = vld [vmem:[#allocation2 + $0x8] sm:$0xff]
    %167 = vrot.lane.b32.xlu0 %v165, 74
    %v168 = vpop.permute.xlu0 %167
    %171 = vrot.lane.b32.xlu0 %v164, 14
    %v172 = vpop.permute.xlu0 %171
    %173 = vrot.lane.b32.xlu0 %v165, 14
    %v174 = vpop.permute.xlu0 %173
    %v175 = vsel %vm90, %v172, %v174
    %v178 = vsel %vm90, %v168, %v172
    %179 = vrot.lane.b32.xlu0 %v165, 88
    %v180 = vpop.permute.xlu0 %179
    %182 = vrot.lane.b32.xlu0 %v164, 28
    %v183 = vpop.permute.xlu0 %182
    %184 = vrot.lane.b32.xlu0 %v165, 28
    %v185 = vpop.permute.xlu0 %184
    %v186 = vsel %vm92, %v183, %v185
    %v189 = vsel %vm92, %v180, %v183
    %190 = vrot.lane.b32.xlu0 %v165, 102
    %v191 = vpop.permute.xlu0 %190
    %193 = vrot.lane.b32.xlu0 %v164, 42
    %v194 = vpop.permute.xlu0 %193
    %195 = vrot.lane.b32.xlu0 %v165, 42
    %v196 = vpop.permute.xlu0 %195
    %v197 = vsel %vm94, %v194, %v196
    %v200 = vsel %vm94, %v191, %v194
    %201 = vrot.lane.b32.xlu0 %v165, 116
    %v202 = vpop.permute.xlu0 %201
    %204 = vrot.lane.b32.xlu0 %v164, 56
    %v205 = vpop.permute.xlu0 %204
    %206 = vrot.lane.b32.xlu0 %v165, 56
    %v207 = vpop.permute.xlu0 %206
    %v208 = vsel %vm96, %v205, %v207
    %v211 = vsel %vm96, %v202, %v205
    %212 = vrot.lane.b32.xlu0 %v164, 2
    %v213 = vpop.permute.xlu0 %212
    %214 = vrot.lane.b32.xlu0 %v165, 2
    %v215 = vpop.permute.xlu0 %214
    %vm216 = vcmask 15360
    %v217 = vsel %vm216, %v213, %v215
    %219 = vrot.lane.b32.xlu0 %v164, 70
    %v220 = vpop.permute.xlu0 %219
    %v222 = vsel %vm98, %v217, %v220
    %223 = vrot.lane.b32.xlu0 %v164, 16
    %v224 = vpop.permute.xlu0 %223
    %225 = vrot.lane.b32.xlu0 %v165, 16
    %v226 = vpop.permute.xlu0 %225
    %vm227 = vcmask 130048
    %v228 = vsel %vm227, %v224, %v226
    %230 = vrot.lane.b32.xlu0 %v164, 84
    %v231 = vpop.permute.xlu0 %230
    %v233 = vsel %vm100, %v228, %v231
    %234 = vrot.lane.b32.xlu0 %v164, 30
    %v235 = vpop.permute.xlu0 %234
    %236 = vrot.lane.b32.xlu0 %v165, 30
    %v237 = vpop.permute.xlu0 %236
    %vm238 = vcmask 244736
    %v239 = vsel %vm238, %v235, %v237
    %241 = vrot.lane.b32.xlu0 %v164, 98
    %v242 = vpop.permute.xlu0 %241
    %v244 = vsel %vm102, %v239, %v242
    %vm245 = vcmask 1040384
    %v246 = vsel %vm245, %v164, %v178
    %v247 = vsel %vm245, %v165, %v175
    %vm248 = vcmask 1041408
    %v249 = vsel %vm248, %v246, %v189
    %v250 = vsel %vm248, %v247, %v186
    %vm251 = vcmask 1042432
    %v252 = vsel %vm251, %v249, %v200
    %v253 = vsel %vm251, %v250, %v197
    %vm254 = vcmask 1043456
    %v255 = vsel %vm254, %v252, %v211
    %v256 = vsel %vm254, %v253, %v208
    %vm257 = vcmask 1044480
    %v258 = vsel %vm257, %v255, %v222
    %v259 = vsel %vm257, %v256, %v220
    %vm260 = vcmask 1045504
    %v261 = vsel %vm260, %v258, %v233
    %v262 = vsel %vm260, %v259, %v231
    %vm263 = vcmask 1046528
    %v264 = vsel %vm263, %v261, %v244
    %v265 = vsel %vm263, %v262, %v242
    %267 = vset.pattern.permute.xlu0 0
    %268 = vperm.xlu0 %267, %v131
    %v269 = vpop.permute.xlu0 %268
    %vm271 = vcmask 64512
    %v273 = vsel %vm271, %v116, 0
    %275 = vmatprep.subr.mxu0 %v265
    %276 = vmatpush1.msra.mxu0 %v264
    %277 = vmatprep.subr.mxu0 0.0
    %278 = vmatpush1.msra.mxu0 0.0
    %279 = vmatprep.subr.mxu0 0.0
    %280 = vmatpush1.msra.mxu0 0.0
    %281 = vmatprep.subr.mxu0 0.0
    %282 = vmatpush1.msra.mxu0 0.0
    %283 = vmatprep.subr.mxu0 0.0
    %284 = vmatpush1.msra.mxu0 0.0
    %285 = vmatprep.subr.mxu0 0.0
    %286 = vmatpush1.msra.mxu0 0.0
    %287 = vmatprep.subr.mxu0 0.0
    %288 = vmatpush1.msra.mxu0 0.0
    %289 = vmatprep.subr.mxu0 0.0
    %290 = vmatpush1.msra.mxu0 0.0
    %291 = vmatprep.subr.mxu0 0.0
    %292 = vmatpush1.msra.mxu0 0.0
    %293 = vmatprep.subr.mxu0 0.0
    %294 = vmatpush1.msra.mxu0 0.0
    %295 = vmatprep.subr.mxu0 0.0
    %296 = vmatpush1.msra.mxu0 0.0
    %297 = vmatprep.subr.mxu0 0.0
    %298 = vmatpush1.msra.mxu0 0.0
    %299 = vmatprep.subr.mxu0 0.0
    %300 = vmatpush1.msra.mxu0 0.0
    %301 = vmatprep.subr.mxu0 0.0
    %302 = vmatpush1.msra.mxu0 0.0
    %303 = vmatprep.subr.mxu0 0.0
    %304 = vmatpush1.msra.mxu0 0.0
    %305 = vmatprep.subr.mxu0 0.0
    %306 = vmatpush1.msra.mxu0 0.0
    %307 = vmatprep.subr.mxu0 0.0
    %308 = vmatpush1.msra.mxu0 0.0
    %309 = vmatprep.subr.mxu0 0.0
    %310 = vmatpush1.msra.mxu0 0.0
    %311 = vmatprep.subr.mxu0 0.0
    %312 = vmatpush1.msra.mxu0 0.0
    %313 = vmatprep.subr.mxu0 0.0
    %314 = vmatpush1.msra.mxu0 0.0
    %315 = vmatprep.subr.mxu0 0.0
    %316 = vmatpush1.msra.mxu0 0.0
    %317 = vmatprep.subr.mxu0 0.0
    %318 = vmatpush1.msra.mxu0 0.0
    %319 = vmatprep.subr.mxu0 0.0
    %320 = vmatpush1.msra.mxu0 0.0
    %321 = vmatprep.subr.mxu0 0.0
    %322 = vmatpush1.msra.mxu0 0.0
    %323 = vmatprep.subr.mxu0 0.0
    %324 = vmatpush1.msra.mxu0 0.0
    %325 = vmatprep.subr.mxu0 0.0
    %326 = vmatpush1.msra.mxu0 0.0
    %327 = vmatprep.subr.mxu0 0.0
    %328 = vmatpush1.msra.mxu0 0.0
    %329 = vmatprep.subr.mxu0 0.0
    %330 = vmatpush1.msra.mxu0 0.0
    %331 = vmatprep.subr.mxu0 0.0
    %332 = vmatpush1.msra.mxu0 0.0
    %333 = vmatprep.subr.mxu0 0.0
    %334 = vmatpush1.msra.mxu0 0.0
    %335 = vmatprep.subr.mxu0 0.0
    %336 = vmatpush1.msra.mxu0 0.0
    %337 = vmatprep.subr.mxu0 0.0
    %338 = vmatpush1.msra.mxu0 0.0
    %339 = vmatprep.mubr.f32.mxu0 0.0
    %340 = vmatmul.mubr.f32.gmra.mrb[0].mxu0 %v273
    %v341 = vpop.f32.mrb[0].mxu0
    %v342 = vadd.f32 %v269, %v341
    %v343 = vpop.f32.mrb[0].mxu0
    %v344 = vadd.f32 %v269, %v343
    %345 = vdwg.mxu0
    %v346 = vmul.f32 %v342, 0.5
    %v347 = vmul.f32 %v344, 0.5
    %v348 = vmul.f32 %v342, 0.70710677
    %v349 = vmul.f32 %v344, 0.70710677
    %vm350 = vcmp.ge.f32.partialorder %v348, 0.0
    %vm351 = vcmp.ge.f32.partialorder %v349, 0.0
    %v352 = vsel %vm350, 1.0, -1.0
    %v353 = vsel %vm351, 1.0, -1.0
    %v354 = vand.u32 2147483647, %v348
    %v355 = vand.u32 2147483647, %v349
    %v356 = vmul.f32 %v354, 0.3275911
    %v357 = vmul.f32 %v355, 0.3275911
    %v358 = vadd.f32 %v356, 1.0
    %v359 = vadd.f32 %v357, 1.0
    %v360 = vrcp.pop %v358
    %v361 = vmul.f32 1.0, %v360
    %v362 = vrcp.pop %v359
    %v363 = vmul.f32 1.0, %v362
    %v364 = vmul.f32 %v361, 1.0614054
    %v365 = vmul.f32 %v363, 1.0614054
    %v366 = vadd.f32 %v364, -1.4531521
    %v367 = vadd.f32 %v365, -1.4531521
    %v368 = vmul.f32 %v366, %v361
    %v369 = vmul.f32 %v367, %v363
    %v370 = vadd.f32 %v368, 1.4214138
    %v371 = vadd.f32 %v369, 1.4214138
    %v372 = vmul.f32 %v370, %v361
    %v373 = vmul.f32 %v371, %v363
    %v374 = vadd.f32 %v372, -0.28449672
    %v375 = vadd.f32 %v373, -0.28449672
    %v376 = vmul.f32 %v374, %v361
    %v377 = vmul.f32 %v375, %v363
    %v378 = vadd.f32 %v376, 0.2548296
    %v379 = vadd.f32 %v377, 0.2548296
    %v380 = vmul.f32 %v378, %v361
    %v381 = vmul.f32 %v379, %v363
    %v382 = vsub.f32 0.0, %v354
    %v383 = vsub.f32 0.0, %v355
    %v384 = vmul.f32 %v382, %v354
    %v385 = vmul.f32 %v383, %v355
    %v386 = vmul.f32 %v384, 1.442695
    %v387 = vpow.pop %v386
    %v388 = vmul.f32 %v385, 1.442695
    %v389 = vpow.pop %v388
    %v390 = vmul.f32 %v380, %v387
    %v391 = vmul.f32 %v381, %v389
    %v392 = vsub.f32 1.0, %v390
    %v393 = vsub.f32 1.0, %v391
    %v394 = vmul.f32 %v352, %v392
    %v395 = vmul.f32 %v353, %v393
    %v396 = vadd.f32 %v394, 1.0
    %v397 = vadd.f32 %v395, 1.0
    %v398 = vmul.f32 %v346, %v396
    %v399 = vmul.f32 %v347, %v397
    %401 = vrot.lane.b32.xlu0 %v399, 61
    %v402 = vpop.permute.xlu0 %401
    %405 = vrot.lane.b32.xlu0 %v398, 1
    %v406 = vpop.permute.xlu0 %405
    %407 = vrot.lane.b32.xlu0 %v399, 1
    %v408 = vpop.permute.xlu0 %407
    %vm409 = vcmask 7168
    %v410 = vsel %vm409, %v406, %v408
    %v412 = vsel %vm409, %v402, %v406
    %413 = vrot.lane.b32.xlu0 %v398, 115
    %v414 = vpop.permute.xlu0 %413
    %415 = vrot.lane.b32.xlu0 %v399, 115
    %v416 = vpop.permute.xlu0 %415
    %vm417 = vcmask 941056
    %v418 = vsel %vm417, %v414, %v416
    %420 = vrot.lane.b32.xlu0 %v398, 55
    %v421 = vpop.permute.xlu0 %420
    %vm423 = vcmask 449536
    %v424 = vsel %vm423, %v416, %v421
    %vm425 = vcmp.ge.s32.totalorder %v107, 1
    %vm426 = vcmp.ge.s32.totalorder %v115, 1
    %v428 = vrot.slane %v412, 1
    %v429 = vrot.slane %v410, 1
    %v433 = vrot.slane %v418, 1
    %v434 = vrot.slane %v424, 1
    %v437 = vsel %vm425, %v428, %v433
    %v438 = vsel %vm426, %v429, %v434
    %439 = vrot.lane.b32.xlu0 %v399, 62
    %v440 = vpop.permute.xlu0 %439
    %442 = vrot.lane.b32.xlu0 %v398, 2
    %v443 = vpop.permute.xlu0 %442
    %444 = vrot.lane.b32.xlu0 %v399, 2
    %v445 = vpop.permute.xlu0 %444
    %v446 = vsel %vm216, %v443, %v445
    %v448 = vsel %vm216, %v440, %v443
    %449 = vrot.lane.b32.xlu0 %v398, 116
    %v450 = vpop.permute.xlu0 %449
    %451 = vrot.lane.b32.xlu0 %v399, 116
    %v452 = vpop.permute.xlu0 %451
    %vm453 = vcmask 949248
    %v454 = vsel %vm453, %v450, %v452
    %456 = vrot.lane.b32.xlu0 %v398, 56
    %v457 = vpop.permute.xlu0 %456
    %v459 = vsel %vm96, %v452, %v457
    %vm460 = vcmp.ge.s32.totalorder %v107, 2
    %vm461 = vcmp.ge.s32.totalorder %v115, 2
    %v463 = vrot.slane %v448, 2
    %v464 = vrot.slane %v446, 2
    %v468 = vrot.slane %v454, 2
    %v469 = vrot.slane %v459, 2
    %v472 = vsel %vm460, %v463, %v468
    %v473 = vsel %vm461, %v464, %v469
    %474 = vrot.lane.b32.xlu0 %v399, 63
    %v475 = vpop.permute.xlu0 %474
    %477 = vrot.lane.b32.xlu0 %v398, 3
    %v478 = vpop.permute.xlu0 %477
    %479 = vrot.lane.b32.xlu0 %v399, 3
    %v480 = vpop.permute.xlu0 %479
    %vm481 = vcmask 23552
    %v482 = vsel %vm481, %v478, %v480
    %v484 = vsel %vm481, %v475, %v478
    %485 = vrot.lane.b32.xlu0 %v398, 117
    %v486 = vpop.permute.xlu0 %485
    %487 = vrot.lane.b32.xlu0 %v399, 117
    %v488 = vpop.permute.xlu0 %487
    %vm489 = vcmask 957440
    %v490 = vsel %vm489, %v486, %v488
    %492 = vrot.lane.b32.xlu0 %v398, 57
    %v493 = vpop.permute.xlu0 %492
    %vm495 = vcmask 465920
    %v496 = vsel %vm495, %v488, %v493
    %vm497 = vcmp.ge.s32.totalorder %v107, 3
    %vm498 = vcmp.ge.s32.totalorder %v115, 3
    %v500 = vrot.slane %v484, 3
    %v501 = vrot.slane %v482, 3
    %v505 = vrot.slane %v490, 3
    %v506 = vrot.slane %v496, 3
    %v509 = vsel %vm497, %v500, %v505
    %v510 = vsel %vm498, %v501, %v506
    %511 = vrot.lane.b32.xlu0 %v399, 64
    %v512 = vpop.permute.xlu0 %511
    %514 = vrot.lane.b32.xlu0 %v398, 4
    %v515 = vpop.permute.xlu0 %514
    %516 = vrot.lane.b32.xlu0 %v399, 4
    %v517 = vpop.permute.xlu0 %516
    %vm518 = vcmask 31744
    %v519 = vsel %vm518, %v515, %v517
    %v521 = vsel %vm518, %v512, %v515
    %522 = vrot.lane.b32.xlu0 %v398, 118
    %v523 = vpop.permute.xlu0 %522
    %524 = vrot.lane.b32.xlu0 %v399, 118
    %v525 = vpop.permute.xlu0 %524
    %vm526 = vcmask 965632
    %v527 = vsel %vm526, %v523, %v525
    %529 = vrot.lane.b32.xlu0 %v398, 58
    %v530 = vpop.permute.xlu0 %529
    %vm532 = vcmask 474112
    %v533 = vsel %vm532, %v525, %v530
    %vm534 = vcmp.ge.s32.totalorder %v107, 4
    %vm535 = vcmp.ge.s32.totalorder %v115, 4
    %v537 = vrot.slane %v521, 4
    %v538 = vrot.slane %v519, 4
    %v542 = vrot.slane %v527, 4
    %v543 = vrot.slane %v533, 4
    %v546 = vsel %vm534, %v537, %v542
    %v547 = vsel %vm535, %v538, %v543
    %548 = vrot.lane.b32.xlu0 %v399, 65
    %v549 = vpop.permute.xlu0 %548
    %551 = vrot.lane.b32.xlu0 %v398, 5
    %v552 = vpop.permute.xlu0 %551
    %553 = vrot.lane.b32.xlu0 %v399, 5
    %v554 = vpop.permute.xlu0 %553
    %vm555 = vcmask 39936
    %v556 = vsel %vm555, %v552, %v554
    %v558 = vsel %vm555, %v549, %v552
    %559 = vrot.lane.b32.xlu0 %v398, 119
    %v560 = vpop.permute.xlu0 %559
    %561 = vrot.lane.b32.xlu0 %v399, 119
    %v562 = vpop.permute.xlu0 %561
    %vm563 = vcmask 973824
    %v564 = vsel %vm563, %v560, %v562
    %566 = vrot.lane.b32.xlu0 %v398, 59
    %v567 = vpop.permute.xlu0 %566
    %vm569 = vcmask 482304
    %v570 = vsel %vm569, %v562, %v567
    %vm571 = vcmp.ge.s32.totalorder %v107, 5
    %vm572 = vcmp.ge.s32.totalorder %v115, 5
    %v574 = vrot.slane %v558, 5
    %v575 = vrot.slane %v556, 5
    %v579 = vrot.slane %v564, 5
    %v580 = vrot.slane %v570, 5
    %v583 = vsel %vm571, %v574, %v579
    %v584 = vsel %vm572, %v575, %v580
    %585 = vrot.lane.b32.xlu0 %v399, 66
    %v586 = vpop.permute.xlu0 %585
    %588 = vrot.lane.b32.xlu0 %v398, 6
    %v589 = vpop.permute.xlu0 %588
    %590 = vrot.lane.b32.xlu0 %v399, 6
    %v591 = vpop.permute.xlu0 %590
    %vm592 = vcmask 48128
    %v593 = vsel %vm592, %v589, %v591
    %v595 = vsel %vm592, %v586, %v589
    %596 = vrot.lane.b32.xlu0 %v398, 120
    %v597 = vpop.permute.xlu0 %596
    %598 = vrot.lane.b32.xlu0 %v399, 120
    %v599 = vpop.permute.xlu0 %598
    %vm600 = vcmask 982016
    %v601 = vsel %vm600, %v597, %v599
    %603 = vrot.lane.b32.xlu0 %v398, 60
    %v604 = vpop.permute.xlu0 %603
    %vm606 = vcmask 490496
    %v607 = vsel %vm606, %v599, %v604
    %vm608 = vcmp.ge.s32.totalorder %v107, 6
    %vm609 = vcmp.ge.s32.totalorder %v115, 6
    %v611 = vrot.slane %v595, 6
    %v612 = vrot.slane %v593, 6
    %v616 = vrot.slane %v601, 6
    %v617 = vrot.slane %v607, 6
    %v620 = vsel %vm608, %v611, %v616
    %v621 = vsel %vm609, %v612, %v617
    %622 = vrot.lane.b32.xlu0 %v399, 67
    %v623 = vpop.permute.xlu0 %622
    %625 = vrot.lane.b32.xlu0 %v398, 7
    %v626 = vpop.permute.xlu0 %625
    %627 = vrot.lane.b32.xlu0 %v399, 7
    %v628 = vpop.permute.xlu0 %627
    %vm629 = vcmask 56320
    %v630 = vsel %vm629, %v626, %v628
    %v632 = vsel %vm629, %v623, %v626
    %633 = vrot.lane.b32.xlu0 %v398, 121
    %v634 = vpop.permute.xlu0 %633
    %635 = vrot.lane.b32.xlu0 %v399, 121
    %v636 = vpop.permute.xlu0 %635
    %vm637 = vcmask 990208
    %v638 = vsel %vm637, %v634, %v636
    %640 = vrot.lane.b32.xlu0 %v398, 61
    %v641 = vpop.permute.xlu0 %640
    %vm643 = vcmask 498688
    %v644 = vsel %vm643, %v636, %v641
    %vm645 = vcmp.ge.s32.totalorder %v107, 7
    %vm646 = vcmp.ge.s32.totalorder %v115, 7
    %v648 = vrot.slane %v632, 7
    %v649 = vrot.slane %v630, 7
    %v653 = vrot.slane %v638, 7
    %v654 = vrot.slane %v644, 7
    %v657 = vsel %vm645, %v648, %v653
    %v658 = vsel %vm646, %v649, %v654
    %v661 = vrot.slane %v437, 7
    %v662 = vrot.slane %v438, 7
    %v667 = vrot.slane %v472, 6
    %v668 = vrot.slane %v473, 6
    %v673 = vrot.slane %v509, 5
    %v674 = vrot.slane %v510, 5
    %v679 = vrot.slane %v546, 4
    %v680 = vrot.slane %v547, 4
    %v685 = vrot.slane %v583, 3
    %v686 = vrot.slane %v584, 3
    %v691 = vrot.slane %v620, 2
    %v692 = vrot.slane %v621, 2
    %v697 = vrot.slane %v657, 1
    %v698 = vrot.slane %v658, 1
    %v701 = vsel %vm245, %v398, %v661
    %v702 = vsel %vm245, %v399, %v662
    %v703 = vsel %vm248, %v701, %v667
    %v704 = vsel %vm248, %v702, %v668
    %v705 = vsel %vm251, %v703, %v673
    %v706 = vsel %vm251, %v704, %v674
    %v707 = vsel %vm254, %v705, %v679
    %v708 = vsel %vm254, %v706, %v680
    %v709 = vsel %vm257, %v707, %v685
    %v710 = vsel %vm257, %v708, %v686
    %v711 = vsel %vm260, %v709, %v691
    %v712 = vsel %vm260, %v710, %v692
    %v713 = vsel %vm263, %v711, %v697
    %v714 = vsel %vm263, %v712, %v698
    %716 = vset.pattern.permute.xlu0 0
    %717 = vperm.xlu0 %716, %v133
    %v718 = vpop.permute.xlu0 %717
    %v721 = vsel %vm271, %v118, 0
    %723 = vmatprep.subr.mxu0 %v714
    %724 = vmatpush1.msra.mxu0 %v713
    %725 = vmatprep.subr.mxu0 0.0
    %726 = vmatpush1.msra.mxu0 0.0
    %727 = vmatprep.subr.mxu0 0.0
    %728 = vmatpush1.msra.mxu0 0.0
    %729 = vmatprep.subr.mxu0 0.0
    %730 = vmatpush1.msra.mxu0 0.0
    %731 = vmatprep.subr.mxu0 0.0
    %732 = vmatpush1.msra.mxu0 0.0
    %733 = vmatprep.subr.mxu0 0.0
    %734 = vmatpush1.msra.mxu0 0.0
    %735 = vmatprep.subr.mxu0 0.0
    %736 = vmatpush1.msra.mxu0 0.0
    %737 = vmatprep.subr.mxu0 0.0
    %738 = vmatpush1.msra.mxu0 0.0
    %739 = vmatprep.subr.mxu0 0.0
    %740 = vmatpush1.msra.mxu0 0.0
    %741 = vmatprep.subr.mxu0 0.0
    %742 = vmatpush1.msra.mxu0 0.0
    %743 = vmatprep.subr.mxu0 0.0
    %744 = vmatpush1.msra.mxu0 0.0
    %745 = vmatprep.subr.mxu0 0.0
    %746 = vmatpush1.msra.mxu0 0.0
    %747 = vmatprep.subr.mxu0 0.0
    %748 = vmatpush1.msra.mxu0 0.0
    %749 = vmatprep.subr.mxu0 0.0
    %750 = vmatpush1.msra.mxu0 0.0
    %751 = vmatprep.subr.mxu0 0.0
    %752 = vmatpush1.msra.mxu0 0.0
    %753 = vmatprep.subr.mxu0 0.0
    %754 = vmatpush1.msra.mxu0 0.0
    %755 = vmatprep.subr.mxu0 0.0
    %756 = vmatpush1.msra.mxu0 0.0
    %757 = vmatprep.subr.mxu0 0.0
    %758 = vmatpush1.msra.mxu0 0.0
    %759 = vmatprep.subr.mxu0 0.0
    %760 = vmatpush1.msra.mxu0 0.0
    %761 = vmatprep.subr.mxu0 0.0
    %762 = vmatpush1.msra.mxu0 0.0
    %763 = vmatprep.subr.mxu0 0.0
    %764 = vmatpush1.msra.mxu0 0.0
    %765 = vmatprep.subr.mxu0 0.0
    %766 = vmatpush1.msra.mxu0 0.0
    %767 = vmatprep.subr.mxu0 0.0
    %768 = vmatpush1.msra.mxu0 0.0
    %769 = vmatprep.subr.mxu0 0.0
    %770 = vmatpush1.msra.mxu0 0.0
    %771 = vmatprep.subr.mxu0 0.0
    %772 = vmatpush1.msra.mxu0 0.0
    %773 = vmatprep.subr.mxu0 0.0
    %774 = vmatpush1.msra.mxu0 0.0
    %775 = vmatprep.subr.mxu0 0.0
    %776 = vmatpush1.msra.mxu0 0.0
    %777 = vmatprep.subr.mxu0 0.0
    %778 = vmatpush1.msra.mxu0 0.0
    %779 = vmatprep.subr.mxu0 0.0
    %780 = vmatpush1.msra.mxu0 0.0
    %781 = vmatprep.subr.mxu0 0.0
    %782 = vmatpush1.msra.mxu0 0.0
    %783 = vmatprep.subr.mxu0 0.0
    %784 = vmatpush1.msra.mxu0 0.0
    %785 = vmatprep.subr.mxu0 0.0
    %786 = vmatpush1.msra.mxu0 0.0
    %787 = vmatprep.mubr.f32.mxu0 0.0
    %788 = vmatmul.mubr.f32.gmra.mrb[0].mxu0 %v721
    %v789 = vpop.f32.mrb[0].mxu0
    %v790 = vadd.f32 %v718, %v789
    %v791 = vpop.f32.mrb[0].mxu0
    %v792 = vadd.f32 %v718, %v791
    %793 = vdwg.mxu0
    %v794 = vadd.f32 %v790, %v164
    %v795 = vadd.f32 %v792, %v165
    %796 = vrot.lane.b32.xlu0 %v165, 73
    %v797 = vpop.permute.xlu0 %796
    %799 = vrot.lane.b32.xlu0 %v164, 13
    %v800 = vpop.permute.xlu0 %799
    %801 = vrot.lane.b32.xlu0 %v165, 13
    %v802 = vpop.permute.xlu0 %801
    %vm803 = vcmask 105472
    %v804 = vsel %vm803, %v800, %v802
    %v806 = vsel %vm803, %v797, %v800
    %807 = vrot.lane.b32.xlu0 %v164, 127
    %v808 = vpop.permute.xlu0 %807
    %809 = vrot.lane.b32.xlu0 %v165, 127
    %v810 = vpop.permute.xlu0 %809
    %vm811 = vcmask 1039360
    %v812 = vsel %vm811, %v808, %v810
    %814 = vrot.lane.b32.xlu0 %v164, 67
    %v815 = vpop.permute.xlu0 %814
    %vm817 = vcmask 547840
    %v818 = vsel %vm817, %v810, %v815
    %vm819 = vcmp.ge.s32.totalorder %v107, 13
    %vm820 = vcmp.ge.s32.totalorder %v115, 13
    %v822 = vrot.slane %v806, 1
    %v823 = vrot.slane %v804, 1
    %v827 = vrot.slane %v812, 1
    %v828 = vrot.slane %v818, 1
    %v831 = vsel %vm819, %v822, %v827
    %v832 = vsel %vm820, %v823, %v828
    %833 = vrot.lane.b32.xlu0 %v165, 72
    %v834 = vpop.permute.xlu0 %833
    %836 = vrot.lane.b32.xlu0 %v164, 12
    %v837 = vpop.permute.xlu0 %836
    %838 = vrot.lane.b32.xlu0 %v165, 12
    %v839 = vpop.permute.xlu0 %838
    %v840 = vsel %vm108, %v837, %v839
    %v842 = vsel %vm108, %v834, %v837
    %843 = vrot.lane.b32.xlu0 %v164, 126
    %v844 = vpop.permute.xlu0 %843
    %845 = vrot.lane.b32.xlu0 %v165, 126
    %v846 = vpop.permute.xlu0 %845
    %v847 = vsel %vm106, %v844, %v846
    %849 = vrot.lane.b32.xlu0 %v164, 66
    %v850 = vpop.permute.xlu0 %849
    %vm852 = vcmask 539648
    %v853 = vsel %vm852, %v846, %v850
    %vm854 = vcmp.ge.s32.totalorder %v107, 12
    %vm855 = vcmp.ge.s32.totalorder %v115, 12
    %v857 = vrot.slane %v842, 2
    %v858 = vrot.slane %v840, 2
    %v862 = vrot.slane %v847, 2
    %v863 = vrot.slane %v853, 2
    %v866 = vsel %vm854, %v857, %v862
    %v867 = vsel %vm855, %v858, %v863
    %868 = vrot.lane.b32.xlu0 %v165, 71
    %v869 = vpop.permute.xlu0 %868
    %871 = vrot.lane.b32.xlu0 %v164, 11
    %v872 = vpop.permute.xlu0 %871
    %873 = vrot.lane.b32.xlu0 %v165, 11
    %v874 = vpop.permute.xlu0 %873
    %vm875 = vcmask 89088
    %v876 = vsel %vm875, %v872, %v874
    %v878 = vsel %vm875, %v869, %v872
    %879 = vrot.lane.b32.xlu0 %v164, 125
    %v880 = vpop.permute.xlu0 %879
    %881 = vrot.lane.b32.xlu0 %v165, 125
    %v882 = vpop.permute.xlu0 %881
    %vm883 = vcmask 1022976
    %v884 = vsel %vm883, %v880, %v882
    %886 = vrot.lane.b32.xlu0 %v164, 65
    %v887 = vpop.permute.xlu0 %886
    %vm889 = vcmask 531456
    %v890 = vsel %vm889, %v882, %v887
    %vm891 = vcmp.ge.s32.totalorder %v107, 11
    %vm892 = vcmp.ge.s32.totalorder %v115, 11
    %v894 = vrot.slane %v878, 3
    %v895 = vrot.slane %v876, 3
    %v899 = vrot.slane %v884, 3
    %v900 = vrot.slane %v890, 3
    %v903 = vsel %vm891, %v894, %v899
    %v904 = vsel %vm892, %v895, %v900
    %905 = vrot.lane.b32.xlu0 %v165, 70
    %v906 = vpop.permute.xlu0 %905
    %908 = vrot.lane.b32.xlu0 %v164, 10
    %v909 = vpop.permute.xlu0 %908
    %910 = vrot.lane.b32.xlu0 %v165, 10
    %v911 = vpop.permute.xlu0 %910
    %vm912 = vcmask 80896
    %v913 = vsel %vm912, %v909, %v911
    %v915 = vsel %vm912, %v906, %v909
    %916 = vrot.lane.b32.xlu0 %v164, 124
    %v917 = vpop.permute.xlu0 %916
    %918 = vrot.lane.b32.xlu0 %v165, 124
    %v919 = vpop.permute.xlu0 %918
    %vm920 = vcmask 1014784
    %v921 = vsel %vm920, %v917, %v919
    %923 = vrot.lane.b32.xlu0 %v164, 64
    %v924 = vpop.permute.xlu0 %923
    %vm926 = vcmask 523264
    %v927 = vsel %vm926, %v919, %v924
    %vm928 = vcmp.ge.s32.totalorder %v107, 10
    %vm929 = vcmp.ge.s32.totalorder %v115, 10
    %v931 = vrot.slane %v915, 4
    %v932 = vrot.slane %v913, 4
    %v936 = vrot.slane %v921, 4
    %v937 = vrot.slane %v927, 4
    %v940 = vsel %vm928, %v931, %v936
    %v941 = vsel %vm929, %v932, %v937
    %942 = vrot.lane.b32.xlu0 %v165, 69
    %v943 = vpop.permute.xlu0 %942
    %945 = vrot.lane.b32.xlu0 %v164, 9
    %v946 = vpop.permute.xlu0 %945
    %947 = vrot.lane.b32.xlu0 %v165, 9
    %v948 = vpop.permute.xlu0 %947
    %vm949 = vcmask 72704
    %v950 = vsel %vm949, %v946, %v948
    %v952 = vsel %vm949, %v943, %v946
    %953 = vrot.lane.b32.xlu0 %v164, 123
    %v954 = vpop.permute.xlu0 %953
    %955 = vrot.lane.b32.xlu0 %v165, 123
    %v956 = vpop.permute.xlu0 %955
    %vm957 = vcmask 1006592
    %v958 = vsel %vm957, %v954, %v956
    %960 = vrot.lane.b32.xlu0 %v164, 63
    %v961 = vpop.permute.xlu0 %960
    %vm963 = vcmask 515072
    %v964 = vsel %vm963, %v956, %v961
    %vm965 = vcmp.ge.s32.totalorder %v107, 9
    %vm966 = vcmp.ge.s32.totalorder %v115, 9
    %v968 = vrot.slane %v952, 5
    %v969 = vrot.slane %v950, 5
    %v973 = vrot.slane %v958, 5
    %v974 = vrot.slane %v964, 5
    %v977 = vsel %vm965, %v968, %v973
    %v978 = vsel %vm966, %v969, %v974
    %979 = vrot.lane.b32.xlu0 %v165, 68
    %v980 = vpop.permute.xlu0 %979
    %982 = vrot.lane.b32.xlu0 %v164, 8
    %v983 = vpop.permute.xlu0 %982
    %984 = vrot.lane.b32.xlu0 %v165, 8
    %v985 = vpop.permute.xlu0 %984
    %v986 = vsel %vm271, %v983, %v985
    %v988 = vsel %vm271, %v980, %v983
    %989 = vrot.lane.b32.xlu0 %v164, 122
    %v990 = vpop.permute.xlu0 %989
    %991 = vrot.lane.b32.xlu0 %v165, 122
    %v992 = vpop.permute.xlu0 %991
    %vm993 = vcmask 998400
    %v994 = vsel %vm993, %v990, %v992
    %996 = vrot.lane.b32.xlu0 %v164, 62
    %v997 = vpop.permute.xlu0 %996
    %vm999 = vcmask 506880
    %v1000 = vsel %vm999, %v992, %v997
    %vm1001 = vcmp.ge.s32.totalorder %v107, 8
    %vm1002 = vcmp.ge.s32.totalorder %v115, 8
    %v1004 = vrot.slane %v988, 6
    %v1005 = vrot.slane %v986, 6
    %v1009 = vrot.slane %v994, 6
    %v1010 = vrot.slane %v1000, 6
    %v1013 = vsel %vm1001, %v1004, %v1009
    %v1014 = vsel %vm1002, %v1005, %v1010
    %1015 = vrot.lane.b32.xlu0 %v165, 67
    %v1016 = vpop.permute.xlu0 %1015
    %1018 = vrot.lane.b32.xlu0 %v164, 7
    %v1019 = vpop.permute.xlu0 %1018
    %1020 = vrot.lane.b32.xlu0 %v165, 7
    %v1021 = vpop.permute.xlu0 %1020
    %v1022 = vsel %vm629, %v1019, %v1021
    %v1024 = vsel %vm629, %v1016, %v1019
    %1025 = vrot.lane.b32.xlu0 %v164, 121
    %v1026 = vpop.permute.xlu0 %1025
    %1027 = vrot.lane.b32.xlu0 %v165, 121
    %v1028 = vpop.permute.xlu0 %1027
    %v1029 = vsel %vm637, %v1026, %v1028
    %1031 = vrot.lane.b32.xlu0 %v164, 61
    %v1032 = vpop.permute.xlu0 %1031
    %v1034 = vsel %vm643, %v1028, %v1032
    %v1036 = vrot.slane %v1024, 7
    %v1037 = vrot.slane %v1022, 7
    %v1041 = vrot.slane %v1029, 7
    %v1042 = vrot.slane %v1034, 7
    %v1045 = vsel %vm645, %v1036, %v1041
    %v1046 = vsel %vm646, %v1037, %v1042
    %v1049 = vrot.slane %v831, 7
    %v1050 = vrot.slane %v832, 7
    %v1055 = vrot.slane %v866, 6
    %v1056 = vrot.slane %v867, 6
    %v1061 = vrot.slane %v903, 5
    %v1062 = vrot.slane %v904, 5
    %v1067 = vrot.slane %v940, 4
    %v1068 = vrot.slane %v941, 4
    %v1073 = vrot.slane %v977, 3
    %v1074 = vrot.slane %v978, 3
    %v1079 = vrot.slane %v1013, 2
    %v1080 = vrot.slane %v1014, 2
    %v1085 = vrot.slane %v1045, 1
    %v1086 = vrot.slane %v1046, 1
    %v1089 = vsel %vm245, %v164, %v1049
    %v1090 = vsel %vm245, %v165, %v1050
    %v1091 = vsel %vm248, %v1089, %v1055
    %v1092 = vsel %vm248, %v1090, %v1056
    %v1093 = vsel %vm251, %v1091, %v1061
    %v1094 = vsel %vm251, %v1092, %v1062
    %v1095 = vsel %vm254, %v1093, %v1067
    %v1096 = vsel %vm254, %v1094, %v1068
    %v1097 = vsel %vm257, %v1095, %v1073
    %v1098 = vsel %vm257, %v1096, %v1074
    %v1099 = vsel %vm260, %v1097, %v1079
    %v1100 = vsel %vm260, %v1098, %v1080
    %v1101 = vsel %vm263, %v1099, %v1085
    %v1102 = vsel %vm263, %v1100, %v1086
    %1104 = vset.pattern.permute.xlu0 0
    %1105 = vperm.xlu0 %1104, %v135
    %v1106 = vpop.permute.xlu0 %1105
    %v1109 = vsel %vm271, %v120, 0
    %1111 = vmatprep.subr.mxu0 %v1102
    %1112 = vmatpush1.msra.mxu0 %v1101
    %1113 = vmatprep.subr.mxu0 0.0
    %1114 = vmatpush1.msra.mxu0 0.0
    %1115 = vmatprep.subr.mxu0 0.0
    %1116 = vmatpush1.msra.mxu0 0.0
    %1117 = vmatprep.subr.mxu0 0.0
    %1118 = vmatpush1.msra.mxu0 0.0
    %1119 = vmatprep.subr.mxu0 0.0
    %1120 = vmatpush1.msra.mxu0 0.0
    %1121 = vmatprep.subr.mxu0 0.0
    %1122 = vmatpush1.msra.mxu0 0.0
    %1123 = vmatprep.subr.mxu0 0.0
    %1124 = vmatpush1.msra.mxu0 0.0
    %1125 = vmatprep.subr.mxu0 0.0
    %1126 = vmatpush1.msra.mxu0 0.0
    %1127 = vmatprep.subr.mxu0 0.0
    %1128 = vmatpush1.msra.mxu0 0.0
    %1129 = vmatprep.subr.mxu0 0.0
    %1130 = vmatpush1.msra.mxu0 0.0
    %1131 = vmatprep.subr.mxu0 0.0
    %1132 = vmatpush1.msra.mxu0 0.0
    %1133 = vmatprep.subr.mxu0 0.0
    %1134 = vmatpush1.msra.mxu0 0.0
    %1135 = vmatprep.subr.mxu0 0.0
    %1136 = vmatpush1.msra.mxu0 0.0
    %1137 = vmatprep.subr.mxu0 0.0
    %1138 = vmatpush1.msra.mxu0 0.0
    %1139 = vmatprep.subr.mxu0 0.0
    %1140 = vmatpush1.msra.mxu0 0.0
    %1141 = vmatprep.subr.mxu0 0.0
    %1142 = vmatpush1.msra.mxu0 0.0
    %1143 = vmatprep.subr.mxu0 0.0
    %1144 = vmatpush1.msra.mxu0 0.0
    %1145 = vmatprep.subr.mxu0 0.0
    %1146 = vmatpush1.msra.mxu0 0.0
    %1147 = vmatprep.subr.mxu0 0.0
    %1148 = vmatpush1.msra.mxu0 0.0
    %1149 = vmatprep.subr.mxu0 0.0
    %1150 = vmatpush1.msra.mxu0 0.0
    %1151 = vmatprep.subr.mxu0 0.0
    %1152 = vmatpush1.msra.mxu0 0.0
    %1153 = vmatprep.subr.mxu0 0.0
    %1154 = vmatpush1.msra.mxu0 0.0
    %1155 = vmatprep.subr.mxu0 0.0
    %1156 = vmatpush1.msra.mxu0 0.0
    %1157 = vmatprep.subr.mxu0 0.0
    %1158 = vmatpush1.msra.mxu0 0.0
    %1159 = vmatprep.subr.mxu0 0.0
    %1160 = vmatpush1.msra.mxu0 0.0
    %1161 = vmatprep.subr.mxu0 0.0
    %1162 = vmatpush1.msra.mxu0 0.0
    %1163 = vmatprep.subr.mxu0 0.0
    %1164 = vmatpush1.msra.mxu0 0.0
    %1165 = vmatprep.subr.mxu0 0.0
    %1166 = vmatpush1.msra.mxu0 0.0
    %1167 = vmatprep.subr.mxu0 0.0
    %1168 = vmatpush1.msra.mxu0 0.0
    %1169 = vmatprep.subr.mxu0 0.0
    %1170 = vmatpush1.msra.mxu0 0.0
    %1171 = vmatprep.subr.mxu0 0.0
    %1172 = vmatpush1.msra.mxu0 0.0
    %1173 = vmatprep.subr.mxu0 0.0
    %1174 = vmatpush1.msra.mxu0 0.0
    %1175 = vmatprep.mubr.f32.mxu0 0.0
    %1176 = vmatmul.mubr.f32.gmra.mrb[0].mxu0 %v1109
    %v1177 = vpop.f32.mrb[0].mxu0
    %v1178 = vadd.f32 %v1106, %v1177
    %v1179 = vpop.f32.mrb[0].mxu0
    %v1180 = vadd.f32 %v1106, %v1179
    %1181 = vdwg.mxu0
    %v1182 = vmul.f32 %v1178, 0.5
    %v1183 = vmul.f32 %v1180, 0.5
    %v1184 = vmul.f32 %v1178, 0.70710677
    %v1185 = vmul.f32 %v1180, 0.70710677
    %vm1186 = vcmp.ge.f32.partialorder %v1184, 0.0
    %vm1187 = vcmp.ge.f32.partialorder %v1185, 0.0
    %v1188 = vsel %vm1186, 1.0, -1.0
    %v1189 = vsel %vm1187, 1.0, -1.0
    %v1190 = vand.u32 2147483647, %v1184
    %v1191 = vand.u32 2147483647, %v1185
    %v1192 = vmul.f32 %v1190, 0.3275911
    %v1193 = vmul.f32 %v1191, 0.3275911
    %v1194 = vadd.f32 %v1192, 1.0
    %v1195 = vadd.f32 %v1193, 1.0
    %v1196 = vrcp.pop %v1194
    %v1197 = vmul.f32 1.0, %v1196
    %v1198 = vrcp.pop %v1195
    %v1199 = vmul.f32 1.0, %v1198
    %v1200 = vmul.f32 %v1197, 1.0614054
    %v1201 = vmul.f32 %v1199, 1.0614054
    %v1202 = vadd.f32 %v1200, -1.4531521
    %v1203 = vadd.f32 %v1201, -1.4531521
    %v1204 = vmul.f32 %v1202, %v1197
    %v1205 = vmul.f32 %v1203, %v1199
    %v1206 = vadd.f32 %v1204, 1.4214138
    %v1207 = vadd.f32 %v1205, 1.4214138
    %v1208 = vmul.f32 %v1206, %v1197
    %v1209 = vmul.f32 %v1207, %v1199
    %v1210 = vadd.f32 %v1208, -0.28449672
    %v1211 = vadd.f32 %v1209, -0.28449672
    %v1212 = vmul.f32 %v1210, %v1197
    %v1213 = vmul.f32 %v1211, %v1199
    %v1214 = vadd.f32 %v1212, 0.2548296
    %v1215 = vadd.f32 %v1213, 0.2548296
    %v1216 = vmul.f32 %v1214, %v1197
    %v1217 = vmul.f32 %v1215, %v1199
    %v1218 = vsub.f32 0.0, %v1190
    %v1219 = vsub.f32 0.0, %v1191
    %v1220 = vmul.f32 %v1218, %v1190
    %v1221 = vmul.f32 %v1219, %v1191
    %v1222 = vmul.f32 %v1220, 1.442695
    %v1223 = vpow.pop %v1222
    %v1224 = vmul.f32 %v1221, 1.442695
    %v1225 = vpow.pop %v1224
    %v1226 = vmul.f32 %v1216, %v1223
    %v1227 = vmul.f32 %v1217, %v1225
    %v1228 = vsub.f32 1.0, %v1226
    %v1229 = vsub.f32 1.0, %v1227
    %v1230 = vmul.f32 %v1188, %v1228
    %v1231 = vmul.f32 %v1189, %v1229
    %v1232 = vadd.f32 %v1230, 1.0
    %v1233 = vadd.f32 %v1231, 1.0
    %v1234 = vmul.f32 %v1182, %v1232
    %v1235 = vmul.f32 %v1183, %v1233
    %1237 = vrot.lane.b32.xlu0 %v1235, 74
    %v1238 = vpop.permute.xlu0 %1237
    %1241 = vrot.lane.b32.xlu0 %v1234, 14
    %v1242 = vpop.permute.xlu0 %1241
    %1243 = vrot.lane.b32.xlu0 %v1235, 14
    %v1244 = vpop.permute.xlu0 %1243
    %v1245 = vsel %vm90, %v1242, %v1244
    %v1248 = vsel %vm90, %v1238, %v1242
    %1249 = vrot.lane.b32.xlu0 %v1235, 88
    %v1250 = vpop.permute.xlu0 %1249
    %1252 = vrot.lane.b32.xlu0 %v1234, 28
    %v1253 = vpop.permute.xlu0 %1252
    %1254 = vrot.lane.b32.xlu0 %v1235, 28
    %v1255 = vpop.permute.xlu0 %1254
    %v1256 = vsel %vm92, %v1253, %v1255
    %v1259 = vsel %vm92, %v1250, %v1253
    %1260 = vrot.lane.b32.xlu0 %v1235, 102
    %v1261 = vpop.permute.xlu0 %1260
    %1263 = vrot.lane.b32.xlu0 %v1234, 42
    %v1264 = vpop.permute.xlu0 %1263
    %1265 = vrot.lane.b32.xlu0 %v1235, 42
    %v1266 = vpop.permute.xlu0 %1265
    %v1267 = vsel %vm94, %v1264, %v1266
    %v1270 = vsel %vm94, %v1261, %v1264
    %1271 = vrot.lane.b32.xlu0 %v1235, 116
    %v1272 = vpop.permute.xlu0 %1271
    %1274 = vrot.lane.b32.xlu0 %v1234, 56
    %v1275 = vpop.permute.xlu0 %1274
    %1276 = vrot.lane.b32.xlu0 %v1235, 56
    %v1277 = vpop.permute.xlu0 %1276
    %v1278 = vsel %vm96, %v1275, %v1277
    %v1281 = vsel %vm96, %v1272, %v1275
    %1282 = vrot.lane.b32.xlu0 %v1234, 2
    %v1283 = vpop.permute.xlu0 %1282
    %1284 = vrot.lane.b32.xlu0 %v1235, 2
    %v1285 = vpop.permute.xlu0 %1284
    %v1286 = vsel %vm216, %v1283, %v1285
    %1288 = vrot.lane.b32.xlu0 %v1234, 70
    %v1289 = vpop.permute.xlu0 %1288
    %v1291 = vsel %vm98, %v1286, %v1289
    %1292 = vrot.lane.b32.xlu0 %v1234, 16
    %v1293 = vpop.permute.xlu0 %1292
    %1294 = vrot.lane.b32.xlu0 %v1235, 16
    %v1295 = vpop.permute.xlu0 %1294
    %v1296 = vsel %vm227, %v1293, %v1295
    %1298 = vrot.lane.b32.xlu0 %v1234, 84
    %v1299 = vpop.permute.xlu0 %1298
    %v1301 = vsel %vm100, %v1296, %v1299
    %1302 = vrot.lane.b32.xlu0 %v1234, 30
    %v1303 = vpop.permute.xlu0 %1302
    %1304 = vrot.lane.b32.xlu0 %v1235, 30
    %v1305 = vpop.permute.xlu0 %1304
    %v1306 = vsel %vm238, %v1303, %v1305
    %1308 = vrot.lane.b32.xlu0 %v1234, 98
    %v1309 = vpop.permute.xlu0 %1308
    %v1311 = vsel %vm102, %v1306, %v1309
    %v1312 = vsel %vm245, %v1234, %v1248
    %v1313 = vsel %vm245, %v1235, %v1245
    %v1314 = vsel %vm248, %v1312, %v1259
    %v1315 = vsel %vm248, %v1313, %v1256
    %v1316 = vsel %vm251, %v1314, %v1270
    %v1317 = vsel %vm251, %v1315, %v1267
    %v1318 = vsel %vm254, %v1316, %v1281
    %v1319 = vsel %vm254, %v1317, %v1278
    %v1320 = vsel %vm257, %v1318, %v1291
    %v1321 = vsel %vm257, %v1319, %v1289
    %v1322 = vsel %vm260, %v1320, %v1301
    %v1323 = vsel %vm260, %v1321, %v1299
    %v1324 = vsel %vm263, %v1322, %v1311
    %v1325 = vsel %vm263, %v1323, %v1309
    %1327 = vset.pattern.permute.xlu0 0
    %1328 = vperm.xlu0 %1327, %v137
    %v1329 = vpop.permute.xlu0 %1328
    %v1332 = vsel %vm271, %v122, 0
    %1334 = vmatprep.subr.mxu0 %v1325
    %1335 = vmatpush1.msra.mxu0 %v1324
    %1336 = vmatprep.subr.mxu0 0.0
    %1337 = vmatpush1.msra.mxu0 0.0
    %1338 = vmatprep.subr.mxu0 0.0
    %1339 = vmatpush1.msra.mxu0 0.0
    %1340 = vmatprep.subr.mxu0 0.0
    %1341 = vmatpush1.msra.mxu0 0.0
    %1342 = vmatprep.subr.mxu0 0.0
    %1343 = vmatpush1.msra.mxu0 0.0
    %1344 = vmatprep.subr.mxu0 0.0
    %1345 = vmatpush1.msra.mxu0 0.0
    %1346 = vmatprep.subr.mxu0 0.0
    %1347 = vmatpush1.msra.mxu0 0.0
    %1348 = vmatprep.subr.mxu0 0.0
    %1349 = vmatpush1.msra.mxu0 0.0
    %1350 = vmatprep.subr.mxu0 0.0
    %1351 = vmatpush1.msra.mxu0 0.0
    %1352 = vmatprep.subr.mxu0 0.0
    %1353 = vmatpush1.msra.mxu0 0.0
    %1354 = vmatprep.subr.mxu0 0.0
    %1355 = vmatpush1.msra.mxu0 0.0
    %1356 = vmatprep.subr.mxu0 0.0
    %1357 = vmatpush1.msra.mxu0 0.0
    %1358 = vmatprep.subr.mxu0 0.0
    %1359 = vmatpush1.msra.mxu0 0.0
    %1360 = vmatprep.subr.mxu0 0.0
    %1361 = vmatpush1.msra.mxu0 0.0
    %1362 = vmatprep.subr.mxu0 0.0
    %1363 = vmatpush1.msra.mxu0 0.0
    %1364 = vmatprep.subr.mxu0 0.0
    %1365 = vmatpush1.msra.mxu0 0.0
    %1366 = vmatprep.subr.mxu0 0.0
    %1367 = vmatpush1.msra.mxu0 0.0
    %1368 = vmatprep.subr.mxu0 0.0
    %1369 = vmatpush1.msra.mxu0 0.0
    %1370 = vmatprep.subr.mxu0 0.0
    %1371 = vmatpush1.msra.mxu0 0.0
    %1372 = vmatprep.subr.mxu0 0.0
    %1373 = vmatpush1.msra.mxu0 0.0
    %1374 = vmatprep.subr.mxu0 0.0
    %1375 = vmatpush1.msra.mxu0 0.0
    %1376 = vmatprep.subr.mxu0 0.0
    %1377 = vmatpush1.msra.mxu0 0.0
    %1378 = vmatprep.subr.mxu0 0.0
    %1379 = vmatpush1.msra.mxu0 0.0
    %1380 = vmatprep.subr.mxu0 0.0
    %1381 = vmatpush1.msra.mxu0 0.0
    %1382 = vmatprep.subr.mxu0 0.0
    %1383 = vmatpush1.msra.mxu0 0.0
    %1384 = vmatprep.subr.mxu0 0.0
    %1385 = vmatpush1.msra.mxu0 0.0
    %1386 = vmatprep.subr.mxu0 0.0
    %1387 = vmatpush1.msra.mxu0 0.0
    %1388 = vmatprep.subr.mxu0 0.0
    %1389 = vmatpush1.msra.mxu0 0.0
    %1390 = vmatprep.subr.mxu0 0.0
    %1391 = vmatpush1.msra.mxu0 0.0
    %1392 = vmatprep.subr.mxu0 0.0
    %1393 = vmatpush1.msra.mxu0 0.0
    %1394 = vmatprep.subr.mxu0 0.0
    %1395 = vmatpush1.msra.mxu0 0.0
    %1396 = vmatprep.subr.mxu0 0.0
    %1397 = vmatpush1.msra.mxu0 0.0
    %1398 = vmatprep.mubr.f32.mxu0 0.0
    %1399 = vmatmul.mubr.f32.gmra.mrb[0].mxu0 %v1332
    %v1400 = vpop.f32.mrb[0].mxu0
    %v1401 = vadd.f32 %v1329, %v1400
    %v1402 = vpop.f32.mrb[0].mxu0
    %v1403 = vadd.f32 %v1329, %v1402
    %1404 = vdwg.mxu0
    %v1405 = vadd.f32 %v1401, %v164
    %v1406 = vadd.f32 %v1403, %v165
    %v1407 = vrot.slane %v794, 4
    %v1408 = vadd.f32 %v794, %v1407
    %v1409 = vrot.slane %v1408, 2
    %v1410 = vadd.f32 %v1408, %v1409
    %v1411 = vrot.slane %v1410, 1
    %v1412 = vadd.f32 %v1410, %v1411
    %vm1413 = vcmask 556032
    %v1414 = vsel %vm1413, %v795, 0.0
    %v1415 = vrot.slane %v1414, 4
    %v1416 = vadd.f32 %v1414, %v1415
    %v1417 = vrot.slane %v1416, 2
    %v1418 = vadd.f32 %v1416, %v1417
    %v1419 = vrot.slane %v1418, 1
    %v1420 = vadd.f32 %v1418, %v1419
    %v1421 = vrot.slane %v1405, 4
    %v1422 = vadd.f32 %v1405, %v1421
    %v1423 = vrot.slane %v1422, 2
    %v1424 = vadd.f32 %v1422, %v1423
    %v1425 = vrot.slane %v1424, 1
    %v1426 = vadd.f32 %v1424, %v1425
    %v1427 = vsel %vm1413, %v1406, 0.0
    %v1428 = vrot.slane %v1427, 4
    %v1429 = vadd.f32 %v1427, %v1428
    %v1430 = vrot.slane %v1429, 2
    %v1431 = vadd.f32 %v1429, %v1430
    %v1432 = vrot.slane %v1431, 1
    %v1433 = vadd.f32 %v1431, %v1432
    %v1434 = vadd.f32 %v1412, %v1426
    %v1435 = vadd.f32 %v1420, %v1433
    %v1436 = vrcp.pop 16.0
    %v1437 = vmul.f32 %v1434, %v1436
    %v1438 = vmul.f32 %v1435, %v1436
    %v1439 = vsub.f32 %v794, %v1437
    %v1440 = vsub.f32 %v795, %v1438
    %v1441 = vmul.f32 %v1439, %v1439
    %v1442 = vmul.f32 %v1440, %v1440
    %v1443 = vrot.slane %v1441, 4
    %v1444 = vadd.f32 %v1441, %v1443
    %v1445 = vrot.slane %v1444, 2
    %v1446 = vadd.f32 %v1444, %v1445
    %v1447 = vrot.slane %v1446, 1
    %v1448 = vadd.f32 %v1446, %v1447
    %v1449 = vsel %vm1413, %v1442, 0.0
    %v1450 = vrot.slane %v1449, 4
    %v1451 = vadd.f32 %v1449, %v1450
    %v1452 = vrot.slane %v1451, 2
    %v1453 = vadd.f32 %v1451, %v1452
    %v1454 = vrot.slane %v1453, 1
    %v1455 = vadd.f32 %v1453, %v1454
    %v1456 = vsub.f32 %v1405, %v1437
    %v1457 = vsub.f32 %v1406, %v1438
    %v1458 = vmul.f32 %v1456, %v1456
    %v1459 = vmul.f32 %v1457, %v1457
    %v1460 = vrot.slane %v1458, 4
    %v1461 = vadd.f32 %v1458, %v1460
    %v1462 = vrot.slane %v1461, 2
    %v1463 = vadd.f32 %v1461, %v1462
    %v1464 = vrot.slane %v1463, 1
    %v1465 = vadd.f32 %v1463, %v1464
    %v1466 = vsel %vm1413, %v1459, 0.0
    %v1467 = vrot.slane %v1466, 4
    %v1468 = vadd.f32 %v1466, %v1467
    %v1469 = vrot.slane %v1468, 2
    %v1470 = vadd.f32 %v1468, %v1469
    %v1471 = vrot.slane %v1470, 1
    %v1472 = vadd.f32 %v1470, %v1471
    %v1473 = vadd.f32 %v1448, %v1465
    %v1474 = vadd.f32 %v1455, %v1472
    %v1475 = vmul.f32 %v1473, %v1436
    %v1476 = vmul.f32 %v1474, %v1436
    %v1477 = vadd.f32 %v1475, 1e-05
    %v1478 = vadd.f32 %v1476, 1e-05
    %v1479 = vrsqrt.pop %v1477
    %v1480 = vrsqrt.pop %v1478
    %v1481 = vmul.f32 %v1439, %v1479
    %v1482 = vmul.f32 %v1440, %v1480
    %1484 = vset.pattern.permute.xlu0 0
    %1485 = vperm.xlu0 %1484, %v143
    %v1486 = vpop.permute.xlu0 %1485
    %v1488 = vmul.f32 %v1481, %v1486
    %v1489 = vmul.f32 %v1482, %v1486
    %1491 = vset.pattern.permute.xlu0 0
    %1492 = vperm.xlu0 %1491, %v147
    %v1493 = vpop.permute.xlu0 %1492
    %v1495 = vadd.f32 %v1488, %v1493
    %v1496 = vadd.f32 %v1489, %v1493
    %v1497 = vmul.f32 %v1456, %v1479
    %v1498 = vmul.f32 %v1457, %v1480
    %1500 = vset.pattern.permute.xlu0 0
    %1501 = vperm.xlu0 %1500, %v145
    %v1502 = vpop.permute.xlu0 %1501
    %v1504 = vmul.f32 %v1497, %v1502
    %v1505 = vmul.f32 %v1498, %v1502
    %1507 = vset.pattern.permute.xlu0 0
    %1508 = vperm.xlu0 %1507, %v149
    %v1509 = vpop.permute.xlu0 %1508
    %v1511 = vadd.f32 %v1504, %v1509
    %v1512 = vadd.f32 %v1505, %v1509
    %v1514 = vsel %vm271, %v126, 0
    %1516 = vmatprep.subr.mxu0 %v1512
    %1517 = vmatpush1.msra.mxu0 %v1511
    %1518 = vmatprep.subr.mxu0 0.0
    %1519 = vmatpush1.msra.mxu0 0.0
    %1520 = vmatprep.subr.mxu0 0.0
    %1521 = vmatpush1.msra.mxu0 0.0
    %1522 = vmatprep.subr.mxu0 0.0
    %1523 = vmatpush1.msra.mxu0 0.0
    %1524 = vmatprep.subr.mxu0 0.0
    %1525 = vmatpush1.msra.mxu0 0.0
    %1526 = vmatprep.subr.mxu0 0.0
    %1527 = vmatpush1.msra.mxu0 0.0
    %1528 = vmatprep.subr.mxu0 0.0
    %1529 = vmatpush1.msra.mxu0 0.0
    %1530 = vmatprep.subr.mxu0 0.0
    %1531 = vmatpush1.msra.mxu0 0.0
    %1532 = vmatprep.subr.mxu0 0.0
    %1533 = vmatpush1.msra.mxu0 0.0
    %1534 = vmatprep.subr.mxu0 0.0
    %1535 = vmatpush1.msra.mxu0 0.0
    %1536 = vmatprep.subr.mxu0 0.0
    %1537 = vmatpush1.msra.mxu0 0.0
    %1538 = vmatprep.subr.mxu0 0.0
    %1539 = vmatpush1.msra.mxu0 0.0
    %1540 = vmatprep.subr.mxu0 0.0
    %1541 = vmatpush1.msra.mxu0 0.0
    %1542 = vmatprep.subr.mxu0 0.0
    %1543 = vmatpush1.msra.mxu0 0.0
    %1544 = vmatprep.subr.mxu0 0.0
    %1545 = vmatpush1.msra.mxu0 0.0
    %1546 = vmatprep.subr.mxu0 0.0
    %1547 = vmatpush1.msra.mxu0 0.0
    %1548 = vmatprep.subr.mxu0 0.0
    %1549 = vmatpush1.msra.mxu0 0.0
    %1550 = vmatprep.subr.mxu0 0.0
    %1551 = vmatpush1.msra.mxu0 0.0
    %1552 = vmatprep.subr.mxu0 0.0
    %1553 = vmatpush1.msra.mxu0 0.0
    %1554 = vmatprep.subr.mxu0 0.0
    %1555 = vmatpush1.msra.mxu0 0.0
    %1556 = vmatprep.subr.mxu0 0.0
    %1557 = vmatpush1.msra.mxu0 0.0
    %1558 = vmatprep.subr.mxu0 0.0
    %1559 = vmatpush1.msra.mxu0 0.0
    %1560 = vmatprep.subr.mxu0 0.0
    %1561 = vmatpush1.msra.mxu0 0.0
    %1562 = vmatprep.subr.mxu0 0.0
    %1563 = vmatpush1.msra.mxu0 0.0
    %1564 = vmatprep.subr.mxu0 0.0
    %1565 = vmatpush1.msra.mxu0 0.0
    %1566 = vmatprep.subr.mxu0 0.0
    %1567 = vmatpush1.msra.mxu0 0.0
    %1568 = vmatprep.subr.mxu0 0.0
    %1569 = vmatpush1.msra.mxu0 0.0
    %1570 = vmatprep.subr.mxu0 0.0
    %1571 = vmatpush1.msra.mxu0 0.0
    %1572 = vmatprep.subr.mxu0 0.0
    %1573 = vmatpush1.msra.mxu0 0.0
    %1574 = vmatprep.subr.mxu0 0.0
    %1575 = vmatpush1.msra.mxu0 0.0
    %1576 = vmatprep.subr.mxu0 0.0
    %1577 = vmatpush1.msra.mxu0 0.0
    %1578 = vmatprep.subr.mxu0 0.0
    %1579 = vmatpush1.msra.mxu0 0.0
    %1580 = vmatprep.mubr.f32.mxu0 0.0
    %1581 = vmatmul.mubr.f32.gmra.mrb[0].mxu0 %v1514
    %v1582 = vpop.f32.mrb[0].mxu0
    %v1583 = vadd.f32 0.0, %v1582
    %v1584 = vpop.f32.mrb[0].mxu0
    %v1585 = vadd.f32 0.0, %v1584
    %1586 = vdwg.mxu0
    %v1588 = vsel %vm271, %v124, 0
    %1590 = vmatprep.subr.mxu0 %v1496
    %1591 = vmatpush1.msra.mxu0 %v1495
    %1592 = vmatprep.subr.mxu0 0.0
    %1593 = vmatpush1.msra.mxu0 0.0
    %1594 = vmatprep.subr.mxu0 0.0
    %1595 = vmatpush1.msra.mxu0 0.0
    %1596 = vmatprep.subr.mxu0 0.0
    %1597 = vmatpush1.msra.mxu0 0.0
    %1598 = vmatprep.subr.mxu0 0.0
    %1599 = vmatpush1.msra.mxu0 0.0
    %1600 = vmatprep.subr.mxu0 0.0
    %1601 = vmatpush1.msra.mxu0 0.0
    %1602 = vmatprep.subr.mxu0 0.0
    %1603 = vmatpush1.msra.mxu0 0.0
    %1604 = vmatprep.subr.mxu0 0.0
    %1605 = vmatpush1.msra.mxu0 0.0
    %1606 = vmatprep.subr.mxu0 0.0
    %1607 = vmatpush1.msra.mxu0 0.0
    %1608 = vmatprep.subr.mxu0 0.0
    %1609 = vmatpush1.msra.mxu0 0.0
    %1610 = vmatprep.subr.mxu0 0.0
    %1611 = vmatpush1.msra.mxu0 0.0
    %1612 = vmatprep.subr.mxu0 0.0
    %1613 = vmatpush1.msra.mxu0 0.0
    %1614 = vmatprep.subr.mxu0 0.0
    %1615 = vmatpush1.msra.mxu0 0.0
    %1616 = vmatprep.subr.mxu0 0.0
    %1617 = vmatpush1.msra.mxu0 0.0
    %1618 = vmatprep.subr.mxu0 0.0
    %1619 = vmatpush1.msra.mxu0 0.0
    %1620 = vmatprep.subr.mxu0 0.0
    %1621 = vmatpush1.msra.mxu0 0.0
    %1622 = vmatprep.subr.mxu0 0.0
    %1623 = vmatpush1.msra.mxu0 0.0
    %1624 = vmatprep.subr.mxu0 0.0
    %1625 = vmatpush1.msra.mxu0 0.0
    %1626 = vmatprep.subr.mxu0 0.0
    %1627 = vmatpush1.msra.mxu0 0.0
    %1628 = vmatprep.subr.mxu0 0.0
    %1629 = vmatpush1.msra.mxu0 0.0
    %1630 = vmatprep.subr.mxu0 0.0
    %1631 = vmatpush1.msra.mxu0 0.0
    %1632 = vmatprep.subr.mxu0 0.0
    %1633 = vmatpush1.msra.mxu0 0.0
    %1634 = vmatprep.subr.mxu0 0.0
    %1635 = vmatpush1.msra.mxu0 0.0
    %1636 = vmatprep.subr.mxu0 0.0
    %1637 = vmatpush1.msra.mxu0 0.0
    %1638 = vmatprep.subr.mxu0 0.0
    %1639 = vmatpush1.msra.mxu0 0.0
    %1640 = vmatprep.subr.mxu0 0.0
    %1641 = vmatpush1.msra.mxu0 0.0
    %1642 = vmatprep.subr.mxu0 0.0
    %1643 = vmatpush1.msra.mxu0 0.0
    %1644 = vmatprep.subr.mxu0 0.0
    %1645 = vmatpush1.msra.mxu0 0.0
    %1646 = vmatprep.subr.mxu0 0.0
    %1647 = vmatpush1.msra.mxu0 0.0
    %1648 = vmatprep.subr.mxu0 0.0
    %1649 = vmatpush1.msra.mxu0 0.0
    %1650 = vmatprep.subr.mxu0 0.0
    %1651 = vmatpush1.msra.mxu0 0.0
    %1652 = vmatprep.subr.mxu0 0.0
    %1653 = vmatpush1.msra.mxu0 0.0
    %1654 = vmatprep.mubr.f32.mxu0 0.0
    %1655 = vmatmul.mubr.f32.gmra.mrb[0].mxu0 %v1588
    %v1656 = vpop.f32.mrb[0].mxu0
    %v1657 = vadd.f32 %v1583, %v1656
    %v1658 = vpop.f32.mrb[0].mxu0
    %v1659 = vadd.f32 %v1585, %v1658
    %1660 = vdwg.mxu0
    %1662 = vset.pattern.permute.xlu0 0
    %1663 = vperm.xlu0 %1662, %v139
    %v1664 = vpop.permute.xlu0 %1663
    %v1666 = vadd.f32 %v1657, %v1664
    %v1667 = vadd.f32 %v1659, %v1664
    %v1668 = vadd.f32 %v1666, %v164
    %v1669 = vadd.f32 %v1667, %v165
    %1671 = vset.pattern.permute.xlu0 0
    %1672 = vperm.xlu0 %1671, %v161
    %v1673 = vpop.permute.xlu0 %1672
    %1676 = vset.pattern.permute.xlu0 0
    %1677 = vperm.xlu0 %1676, %v162
    %v1678 = vpop.permute.xlu0 %1677
    %1681 = vset.pattern.permute.xlu0 0
    %1682 = vperm.xlu0 %1681, %v163
    %v1683 = vpop.permute.xlu0 %1682
    %v1686 = vsel %vm271, %v158, 0
    %v1689 = vsel %vm271, %v159, 0
    %v1692 = vsel %vm271, %v160, 0
    %1694 = vmatprep.subr.mxu0 %v165
    %1695 = vmatpush1.msra.mxu0 %v164
    %1696 = vmatprep.subr.mxu0 0.0
    %1697 = vmatpush1.msra.mxu0 0.0
    %1698 = vmatprep.subr.mxu0 0.0
    %1699 = vmatpush1.msra.mxu0 0.0
    %1700 = vmatprep.subr.mxu0 0.0
    %1701 = vmatpush1.msra.mxu0 0.0
    %1702 = vmatprep.subr.mxu0 0.0
    %1703 = vmatpush1.msra.mxu0 0.0
    %1704 = vmatprep.subr.mxu0 0.0
    %1705 = vmatpush1.msra.mxu0 0.0
    %1706 = vmatprep.subr.mxu0 0.0
    %1707 = vmatpush1.msra.mxu0 0.0
    %1708 = vmatprep.subr.mxu0 0.0
    %1709 = vmatpush1.msra.mxu0 0.0
    %1710 = vmatprep.subr.mxu0 0.0
    %1711 = vmatpush1.msra.mxu0 0.0
    %1712 = vmatprep.subr.mxu0 0.0
    %1713 = vmatpush1.msra.mxu0 0.0
    %1714 = vmatprep.subr.mxu0 0.0
    %1715 = vmatpush1.msra.mxu0 0.0
    %1716 = vmatprep.subr.mxu0 0.0
    %1717 = vmatpush1.msra.mxu0 0.0
    %1718 = vmatprep.subr.mxu0 0.0
    %1719 = vmatpush1.msra.mxu0 0.0
    %1720 = vmatprep.subr.mxu0 0.0
    %1721 = vmatpush1.msra.mxu0 0.0
    %1722 = vmatprep.subr.mxu0 0.0
    %1723 = vmatpush1.msra.mxu0 0.0
    %1724 = vmatprep.subr.mxu0 0.0
    %1725 = vmatpush1.msra.mxu0 0.0
    %1726 = vmatprep.subr.mxu0 0.0
    %1727 = vmatpush1.msra.mxu0 0.0
    %1728 = vmatprep.subr.mxu0 0.0
    %1729 = vmatpush1.msra.mxu0 0.0
    %1730 = vmatprep.subr.mxu0 0.0
    %1731 = vmatpush1.msra.mxu0 0.0
    %1732 = vmatprep.subr.mxu0 0.0
    %1733 = vmatpush1.msra.mxu0 0.0
    %1734 = vmatprep.subr.mxu0 0.0
    %1735 = vmatpush1.msra.mxu0 0.0
    %1736 = vmatprep.subr.mxu0 0.0
    %1737 = vmatpush1.msra.mxu0 0.0
    %1738 = vmatprep.subr.mxu0 0.0
    %1739 = vmatpush1.msra.mxu0 0.0
    %1740 = vmatprep.subr.mxu0 0.0
    %1741 = vmatpush1.msra.mxu0 0.0
    %1742 = vmatprep.subr.mxu0 0.0
    %1743 = vmatpush1.msra.mxu0 0.0
    %1744 = vmatprep.subr.mxu0 0.0
    %1745 = vmatpush1.msra.mxu0 0.0
    %1746 = vmatprep.subr.mxu0 0.0
    %1747 = vmatpush1.msra.mxu0 0.0
    %1748 = vmatprep.subr.mxu0 0.0
    %1749 = vmatpush1.msra.mxu0 0.0
    %1750 = vmatprep.subr.mxu0 0.0
    %1751 = vmatpush1.msra.mxu0 0.0
    %1752 = vmatprep.subr.mxu0 0.0
    %1753 = vmatpush1.msra.mxu0 0.0
    %1754 = vmatprep.subr.mxu0 0.0
    %1755 = vmatpush1.msra.mxu0 0.0
    %1756 = vmatprep.subr.mxu0 0.0
    %1757 = vmatpush1.msra.mxu0 0.0
    %1758 = vmatprep.mubr.f32.mxu0 0.0
    %1759 = vmatmul.mubr.f32.gmra.mrb[0].mxu0 %v1686
    %v1760 = vpop.f32.mrb[0].mxu0
    %v1761 = vadd.f32 %v1673, %v1760
    %v1762 = vpop.f32.mrb[0].mxu0
    %v1763 = vadd.f32 %v1673, %v1762
    %1764 = vmatprep.mubr.f32.mxu0 0.0
    %1765 = vmatmul.mubr.f32.gmra.mrb[0].mxu0 %v1689
    %v1766 = vpop.f32.mrb[0].mxu0
    %v1767 = vadd.f32 %v1678, %v1766
    %v1768 = vpop.f32.mrb[0].mxu0
    %v1769 = vadd.f32 %v1678, %v1768
    %1770 = vmatprep.mubr.f32.mxu0 0.0
    %1771 = vmatmul.mubr.f32.gmra.mrb[0].mxu0 %v1692
    %v1772 = vpop.f32.mrb[0].mxu0
    %v1773 = vadd.f32 %v1683, %v1772
    %v1774 = vpop.f32.mrb[0].mxu0
    %v1775 = vadd.f32 %v1683, %v1774
    %1776 = vdwg.mxu0
    %1780 = vrot.lane.b32.xlu0 %v1761, 121
    %v1781 = vpop.permute.xlu0 %1780
    %1782 = vrot.lane.b32.xlu0 %v1767, 121
    %v1783 = vpop.permute.xlu0 %1782
    %1784 = vrot.lane.b32.xlu0 %v1773, 121
    %v1785 = vpop.permute.xlu0 %1784
    %1789 = vrot.lane.b32.xlu0 %v1761, 114
    %v1790 = vpop.permute.xlu0 %1789
    %1791 = vrot.lane.b32.xlu0 %v1767, 114
    %v1792 = vpop.permute.xlu0 %1791
    %1793 = vrot.lane.b32.xlu0 %v1773, 114
    %v1794 = vpop.permute.xlu0 %1793
    %1798 = vrot.lane.b32.xlu0 %v1761, 107
    %v1799 = vpop.permute.xlu0 %1798
    %1800 = vrot.lane.b32.xlu0 %v1767, 107
    %v1801 = vpop.permute.xlu0 %1800
    %1802 = vrot.lane.b32.xlu0 %v1773, 107
    %v1803 = vpop.permute.xlu0 %1802
    %1807 = vrot.lane.b32.xlu0 %v1761, 100
    %v1808 = vpop.permute.xlu0 %1807
    %1809 = vrot.lane.b32.xlu0 %v1767, 100
    %v1810 = vpop.permute.xlu0 %1809
    %1811 = vrot.lane.b32.xlu0 %v1773, 100
    %v1812 = vpop.permute.xlu0 %1811
    %1816 = vrot.lane.b32.xlu0 %v1761, 93
    %v1817 = vpop.permute.xlu0 %1816
    %1818 = vrot.lane.b32.xlu0 %v1767, 93
    %v1819 = vpop.permute.xlu0 %1818
    %1820 = vrot.lane.b32.xlu0 %v1773, 93
    %v1821 = vpop.permute.xlu0 %1820
    %1825 = vrot.lane.b32.xlu0 %v1761, 86
    %v1826 = vpop.permute.xlu0 %1825
    %1827 = vrot.lane.b32.xlu0 %v1767, 86
    %v1828 = vpop.permute.xlu0 %1827
    %1829 = vrot.lane.b32.xlu0 %v1773, 86
    %v1830 = vpop.permute.xlu0 %1829
    %v1834 = vsel %vm629, %v1761, %v1781
    %v1835 = vsel %vm629, %v1767, %v1783
    %v1836 = vsel %vm629, %v1773, %v1785
    %v1837 = vsel %vm90, %v1834, %v1790
    %v1838 = vsel %vm90, %v1835, %v1792
    %v1839 = vsel %vm90, %v1836, %v1794
    %vm1840 = vcmask 171008
    %v1841 = vsel %vm1840, %v1837, %v1799
    %v1842 = vsel %vm1840, %v1838, %v1801
    %v1843 = vsel %vm1840, %v1839, %v1803
    %v1844 = vsel %vm92, %v1841, %v1808
    %v1845 = vsel %vm92, %v1842, %v1810
    %v1846 = vsel %vm92, %v1843, %v1812
    %vm1847 = vcmask 285696
    %v1848 = vsel %vm1847, %v1844, %v1817
    %v1849 = vsel %vm1847, %v1845, %v1819
    %v1850 = vsel %vm1847, %v1846, %v1821
    %v1851 = vsel %vm94, %v1848, %v1826
    %v1852 = vsel %vm94, %v1849, %v1828
    %v1853 = vsel %vm94, %v1850, %v1830
    %1854 = vxpose.xlu0.b32.start [1/16] %v1851, 128
    %1855 = vxpose.xlu0.b32.cont [2/16] 0.0, 128
    %1856 = vxpose.xlu0.b32.cont [3/16] 0.0, 128
    %1857 = vxpose.xlu0.b32.cont [4/16] 0.0, 128
    %1858 = vxpose.xlu0.b32.cont [5/16] 0.0, 128
    %1859 = vxpose.xlu0.b32.cont [6/16] 0.0, 128
    %1860 = vxpose.xlu0.b32.cont [7/16] 0.0, 128
    %1861 = vxpose.xlu0.b32.cont [8/16] 0.0, 128
    %1862 = vxpose.xlu0.b32.cont [9/16] 0.0, 128
    %1863 = vxpose.xlu0.b32.cont [10/16] 0.0, 128
    %1864 = vxpose.xlu0.b32.cont [11/16] 0.0, 128
    %1865 = vxpose.xlu0.b32.cont [12/16] 0.0, 128
    %1866 = vxpose.xlu0.b32.cont [13/16] 0.0, 128
    %1867 = vxpose.xlu0.b32.cont [14/16] 0.0, 128
    %1868 = vxpose.xlu0.b32.cont [15/16] 0.0, 128
    %1869 = vxpose.xlu0.b32.end [16/16] 0.0, 128
    %v1870 = vpop.trf.xlu0
    %v1871 = vpop.trf.xlu0
    %v1872 = vpop.trf.xlu0
    %v1873 = vpop.trf.xlu0
    %v1874 = vpop.trf.xlu0
    %v1875 = vpop.trf.xlu0
    %v1876 = vpop.trf.xlu0
    %v1877 = vpop.trf.xlu0
    %v1878 = vpop.trf.xlu0
    %v1879 = vpop.trf.xlu0
    %v1880 = vpop.trf.xlu0
    %v1881 = vpop.trf.xlu0
    %v1882 = vpop.trf.xlu0
    %v1883 = vpop.trf.xlu0
    %v1884 = vpop.trf.xlu0
    %v1885 = vpop.trf.xlu0
    %v1887 = vsel %vm271, %v1870, 0
    %v1890 = vsel %vm271, %v1871, 0
    %v1893 = vsel %vm271, %v1872, 0
    %v1896 = vsel %vm271, %v1873, 0
    %v1899 = vsel %vm271, %v1874, 0
    %v1902 = vsel %vm271, %v1875, 0
    %v1905 = vsel %vm271, %v1876, 0
    %1907 = vmatprep.subr.mxu0 0.0
    %1908 = vmatpush1.msra.mxu0 %v1852
    %1909 = vmatprep.subr.mxu0 0.0
    %1910 = vmatpush1.msra.mxu0 0.0
    %1911 = vmatprep.subr.mxu0 0.0
    %1912 = vmatpush1.msra.mxu0 0.0
    %1913 = vmatprep.subr.mxu0 0.0
    %1914 = vmatpush1.msra.mxu0 0.0
    %1915 = vmatprep.subr.mxu0 0.0
    %1916 = vmatpush1.msra.mxu0 0.0
    %1917 = vmatprep.subr.mxu0 0.0
    %1918 = vmatpush1.msra.mxu0 0.0
    %1919 = vmatprep.subr.mxu0 0.0
    %1920 = vmatpush1.msra.mxu0 0.0
    %1921 = vmatprep.subr.mxu0 0.0
    %1922 = vmatpush1.msra.mxu0 0.0
    %1923 = vmatprep.subr.mxu0 0.0
    %1924 = vmatpush1.msra.mxu0 0.0
    %1925 = vmatprep.subr.mxu0 0.0
    %1926 = vmatpush1.msra.mxu0 0.0
    %1927 = vmatprep.subr.mxu0 0.0
    %1928 = vmatpush1.msra.mxu0 0.0
    %1929 = vmatprep.subr.mxu0 0.0
    %1930 = vmatpush1.msra.mxu0 0.0
    %1931 = vmatprep.subr.mxu0 0.0
    %1932 = vmatpush1.msra.mxu0 0.0
    %1933 = vmatprep.subr.mxu0 0.0
    %1934 = vmatpush1.msra.mxu0 0.0
    %1935 = vmatprep.subr.mxu0 0.0
    %1936 = vmatpush1.msra.mxu0 0.0
    %1937 = vmatprep.subr.mxu0 0.0
    %1938 = vmatpush1.msra.mxu0 0.0
    %1939 = vmatprep.subr.mxu0 0.0
    %1940 = vmatpush1.msra.mxu0 0.0
    %1941 = vmatprep.subr.mxu0 0.0
    %1942 = vmatpush1.msra.mxu0 0.0
    %1943 = vmatprep.subr.mxu0 0.0
    %1944 = vmatpush1.msra.mxu0 0.0
    %1945 = vmatprep.subr.mxu0 0.0
    %1946 = vmatpush1.msra.mxu0 0.0
    %1947 = vmatprep.subr.mxu0 0.0
    %1948 = vmatpush1.msra.mxu0 0.0
    %1949 = vmatprep.subr.mxu0 0.0
    %1950 = vmatpush1.msra.mxu0 0.0
    %1951 = vmatprep.subr.mxu0 0.0
    %1952 = vmatpush1.msra.mxu0 0.0
    %1953 = vmatprep.subr.mxu0 0.0
    %1954 = vmatpush1.msra.mxu0 0.0
    %1955 = vmatprep.subr.mxu0 0.0
    %1956 = vmatpush1.msra.mxu0 0.0
    %1957 = vmatprep.subr.mxu0 0.0
    %1958 = vmatpush1.msra.mxu0 0.0
    %1959 = vmatprep.subr.mxu0 0.0
    %1960 = vmatpush1.msra.mxu0 0.0
    %1961 = vmatprep.subr.mxu0 0.0
    %1962 = vmatpush1.msra.mxu0 0.0
    %1963 = vmatprep.subr.mxu0 0.0
    %1964 = vmatpush1.msra.mxu0 0.0
    %1965 = vmatprep.subr.mxu0 0.0
    %1966 = vmatpush1.msra.mxu0 0.0
    %1967 = vmatprep.subr.mxu0 0.0
    %1968 = vmatpush1.msra.mxu0 0.0
    %1969 = vmatprep.subr.mxu0 0.0
    %1970 = vmatpush1.msra.mxu0 0.0
    %1971 = vmatprep.mubr.f32.mxu0 0.0
    %1972 = vmatmul.mubr.f32.gmra.mrb[0].mxu0 %v1887
    %v1973 = vpop.f32.mrb[0].mxu0
    %v1974 = vadd.f32 0.0, %v1973
    %v1975 = vpop.f32.mrb[0].mxu0
    %1976 = vmatprep.mubr.f32.mxu0 0.0
    %1977 = vmatmul.mubr.f32.gmra.mrb[0].mxu0 %v1890
    %v1978 = vpop.f32.mrb[0].mxu0
    %v1979 = vadd.f32 0.0, %v1978
    %v1980 = vpop.f32.mrb[0].mxu0
    %1981 = vmatprep.mubr.f32.mxu0 0.0
    %1982 = vmatmul.mubr.f32.gmra.mrb[0].mxu0 %v1893
    %v1983 = vpop.f32.mrb[0].mxu0
    %v1984 = vadd.f32 0.0, %v1983
    %v1985 = vpop.f32.mrb[0].mxu0
    %1986 = vmatprep.mubr.f32.mxu0 0.0
    %1987 = vmatmul.mubr.f32.gmra.mrb[0].mxu0 %v1896
    %v1988 = vpop.f32.mrb[0].mxu0
    %v1989 = vadd.f32 0.0, %v1988
    %v1990 = vpop.f32.mrb[0].mxu0
    %1991 = vmatprep.mubr.f32.mxu0 0.0
    %1992 = vmatmul.mubr.f32.gmra.mrb[0].mxu0 %v1899
    %v1993 = vpop.f32.mrb[0].mxu0
    %v1994 = vadd.f32 0.0, %v1993
    %v1995 = vpop.f32.mrb[0].mxu0
    %1996 = vmatprep.mubr.f32.mxu0 0.0
    %1997 = vmatmul.mubr.f32.gmra.mrb[0].mxu0 %v1902
    %v1998 = vpop.f32.mrb[0].mxu0
    %v1999 = vadd.f32 0.0, %v1998
    %v2000 = vpop.f32.mrb[0].mxu0
    %2001 = vmatprep.mubr.f32.mxu0 0.0
    %2002 = vmatmul.mubr.f32.gmra.mrb[0].mxu0 %v1905
    %v2003 = vpop.f32.mrb[0].mxu0
    %v2004 = vadd.f32 0.0, %v2003
    %v2005 = vpop.f32.mrb[0].mxu0
    %2006 = vdwg.mxu0
    %vm2007 = vcmask 400384
    %v2008 = vsel %vm2007, %v1974, -inf
    %2009 = vmax.xlane.f32.xlu0 %v2008
    %v2010 = vpop.xlane.xlu0 %2009
    %v2011 = vsel %vm2007, %v1979, -inf
    %2012 = vmax.xlane.f32.xlu0 %v2011
    %v2013 = vpop.xlane.xlu0 %2012
    %v2014 = vsel %vm2007, %v1984, -inf
    %2015 = vmax.xlane.f32.xlu0 %v2014
    %v2016 = vpop.xlane.xlu0 %2015
    %v2017 = vsel %vm2007, %v1989, -inf
    %2018 = vmax.xlane.f32.xlu0 %v2017
    %v2019 = vpop.xlane.xlu0 %2018
    %v2020 = vsel %vm2007, %v1994, -inf
    %2021 = vmax.xlane.f32.xlu0 %v2020
    %v2022 = vpop.xlane.xlu0 %2021
    %v2023 = vsel %vm2007, %v1999, -inf
    %2024 = vmax.xlane.f32.xlu0 %v2023
    %v2025 = vpop.xlane.xlu0 %2024
    %vm2026 = vcmask 393216
    %v2027 = vsel %vm2026, %v2004, -inf
    %2028 = vmax.xlane.f32.xlu0 %v2027
    %v2029 = vpop.xlane.xlu0 %2028
    %v2030 = vsub.f32 %v1974, %v2010
    %v2031 = vsub.f32 %v1979, %v2013
    %v2032 = vsub.f32 %v1984, %v2016
    %v2033 = vsub.f32 %v1989, %v2019
    %v2034 = vsub.f32 %v1994, %v2022
    %v2035 = vsub.f32 %v1999, %v2025
    %v2036 = vsub.f32 %v2004, %v2029
    %v2037 = vmul.f32 %v2030, 1.442695
    %v2038 = vpow.pop %v2037
    %v2039 = vmul.f32 %v2031, 1.442695
    %v2040 = vpow.pop %v2039
    %v2041 = vmul.f32 %v2032, 1.442695
    %v2042 = vpow.pop %v2041
    %v2043 = vmul.f32 %v2033, 1.442695
    %v2044 = vpow.pop %v2043
    %v2045 = vmul.f32 %v2034, 1.442695
    %v2046 = vpow.pop %v2045
    %v2047 = vmul.f32 %v2035, 1.442695
    %v2048 = vpow.pop %v2047
    %v2049 = vmul.f32 %v2036, 1.442695
    %v2050 = vpow.pop %v2049
    %v2051 = vsel %vm2007, %v2038, 0.0
    %2052 = vadd.xlane.f32.xlu0 %v2051
    %v2053 = vpop.xlane.xlu0 %2052
    %v2054 = vsel %vm2007, %v2040, 0.0
    %2055 = vadd.xlane.f32.xlu0 %v2054
    %v2056 = vpop.xlane.xlu0 %2055
    %v2057 = vsel %vm2007, %v2042, 0.0
    %2058 = vadd.xlane.f32.xlu0 %v2057
    %v2059 = vpop.xlane.xlu0 %2058
    %v2060 = vsel %vm2007, %v2044, 0.0
    %2061 = vadd.xlane.f32.xlu0 %v2060
    %v2062 = vpop.xlane.xlu0 %2061
    %v2063 = vsel %vm2007, %v2046, 0.0
    %2064 = vadd.xlane.f32.xlu0 %v2063
    %v2065 = vpop.xlane.xlu0 %2064
    %v2066 = vsel %vm2007, %v2048, 0.0
    %2067 = vadd.xlane.f32.xlu0 %v2066
    %v2068 = vpop.xlane.xlu0 %2067
    %v2069 = vsel %vm2026, %v2050, 0.0
    %2070 = vadd.xlane.f32.xlu0 %v2069
    %v2071 = vpop.xlane.xlu0 %2070
    %v2072 = vrcp.pop %v2053
    %v2073 = vmul.f32 %v2038, %v2072
    %v2074 = vrcp.pop %v2056
    %v2075 = vmul.f32 %v2040, %v2074
    %v2076 = vrcp.pop %v2059
    %v2077 = vmul.f32 %v2042, %v2076
    %v2078 = vrcp.pop %v2062
    %v2079 = vmul.f32 %v2044, %v2078
    %v2080 = vrcp.pop %v2065
    %v2081 = vmul.f32 %v2046, %v2080
    %v2082 = vrcp.pop %v2068
    %v2083 = vmul.f32 %v2048, %v2082
    %v2084 = vrcp.pop %v2071
    %v2085 = vmul.f32 %v2050, %v2084
    %v2087 = vsel %vm2007, %v1853, 0
    %v2090 = vsel %vm2007, %v2073, 0
    %v2093 = vsel %vm2007, %v2075, 0
    %v2096 = vsel %vm2007, %v2077, 0
    %v2099 = vsel %vm2007, %v2079, 0
    %v2102 = vsel %vm2007, %v2081, 0
    %v2105 = vsel %vm2007, %v2083, 0
    %v2108 = vsel %vm2007, %v2085, 0
    %2110 = vmatprep.subr.mxu0 0.0
    %2111 = vmatpush1.xpose.msra.mxu0 %v2090
    %2112 = vmatprep.subr.mxu0 0.0
    %2113 = vmatpush1.xpose.msra.mxu0 %v2093
    %2114 = vmatprep.subr.mxu0 0.0
    %2115 = vmatpush1.xpose.msra.mxu0 %v2096
    %2116 = vmatprep.subr.mxu0 0.0
    %2117 = vmatpush1.xpose.msra.mxu0 %v2099
    %2118 = vmatprep.subr.mxu0 0.0
    %2119 = vmatpush1.xpose.msra.mxu0 %v2102
    %2120 = vmatprep.subr.mxu0 0.0
    %2121 = vmatpush1.xpose.msra.mxu0 %v2105
    %2122 = vmatprep.subr.mxu0 0.0
    %2123 = vmatpush1.xpose.msra.mxu0 %v2108
    %2124 = vmatprep.subr.mxu0 0.0
    %2125 = vmatpush1.xpose.msra.mxu0 0.0
    %2126 = vmatprep.subr.mxu0 0.0
    %2127 = vmatpush1.xpose.msra.mxu0 0.0
    %2128 = vmatprep.subr.mxu0 0.0
    %2129 = vmatpush1.xpose.msra.mxu0 0.0
    %2130 = vmatprep.subr.mxu0 0.0
    %2131 = vmatpush1.xpose.msra.mxu0 0.0
    %2132 = vmatprep.subr.mxu0 0.0
    %2133 = vmatpush1.xpose.msra.mxu0 0.0
    %2134 = vmatprep.subr.mxu0 0.0
    %2135 = vmatpush1.xpose.msra.mxu0 0.0
    %2136 = vmatprep.subr.mxu0 0.0
    %2137 = vmatpush1.xpose.msra.mxu0 0.0
    %2138 = vmatprep.subr.mxu0 0.0
    %2139 = vmatpush1.xpose.msra.mxu0 0.0
    %2140 = vmatprep.subr.mxu0 0.0
    %2141 = vmatpush1.xpose.msra.mxu0 0.0
    %2142 = vmatprep.subr.mxu0 0.0
    %2143 = vmatpush1.xpose.msra.mxu0 0.0
    %2144 = vmatprep.subr.mxu0 0.0
    %2145 = vmatpush1.xpose.msra.mxu0 0.0
    %2146 = vmatprep.subr.mxu0 0.0
    %2147 = vmatpush1.xpose.msra.mxu0 0.0
    %2148 = vmatprep.subr.mxu0 0.0
    %2149 = vmatpush1.xpose.msra.mxu0 0.0
    %2150 = vmatprep.subr.mxu0 0.0
    %2151 = vmatpush1.xpose.msra.mxu0 0.0
    %2152 = vmatprep.subr.mxu0 0.0
    %2153 = vmatpush1.xpose.msra.mxu0 0.0
    %2154 = vmatprep.subr.mxu0 0.0
    %2155 = vmatpush1.xpose.msra.mxu0 0.0
    %2156 = vmatprep.subr.mxu0 0.0
    %2157 = vmatpush1.xpose.msra.mxu0 0.0
    %2158 = vmatprep.subr.mxu0 0.0
    %2159 = vmatpush1.xpose.msra.mxu0 0.0
    %2160 = vmatprep.subr.mxu0 0.0
    %2161 = vmatpush1.xpose.msra.mxu0 0.0
    %2162 = vmatprep.subr.mxu0 0.0
    %2163 = vmatpush1.xpose.msra.mxu0 0.0
    %2164 = vmatprep.subr.mxu0 0.0
    %2165 = vmatpush1.xpose.msra.mxu0 0.0
    %2166 = vmatprep.subr.mxu0 0.0
    %2167 = vmatpush1.xpose.msra.mxu0 0.0
    %2168 = vmatprep.subr.mxu0 0.0
    %2169 = vmatpush1.xpose.msra.mxu0 0.0
    %2170 = vmatprep.subr.mxu0 0.0
    %2171 = vmatpush1.xpose.msra.mxu0 0.0
    %2172 = vmatprep.subr.mxu0 0.0
    %2173 = vmatpush1.xpose.msra.mxu0 0.0
    %2174 = vmatprep.mubr.f32.mxu0 0.0
    %2175 = vmatmul.mubr.f32.gmra.mrb[0].mxu0 %v2087
    %v2176 = vpop.f32.mrb[0].mxu0
    %v2177 = vadd.f32 0.0, %v2176
    %v2178 = vpop.f32.mrb[0].mxu0
    %2179 = vdwg.mxu0
    %2180 = vrot.lane.b32.xlu0 %v1761, 79
    %v2181 = vpop.permute.xlu0 %2180
    %2182 = vrot.lane.b32.xlu0 %v1767, 79
    %v2183 = vpop.permute.xlu0 %2182
    %2184 = vrot.lane.b32.xlu0 %v1773, 79
    %v2185 = vpop.permute.xlu0 %2184
    %v2189 = vsel %vm629, %v1781, %v1790
    %v2190 = vsel %vm629, %v1783, %v1792
    %v2191 = vsel %vm629, %v1785, %v1794
    %v2192 = vsel %vm90, %v2189, %v1799
    %v2193 = vsel %vm90, %v2190, %v1801
    %v2194 = vsel %vm90, %v2191, %v1803
    %v2195 = vsel %vm1840, %v2192, %v1808
    %v2196 = vsel %vm1840, %v2193, %v1810
    %v2197 = vsel %vm1840, %v2194, %v1812
    %v2198 = vsel %vm92, %v2195, %v1817
    %v2199 = vsel %vm92, %v2196, %v1819
    %v2200 = vsel %vm92, %v2197, %v1821
    %v2201 = vsel %vm1847, %v2198, %v1826
    %v2202 = vsel %vm1847, %v2199, %v1828
    %v2203 = vsel %vm1847, %v2200, %v1830
    %v2204 = vsel %vm94, %v2201, %v2181
    %v2205 = vsel %vm94, %v2202, %v2183
    %v2206 = vsel %vm94, %v2203, %v2185
    %2207 = vxpose.xlu0.b32.start [1/16] %v2204, 128
    %2208 = vxpose.xlu0.b32.cont [2/16] 0.0, 128
    %2209 = vxpose.xlu0.b32.cont [3/16] 0.0, 128
    %2210 = vxpose.xlu0.b32.cont [4/16] 0.0, 128
    %2211 = vxpose.xlu0.b32.cont [5/16] 0.0, 128
    %2212 = vxpose.xlu0.b32.cont [6/16] 0.0, 128
    %2213 = vxpose.xlu0.b32.cont [7/16] 0.0, 128
    %2214 = vxpose.xlu0.b32.cont [8/16] 0.0, 128
    %2215 = vxpose.xlu0.b32.cont [9/16] 0.0, 128
    %2216 = vxpose.xlu0.b32.cont [10/16] 0.0, 128
    %2217 = vxpose.xlu0.b32.cont [11/16] 0.0, 128
    %2218 = vxpose.xlu0.b32.cont [12/16] 0.0, 128
    %2219 = vxpose.xlu0.b32.cont [13/16] 0.0, 128
    %2220 = vxpose.xlu0.b32.cont [14/16] 0.0, 128
    %2221 = vxpose.xlu0.b32.cont [15/16] 0.0, 128
    %2222 = vxpose.xlu0.b32.end [16/16] 0.0, 128
    %v2223 = vpop.trf.xlu0
    %v2224 = vpop.trf.xlu0
    %v2225 = vpop.trf.xlu0
    %v2226 = vpop.trf.xlu0
    %v2227 = vpop.trf.xlu0
    %v2228 = vpop.trf.xlu0
    %v2229 = vpop.trf.xlu0
    %v2230 = vpop.trf.xlu0
    %v2231 = vpop.trf.xlu0
    %v2232 = vpop.trf.xlu0
    %v2233 = vpop.trf.xlu0
    %v2234 = vpop.trf.xlu0
    %v2235 = vpop.trf.xlu0
    %v2236 = vpop.trf.xlu0
    %v2237 = vpop.trf.xlu0
    %v2238 = vpop.trf.xlu0
    %v2240 = vsel %vm271, %v2223, 0
    %v2243 = vsel %vm271, %v2224, 0
    %v2246 = vsel %vm271, %v2225, 0
    %v2249 = vsel %vm271, %v2226, 0
    %v2252 = vsel %vm271, %v2227, 0
    %v2255 = vsel %vm271, %v2228, 0
    %v2258 = vsel %vm271, %v2229, 0
    %2260 = vmatprep.subr.mxu0 0.0
    %2261 = vmatpush1.msra.mxu0 %v2205
    %2262 = vmatprep.subr.mxu0 0.0
    %2263 = vmatpush1.msra.mxu0 0.0
    %2264 = vmatprep.subr.mxu0 0.0
    %2265 = vmatpush1.msra.mxu0 0.0
    %2266 = vmatprep.subr.mxu0 0.0
    %2267 = vmatpush1.msra.mxu0 0.0
    %2268 = vmatprep.subr.mxu0 0.0
    %2269 = vmatpush1.msra.mxu0 0.0
    %2270 = vmatprep.subr.mxu0 0.0
    %2271 = vmatpush1.msra.mxu0 0.0
    %2272 = vmatprep.subr.mxu0 0.0
    %2273 = vmatpush1.msra.mxu0 0.0
    %2274 = vmatprep.subr.mxu0 0.0
    %2275 = vmatpush1.msra.mxu0 0.0
    %2276 = vmatprep.subr.mxu0 0.0
    %2277 = vmatpush1.msra.mxu0 0.0
    %2278 = vmatprep.subr.mxu0 0.0
    %2279 = vmatpush1.msra.mxu0 0.0
    %2280 = vmatprep.subr.mxu0 0.0
    %2281 = vmatpush1.msra.mxu0 0.0
    %2282 = vmatprep.subr.mxu0 0.0
    %2283 = vmatpush1.msra.mxu0 0.0
    %2284 = vmatprep.subr.mxu0 0.0
    %2285 = vmatpush1.msra.mxu0 0.0
    %2286 = vmatprep.subr.mxu0 0.0
    %2287 = vmatpush1.msra.mxu0 0.0
    %2288 = vmatprep.subr.mxu0 0.0
    %2289 = vmatpush1.msra.mxu0 0.0
    %2290 = vmatprep.subr.mxu0 0.0
    %2291 = vmatpush1.msra.mxu0 0.0
    %2292 = vmatprep.subr.mxu0 0.0
    %2293 = vmatpush1.msra.mxu0 0.0
    %2294 = vmatprep.subr.mxu0 0.0
    %2295 = vmatpush1.msra.mxu0 0.0
    %2296 = vmatprep.subr.mxu0 0.0
    %2297 = vmatpush1.msra.mxu0 0.0
    %2298 = vmatprep.subr.mxu0 0.0
    %2299 = vmatpush1.msra.mxu0 0.0
    %2300 = vmatprep.subr.mxu0 0.0
    %2301 = vmatpush1.msra.mxu0 0.0
    %2302 = vmatprep.subr.mxu0 0.0
    %2303 = vmatpush1.msra.mxu0 0.0
    %2304 = vmatprep.subr.mxu0 0.0
    %2305 = vmatpush1.msra.mxu0 0.0
    %2306 = vmatprep.subr.mxu0 0.0
    %2307 = vmatpush1.msra.mxu0 0.0
    %2308 = vmatprep.subr.mxu0 0.0
    %2309 = vmatpush1.msra.mxu0 0.0
    %2310 = vmatprep.subr.mxu0 0.0
    %2311 = vmatpush1.msra.mxu0 0.0
    %2312 = vmatprep.subr.mxu0 0.0
    %2313 = vmatpush1.msra.mxu0 0.0
    %2314 = vmatprep.subr.mxu0 0.0
    %2315 = vmatpush1.msra.mxu0 0.0
    %2316 = vmatprep.subr.mxu0 0.0
    %2317 = vmatpush1.msra.mxu0 0.0
    %2318 = vmatprep.subr.mxu0 0.0
    %2319 = vmatpush1.msra.mxu0 0.0
    %2320 = vmatprep.subr.mxu0 0.0
    %2321 = vmatpush1.msra.mxu0 0.0
    %2322 = vmatprep.subr.mxu0 0.0
    %2323 = vmatpush1.msra.mxu0 0.0
    %2324 = vmatprep.mubr.f32.mxu0 0.0
    %2325 = vmatmul.mubr.f32.gmra.mrb[0].mxu0 %v2240
    %v2326 = vpop.f32.mrb[0].mxu0
    %v2327 = vadd.f32 0.0, %v2326
    %v2328 = vpop.f32.mrb[0].mxu0
    %2329 = vmatprep.mubr.f32.mxu0 0.0
    %2330 = vmatmul.mubr.f32.gmra.mrb[0].mxu0 %v2243
    %v2331 = vpop.f32.mrb[0].mxu0
    %v2332 = vadd.f32 0.0, %v2331
    %v2333 = vpop.f32.mrb[0].mxu0
    %2334 = vmatprep.mubr.f32.mxu0 0.0
    %2335 = vmatmul.mubr.f32.gmra.mrb[0].mxu0 %v2246
    %v2336 = vpop.f32.mrb[0].mxu0
    %v2337 = vadd.f32 0.0, %v2336
    %v2338 = vpop.f32.mrb[0].mxu0
    %2339 = vmatprep.mubr.f32.mxu0 0.0
    %2340 = vmatmul.mubr.f32.gmra.mrb[0].mxu0 %v2249
    %v2341 = vpop.f32.mrb[0].mxu0
    %v2342 = vadd.f32 0.0, %v2341
    %v2343 = vpop.f32.mrb[0].mxu0
    %2344 = vmatprep.mubr.f32.mxu0 0.0
    %2345 = vmatmul.mubr.f32.gmra.mrb[0].mxu0 %v2252
    %v2346 = vpop.f32.mrb[0].mxu0
    %v2347 = vadd.f32 0.0, %v2346
    %v2348 = vpop.f32.mrb[0].mxu0
    %2349 = vmatprep.mubr.f32.mxu0 0.0
    %2350 = vmatmul.mubr.f32.gmra.mrb[0].mxu0 %v2255
    %v2351 = vpop.f32.mrb[0].mxu0
    %v2352 = vadd.f32 0.0, %v2351
    %v2353 = vpop.f32.mrb[0].mxu0
    %2354 = vmatprep.mubr.f32.mxu0 0.0
    %2355 = vmatmul.mubr.f32.gmra.mrb[0].mxu0 %v2258
    %v2356 = vpop.f32.mrb[0].mxu0
    %v2357 = vadd.f32 0.0, %v2356
    %v2358 = vpop.f32.mrb[0].mxu0
    %2359 = vdwg.mxu0
    %v2360 = vsel %vm2007, %v2327, -inf
    %2361 = vmax.xlane.f32.xlu0 %v2360
    %v2362 = vpop.xlane.xlu0 %2361
    %v2363 = vsel %vm2007, %v2332, -inf
    %2364 = vmax.xlane.f32.xlu0 %v2363
    %v2365 = vpop.xlane.xlu0 %2364
    %v2366 = vsel %vm2007, %v2337, -inf
    %2367 = vmax.xlane.f32.xlu0 %v2366
    %v2368 = vpop.xlane.xlu0 %2367
    %v2369 = vsel %vm2007, %v2342, -inf
    %2370 = vmax.xlane.f32.xlu0 %v2369
    %v2371 = vpop.xlane.xlu0 %2370
    %v2372 = vsel %vm2007, %v2347, -inf
    %2373 = vmax.xlane.f32.xlu0 %v2372
    %v2374 = vpop.xlane.xlu0 %2373
    %v2375 = vsel %vm2007, %v2352, -inf
    %2376 = vmax.xlane.f32.xlu0 %v2375
    %v2377 = vpop.xlane.xlu0 %2376
    %v2378 = vsel %vm2026, %v2357, -inf
    %2379 = vmax.xlane.f32.xlu0 %v2378
    %v2380 = vpop.xlane.xlu0 %2379
    %v2381 = vsub.f32 %v2327, %v2362
    %v2382 = vsub.f32 %v2332, %v2365
    %v2383 = vsub.f32 %v2337, %v2368
    %v2384 = vsub.f32 %v2342, %v2371
    %v2385 = vsub.f32 %v2347, %v2374
    %v2386 = vsub.f32 %v2352, %v2377
    %v2387 = vsub.f32 %v2357, %v2380
    %v2388 = vmul.f32 %v2381, 1.442695
    %v2389 = vpow.pop %v2388
    %v2390 = vmul.f32 %v2382, 1.442695
    %v2391 = vpow.pop %v2390
    %v2392 = vmul.f32 %v2383, 1.442695
    %v2393 = vpow.pop %v2392
    %v2394 = vmul.f32 %v2384, 1.442695
    %v2395 = vpow.pop %v2394
    %v2396 = vmul.f32 %v2385, 1.442695
    %v2397 = vpow.pop %v2396
    %v2398 = vmul.f32 %v2386, 1.442695
    %v2399 = vpow.pop %v2398
    %v2400 = vmul.f32 %v2387, 1.442695
    %v2401 = vpow.pop %v2400
    %v2402 = vsel %vm2007, %v2389, 0.0
    %2403 = vadd.xlane.f32.xlu0 %v2402
    %v2404 = vpop.xlane.xlu0 %2403
    %v2405 = vsel %vm2007, %v2391, 0.0
    %2406 = vadd.xlane.f32.xlu0 %v2405
    %v2407 = vpop.xlane.xlu0 %2406
    %v2408 = vsel %vm2007, %v2393, 0.0
    %2409 = vadd.xlane.f32.xlu0 %v2408
    %v2410 = vpop.xlane.xlu0 %2409
    %v2411 = vsel %vm2007, %v2395, 0.0
    %2412 = vadd.xlane.f32.xlu0 %v2411
    %v2413 = vpop.xlane.xlu0 %2412
    %v2414 = vsel %vm2007, %v2397, 0.0
    %2415 = vadd.xlane.f32.xlu0 %v2414
    %v2416 = vpop.xlane.xlu0 %2415
    %v2417 = vsel %vm2007, %v2399, 0.0
    %2418 = vadd.xlane.f32.xlu0 %v2417
    %v2419 = vpop.xlane.xlu0 %2418
    %v2420 = vsel %vm2026, %v2401, 0.0
    %2421 = vadd.xlane.f32.xlu0 %v2420
    %v2422 = vpop.xlane.xlu0 %2421
    %v2423 = vrcp.pop %v2404
    %v2424 = vmul.f32 %v2389, %v2423
    %v2425 = vrcp.pop %v2407
    %v2426 = vmul.f32 %v2391, %v2425
    %v2427 = vrcp.pop %v2410
    %v2428 = vmul.f32 %v2393, %v2427
    %v2429 = vrcp.pop %v2413
    %v2430 = vmul.f32 %v2395, %v2429
    %v2431 = vrcp.pop %v2416
    %v2432 = vmul.f32 %v2397, %v2431
    %v2433 = vrcp.pop %v2419
    %v2434 = vmul.f32 %v2399, %v2433
    %v2435 = vrcp.pop %v2422
    %v2436 = vmul.f32 %v2401, %v2435
    %v2438 = vsel %vm2007, %v2206, 0
    %v2441 = vsel %vm2007, %v2424, 0
    %v2444 = vsel %vm2007, %v2426, 0
    %v2447 = vsel %vm2007, %v2428, 0
    %v2450 = vsel %vm2007, %v2430, 0
    %v2453 = vsel %vm2007, %v2432, 0
    %v2456 = vsel %vm2007, %v2434, 0
    %v2459 = vsel %vm2007, %v2436, 0
    %2461 = vmatprep.subr.mxu0 0.0
    %2462 = vmatpush1.xpose.msra.mxu0 %v2441
    %2463 = vmatprep.subr.mxu0 0.0
    %2464 = vmatpush1.xpose.msra.mxu0 %v2444
    %2465 = vmatprep.subr.mxu0 0.0
    %2466 = vmatpush1.xpose.msra.mxu0 %v2447
    %2467 = vmatprep.subr.mxu0 0.0
    %2468 = vmatpush1.xpose.msra.mxu0 %v2450
    %2469 = vmatprep.subr.mxu0 0.0
    %2470 = vmatpush1.xpose.msra.mxu0 %v2453
    %2471 = vmatprep.subr.mxu0 0.0
    %2472 = vmatpush1.xpose.msra.mxu0 %v2456
    %2473 = vmatprep.subr.mxu0 0.0
    %2474 = vmatpush1.xpose.msra.mxu0 %v2459
    %2475 = vmatprep.subr.mxu0 0.0
    %2476 = vmatpush1.xpose.msra.mxu0 0.0
    %2477 = vmatprep.subr.mxu0 0.0
    %2478 = vmatpush1.xpose.msra.mxu0 0.0
    %2479 = vmatprep.subr.mxu0 0.0
    %2480 = vmatpush1.xpose.msra.mxu0 0.0
    %2481 = vmatprep.subr.mxu0 0.0
    %2482 = vmatpush1.xpose.msra.mxu0 0.0
    %2483 = vmatprep.subr.mxu0 0.0
    %2484 = vmatpush1.xpose.msra.mxu0 0.0
    %2485 = vmatprep.subr.mxu0 0.0
    %2486 = vmatpush1.xpose.msra.mxu0 0.0
    %2487 = vmatprep.subr.mxu0 0.0
    %2488 = vmatpush1.xpose.msra.mxu0 0.0
    %2489 = vmatprep.subr.mxu0 0.0
    %2490 = vmatpush1.xpose.msra.mxu0 0.0
    %2491 = vmatprep.subr.mxu0 0.0
    %2492 = vmatpush1.xpose.msra.mxu0 0.0
    %2493 = vmatprep.subr.mxu0 0.0
    %2494 = vmatpush1.xpose.msra.mxu0 0.0
    %2495 = vmatprep.subr.mxu0 0.0
    %2496 = vmatpush1.xpose.msra.mxu0 0.0
    %2497 = vmatprep.subr.mxu0 0.0
    %2498 = vmatpush1.xpose.msra.mxu0 0.0
    %2499 = vmatprep.subr.mxu0 0.0
    %2500 = vmatpush1.xpose.msra.mxu0 0.0
    %2501 = vmatprep.subr.mxu0 0.0
    %2502 = vmatpush1.xpose.msra.mxu0 0.0
    %2503 = vmatprep.subr.mxu0 0.0
    %2504 = vmatpush1.xpose.msra.mxu0 0.0
    %2505 = vmatprep.subr.mxu0 0.0
    %2506 = vmatpush1.xpose.msra.mxu0 0.0
    %2507 = vmatprep.subr.mxu0 0.0
    %2508 = vmatpush1.xpose.msra.mxu0 0.0
    %2509 = vmatprep.subr.mxu0 0.0
    %2510 = vmatpush1.xpose.msra.mxu0 0.0
    %2511 = vmatprep.subr.mxu0 0.0
    %2512 = vmatpush1.xpose.msra.mxu0 0.0
    %2513 = vmatprep.subr.mxu0 0.0
    %2514 = vmatpush1.xpose.msra.mxu0 0.0
    %2515 = vmatprep.subr.mxu0 0.0
    %2516 = vmatpush1.xpose.msra.mxu0 0.0
    %2517 = vmatprep.subr.mxu0 0.0
    %2518 = vmatpush1.xpose.msra.mxu0 0.0
    %2519 = vmatprep.subr.mxu0 0.0
    %2520 = vmatpush1.xpose.msra.mxu0 0.0
    %2521 = vmatprep.subr.mxu0 0.0
    %2522 = vmatpush1.xpose.msra.mxu0 0.0
    %2523 = vmatprep.subr.mxu0 0.0
    %2524 = vmatpush1.xpose.msra.mxu0 0.0
    %2525 = vmatprep.mubr.f32.mxu0 0.0
    %2526 = vmatmul.mubr.f32.gmra.mrb[0].mxu0 %v2438
    %v2527 = vpop.f32.mrb[0].mxu0
    %v2528 = vadd.f32 0.0, %v2527
    %v2529 = vpop.f32.mrb[0].mxu0
    %2530 = vdwg.mxu0
    %2531 = vrot.lane.b32.xlu0 %v1761, 30
    %v2532 = vpop.permute.xlu0 %2531
    %2533 = vrot.lane.b32.xlu0 %v1767, 30
    %v2534 = vpop.permute.xlu0 %2533
    %2535 = vrot.lane.b32.xlu0 %v1773, 30
    %v2536 = vpop.permute.xlu0 %2535
    %2540 = vrot.lane.b32.xlu0 %v1761, 23
    %v2541 = vpop.permute.xlu0 %2540
    %2542 = vrot.lane.b32.xlu0 %v1767, 23
    %v2543 = vpop.permute.xlu0 %2542
    %2544 = vrot.lane.b32.xlu0 %v1773, 23
    %v2545 = vpop.permute.xlu0 %2544
    %2552 = vrot.lane.b32.xlu0 %v1761, 16
    %v2553 = vpop.permute.xlu0 %2552
    %2554 = vrot.lane.b32.xlu0 %v1763, 16
    %v2555 = vpop.permute.xlu0 %2554
    %2556 = vrot.lane.b32.xlu0 %v1767, 16
    %v2557 = vpop.permute.xlu0 %2556
    %2558 = vrot.lane.b32.xlu0 %v1769, 16
    %v2559 = vpop.permute.xlu0 %2558
    %2560 = vrot.lane.b32.xlu0 %v1773, 16
    %v2561 = vpop.permute.xlu0 %2560
    %2562 = vrot.lane.b32.xlu0 %v1775, 16
    %v2563 = vpop.permute.xlu0 %2562
    %v2564 = vsel %vm227, %v2553, %v2555
    %v2565 = vsel %vm227, %v2557, %v2559
    %v2566 = vsel %vm227, %v2561, %v2563
    %2570 = vrot.lane.b32.xlu0 %v1763, 9
    %v2571 = vpop.permute.xlu0 %2570
    %2572 = vrot.lane.b32.xlu0 %v1769, 9
    %v2573 = vpop.permute.xlu0 %2572
    %2574 = vrot.lane.b32.xlu0 %v1775, 9
    %v2575 = vpop.permute.xlu0 %2574
    %2579 = vrot.lane.b32.xlu0 %v1763, 2
    %v2580 = vpop.permute.xlu0 %2579
    %2581 = vrot.lane.b32.xlu0 %v1769, 2
    %v2582 = vpop.permute.xlu0 %2581
    %2583 = vrot.lane.b32.xlu0 %v1775, 2
    %v2584 = vpop.permute.xlu0 %2583
    %2588 = vrot.lane.b32.xlu0 %v1763, 123
    %v2589 = vpop.permute.xlu0 %2588
    %2590 = vrot.lane.b32.xlu0 %v1769, 123
    %v2591 = vpop.permute.xlu0 %2590
    %2592 = vrot.lane.b32.xlu0 %v1775, 123
    %v2593 = vpop.permute.xlu0 %2592
    %2597 = vrot.lane.b32.xlu0 %v1763, 116
    %v2598 = vpop.permute.xlu0 %2597
    %2599 = vrot.lane.b32.xlu0 %v1769, 116
    %v2600 = vpop.permute.xlu0 %2599
    %2601 = vrot.lane.b32.xlu0 %v1775, 116
    %v2602 = vpop.permute.xlu0 %2601
    %v2606 = vsel %vm629, %v2532, %v2541
    %v2607 = vsel %vm629, %v2534, %v2543
    %v2608 = vsel %vm629, %v2536, %v2545
    %v2609 = vsel %vm90, %v2606, %v2564
    %v2610 = vsel %vm90, %v2607, %v2565
    %v2611 = vsel %vm90, %v2608, %v2566
    %v2612 = vsel %vm1840, %v2609, %v2571
    %v2613 = vsel %vm1840, %v2610, %v2573
    %v2614 = vsel %vm1840, %v2611, %v2575
    %v2615 = vsel %vm92, %v2612, %v2580
    %v2616 = vsel %vm92, %v2613, %v2582
    %v2617 = vsel %vm92, %v2614, %v2584
    %v2618 = vsel %vm1847, %v2615, %v2589
    %v2619 = vsel %vm1847, %v2616, %v2591
    %v2620 = vsel %vm1847, %v2617, %v2593
    %v2621 = vsel %vm94, %v2618, %v2598
    %v2622 = vsel %vm94, %v2619, %v2600
    %v2623 = vsel %vm94, %v2620, %v2602
    %2624 = vxpose.xlu0.b32.start [1/16] %v2621, 128
    %2625 = vxpose.xlu0.b32.cont [2/16] 0.0, 128
    %2626 = vxpose.xlu0.b32.cont [3/16] 0.0, 128
    %2627 = vxpose.xlu0.b32.cont [4/16] 0.0, 128
    %2628 = vxpose.xlu0.b32.cont [5/16] 0.0, 128
    %2629 = vxpose.xlu0.b32.cont [6/16] 0.0, 128
    %2630 = vxpose.xlu0.b32.cont [7/16] 0.0, 128
    %2631 = vxpose.xlu0.b32.cont [8/16] 0.0, 128
    %2632 = vxpose.xlu0.b32.cont [9/16] 0.0, 128
    %2633 = vxpose.xlu0.b32.cont [10/16] 0.0, 128
    %2634 = vxpose.xlu0.b32.cont [11/16] 0.0, 128
    %2635 = vxpose.xlu0.b32.cont [12/16] 0.0, 128
    %2636 = vxpose.xlu0.b32.cont [13/16] 0.0, 128
    %2637 = vxpose.xlu0.b32.cont [14/16] 0.0, 128
    %2638 = vxpose.xlu0.b32.cont [15/16] 0.0, 128
    %2639 = vxpose.xlu0.b32.end [16/16] 0.0, 128
    %v2640 = vpop.trf.xlu0
    %v2641 = vpop.trf.xlu0
    %v2642 = vpop.trf.xlu0
    %v2643 = vpop.trf.xlu0
    %v2644 = vpop.trf.xlu0
    %v2645 = vpop.trf.xlu0
    %v2646 = vpop.trf.xlu0
    %v2647 = vpop.trf.xlu0
    %v2648 = vpop.trf.xlu0
    %v2649 = vpop.trf.xlu0
    %v2650 = vpop.trf.xlu0
    %v2651 = vpop.trf.xlu0
    %v2652 = vpop.trf.xlu0
    %v2653 = vpop.trf.xlu0
    %v2654 = vpop.trf.xlu0
    %v2655 = vpop.trf.xlu0
    %v2657 = vsel %vm271, %v2640, 0
    %v2660 = vsel %vm271, %v2641, 0
    %v2663 = vsel %vm271, %v2642, 0
    %v2666 = vsel %vm271, %v2643, 0
    %v2669 = vsel %vm271, %v2644, 0
    %v2672 = vsel %vm271, %v2645, 0
    %v2675 = vsel %vm271, %v2646, 0
    %2677 = vmatprep.subr.mxu0 0.0
    %2678 = vmatpush1.msra.mxu0 %v2622
    %2679 = vmatprep.subr.mxu0 0.0
    %2680 = vmatpush1.msra.mxu0 0.0
    %2681 = vmatprep.subr.mxu0 0.0
    %2682 = vmatpush1.msra.mxu0 0.0
    %2683 = vmatprep.subr.mxu0 0.0
    %2684 = vmatpush1.msra.mxu0 0.0
    %2685 = vmatprep.subr.mxu0 0.0
    %2686 = vmatpush1.msra.mxu0 0.0
    %2687 = vmatprep.subr.mxu0 0.0
    %2688 = vmatpush1.msra.mxu0 0.0
    %2689 = vmatprep.subr.mxu0 0.0
    %2690 = vmatpush1.msra.mxu0 0.0
    %2691 = vmatprep.subr.mxu0 0.0
    %2692 = vmatpush1.msra.mxu0 0.0
    %2693 = vmatprep.subr.mxu0 0.0
    %2694 = vmatpush1.msra.mxu0 0.0
    %2695 = vmatprep.subr.mxu0 0.0
    %2696 = vmatpush1.msra.mxu0 0.0
    %2697 = vmatprep.subr.mxu0 0.0
    %2698 = vmatpush1.msra.mxu0 0.0
    %2699 = vmatprep.subr.mxu0 0.0
    %2700 = vmatpush1.msra.mxu0 0.0
    %2701 = vmatprep.subr.mxu0 0.0
    %2702 = vmatpush1.msra.mxu0 0.0
    %2703 = vmatprep.subr.mxu0 0.0
    %2704 = vmatpush1.msra.mxu0 0.0
    %2705 = vmatprep.subr.mxu0 0.0
    %2706 = vmatpush1.msra.mxu0 0.0
    %2707 = vmatprep.subr.mxu0 0.0
    %2708 = vmatpush1.msra.mxu0 0.0
    %2709 = vmatprep.subr.mxu0 0.0
    %2710 = vmatpush1.msra.mxu0 0.0
    %2711 = vmatprep.subr.mxu0 0.0
    %2712 = vmatpush1.msra.mxu0 0.0
    %2713 = vmatprep.subr.mxu0 0.0
    %2714 = vmatpush1.msra.mxu0 0.0
    %2715 = vmatprep.subr.mxu0 0.0
    %2716 = vmatpush1.msra.mxu0 0.0
    %2717 = vmatprep.subr.mxu0 0.0
    %2718 = vmatpush1.msra.mxu0 0.0
    %2719 = vmatprep.subr.mxu0 0.0
    %2720 = vmatpush1.msra.mxu0 0.0
    %2721 = vmatprep.subr.mxu0 0.0
    %2722 = vmatpush1.msra.mxu0 0.0
    %2723 = vmatprep.subr.mxu0 0.0
    %2724 = vmatpush1.msra.mxu0 0.0
    %2725 = vmatprep.subr.mxu0 0.0
    %2726 = vmatpush1.msra.mxu0 0.0
    %2727 = vmatprep.subr.mxu0 0.0
    %2728 = vmatpush1.msra.mxu0 0.0
    %2729 = vmatprep.subr.mxu0 0.0
    %2730 = vmatpush1.msra.mxu0 0.0
    %2731 = vmatprep.subr.mxu0 0.0
    %2732 = vmatpush1.msra.mxu0 0.0
    %2733 = vmatprep.subr.mxu0 0.0
    %2734 = vmatpush1.msra.mxu0 0.0
    %2735 = vmatprep.subr.mxu0 0.0
    %2736 = vmatpush1.msra.mxu0 0.0
    %2737 = vmatprep.subr.mxu0 0.0
    %2738 = vmatpush1.msra.mxu0 0.0
    %2739 = vmatprep.subr.mxu0 0.0
    %2740 = vmatpush1.msra.mxu0 0.0
    %2741 = vmatprep.mubr.f32.mxu0 0.0
    %2742 = vmatmul.mubr.f32.gmra.mrb[0].mxu0 %v2657
    %v2743 = vpop.f32.mrb[0].mxu0
    %v2744 = vadd.f32 0.0, %v2743
    %v2745 = vpop.f32.mrb[0].mxu0
    %2746 = vmatprep.mubr.f32.mxu0 0.0
    %2747 = vmatmul.mubr.f32.gmra.mrb[0].mxu0 %v2660
    %v2748 = vpop.f32.mrb[0].mxu0
    %v2749 = vadd.f32 0.0, %v2748
    %v2750 = vpop.f32.mrb[0].mxu0
    %2751 = vmatprep.mubr.f32.mxu0 0.0
    %2752 = vmatmul.mubr.f32.gmra.mrb[0].mxu0 %v2663
    %v2753 = vpop.f32.mrb[0].mxu0
    %v2754 = vadd.f32 0.0, %v2753
    %v2755 = vpop.f32.mrb[0].mxu0
    %2756 = vmatprep.mubr.f32.mxu0 0.0
    %2757 = vmatmul.mubr.f32.gmra.mrb[0].mxu0 %v2666
    %v2758 = vpop.f32.mrb[0].mxu0
    %v2759 = vadd.f32 0.0, %v2758
    %v2760 = vpop.f32.mrb[0].mxu0
    %2761 = vmatprep.mubr.f32.mxu0 0.0
    %2762 = vmatmul.mubr.f32.gmra.mrb[0].mxu0 %v2669
    %v2763 = vpop.f32.mrb[0].mxu0
    %v2764 = vadd.f32 0.0, %v2763
    %v2765 = vpop.f32.mrb[0].mxu0
    %2766 = vmatprep.mubr.f32.mxu0 0.0
    %2767 = vmatmul.mubr.f32.gmra.mrb[0].mxu0 %v2672
    %v2768 = vpop.f32.mrb[0].mxu0
    %v2769 = vadd.f32 0.0, %v2768
    %v2770 = vpop.f32.mrb[0].mxu0
    %2771 = vmatprep.mubr.f32.mxu0 0.0
    %2772 = vmatmul.mubr.f32.gmra.mrb[0].mxu0 %v2675
    %v2773 = vpop.f32.mrb[0].mxu0
    %v2774 = vadd.f32 0.0, %v2773
    %v2775 = vpop.f32.mrb[0].mxu0
    %2776 = vdwg.mxu0
    %v2777 = vsel %vm2007, %v2744, -inf
    %2778 = vmax.xlane.f32.xlu0 %v2777
    %v2779 = vpop.xlane.xlu0 %2778
    %v2780 = vsel %vm2007, %v2749, -inf
    %2781 = vmax.xlane.f32.xlu0 %v2780
    %v2782 = vpop.xlane.xlu0 %2781
    %v2783 = vsel %vm2007, %v2754, -inf
    %2784 = vmax.xlane.f32.xlu0 %v2783
    %v2785 = vpop.xlane.xlu0 %2784
    %v2786 = vsel %vm2007, %v2759, -inf
    %2787 = vmax.xlane.f32.xlu0 %v2786
    %v2788 = vpop.xlane.xlu0 %2787
    %v2789 = vsel %vm2007, %v2764, -inf
    %2790 = vmax.xlane.f32.xlu0 %v2789
    %v2791 = vpop.xlane.xlu0 %2790
    %v2792 = vsel %vm2007, %v2769, -inf
    %2793 = vmax.xlane.f32.xlu0 %v2792
    %v2794 = vpop.xlane.xlu0 %2793
    %v2795 = vsel %vm2026, %v2774, -inf
    %2796 = vmax.xlane.f32.xlu0 %v2795
    %v2797 = vpop.xlane.xlu0 %2796
    %v2798 = vsub.f32 %v2744, %v2779
    %v2799 = vsub.f32 %v2749, %v2782
    %v2800 = vsub.f32 %v2754, %v2785
    %v2801 = vsub.f32 %v2759, %v2788
    %v2802 = vsub.f32 %v2764, %v2791
    %v2803 = vsub.f32 %v2769, %v2794
    %v2804 = vsub.f32 %v2774, %v2797
    %v2805 = vmul.f32 %v2798, 1.442695
    %v2806 = vpow.pop %v2805
    %v2807 = vmul.f32 %v2799, 1.442695
    %v2808 = vpow.pop %v2807
    %v2809 = vmul.f32 %v2800, 1.442695
    %v2810 = vpow.pop %v2809
    %v2811 = vmul.f32 %v2801, 1.442695
    %v2812 = vpow.pop %v2811
    %v2813 = vmul.f32 %v2802, 1.442695
    %v2814 = vpow.pop %v2813
    %v2815 = vmul.f32 %v2803, 1.442695
    %v2816 = vpow.pop %v2815
    %v2817 = vmul.f32 %v2804, 1.442695
    %v2818 = vpow.pop %v2817
    %v2819 = vsel %vm2007, %v2806, 0.0
    %2820 = vadd.xlane.f32.xlu0 %v2819
    %v2821 = vpop.xlane.xlu0 %2820
    %v2822 = vsel %vm2007, %v2808, 0.0
    %2823 = vadd.xlane.f32.xlu0 %v2822
    %v2824 = vpop.xlane.xlu0 %2823
    %v2825 = vsel %vm2007, %v2810, 0.0
    %2826 = vadd.xlane.f32.xlu0 %v2825
    %v2827 = vpop.xlane.xlu0 %2826
    %v2828 = vsel %vm2007, %v2812, 0.0
    %2829 = vadd.xlane.f32.xlu0 %v2828
    %v2830 = vpop.xlane.xlu0 %2829
    %v2831 = vsel %vm2007, %v2814, 0.0
    %2832 = vadd.xlane.f32.xlu0 %v2831
    %v2833 = vpop.xlane.xlu0 %2832
    %v2834 = vsel %vm2007, %v2816, 0.0
    %2835 = vadd.xlane.f32.xlu0 %v2834
    %v2836 = vpop.xlane.xlu0 %2835
    %v2837 = vsel %vm2026, %v2818, 0.0
    %2838 = vadd.xlane.f32.xlu0 %v2837
    %v2839 = vpop.xlane.xlu0 %2838
    %v2840 = vrcp.pop %v2821
    %v2841 = vmul.f32 %v2806, %v2840
    %v2842 = vrcp.pop %v2824
    %v2843 = vmul.f32 %v2808, %v2842
    %v2844 = vrcp.pop %v2827
    %v2845 = vmul.f32 %v2810, %v2844
    %v2846 = vrcp.pop %v2830
    %v2847 = vmul.f32 %v2812, %v2846
    %v2848 = vrcp.pop %v2833
    %v2849 = vmul.f32 %v2814, %v2848
    %v2850 = vrcp.pop %v2836
    %v2851 = vmul.f32 %v2816, %v2850
    %v2852 = vrcp.pop %v2839
    %v2853 = vmul.f32 %v2818, %v2852
    %v2855 = vsel %vm2007, %v2623, 0
    %v2858 = vsel %vm2007, %v2841, 0
    %v2861 = vsel %vm2007, %v2843, 0
    %v2864 = vsel %vm2007, %v2845, 0
    %v2867 = vsel %vm2007, %v2847, 0
    %v2870 = vsel %vm2007, %v2849, 0
    %v2873 = vsel %vm2007, %v2851, 0
    %v2876 = vsel %vm2007, %v2853, 0
    %2878 = vmatprep.subr.mxu0 0.0
    %2879 = vmatpush1.xpose.msra.mxu0 %v2858
    %2880 = vmatprep.subr.mxu0 0.0
    %2881 = vmatpush1.xpose.msra.mxu0 %v2861
    %2882 = vmatprep.subr.mxu0 0.0
    %2883 = vmatpush1.xpose.msra.mxu0 %v2864
    %2884 = vmatprep.subr.mxu0 0.0
    %2885 = vmatpush1.xpose.msra.mxu0 %v2867
    %2886 = vmatprep.subr.mxu0 0.0
    %2887 = vmatpush1.xpose.msra.mxu0 %v2870
    %2888 = vmatprep.subr.mxu0 0.0
    %2889 = vmatpush1.xpose.msra.mxu0 %v2873
    %2890 = vmatprep.subr.mxu0 0.0
    %2891 = vmatpush1.xpose.msra.mxu0 %v2876
    %2892 = vmatprep.subr.mxu0 0.0
    %2893 = vmatpush1.xpose.msra.mxu0 0.0
    %2894 = vmatprep.subr.mxu0 0.0
    %2895 = vmatpush1.xpose.msra.mxu0 0.0
    %2896 = vmatprep.subr.mxu0 0.0
    %2897 = vmatpush1.xpose.msra.mxu0 0.0
    %2898 = vmatprep.subr.mxu0 0.0
    %2899 = vmatpush1.xpose.msra.mxu0 0.0
    %2900 = vmatprep.subr.mxu0 0.0
    %2901 = vmatpush1.xpose.msra.mxu0 0.0
    %2902 = vmatprep.subr.mxu0 0.0
    %2903 = vmatpush1.xpose.msra.mxu0 0.0
    %2904 = vmatprep.subr.mxu0 0.0
    %2905 = vmatpush1.xpose.msra.mxu0 0.0
    %2906 = vmatprep.subr.mxu0 0.0
    %2907 = vmatpush1.xpose.msra.mxu0 0.0
    %2908 = vmatprep.subr.mxu0 0.0
    %2909 = vmatpush1.xpose.msra.mxu0 0.0
    %2910 = vmatprep.subr.mxu0 0.0
    %2911 = vmatpush1.xpose.msra.mxu0 0.0
    %2912 = vmatprep.subr.mxu0 0.0
    %2913 = vmatpush1.xpose.msra.mxu0 0.0
    %2914 = vmatprep.subr.mxu0 0.0
    %2915 = vmatpush1.xpose.msra.mxu0 0.0
    %2916 = vmatprep.subr.mxu0 0.0
    %2917 = vmatpush1.xpose.msra.mxu0 0.0
    %2918 = vmatprep.subr.mxu0 0.0
    %2919 = vmatpush1.xpose.msra.mxu0 0.0
    %2920 = vmatprep.subr.mxu0 0.0
    %2921 = vmatpush1.xpose.msra.mxu0 0.0
    %2922 = vmatprep.subr.mxu0 0.0
    %2923 = vmatpush1.xpose.msra.mxu0 0.0
    %2924 = vmatprep.subr.mxu0 0.0
    %2925 = vmatpush1.xpose.msra.mxu0 0.0
    %2926 = vmatprep.subr.mxu0 0.0
    %2927 = vmatpush1.xpose.msra.mxu0 0.0
    %2928 = vmatprep.subr.mxu0 0.0
    %2929 = vmatpush1.xpose.msra.mxu0 0.0
    %2930 = vmatprep.subr.mxu0 0.0
    %2931 = vmatpush1.xpose.msra.mxu0 0.0
    %2932 = vmatprep.subr.mxu0 0.0
    %2933 = vmatpush1.xpose.msra.mxu0 0.0
    %2934 = vmatprep.subr.mxu0 0.0
    %2935 = vmatpush1.xpose.msra.mxu0 0.0
    %2936 = vmatprep.subr.mxu0 0.0
    %2937 = vmatpush1.xpose.msra.mxu0 0.0
    %2938 = vmatprep.subr.mxu0 0.0
    %2939 = vmatpush1.xpose.msra.mxu0 0.0
    %2940 = vmatprep.subr.mxu0 0.0
    %2941 = vmatpush1.xpose.msra.mxu0 0.0
    %2942 = vmatprep.mubr.f32.mxu0 0.0
    %2943 = vmatmul.mubr.f32.gmra.mrb[0].mxu0 %v2855
    %v2944 = vpop.f32.mrb[0].mxu0
    %v2945 = vadd.f32 0.0, %v2944
    %v2946 = vpop.f32.mrb[0].mxu0
    %2947 = vdwg.mxu0
    %2951 = vrot.lane.b32.xlu0 %v1763, 109
    %v2952 = vpop.permute.xlu0 %2951
    %2953 = vrot.lane.b32.xlu0 %v1769, 109
    %v2954 = vpop.permute.xlu0 %2953
    %2955 = vrot.lane.b32.xlu0 %v1775, 109
    %v2956 = vpop.permute.xlu0 %2955
    %v2960 = vsel %vm629, %v2541, %v2553
    %v2961 = vsel %vm629, %v2543, %v2557
    %v2962 = vsel %vm629, %v2545, %v2561
    %v2963 = vsel %vm90, %v2960, %v2571
    %v2964 = vsel %vm90, %v2961, %v2573
    %v2965 = vsel %vm90, %v2962, %v2575
    %v2966 = vsel %vm1840, %v2963, %v2580
    %v2967 = vsel %vm1840, %v2964, %v2582
    %v2968 = vsel %vm1840, %v2965, %v2584
    %v2969 = vsel %vm92, %v2966, %v2589
    %v2970 = vsel %vm92, %v2967, %v2591
    %v2971 = vsel %vm92, %v2968, %v2593
    %v2972 = vsel %vm1847, %v2969, %v2598
    %v2973 = vsel %vm1847, %v2970, %v2600
    %v2974 = vsel %vm1847, %v2971, %v2602
    %v2975 = vsel %vm94, %v2972, %v2952
    %v2976 = vsel %vm94, %v2973, %v2954
    %v2977 = vsel %vm94, %v2974, %v2956
    %2978 = vxpose.xlu0.b32.start [1/16] %v2975, 128
    %2979 = vxpose.xlu0.b32.cont [2/16] 0.0, 128
    %2980 = vxpose.xlu0.b32.cont [3/16] 0.0, 128
    %2981 = vxpose.xlu0.b32.cont [4/16] 0.0, 128
    %2982 = vxpose.xlu0.b32.cont [5/16] 0.0, 128
    %2983 = vxpose.xlu0.b32.cont [6/16] 0.0, 128
    %2984 = vxpose.xlu0.b32.cont [7/16] 0.0, 128
    %2985 = vxpose.xlu0.b32.cont [8/16] 0.0, 128
    %2986 = vxpose.xlu0.b32.cont [9/16] 0.0, 128
    %2987 = vxpose.xlu0.b32.cont [10/16] 0.0, 128
    %2988 = vxpose.xlu0.b32.cont [11/16] 0.0, 128
    %2989 = vxpose.xlu0.b32.cont [12/16] 0.0, 128
    %2990 = vxpose.xlu0.b32.cont [13/16] 0.0, 128
    %2991 = vxpose.xlu0.b32.cont [14/16] 0.0, 128
    %2992 = vxpose.xlu0.b32.cont [15/16] 0.0, 128
    %2993 = vxpose.xlu0.b32.end [16/16] 0.0, 128
    %v2994 = vpop.trf.xlu0
    %v2995 = vpop.trf.xlu0
    %v2996 = vpop.trf.xlu0
    %v2997 = vpop.trf.xlu0
    %v2998 = vpop.trf.xlu0
    %v2999 = vpop.trf.xlu0
    %v3000 = vpop.trf.xlu0
    %v3001 = vpop.trf.xlu0
    %v3002 = vpop.trf.xlu0
    %v3003 = vpop.trf.xlu0
    %v3004 = vpop.trf.xlu0
    %v3005 = vpop.trf.xlu0
    %v3006 = vpop.trf.xlu0
    %v3007 = vpop.trf.xlu0
    %v3008 = vpop.trf.xlu0
    %v3009 = vpop.trf.xlu0
    %v3011 = vsel %vm271, %v2994, 0
    %v3014 = vsel %vm271, %v2995, 0
    %v3017 = vsel %vm271, %v2996, 0
    %v3020 = vsel %vm271, %v2997, 0
    %v3023 = vsel %vm271, %v2998, 0
    %v3026 = vsel %vm271, %v2999, 0
    %v3029 = vsel %vm271, %v3000, 0
    %3031 = vmatprep.subr.mxu0 0.0
    %3032 = vmatpush1.msra.mxu0 %v2976
    %3033 = vmatprep.subr.mxu0 0.0
    %3034 = vmatpush1.msra.mxu0 0.0
    %3035 = vmatprep.subr.mxu0 0.0
    %3036 = vmatpush1.msra.mxu0 0.0
    %3037 = vmatprep.subr.mxu0 0.0
    %3038 = vmatpush1.msra.mxu0 0.0
    %3039 = vmatprep.subr.mxu0 0.0
    %3040 = vmatpush1.msra.mxu0 0.0
    %3041 = vmatprep.subr.mxu0 0.0
    %3042 = vmatpush1.msra.mxu0 0.0
    %3043 = vmatprep.subr.mxu0 0.0
    %3044 = vmatpush1.msra.mxu0 0.0
    %3045 = vmatprep.subr.mxu0 0.0
    %3046 = vmatpush1.msra.mxu0 0.0
    %3047 = vmatprep.subr.mxu0 0.0
    %3048 = vmatpush1.msra.mxu0 0.0
    %3049 = vmatprep.subr.mxu0 0.0
    %3050 = vmatpush1.msra.mxu0 0.0
    %3051 = vmatprep.subr.mxu0 0.0
    %3052 = vmatpush1.msra.mxu0 0.0
    %3053 = vmatprep.subr.mxu0 0.0
    %3054 = vmatpush1.msra.mxu0 0.0
    %3055 = vmatprep.subr.mxu0 0.0
    %3056 = vmatpush1.msra.mxu0 0.0
    %3057 = vmatprep.subr.mxu0 0.0
    %3058 = vmatpush1.msra.mxu0 0.0
    %3059 = vmatprep.subr.mxu0 0.0
    %3060 = vmatpush1.msra.mxu0 0.0
    %3061 = vmatprep.subr.mxu0 0.0
    %3062 = vmatpush1.msra.mxu0 0.0
    %3063 = vmatprep.subr.mxu0 0.0
    %3064 = vmatpush1.msra.mxu0 0.0
    %3065 = vmatprep.subr.mxu0 0.0
    %3066 = vmatpush1.msra.mxu0 0.0
    %3067 = vmatprep.subr.mxu0 0.0
    %3068 = vmatpush1.msra.mxu0 0.0
    %3069 = vmatprep.subr.mxu0 0.0
    %3070 = vmatpush1.msra.mxu0 0.0
    %3071 = vmatprep.subr.mxu0 0.0
    %3072 = vmatpush1.msra.mxu0 0.0
    %3073 = vmatprep.subr.mxu0 0.0
    %3074 = vmatpush1.msra.mxu0 0.0
    %3075 = vmatprep.subr.mxu0 0.0
    %3076 = vmatpush1.msra.mxu0 0.0
    %3077 = vmatprep.subr.mxu0 0.0
    %3078 = vmatpush1.msra.mxu0 0.0
    %3079 = vmatprep.subr.mxu0 0.0
    %3080 = vmatpush1.msra.mxu0 0.0
    %3081 = vmatprep.subr.mxu0 0.0
    %3082 = vmatpush1.msra.mxu0 0.0
    %3083 = vmatprep.subr.mxu0 0.0
    %3084 = vmatpush1.msra.mxu0 0.0
    %3085 = vmatprep.subr.mxu0 0.0
    %3086 = vmatpush1.msra.mxu0 0.0
    %3087 = vmatprep.subr.mxu0 0.0
    %3088 = vmatpush1.msra.mxu0 0.0
    %3089 = vmatprep.subr.mxu0 0.0
    %3090 = vmatpush1.msra.mxu0 0.0
    %3091 = vmatprep.subr.mxu0 0.0
    %3092 = vmatpush1.msra.mxu0 0.0
    %3093 = vmatprep.subr.mxu0 0.0
    %3094 = vmatpush1.msra.mxu0 0.0
    %3095 = vmatprep.mubr.f32.mxu0 0.0
    %3096 = vmatmul.mubr.f32.gmra.mrb[0].mxu0 %v3011
    %v3097 = vpop.f32.mrb[0].mxu0
    %v3098 = vadd.f32 0.0, %v3097
    %v3099 = vpop.f32.mrb[0].mxu0
    %3100 = vmatprep.mubr.f32.mxu0 0.0
    %3101 = vmatmul.mubr.f32.gmra.mrb[0].mxu0 %v3014
    %v3102 = vpop.f32.mrb[0].mxu0
    %v3103 = vadd.f32 0.0, %v3102
    %v3104 = vpop.f32.mrb[0].mxu0
    %3105 = vmatprep.mubr.f32.mxu0 0.0
    %3106 = vmatmul.mubr.f32.gmra.mrb[0].mxu0 %v3017
    %v3107 = vpop.f32.mrb[0].mxu0
    %v3108 = vadd.f32 0.0, %v3107
    %v3109 = vpop.f32.mrb[0].mxu0
    %3110 = vmatprep.mubr.f32.mxu0 0.0
    %3111 = vmatmul.mubr.f32.gmra.mrb[0].mxu0 %v3020
    %v3112 = vpop.f32.mrb[0].mxu0
    %v3113 = vadd.f32 0.0, %v3112
    %v3114 = vpop.f32.mrb[0].mxu0
    %3115 = vmatprep.mubr.f32.mxu0 0.0
    %3116 = vmatmul.mubr.f32.gmra.mrb[0].mxu0 %v3023
    %v3117 = vpop.f32.mrb[0].mxu0
    %v3118 = vadd.f32 0.0, %v3117
    %v3119 = vpop.f32.mrb[0].mxu0
    %3120 = vmatprep.mubr.f32.mxu0 0.0
    %3121 = vmatmul.mubr.f32.gmra.mrb[0].mxu0 %v3026
    %v3122 = vpop.f32.mrb[0].mxu0
    %v3123 = vadd.f32 0.0, %v3122
    %v3124 = vpop.f32.mrb[0].mxu0
    %3125 = vmatprep.mubr.f32.mxu0 0.0
    %3126 = vmatmul.mubr.f32.gmra.mrb[0].mxu0 %v3029
    %v3127 = vpop.f32.mrb[0].mxu0
    %v3128 = vadd.f32 0.0, %v3127
    %v3129 = vpop.f32.mrb[0].mxu0
    %3130 = vdwg.mxu0
    %v3131 = vsel %vm2007, %v3098, -inf
    %3132 = vmax.xlane.f32.xlu0 %v3131
    %v3133 = vpop.xlane.xlu0 %3132
    %v3134 = vsel %vm2007, %v3103, -inf
    %3135 = vmax.xlane.f32.xlu0 %v3134
    %v3136 = vpop.xlane.xlu0 %3135
    %v3137 = vsel %vm2007, %v3108, -inf
    %3138 = vmax.xlane.f32.xlu0 %v3137
    %v3139 = vpop.xlane.xlu0 %3138
    %v3140 = vsel %vm2007, %v3113, -inf
    %3141 = vmax.xlane.f32.xlu0 %v3140
    %v3142 = vpop.xlane.xlu0 %3141
    %v3143 = vsel %vm2007, %v3118, -inf
    %3144 = vmax.xlane.f32.xlu0 %v3143
    %v3145 = vpop.xlane.xlu0 %3144
    %v3146 = vsel %vm2007, %v3123, -inf
    %3147 = vmax.xlane.f32.xlu0 %v3146
    %v3148 = vpop.xlane.xlu0 %3147
    %v3149 = vsel %vm2026, %v3128, -inf
    %3150 = vmax.xlane.f32.xlu0 %v3149
    %v3151 = vpop.xlane.xlu0 %3150
    %v3152 = vsub.f32 %v3098, %v3133
    %v3153 = vsub.f32 %v3103, %v3136
    %v3154 = vsub.f32 %v3108, %v3139
    %v3155 = vsub.f32 %v3113, %v3142
    %v3156 = vsub.f32 %v3118, %v3145
    %v3157 = vsub.f32 %v3123, %v3148
    %v3158 = vsub.f32 %v3128, %v3151
    %v3159 = vmul.f32 %v3152, 1.442695
    %v3160 = vpow.pop %v3159
    %v3161 = vmul.f32 %v3153, 1.442695
    %v3162 = vpow.pop %v3161
    %v3163 = vmul.f32 %v3154, 1.442695
    %v3164 = vpow.pop %v3163
    %v3165 = vmul.f32 %v3155, 1.442695
    %v3166 = vpow.pop %v3165
    %v3167 = vmul.f32 %v3156, 1.442695
    %v3168 = vpow.pop %v3167
    %v3169 = vmul.f32 %v3157, 1.442695
    %v3170 = vpow.pop %v3169
    %v3171 = vmul.f32 %v3158, 1.442695
    %v3172 = vpow.pop %v3171
    %v3173 = vsel %vm2007, %v3160, 0.0
    %3174 = vadd.xlane.f32.xlu0 %v3173
    %v3175 = vpop.xlane.xlu0 %3174
    %v3176 = vsel %vm2007, %v3162, 0.0
    %3177 = vadd.xlane.f32.xlu0 %v3176
    %v3178 = vpop.xlane.xlu0 %3177
    %v3179 = vsel %vm2007, %v3164, 0.0
    %3180 = vadd.xlane.f32.xlu0 %v3179
    %v3181 = vpop.xlane.xlu0 %3180
    %v3182 = vsel %vm2007, %v3166, 0.0
    %3183 = vadd.xlane.f32.xlu0 %v3182
    %v3184 = vpop.xlane.xlu0 %3183
    %v3185 = vsel %vm2007, %v3168, 0.0
    %3186 = vadd.xlane.f32.xlu0 %v3185
    %v3187 = vpop.xlane.xlu0 %3186
    %v3188 = vsel %vm2007, %v3170, 0.0
    %3189 = vadd.xlane.f32.xlu0 %v3188
    %v3190 = vpop.xlane.xlu0 %3189
    %v3191 = vsel %vm2026, %v3172, 0.0
    %3192 = vadd.xlane.f32.xlu0 %v3191
    %v3193 = vpop.xlane.xlu0 %3192
    %v3194 = vrcp.pop %v3175
    %v3195 = vmul.f32 %v3160, %v3194
    %v3196 = vrcp.pop %v3178
    %v3197 = vmul.f32 %v3162, %v3196
    %v3198 = vrcp.pop %v3181
    %v3199 = vmul.f32 %v3164, %v3198
    %v3200 = vrcp.pop %v3184
    %v3201 = vmul.f32 %v3166, %v3200
    %v3202 = vrcp.pop %v3187
    %v3203 = vmul.f32 %v3168, %v3202
    %v3204 = vrcp.pop %v3190
    %v3205 = vmul.f32 %v3170, %v3204
    %v3206 = vrcp.pop %v3193
    %v3207 = vmul.f32 %v3172, %v3206
    %v3209 = vsel %vm2007, %v2977, 0
    %v3212 = vsel %vm2007, %v3195, 0
    %v3215 = vsel %vm2007, %v3197, 0
    %v3218 = vsel %vm2007, %v3199, 0
    %v3221 = vsel %vm2007, %v3201, 0
    %v3224 = vsel %vm2007, %v3203, 0
    %v3227 = vsel %vm2007, %v3205, 0
    %v3230 = vsel %vm2007, %v3207, 0
    %3232 = vmatprep.subr.mxu0 0.0
    %3233 = vmatpush1.xpose.msra.mxu0 %v3212
    %3234 = vmatprep.subr.mxu0 0.0
    %3235 = vmatpush1.xpose.msra.mxu0 %v3215
    %3236 = vmatprep.subr.mxu0 0.0
    %3237 = vmatpush1.xpose.msra.mxu0 %v3218
    %3238 = vmatprep.subr.mxu0 0.0
    %3239 = vmatpush1.xpose.msra.mxu0 %v3221
    %3240 = vmatprep.subr.mxu0 0.0
    %3241 = vmatpush1.xpose.msra.mxu0 %v3224
    %3242 = vmatprep.subr.mxu0 0.0
    %3243 = vmatpush1.xpose.msra.mxu0 %v3227
    %3244 = vmatprep.subr.mxu0 0.0
    %3245 = vmatpush1.xpose.msra.mxu0 %v3230
    %3246 = vmatprep.subr.mxu0 0.0
    %3247 = vmatpush1.xpose.msra.mxu0 0.0
    %3248 = vmatprep.subr.mxu0 0.0
    %3249 = vmatpush1.xpose.msra.mxu0 0.0
    %3250 = vmatprep.subr.mxu0 0.0
    %3251 = vmatpush1.xpose.msra.mxu0 0.0
    %3252 = vmatprep.subr.mxu0 0.0
    %3253 = vmatpush1.xpose.msra.mxu0 0.0
    %3254 = vmatprep.subr.mxu0 0.0
    %3255 = vmatpush1.xpose.msra.mxu0 0.0
    %3256 = vmatprep.subr.mxu0 0.0
    %3257 = vmatpush1.xpose.msra.mxu0 0.0
    %3258 = vmatprep.subr.mxu0 0.0
    %3259 = vmatpush1.xpose.msra.mxu0 0.0
    %3260 = vmatprep.subr.mxu0 0.0
    %3261 = vmatpush1.xpose.msra.mxu0 0.0
    %3262 = vmatprep.subr.mxu0 0.0
    %3263 = vmatpush1.xpose.msra.mxu0 0.0
    %3264 = vmatprep.subr.mxu0 0.0
    %3265 = vmatpush1.xpose.msra.mxu0 0.0
    %3266 = vmatprep.subr.mxu0 0.0
    %3267 = vmatpush1.xpose.msra.mxu0 0.0
    %3268 = vmatprep.subr.mxu0 0.0
    %3269 = vmatpush1.xpose.msra.mxu0 0.0
    %3270 = vmatprep.subr.mxu0 0.0
    %3271 = vmatpush1.xpose.msra.mxu0 0.0
    %3272 = vmatprep.subr.mxu0 0.0
    %3273 = vmatpush1.xpose.msra.mxu0 0.0
    %3274 = vmatprep.subr.mxu0 0.0
    %3275 = vmatpush1.xpose.msra.mxu0 0.0
    %3276 = vmatprep.subr.mxu0 0.0
    %3277 = vmatpush1.xpose.msra.mxu0 0.0
    %3278 = vmatprep.subr.mxu0 0.0
    %3279 = vmatpush1.xpose.msra.mxu0 0.0
    %3280 = vmatprep.subr.mxu0 0.0
    %3281 = vmatpush1.xpose.msra.mxu0 0.0
    %3282 = vmatprep.subr.mxu0 0.0
    %3283 = vmatpush1.xpose.msra.mxu0 0.0
    %3284 = vmatprep.subr.mxu0 0.0
    %3285 = vmatpush1.xpose.msra.mxu0 0.0
    %3286 = vmatprep.subr.mxu0 0.0
    %3287 = vmatpush1.xpose.msra.mxu0 0.0
    %3288 = vmatprep.subr.mxu0 0.0
    %3289 = vmatpush1.xpose.msra.mxu0 0.0
    %3290 = vmatprep.subr.mxu0 0.0
    %3291 = vmatpush1.xpose.msra.mxu0 0.0
    %3292 = vmatprep.subr.mxu0 0.0
    %3293 = vmatpush1.xpose.msra.mxu0 0.0
    %3294 = vmatprep.subr.mxu0 0.0
    %3295 = vmatpush1.xpose.msra.mxu0 0.0
    %3296 = vmatprep.mubr.f32.mxu0 0.0
    %3297 = vmatmul.mubr.f32.gmra.mrb[0].mxu0 %v3209
    %v3298 = vpop.f32.mrb[0].mxu0
    %v3299 = vadd.f32 0.0, %v3298
    %v3300 = vpop.f32.mrb[0].mxu0
    %3301 = vdwg.mxu0
    %3303 = vrot.lane.b32.xlu0 %v2528, 7
    %v3304 = vpop.permute.xlu0 %3303
    %3307 = vrot.lane.b32.xlu0 %v2177, 7
    %v3308 = vpop.permute.xlu0 %3307
    %3310 = vrot.lane.b32.xlu0 %v2528, 14
    %v3311 = vpop.permute.xlu0 %3310
    %3313 = vrot.lane.b32.xlu0 %v2177, 14
    %v3314 = vpop.permute.xlu0 %3313
    %3316 = vrot.lane.b32.xlu0 %v2528, 21
    %v3317 = vpop.permute.xlu0 %3316
    %3319 = vrot.lane.b32.xlu0 %v2177, 21
    %v3320 = vpop.permute.xlu0 %3319
    %3322 = vrot.lane.b32.xlu0 %v2528, 28
    %v3323 = vpop.permute.xlu0 %3322
    %3325 = vrot.lane.b32.xlu0 %v2177, 28
    %v3326 = vpop.permute.xlu0 %3325
    %3328 = vrot.lane.b32.xlu0 %v2528, 35
    %v3329 = vpop.permute.xlu0 %3328
    %3331 = vrot.lane.b32.xlu0 %v2177, 35
    %v3332 = vpop.permute.xlu0 %3331
    %3334 = vrot.lane.b32.xlu0 %v2528, 42
    %v3335 = vpop.permute.xlu0 %3334
    %3337 = vrot.lane.b32.xlu0 %v2177, 42
    %v3338 = vpop.permute.xlu0 %3337
    %3340 = vrot.lane.b32.xlu0 %v2528, 49
    %v3341 = vpop.permute.xlu0 %3340
    %3344 = vrot.lane.b32.xlu0 %v2945, 98
    %v3345 = vpop.permute.xlu0 %3344
    %3348 = vrot.lane.b32.xlu0 %v3299, 105
    %v3349 = vpop.permute.xlu0 %3348
    %v3351 = vsel %vm629, %v2177, %v3304
    %v3352 = vsel %vm90, %v3351, %v3308
    %v3353 = vsel %vm1840, %v3352, %v3311
    %v3354 = vsel %vm92, %v3353, %v3314
    %v3355 = vsel %vm1847, %v3354, %v3317
    %v3356 = vsel %vm94, %v3355, %v3320
    %v3357 = vsel %vm2007, %v3356, %v3323
    %v3358 = vsel %vm96, %v3357, %v3326
    %v3359 = vsel %vm963, %v3358, %v3329
    %v3360 = vsel %vm98, %v3359, %v3332
    %vm3361 = vcmask 629760
    %v3362 = vsel %vm3361, %v3360, %v3335
    %v3363 = vsel %vm100, %v3362, %v3338
    %vm3364 = vcmask 744448
    %v3365 = vsel %vm3364, %v3363, %v3341
    %v3366 = vsel %vm102, %v3365, %v3345
    %vm3367 = vcmask 859136
    %v3368 = vsel %vm3367, %v3366, %v3349
    %3369 = vrot.lane.b32.xlu0 %v2945, 121
    %v3370 = vpop.permute.xlu0 %3369
    %3372 = vrot.lane.b32.xlu0 %v3299, 7
    %v3373 = vpop.permute.xlu0 %3372
    %3375 = vrot.lane.b32.xlu0 %v2945, 7
    %v3376 = vpop.permute.xlu0 %3375
    %3378 = vrot.lane.b32.xlu0 %v3299, 14
    %v3379 = vpop.permute.xlu0 %3378
    %3381 = vrot.lane.b32.xlu0 %v2945, 14
    %v3382 = vpop.permute.xlu0 %3381
    %3384 = vrot.lane.b32.xlu0 %v3299, 21
    %v3385 = vpop.permute.xlu0 %3384
    %3387 = vrot.lane.b32.xlu0 %v2945, 21
    %v3388 = vpop.permute.xlu0 %3387
    %3390 = vrot.lane.b32.xlu0 %v3299, 28
    %v3391 = vpop.permute.xlu0 %3390
    %3393 = vrot.lane.b32.xlu0 %v2945, 28
    %v3394 = vpop.permute.xlu0 %3393
    %3396 = vrot.lane.b32.xlu0 %v3299, 35
    %v3397 = vpop.permute.xlu0 %3396
    %v3399 = vsel %vm629, %v3370, %v3299
    %v3400 = vsel %vm90, %v3399, %v2945
    %v3401 = vsel %vm1840, %v3400, %v3373
    %v3402 = vsel %vm92, %v3401, %v3376
    %v3403 = vsel %vm1847, %v3402, %v3379
    %v3404 = vsel %vm94, %v3403, %v3382
    %v3405 = vsel %vm2007, %v3404, %v3385
    %v3406 = vsel %vm96, %v3405, %v3388
    %v3407 = vsel %vm963, %v3406, %v3391
    %v3408 = vsel %vm98, %v3407, %v3394
    %v3409 = vsel %vm3361, %v3408, %v3397
    %3411 = vrot.lane.b32.xlu0 %v3409, 112
    %v3412 = vpop.permute.xlu0 %3411
    %v3414 = vsel %vm104, %v3368, %v3412
    %s3415 = scalar_lea.vmem [#allocation2], 16
    %v3416 = vld [vmem:[%s3415] sm:$0xff]
    %v3417 = vld [vmem:[%s3415 + $0x8] sm:$0xff]
    %3419 = vrot.lane.b32.xlu0 %v3417, 74
    %v3420 = vpop.permute.xlu0 %3419
    %3423 = vrot.lane.b32.xlu0 %v3416, 14
    %v3424 = vpop.permute.xlu0 %3423
    %3425 = vrot.lane.b32.xlu0 %v3417, 14
    %v3426 = vpop.permute.xlu0 %3425
    %v3427 = vsel %vm90, %v3424, %v3426
    %v3430 = vsel %vm90, %v3420, %v3424
    %3431 = vrot.lane.b32.xlu0 %v3417, 88
    %v3432 = vpop.permute.xlu0 %3431
    %3434 = vrot.lane.b32.xlu0 %v3416, 28
    %v3435 = vpop.permute.xlu0 %3434
    %3436 = vrot.lane.b32.xlu0 %v3417, 28
    %v3437 = vpop.permute.xlu0 %3436
    %v3438 = vsel %vm92, %v3435, %v3437
    %v3441 = vsel %vm92, %v3432, %v3435
    %3442 = vrot.lane.b32.xlu0 %v3417, 102
    %v3443 = vpop.permute.xlu0 %3442
    %3445 = vrot.lane.b32.xlu0 %v3416, 42
    %v3446 = vpop.permute.xlu0 %3445
    %3447 = vrot.lane.b32.xlu0 %v3417, 42
    %v3448 = vpop.permute.xlu0 %3447
    %v3449 = vsel %vm94, %v3446, %v3448
    %v3452 = vsel %vm94, %v3443, %v3446
    %3453 = vrot.lane.b32.xlu0 %v3417, 116
    %v3454 = vpop.permute.xlu0 %3453
    %3456 = vrot.lane.b32.xlu0 %v3416, 56
    %v3457 = vpop.permute.xlu0 %3456
    %3458 = vrot.lane.b32.xlu0 %v3417, 56
    %v3459 = vpop.permute.xlu0 %3458
    %v3460 = vsel %vm96, %v3457, %v3459
    %v3463 = vsel %vm96, %v3454, %v3457
    %3464 = vrot.lane.b32.xlu0 %v3416, 2
    %v3465 = vpop.permute.xlu0 %3464
    %3466 = vrot.lane.b32.xlu0 %v3417, 2
    %v3467 = vpop.permute.xlu0 %3466
    %v3468 = vsel %vm216, %v3465, %v3467
    %3470 = vrot.lane.b32.xlu0 %v3416, 70
    %v3471 = vpop.permute.xlu0 %3470
    %v3473 = vsel %vm98, %v3468, %v3471
    %3474 = vrot.lane.b32.xlu0 %v3416, 16
    %v3475 = vpop.permute.xlu0 %3474
    %3476 = vrot.lane.b32.xlu0 %v3417, 16
    %v3477 = vpop.permute.xlu0 %3476
    %v3478 = vsel %vm227, %v3475, %v3477
    %3480 = vrot.lane.b32.xlu0 %v3416, 84
    %v3481 = vpop.permute.xlu0 %3480
    %v3483 = vsel %vm100, %v3478, %v3481
    %3484 = vrot.lane.b32.xlu0 %v3416, 30
    %v3485 = vpop.permute.xlu0 %3484
    %3486 = vrot.lane.b32.xlu0 %v3417, 30
    %v3487 = vpop.permute.xlu0 %3486
    %v3488 = vsel %vm238, %v3485, %v3487
    %3490 = vrot.lane.b32.xlu0 %v3416, 98
    %v3491 = vpop.permute.xlu0 %3490
    %v3493 = vsel %vm102, %v3488, %v3491
    %v3494 = vsel %vm245, %v3416, %v3430
    %v3495 = vsel %vm245, %v3417, %v3427
    %v3496 = vsel %vm248, %v3494, %v3441
    %v3497 = vsel %vm248, %v3495, %v3438
    %v3498 = vsel %vm251, %v3496, %v3452
    %v3499 = vsel %vm251, %v3497, %v3449
    %v3500 = vsel %vm254, %v3498, %v3463
    %v3501 = vsel %vm254, %v3499, %v3460
    %v3502 = vsel %vm257, %v3500, %v3473
    %v3503 = vsel %vm257, %v3501, %v3471
    %v3504 = vsel %vm260, %v3502, %v3483
    %v3505 = vsel %vm260, %v3503, %v3481
    %v3506 = vsel %vm263, %v3504, %v3493
    %v3507 = vsel %vm263, %v3505, %v3491
    %3508 = vmatprep.subr.mxu0 %v3507
    %3509 = vmatpush1.msra.mxu0 %v3506
    %3510 = vmatprep.subr.mxu0 0.0
    %3511 = vmatpush1.msra.mxu0 0.0
    %3512 = vmatprep.subr.mxu0 0.0
    %3513 = vmatpush1.msra.mxu0 0.0
    %3514 = vmatprep.subr.mxu0 0.0
    %3515 = vmatpush1.msra.mxu0 0.0
    %3516 = vmatprep.subr.mxu0 0.0
    %3517 = vmatpush1.msra.mxu0 0.0
    %3518 = vmatprep.subr.mxu0 0.0
    %3519 = vmatpush1.msra.mxu0 0.0
    %3520 = vmatprep.subr.mxu0 0.0
    %3521 = vmatpush1.msra.mxu0 0.0
    %3522 = vmatprep.subr.mxu0 0.0
    %3523 = vmatpush1.msra.mxu0 0.0
    %3524 = vmatprep.subr.mxu0 0.0
    %3525 = vmatpush1.msra.mxu0 0.0
    %3526 = vmatprep.subr.mxu0 0.0
    %3527 = vmatpush1.msra.mxu0 0.0
    %3528 = vmatprep.subr.mxu0 0.0
    %3529 = vmatpush1.msra.mxu0 0.0
    %3530 = vmatprep.subr.mxu0 0.0
    %3531 = vmatpush1.msra.mxu0 0.0
    %3532 = vmatprep.subr.mxu0 0.0
    %3533 = vmatpush1.msra.mxu0 0.0
    %3534 = vmatprep.subr.mxu0 0.0
    %3535 = vmatpush1.msra.mxu0 0.0
    %3536 = vmatprep.subr.mxu0 0.0
    %3537 = vmatpush1.msra.mxu0 0.0
    %3538 = vmatprep.subr.mxu0 0.0
    %3539 = vmatpush1.msra.mxu0 0.0
    %3540 = vmatprep.subr.mxu0 0.0
    %3541 = vmatpush1.msra.mxu0 0.0
    %3542 = vmatprep.subr.mxu0 0.0
    %3543 = vmatpush1.msra.mxu0 0.0
    %3544 = vmatprep.subr.mxu0 0.0
    %3545 = vmatpush1.msra.mxu0 0.0
    %3546 = vmatprep.subr.mxu0 0.0
    %3547 = vmatpush1.msra.mxu0 0.0
    %3548 = vmatprep.subr.mxu0 0.0
    %3549 = vmatpush1.msra.mxu0 0.0
    %3550 = vmatprep.subr.mxu0 0.0
    %3551 = vmatpush1.msra.mxu0 0.0
    %3552 = vmatprep.subr.mxu0 0.0
    %3553 = vmatpush1.msra.mxu0 0.0
    %3554 = vmatprep.subr.mxu0 0.0
    %3555 = vmatpush1.msra.mxu0 0.0
    %3556 = vmatprep.subr.mxu0 0.0
    %3557 = vmatpush1.msra.mxu0 0.0
    %3558 = vmatprep.subr.mxu0 0.0
    %3559 = vmatpush1.msra.mxu0 0.0
    %3560 = vmatprep.subr.mxu0 0.0
    %3561 = vmatpush1.msra.mxu0 0.0
    %3562 = vmatprep.subr.mxu0 0.0
    %3563 = vmatpush1.msra.mxu0 0.0
    %3564 = vmatprep.subr.mxu0 0.0
    %3565 = vmatpush1.msra.mxu0 0.0
    %3566 = vmatprep.subr.mxu0 0.0
    %3567 = vmatpush1.msra.mxu0 0.0
    %3568 = vmatprep.subr.mxu0 0.0
    %3569 = vmatpush1.msra.mxu0 0.0
    %3570 = vmatprep.subr.mxu0 0.0
    %3571 = vmatpush1.msra.mxu0 0.0
    %3572 = vmatprep.mubr.f32.mxu0 0.0
    %3573 = vmatmul.mubr.f32.gmra.mrb[0].mxu0 %v273
    %v3574 = vpop.f32.mrb[0].mxu0
    %v3575 = vadd.f32 %v269, %v3574
    %v3576 = vpop.f32.mrb[0].mxu0
    %v3577 = vadd.f32 %v269, %v3576
    %3578 = vdwg.mxu0
    %v3579 = vmul.f32 %v3575, 0.5
    %v3580 = vmul.f32 %v3577, 0.5
    %v3581 = vmul.f32 %v3575, 0.70710677
    %v3582 = vmul.f32 %v3577, 0.70710677
    %vm3583 = vcmp.ge.f32.partialorder %v3581, 0.0
    %vm3584 = vcmp.ge.f32.partialorder %v3582, 0.0
    %v3585 = vsel %vm3583, 1.0, -1.0
    %v3586 = vsel %vm3584, 1.0, -1.0
    %v3587 = vand.u32 2147483647, %v3581
    %v3588 = vand.u32 2147483647, %v3582
    %v3589 = vmul.f32 %v3587, 0.3275911
    %v3590 = vmul.f32 %v3588, 0.3275911
    %v3591 = vadd.f32 %v3589, 1.0
    %v3592 = vadd.f32 %v3590, 1.0
    %v3593 = vrcp.pop %v3591
    %v3594 = vmul.f32 1.0, %v3593
    %v3595 = vrcp.pop %v3592
    %v3596 = vmul.f32 1.0, %v3595
    %v3597 = vmul.f32 %v3594, 1.0614054
    %v3598 = vmul.f32 %v3596, 1.0614054
    %v3599 = vadd.f32 %v3597, -1.4531521
    %v3600 = vadd.f32 %v3598, -1.4531521
    %v3601 = vmul.f32 %v3599, %v3594
    %v3602 = vmul.f32 %v3600, %v3596
    %v3603 = vadd.f32 %v3601, 1.4214138
    %v3604 = vadd.f32 %v3602, 1.4214138
    %v3605 = vmul.f32 %v3603, %v3594
    %v3606 = vmul.f32 %v3604, %v3596
    %v3607 = vadd.f32 %v3605, -0.28449672
    %v3608 = vadd.f32 %v3606, -0.28449672
    %v3609 = vmul.f32 %v3607, %v3594
    %v3610 = vmul.f32 %v3608, %v3596
    %v3611 = vadd.f32 %v3609, 0.2548296
    %v3612 = vadd.f32 %v3610, 0.2548296
    %v3613 = vmul.f32 %v3611, %v3594
    %v3614 = vmul.f32 %v3612, %v3596
    %v3615 = vsub.f32 0.0, %v3587
    %v3616 = vsub.f32 0.0, %v3588
    %v3617 = vmul.f32 %v3615, %v3587
    %v3618 = vmul.f32 %v3616, %v3588
    %v3619 = vmul.f32 %v3617, 1.442695
    %v3620 = vpow.pop %v3619
    %v3621 = vmul.f32 %v3618, 1.442695
    %v3622 = vpow.pop %v3621
    %v3623 = vmul.f32 %v3613, %v3620
    %v3624 = vmul.f32 %v3614, %v3622
    %v3625 = vsub.f32 1.0, %v3623
    %v3626 = vsub.f32 1.0, %v3624
    %v3627 = vmul.f32 %v3585, %v3625
    %v3628 = vmul.f32 %v3586, %v3626
    %v3629 = vadd.f32 %v3627, 1.0
    %v3630 = vadd.f32 %v3628, 1.0
    %v3631 = vmul.f32 %v3579, %v3629
    %v3632 = vmul.f32 %v3580, %v3630
    %3634 = vrot.lane.b32.xlu0 %v3632, 61
    %v3635 = vpop.permute.xlu0 %3634
    %3638 = vrot.lane.b32.xlu0 %v3631, 1
    %v3639 = vpop.permute.xlu0 %3638
    %3640 = vrot.lane.b32.xlu0 %v3632, 1
    %v3641 = vpop.permute.xlu0 %3640
    %v3642 = vsel %vm409, %v3639, %v3641
    %v3644 = vsel %vm409, %v3635, %v3639
    %3645 = vrot.lane.b32.xlu0 %v3631, 115
    %v3646 = vpop.permute.xlu0 %3645
    %3647 = vrot.lane.b32.xlu0 %v3632, 115
    %v3648 = vpop.permute.xlu0 %3647
    %v3649 = vsel %vm417, %v3646, %v3648
    %3651 = vrot.lane.b32.xlu0 %v3631, 55
    %v3652 = vpop.permute.xlu0 %3651
    %v3654 = vsel %vm423, %v3648, %v3652
    %v3656 = vrot.slane %v3644, 1
    %v3657 = vrot.slane %v3642, 1
    %v3661 = vrot.slane %v3649, 1
    %v3662 = vrot.slane %v3654, 1
    %v3665 = vsel %vm425, %v3656, %v3661
    %v3666 = vsel %vm426, %v3657, %v3662
    %3667 = vrot.lane.b32.xlu0 %v3632, 62
    %v3668 = vpop.permute.xlu0 %3667
    %3670 = vrot.lane.b32.xlu0 %v3631, 2
    %v3671 = vpop.permute.xlu0 %3670
    %3672 = vrot.lane.b32.xlu0 %v3632, 2
    %v3673 = vpop.permute.xlu0 %3672
    %v3674 = vsel %vm216, %v3671, %v3673
    %v3676 = vsel %vm216, %v3668, %v3671
    %3677 = vrot.lane.b32.xlu0 %v3631, 116
    %v3678 = vpop.permute.xlu0 %3677
    %3679 = vrot.lane.b32.xlu0 %v3632, 116
    %v3680 = vpop.permute.xlu0 %3679
    %v3681 = vsel %vm453, %v3678, %v3680
    %3683 = vrot.lane.b32.xlu0 %v3631, 56
    %v3684 = vpop.permute.xlu0 %3683
    %v3686 = vsel %vm96, %v3680, %v3684
    %v3688 = vrot.slane %v3676, 2
    %v3689 = vrot.slane %v3674, 2
    %v3693 = vrot.slane %v3681, 2
    %v3694 = vrot.slane %v3686, 2
    %v3697 = vsel %vm460, %v3688, %v3693
    %v3698 = vsel %vm461, %v3689, %v3694
    %3699 = vrot.lane.b32.xlu0 %v3632, 63
    %v3700 = vpop.permute.xlu0 %3699
    %3702 = vrot.lane.b32.xlu0 %v3631, 3
    %v3703 = vpop.permute.xlu0 %3702
    %3704 = vrot.lane.b32.xlu0 %v3632, 3
    %v3705 = vpop.permute.xlu0 %3704
    %v3706 = vsel %vm481, %v3703, %v3705
    %v3708 = vsel %vm481, %v3700, %v3703
    %3709 = vrot.lane.b32.xlu0 %v3631, 117
    %v3710 = vpop.permute.xlu0 %3709
    %3711 = vrot.lane.b32.xlu0 %v3632, 117
    %v3712 = vpop.permute.xlu0 %3711
    %v3713 = vsel %vm489, %v3710, %v3712
    %3715 = vrot.lane.b32.xlu0 %v3631, 57
    %v3716 = vpop.permute.xlu0 %3715
    %v3718 = vsel %vm495, %v3712, %v3716
    %v3720 = vrot.slane %v3708, 3
    %v3721 = vrot.slane %v3706, 3
    %v3725 = vrot.slane %v3713, 3
    %v3726 = vrot.slane %v3718, 3
    %v3729 = vsel %vm497, %v3720, %v3725
    %v3730 = vsel %vm498, %v3721, %v3726
    %3731 = vrot.lane.b32.xlu0 %v3632, 64
    %v3732 = vpop.permute.xlu0 %3731
    %3734 = vrot.lane.b32.xlu0 %v3631, 4
    %v3735 = vpop.permute.xlu0 %3734
    %3736 = vrot.lane.b32.xlu0 %v3632, 4
    %v3737 = vpop.permute.xlu0 %3736
    %v3738 = vsel %vm518, %v3735, %v3737
    %v3740 = vsel %vm518, %v3732, %v3735
    %3741 = vrot.lane.b32.xlu0 %v3631, 118
    %v3742 = vpop.permute.xlu0 %3741
    %3743 = vrot.lane.b32.xlu0 %v3632, 118
    %v3744 = vpop.permute.xlu0 %3743
    %v3745 = vsel %vm526, %v3742, %v3744
    %3747 = vrot.lane.b32.xlu0 %v3631, 58
    %v3748 = vpop.permute.xlu0 %3747
    %v3750 = vsel %vm532, %v3744, %v3748
    %v3752 = vrot.slane %v3740, 4
    %v3753 = vrot.slane %v3738, 4
    %v3757 = vrot.slane %v3745, 4
    %v3758 = vrot.slane %v3750, 4
    %v3761 = vsel %vm534, %v3752, %v3757
    %v3762 = vsel %vm535, %v3753, %v3758
    %3763 = vrot.lane.b32.xlu0 %v3632, 65
    %v3764 = vpop.permute.xlu0 %3763
    %3766 = vrot.lane.b32.xlu0 %v3631, 5
    %v3767 = vpop.permute.xlu0 %3766
    %3768 = vrot.lane.b32.xlu0 %v3632, 5
    %v3769 = vpop.permute.xlu0 %3768
    %v3770 = vsel %vm555, %v3767, %v3769
    %v3772 = vsel %vm555, %v3764, %v3767
    %3773 = vrot.lane.b32.xlu0 %v3631, 119
    %v3774 = vpop.permute.xlu0 %3773
    %3775 = vrot.lane.b32.xlu0 %v3632, 119
    %v3776 = vpop.permute.xlu0 %3775
    %v3777 = vsel %vm563, %v3774, %v3776
    %3779 = vrot.lane.b32.xlu0 %v3631, 59
    %v3780 = vpop.permute.xlu0 %3779
    %v3782 = vsel %vm569, %v3776, %v3780
    %v3784 = vrot.slane %v3772, 5
    %v3785 = vrot.slane %v3770, 5
    %v3789 = vrot.slane %v3777, 5
    %v3790 = vrot.slane %v3782, 5
    %v3793 = vsel %vm571, %v3784, %v3789
    %v3794 = vsel %vm572, %v3785, %v3790
    %3795 = vrot.lane.b32.xlu0 %v3632, 66
    %v3796 = vpop.permute.xlu0 %3795
    %3798 = vrot.lane.b32.xlu0 %v3631, 6
    %v3799 = vpop.permute.xlu0 %3798
    %3800 = vrot.lane.b32.xlu0 %v3632, 6
    %v3801 = vpop.permute.xlu0 %3800
    %v3802 = vsel %vm592, %v3799, %v3801
    %v3804 = vsel %vm592, %v3796, %v3799
    %3805 = vrot.lane.b32.xlu0 %v3631, 120
    %v3806 = vpop.permute.xlu0 %3805
    %3807 = vrot.lane.b32.xlu0 %v3632, 120
    %v3808 = vpop.permute.xlu0 %3807
    %v3809 = vsel %vm600, %v3806, %v3808
    %3811 = vrot.lane.b32.xlu0 %v3631, 60
    %v3812 = vpop.permute.xlu0 %3811
    %v3814 = vsel %vm606, %v3808, %v3812
    %v3816 = vrot.slane %v3804, 6
    %v3817 = vrot.slane %v3802, 6
    %v3821 = vrot.slane %v3809, 6
    %v3822 = vrot.slane %v3814, 6
    %v3825 = vsel %vm608, %v3816, %v3821
    %v3826 = vsel %vm609, %v3817, %v3822
    %3827 = vrot.lane.b32.xlu0 %v3632, 67
    %v3828 = vpop.permute.xlu0 %3827
    %3830 = vrot.lane.b32.xlu0 %v3631, 7
    %v3831 = vpop.permute.xlu0 %3830
    %3832 = vrot.lane.b32.xlu0 %v3632, 7
    %v3833 = vpop.permute.xlu0 %3832
    %v3834 = vsel %vm629, %v3831, %v3833
    %v3836 = vsel %vm629, %v3828, %v3831
    %3837 = vrot.lane.b32.xlu0 %v3631, 121
    %v3838 = vpop.permute.xlu0 %3837
    %3839 = vrot.lane.b32.xlu0 %v3632, 121
    %v3840 = vpop.permute.xlu0 %3839
    %v3841 = vsel %vm637, %v3838, %v3840
    %3843 = vrot.lane.b32.xlu0 %v3631, 61
    %v3844 = vpop.permute.xlu0 %3843
    %v3846 = vsel %vm643, %v3840, %v3844
    %v3848 = vrot.slane %v3836, 7
    %v3849 = vrot.slane %v3834, 7
    %v3853 = vrot.slane %v3841, 7
    %v3854 = vrot.slane %v3846, 7
    %v3857 = vsel %vm645, %v3848, %v3853
    %v3858 = vsel %vm646, %v3849, %v3854
    %v3861 = vrot.slane %v3665, 7
    %v3862 = vrot.slane %v3666, 7
    %v3867 = vrot.slane %v3697, 6
    %v3868 = vrot.slane %v3698, 6
    %v3873 = vrot.slane %v3729, 5
    %v3874 = vrot.slane %v3730, 5
    %v3879 = vrot.slane %v3761, 4
    %v3880 = vrot.slane %v3762, 4
    %v3885 = vrot.slane %v3793, 3
    %v3886 = vrot.slane %v3794, 3
    %v3891 = vrot.slane %v3825, 2
    %v3892 = vrot.slane %v3826, 2
    %v3897 = vrot.slane %v3857, 1
    %v3898 = vrot.slane %v3858, 1
    %v3901 = vsel %vm245, %v3631, %v3861
    %v3902 = vsel %vm245, %v3632, %v3862
    %v3903 = vsel %vm248, %v3901, %v3867
    %v3904 = vsel %vm248, %v3902, %v3868
    %v3905 = vsel %vm251, %v3903, %v3873
    %v3906 = vsel %vm251, %v3904, %v3874
    %v3907 = vsel %vm254, %v3905, %v3879
    %v3908 = vsel %vm254, %v3906, %v3880
    %v3909 = vsel %vm257, %v3907, %v3885
    %v3910 = vsel %vm257, %v3908, %v3886
    %v3911 = vsel %vm260, %v3909, %v3891
    %v3912 = vsel %vm260, %v3910, %v3892
    %v3913 = vsel %vm263, %v3911, %v3897
    %v3914 = vsel %vm263, %v3912, %v3898
    %3915 = vmatprep.subr.mxu0 %v3914
    %3916 = vmatpush1.msra.mxu0 %v3913
    %3917 = vmatprep.subr.mxu0 0.0
    %3918 = vmatpush1.msra.mxu0 0.0
    %3919 = vmatprep.subr.mxu0 0.0
    %3920 = vmatpush1.msra.mxu0 0.0
    %3921 = vmatprep.subr.mxu0 0.0
    %3922 = vmatpush1.msra.mxu0 0.0
    %3923 = vmatprep.subr.mxu0 0.0
    %3924 = vmatpush1.msra.mxu0 0.0
    %3925 = vmatprep.subr.mxu0 0.0
    %3926 = vmatpush1.msra.mxu0 0.0
    %3927 = vmatprep.subr.mxu0 0.0
    %3928 = vmatpush1.msra.mxu0 0.0
    %3929 = vmatprep.subr.mxu0 0.0
    %3930 = vmatpush1.msra.mxu0 0.0
    %3931 = vmatprep.subr.mxu0 0.0
    %3932 = vmatpush1.msra.mxu0 0.0
    %3933 = vmatprep.subr.mxu0 0.0
    %3934 = vmatpush1.msra.mxu0 0.0
    %3935 = vmatprep.subr.mxu0 0.0
    %3936 = vmatpush1.msra.mxu0 0.0
    %3937 = vmatprep.subr.mxu0 0.0
    %3938 = vmatpush1.msra.mxu0 0.0
    %3939 = vmatprep.subr.mxu0 0.0
    %3940 = vmatpush1.msra.mxu0 0.0
    %3941 = vmatprep.subr.mxu0 0.0
    %3942 = vmatpush1.msra.mxu0 0.0
    %3943 = vmatprep.subr.mxu0 0.0
    %3944 = vmatpush1.msra.mxu0 0.0
    %3945 = vmatprep.subr.mxu0 0.0
    %3946 = vmatpush1.msra.mxu0 0.0
    %3947 = vmatprep.subr.mxu0 0.0
    %3948 = vmatpush1.msra.mxu0 0.0
    %3949 = vmatprep.subr.mxu0 0.0
    %3950 = vmatpush1.msra.mxu0 0.0
    %3951 = vmatprep.subr.mxu0 0.0
    %3952 = vmatpush1.msra.mxu0 0.0
    %3953 = vmatprep.subr.mxu0 0.0
    %3954 = vmatpush1.msra.mxu0 0.0
    %3955 = vmatprep.subr.mxu0 0.0
    %3956 = vmatpush1.msra.mxu0 0.0
    %3957 = vmatprep.subr.mxu0 0.0
    %3958 = vmatpush1.msra.mxu0 0.0
    %3959 = vmatprep.subr.mxu0 0.0
    %3960 = vmatpush1.msra.mxu0 0.0
    %3961 = vmatprep.subr.mxu0 0.0
    %3962 = vmatpush1.msra.mxu0 0.0
    %3963 = vmatprep.subr.mxu0 0.0
    %3964 = vmatpush1.msra.mxu0 0.0
    %3965 = vmatprep.subr.mxu0 0.0
    %3966 = vmatpush1.msra.mxu0 0.0
    %3967 = vmatprep.subr.mxu0 0.0
    %3968 = vmatpush1.msra.mxu0 0.0
    %3969 = vmatprep.subr.mxu0 0.0
    %3970 = vmatpush1.msra.mxu0 0.0
    %3971 = vmatprep.subr.mxu0 0.0
    %3972 = vmatpush1.msra.mxu0 0.0
    %3973 = vmatprep.subr.mxu0 0.0
    %3974 = vmatpush1.msra.mxu0 0.0
    %3975 = vmatprep.subr.mxu0 0.0
    %3976 = vmatpush1.msra.mxu0 0.0
    %3977 = vmatprep.subr.mxu0 0.0
    %3978 = vmatpush1.msra.mxu0 0.0
    %3979 = vmatprep.mubr.f32.mxu0 0.0
    %3980 = vmatmul.mubr.f32.gmra.mrb[0].mxu0 %v721
    %v3981 = vpop.f32.mrb[0].mxu0
    %v3982 = vadd.f32 %v718, %v3981
    %v3983 = vpop.f32.mrb[0].mxu0
    %v3984 = vadd.f32 %v718, %v3983
    %3985 = vdwg.mxu0
    %v3986 = vadd.f32 %v3982, %v3416
    %v3987 = vadd.f32 %v3984, %v3417
    %3988 = vrot.lane.b32.xlu0 %v3417, 73
    %v3989 = vpop.permute.xlu0 %3988
    %3991 = vrot.lane.b32.xlu0 %v3416, 13
    %v3992 = vpop.permute.xlu0 %3991
    %3993 = vrot.lane.b32.xlu0 %v3417, 13
    %v3994 = vpop.permute.xlu0 %3993
    %v3995 = vsel %vm803, %v3992, %v3994
    %v3997 = vsel %vm803, %v3989, %v3992
    %3998 = vrot.lane.b32.xlu0 %v3416, 127
    %v3999 = vpop.permute.xlu0 %3998
    %4000 = vrot.lane.b32.xlu0 %v3417, 127
    %v4001 = vpop.permute.xlu0 %4000
    %v4002 = vsel %vm811, %v3999, %v4001
    %4004 = vrot.lane.b32.xlu0 %v3416, 67
    %v4005 = vpop.permute.xlu0 %4004
    %v4007 = vsel %vm817, %v4001, %v4005
    %v4009 = vrot.slane %v3997, 1
    %v4010 = vrot.slane %v3995, 1
    %v4014 = vrot.slane %v4002, 1
    %v4015 = vrot.slane %v4007, 1
    %v4018 = vsel %vm819, %v4009, %v4014
    %v4019 = vsel %vm820, %v4010, %v4015
    %4020 = vrot.lane.b32.xlu0 %v3417, 72
    %v4021 = vpop.permute.xlu0 %4020
    %4023 = vrot.lane.b32.xlu0 %v3416, 12
    %v4024 = vpop.permute.xlu0 %4023
    %4025 = vrot.lane.b32.xlu0 %v3417, 12
    %v4026 = vpop.permute.xlu0 %4025
    %v4027 = vsel %vm108, %v4024, %v4026
    %v4029 = vsel %vm108, %v4021, %v4024
    %4030 = vrot.lane.b32.xlu0 %v3416, 126
    %v4031 = vpop.permute.xlu0 %4030
    %4032 = vrot.lane.b32.xlu0 %v3417, 126
    %v4033 = vpop.permute.xlu0 %4032
    %v4034 = vsel %vm106, %v4031, %v4033
    %4036 = vrot.lane.b32.xlu0 %v3416, 66
    %v4037 = vpop.permute.xlu0 %4036
    %v4039 = vsel %vm852, %v4033, %v4037
    %v4041 = vrot.slane %v4029, 2
    %v4042 = vrot.slane %v4027, 2
    %v4046 = vrot.slane %v4034, 2
    %v4047 = vrot.slane %v4039, 2
    %v4050 = vsel %vm854, %v4041, %v4046
    %v4051 = vsel %vm855, %v4042, %v4047
    %4052 = vrot.lane.b32.xlu0 %v3417, 71
    %v4053 = vpop.permute.xlu0 %4052
    %4055 = vrot.lane.b32.xlu0 %v3416, 11
    %v4056 = vpop.permute.xlu0 %4055
    %4057 = vrot.lane.b32.xlu0 %v3417, 11
    %v4058 = vpop.permute.xlu0 %4057
    %v4059 = vsel %vm875, %v4056, %v4058
    %v4061 = vsel %vm875, %v4053, %v4056
    %4062 = vrot.lane.b32.xlu0 %v3416, 125
    %v4063 = vpop.permute.xlu0 %4062
    %4064 = vrot.lane.b32.xlu0 %v3417, 125
    %v4065 = vpop.permute.xlu0 %4064
    %v4066 = vsel %vm883, %v4063, %v4065
    %4068 = vrot.lane.b32.xlu0 %v3416, 65
    %v4069 = vpop.permute.xlu0 %4068
    %v4071 = vsel %vm889, %v4065, %v4069
    %v4073 = vrot.slane %v4061, 3
    %v4074 = vrot.slane %v4059, 3
    %v4078 = vrot.slane %v4066, 3
    %v4079 = vrot.slane %v4071, 3
    %v4082 = vsel %vm891, %v4073, %v4078
    %v4083 = vsel %vm892, %v4074, %v4079
    %4084 = vrot.lane.b32.xlu0 %v3417, 70
    %v4085 = vpop.permute.xlu0 %4084
    %4087 = vrot.lane.b32.xlu0 %v3416, 10
    %v4088 = vpop.permute.xlu0 %4087
    %4089 = vrot.lane.b32.xlu0 %v3417, 10
    %v4090 = vpop.permute.xlu0 %4089
    %v4091 = vsel %vm912, %v4088, %v4090
    %v4093 = vsel %vm912, %v4085, %v4088
    %4094 = vrot.lane.b32.xlu0 %v3416, 124
    %v4095 = vpop.permute.xlu0 %4094
    %4096 = vrot.lane.b32.xlu0 %v3417, 124
    %v4097 = vpop.permute.xlu0 %4096
    %v4098 = vsel %vm920, %v4095, %v4097
    %4100 = vrot.lane.b32.xlu0 %v3416, 64
    %v4101 = vpop.permute.xlu0 %4100
    %v4103 = vsel %vm926, %v4097, %v4101
    %v4105 = vrot.slane %v4093, 4
    %v4106 = vrot.slane %v4091, 4
    %v4110 = vrot.slane %v4098, 4
    %v4111 = vrot.slane %v4103, 4
    %v4114 = vsel %vm928, %v4105, %v4110
    %v4115 = vsel %vm929, %v4106, %v4111
    %4116 = vrot.lane.b32.xlu0 %v3417, 69
    %v4117 = vpop.permute.xlu0 %4116
    %4119 = vrot.lane.b32.xlu0 %v3416, 9
    %v4120 = vpop.permute.xlu0 %4119
    %4121 = vrot.lane.b32.xlu0 %v3417, 9
    %v4122 = vpop.permute.xlu0 %4121
    %v4123 = vsel %vm949, %v4120, %v4122
    %v4125 = vsel %vm949, %v4117, %v4120
    %4126 = vrot.lane.b32.xlu0 %v3416, 123
    %v4127 = vpop.permute.xlu0 %4126
    %4128 = vrot.lane.b32.xlu0 %v3417, 123
    %v4129 = vpop.permute.xlu0 %4128
    %v4130 = vsel %vm957, %v4127, %v4129
    %4132 = vrot.lane.b32.xlu0 %v3416, 63
    %v4133 = vpop.permute.xlu0 %4132
    %v4135 = vsel %vm963, %v4129, %v4133
    %v4137 = vrot.slane %v4125, 5
    %v4138 = vrot.slane %v4123, 5
    %v4142 = vrot.slane %v4130, 5
    %v4143 = vrot.slane %v4135, 5
    %v4146 = vsel %vm965, %v4137, %v4142
    %v4147 = vsel %vm966, %v4138, %v4143
    %4148 = vrot.lane.b32.xlu0 %v3417, 68
    %v4149 = vpop.permute.xlu0 %4148
    %4151 = vrot.lane.b32.xlu0 %v3416, 8
    %v4152 = vpop.permute.xlu0 %4151
    %4153 = vrot.lane.b32.xlu0 %v3417, 8
    %v4154 = vpop.permute.xlu0 %4153
    %v4155 = vsel %vm271, %v4152, %v4154
    %v4157 = vsel %vm271, %v4149, %v4152
    %4158 = vrot.lane.b32.xlu0 %v3416, 122
    %v4159 = vpop.permute.xlu0 %4158
    %4160 = vrot.lane.b32.xlu0 %v3417, 122
    %v4161 = vpop.permute.xlu0 %4160
    %v4162 = vsel %vm993, %v4159, %v4161
    %4164 = vrot.lane.b32.xlu0 %v3416, 62
    %v4165 = vpop.permute.xlu0 %4164
    %v4167 = vsel %vm999, %v4161, %v4165
    %v4169 = vrot.slane %v4157, 6
    %v4170 = vrot.slane %v4155, 6
    %v4174 = vrot.slane %v4162, 6
    %v4175 = vrot.slane %v4167, 6
    %v4178 = vsel %vm1001, %v4169, %v4174
    %v4179 = vsel %vm1002, %v4170, %v4175
    %4180 = vrot.lane.b32.xlu0 %v3417, 67
    %v4181 = vpop.permute.xlu0 %4180
    %4183 = vrot.lane.b32.xlu0 %v3416, 7
    %v4184 = vpop.permute.xlu0 %4183
    %4185 = vrot.lane.b32.xlu0 %v3417, 7
    %v4186 = vpop.permute.xlu0 %4185
    %v4187 = vsel %vm629, %v4184, %v4186
    %v4189 = vsel %vm629, %v4181, %v4184
    %4190 = vrot.lane.b32.xlu0 %v3416, 121
    %v4191 = vpop.permute.xlu0 %4190
    %4192 = vrot.lane.b32.xlu0 %v3417, 121
    %v4193 = vpop.permute.xlu0 %4192
    %v4194 = vsel %vm637, %v4191, %v4193
    %4196 = vrot.lane.b32.xlu0 %v3416, 61
    %v4197 = vpop.permute.xlu0 %4196
    %v4199 = vsel %vm643, %v4193, %v4197
    %v4201 = vrot.slane %v4189, 7
    %v4202 = vrot.slane %v4187, 7
    %v4206 = vrot.slane %v4194, 7
    %v4207 = vrot.slane %v4199, 7
    %v4210 = vsel %vm645, %v4201, %v4206
    %v4211 = vsel %vm646, %v4202, %v4207
    %v4214 = vrot.slane %v4018, 7
    %v4215 = vrot.slane %v4019, 7
    %v4220 = vrot.slane %v4050, 6
    %v4221 = vrot.slane %v4051, 6
    %v4226 = vrot.slane %v4082, 5
    %v4227 = vrot.slane %v4083, 5
    %v4232 = vrot.slane %v4114, 4
    %v4233 = vrot.slane %v4115, 4
    %v4238 = vrot.slane %v4146, 3
    %v4239 = vrot.slane %v4147, 3
    %v4244 = vrot.slane %v4178, 2
    %v4245 = vrot.slane %v4179, 2
    %v4250 = vrot.slane %v4210, 1
    %v4251 = vrot.slane %v4211, 1
    %v4254 = vsel %vm245, %v3416, %v4214
    %v4255 = vsel %vm245, %v3417, %v4215
    %v4256 = vsel %vm248, %v4254, %v4220
    %v4257 = vsel %vm248, %v4255, %v4221
    %v4258 = vsel %vm251, %v4256, %v4226
    %v4259 = vsel %vm251, %v4257, %v4227
    %v4260 = vsel %vm254, %v4258, %v4232
    %v4261 = vsel %vm254, %v4259, %v4233
    %v4262 = vsel %vm257, %v4260, %v4238
    %v4263 = vsel %vm257, %v4261, %v4239
    %v4264 = vsel %vm260, %v4262, %v4244
    %v4265 = vsel %vm260, %v4263, %v4245
    %v4266 = vsel %vm263, %v4264, %v4250
    %v4267 = vsel %vm263, %v4265, %v4251
    %4268 = vmatprep.subr.mxu0 %v4267
    %4269 = vmatpush1.msra.mxu0 %v4266
    %4270 = vmatprep.subr.mxu0 0.0
    %4271 = vmatpush1.msra.mxu0 0.0
    %4272 = vmatprep.subr.mxu0 0.0
    %4273 = vmatpush1.msra.mxu0 0.0
    %4274 = vmatprep.subr.mxu0 0.0
    %4275 = vmatpush1.msra.mxu0 0.0
    %4276 = vmatprep.subr.mxu0 0.0
    %4277 = vmatpush1.msra.mxu0 0.0
    %4278 = vmatprep.subr.mxu0 0.0
    %4279 = vmatpush1.msra.mxu0 0.0
    %4280 = vmatprep.subr.mxu0 0.0
    %4281 = vmatpush1.msra.mxu0 0.0
    %4282 = vmatprep.subr.mxu0 0.0
    %4283 = vmatpush1.msra.mxu0 0.0
    %4284 = vmatprep.subr.mxu0 0.0
    %4285 = vmatpush1.msra.mxu0 0.0
    %4286 = vmatprep.subr.mxu0 0.0
    %4287 = vmatpush1.msra.mxu0 0.0
    %4288 = vmatprep.subr.mxu0 0.0
    %4289 = vmatpush1.msra.mxu0 0.0
    %4290 = vmatprep.subr.mxu0 0.0
    %4291 = vmatpush1.msra.mxu0 0.0
    %4292 = vmatprep.subr.mxu0 0.0
    %4293 = vmatpush1.msra.mxu0 0.0
    %4294 = vmatprep.subr.mxu0 0.0
    %4295 = vmatpush1.msra.mxu0 0.0
    %4296 = vmatprep.subr.mxu0 0.0
    %4297 = vmatpush1.msra.mxu0 0.0
    %4298 = vmatprep.subr.mxu0 0.0
    %4299 = vmatpush1.msra.mxu0 0.0
    %4300 = vmatprep.subr.mxu0 0.0
    %4301 = vmatpush1.msra.mxu0 0.0
    %4302 = vmatprep.subr.mxu0 0.0
    %4303 = vmatpush1.msra.mxu0 0.0
    %4304 = vmatprep.subr.mxu0 0.0
    %4305 = vmatpush1.msra.mxu0 0.0
    %4306 = vmatprep.subr.mxu0 0.0
    %4307 = vmatpush1.msra.mxu0 0.0
    %4308 = vmatprep.subr.mxu0 0.0
    %4309 = vmatpush1.msra.mxu0 0.0
    %4310 = vmatprep.subr.mxu0 0.0
    %4311 = vmatpush1.msra.mxu0 0.0
    %4312 = vmatprep.subr.mxu0 0.0
    %4313 = vmatpush1.msra.mxu0 0.0
    %4314 = vmatprep.subr.mxu0 0.0
    %4315 = vmatpush1.msra.mxu0 0.0
    %4316 = vmatprep.subr.mxu0 0.0
    %4317 = vmatpush1.msra.mxu0 0.0
    %4318 = vmatprep.subr.mxu0 0.0
    %4319 = vmatpush1.msra.mxu0 0.0
    %4320 = vmatprep.subr.mxu0 0.0
    %4321 = vmatpush1.msra.mxu0 0.0
    %4322 = vmatprep.subr.mxu0 0.0
    %4323 = vmatpush1.msra.mxu0 0.0
    %4324 = vmatprep.subr.mxu0 0.0
    %4325 = vmatpush1.msra.mxu0 0.0
    %4326 = vmatprep.subr.mxu0 0.0
    %4327 = vmatpush1.msra.mxu0 0.0
    %4328 = vmatprep.subr.mxu0 0.0
    %4329 = vmatpush1.msra.mxu0 0.0
    %4330 = vmatprep.subr.mxu0 0.0
    %4331 = vmatpush1.msra.mxu0 0.0
    %4332 = vmatprep.mubr.f32.mxu0 0.0
    %4333 = vmatmul.mubr.f32.gmra.mrb[0].mxu0 %v1109
    %v4334 = vpop.f32.mrb[0].mxu0
    %v4335 = vadd.f32 %v1106, %v4334
    %v4336 = vpop.f32.mrb[0].mxu0
    %v4337 = vadd.f32 %v1106, %v4336
    %4338 = vdwg.mxu0
    %v4339 = vmul.f32 %v4335, 0.5
    %v4340 = vmul.f32 %v4337, 0.5
    %v4341 = vmul.f32 %v4335, 0.70710677
    %v4342 = vmul.f32 %v4337, 0.70710677
    %vm4343 = vcmp.ge.f32.partialorder %v4341, 0.0
    %vm4344 = vcmp.ge.f32.partialorder %v4342, 0.0
    %v4345 = vsel %vm4343, 1.0, -1.0
    %v4346 = vsel %vm4344, 1.0, -1.0
    %v4347 = vand.u32 2147483647, %v4341
    %v4348 = vand.u32 2147483647, %v4342
    %v4349 = vmul.f32 %v4347, 0.3275911
    %v4350 = vmul.f32 %v4348, 0.3275911
    %v4351 = vadd.f32 %v4349, 1.0
    %v4352 = vadd.f32 %v4350, 1.0
    %v4353 = vrcp.pop %v4351
    %v4354 = vmul.f32 1.0, %v4353
    %v4355 = vrcp.pop %v4352
    %v4356 = vmul.f32 1.0, %v4355
    %v4357 = vmul.f32 %v4354, 1.0614054
    %v4358 = vmul.f32 %v4356, 1.0614054
    %v4359 = vadd.f32 %v4357, -1.4531521
    %v4360 = vadd.f32 %v4358, -1.4531521
    %v4361 = vmul.f32 %v4359, %v4354
    %v4362 = vmul.f32 %v4360, %v4356
    %v4363 = vadd.f32 %v4361, 1.4214138
    %v4364 = vadd.f32 %v4362, 1.4214138
    %v4365 = vmul.f32 %v4363, %v4354
    %v4366 = vmul.f32 %v4364, %v4356
    %v4367 = vadd.f32 %v4365, -0.28449672
    %v4368 = vadd.f32 %v4366, -0.28449672
    %v4369 = vmul.f32 %v4367, %v4354
    %v4370 = vmul.f32 %v4368, %v4356
    %v4371 = vadd.f32 %v4369, 0.2548296
    %v4372 = vadd.f32 %v4370, 0.2548296
    %v4373 = vmul.f32 %v4371, %v4354
    %v4374 = vmul.f32 %v4372, %v4356
    %v4375 = vsub.f32 0.0, %v4347
    %v4376 = vsub.f32 0.0, %v4348
    %v4377 = vmul.f32 %v4375, %v4347
    %v4378 = vmul.f32 %v4376, %v4348
    %v4379 = vmul.f32 %v4377, 1.442695
    %v4380 = vpow.pop %v4379
    %v4381 = vmul.f32 %v4378, 1.442695
    %v4382 = vpow.pop %v4381
    %v4383 = vmul.f32 %v4373, %v4380
    %v4384 = vmul.f32 %v4374, %v4382
    %v4385 = vsub.f32 1.0, %v4383
    %v4386 = vsub.f32 1.0, %v4384
    %v4387 = vmul.f32 %v4345, %v4385
    %v4388 = vmul.f32 %v4346, %v4386
    %v4389 = vadd.f32 %v4387, 1.0
    %v4390 = vadd.f32 %v4388, 1.0
    %v4391 = vmul.f32 %v4339, %v4389
    %v4392 = vmul.f32 %v4340, %v4390
    %4394 = vrot.lane.b32.xlu0 %v4392, 74
    %v4395 = vpop.permute.xlu0 %4394
    %4398 = vrot.lane.b32.xlu0 %v4391, 14
    %v4399 = vpop.permute.xlu0 %4398
    %4400 = vrot.lane.b32.xlu0 %v4392, 14
    %v4401 = vpop.permute.xlu0 %4400
    %v4402 = vsel %vm90, %v4399, %v4401
    %v4405 = vsel %vm90, %v4395, %v4399
    %4406 = vrot.lane.b32.xlu0 %v4392, 88
    %v4407 = vpop.permute.xlu0 %4406
    %4409 = vrot.lane.b32.xlu0 %v4391, 28
    %v4410 = vpop.permute.xlu0 %4409
    %4411 = vrot.lane.b32.xlu0 %v4392, 28
    %v4412 = vpop.permute.xlu0 %4411
    %v4413 = vsel %vm92, %v4410, %v4412
    %v4416 = vsel %vm92, %v4407, %v4410
    %4417 = vrot.lane.b32.xlu0 %v4392, 102
    %v4418 = vpop.permute.xlu0 %4417
    %4420 = vrot.lane.b32.xlu0 %v4391, 42
    %v4421 = vpop.permute.xlu0 %4420
    %4422 = vrot.lane.b32.xlu0 %v4392, 42
    %v4423 = vpop.permute.xlu0 %4422
    %v4424 = vsel %vm94, %v4421, %v4423
    %v4427 = vsel %vm94, %v4418, %v4421
    %4428 = vrot.lane.b32.xlu0 %v4392, 116
    %v4429 = vpop.permute.xlu0 %4428
    %4431 = vrot.lane.b32.xlu0 %v4391, 56
    %v4432 = vpop.permute.xlu0 %4431
    %4433 = vrot.lane.b32.xlu0 %v4392, 56
    %v4434 = vpop.permute.xlu0 %4433
    %v4435 = vsel %vm96, %v4432, %v4434
    %v4438 = vsel %vm96, %v4429, %v4432
    %4439 = vrot.lane.b32.xlu0 %v4391, 2
    %v4440 = vpop.permute.xlu0 %4439
    %4441 = vrot.lane.b32.xlu0 %v4392, 2
    %v4442 = vpop.permute.xlu0 %4441
    %v4443 = vsel %vm216, %v4440, %v4442
    %4445 = vrot.lane.b32.xlu0 %v4391, 70
    %v4446 = vpop.permute.xlu0 %4445
    %v4448 = vsel %vm98, %v4443, %v4446
    %4449 = vrot.lane.b32.xlu0 %v4391, 16
    %v4450 = vpop.permute.xlu0 %4449
    %4451 = vrot.lane.b32.xlu0 %v4392, 16
    %v4452 = vpop.permute.xlu0 %4451
    %v4453 = vsel %vm227, %v4450, %v4452
    %4455 = vrot.lane.b32.xlu0 %v4391, 84
    %v4456 = vpop.permute.xlu0 %4455
    %v4458 = vsel %vm100, %v4453, %v4456
    %4459 = vrot.lane.b32.xlu0 %v4391, 30
    %v4460 = vpop.permute.xlu0 %4459
    %4461 = vrot.lane.b32.xlu0 %v4392, 30
    %v4462 = vpop.permute.xlu0 %4461
    %v4463 = vsel %vm238, %v4460, %v4462
    %4465 = vrot.lane.b32.xlu0 %v4391, 98
    %v4466 = vpop.permute.xlu0 %4465
    %v4468 = vsel %vm102, %v4463, %v4466
    %v4469 = vsel %vm245, %v4391, %v4405
    %v4470 = vsel %vm245, %v4392, %v4402
    %v4471 = vsel %vm248, %v4469, %v4416
    %v4472 = vsel %vm248, %v4470, %v4413
    %v4473 = vsel %vm251, %v4471, %v4427
    %v4474 = vsel %vm251, %v4472, %v4424
    %v4475 = vsel %vm254, %v4473, %v4438
    %v4476 = vsel %vm254, %v4474, %v4435
    %v4477 = vsel %vm257, %v4475, %v4448
    %v4478 = vsel %vm257, %v4476, %v4446
    %v4479 = vsel %vm260, %v4477, %v4458
    %v4480 = vsel %vm260, %v4478, %v4456
    %v4481 = vsel %vm263, %v4479, %v4468
    %v4482 = vsel %vm263, %v4480, %v4466
    %4483 = vmatprep.subr.mxu0 %v4482
    %4484 = vmatpush1.msra.mxu0 %v4481
    %4485 = vmatprep.subr.mxu0 0.0
    %4486 = vmatpush1.msra.mxu0 0.0
    %4487 = vmatprep.subr.mxu0 0.0
    %4488 = vmatpush1.msra.mxu0 0.0
    %4489 = vmatprep.subr.mxu0 0.0
    %4490 = vmatpush1.msra.mxu0 0.0
    %4491 = vmatprep.subr.mxu0 0.0
    %4492 = vmatpush1.msra.mxu0 0.0
    %4493 = vmatprep.subr.mxu0 0.0
    %4494 = vmatpush1.msra.mxu0 0.0
    %4495 = vmatprep.subr.mxu0 0.0
    %4496 = vmatpush1.msra.mxu0 0.0
    %4497 = vmatprep.subr.mxu0 0.0
    %4498 = vmatpush1.msra.mxu0 0.0
    %4499 = vmatprep.subr.mxu0 0.0
    %4500 = vmatpush1.msra.mxu0 0.0
    %4501 = vmatprep.subr.mxu0 0.0
    %4502 = vmatpush1.msra.mxu0 0.0
    %4503 = vmatprep.subr.mxu0 0.0
    %4504 = vmatpush1.msra.mxu0 0.0
    %4505 = vmatprep.subr.mxu0 0.0
    %4506 = vmatpush1.msra.mxu0 0.0
    %4507 = vmatprep.subr.mxu0 0.0
    %4508 = vmatpush1.msra.mxu0 0.0
    %4509 = vmatprep.subr.mxu0 0.0
    %4510 = vmatpush1.msra.mxu0 0.0
    %4511 = vmatprep.subr.mxu0 0.0
    %4512 = vmatpush1.msra.mxu0 0.0
    %4513 = vmatprep.subr.mxu0 0.0
    %4514 = vmatpush1.msra.mxu0 0.0
    %4515 = vmatprep.subr.mxu0 0.0
    %4516 = vmatpush1.msra.mxu0 0.0
    %4517 = vmatprep.subr.mxu0 0.0
    %4518 = vmatpush1.msra.mxu0 0.0
    %4519 = vmatprep.subr.mxu0 0.0
    %4520 = vmatpush1.msra.mxu0 0.0
    %4521 = vmatprep.subr.mxu0 0.0
    %4522 = vmatpush1.msra.mxu0 0.0
    %4523 = vmatprep.subr.mxu0 0.0
    %4524 = vmatpush1.msra.mxu0 0.0
    %4525 = vmatprep.subr.mxu0 0.0
    %4526 = vmatpush1.msra.mxu0 0.0
    %4527 = vmatprep.subr.mxu0 0.0
    %4528 = vmatpush1.msra.mxu0 0.0
    %4529 = vmatprep.subr.mxu0 0.0
    %4530 = vmatpush1.msra.mxu0 0.0
    %4531 = vmatprep.subr.mxu0 0.0
    %4532 = vmatpush1.msra.mxu0 0.0
    %4533 = vmatprep.subr.mxu0 0.0
    %4534 = vmatpush1.msra.mxu0 0.0
    %4535 = vmatprep.subr.mxu0 0.0
    %4536 = vmatpush1.msra.mxu0 0.0
    %4537 = vmatprep.subr.mxu0 0.0
    %4538 = vmatpush1.msra.mxu0 0.0
    %4539 = vmatprep.subr.mxu0 0.0
    %4540 = vmatpush1.msra.mxu0 0.0
    %4541 = vmatprep.subr.mxu0 0.0
    %4542 = vmatpush1.msra.mxu0 0.0
    %4543 = vmatprep.subr.mxu0 0.0
    %4544 = vmatpush1.msra.mxu0 0.0
    %4545 = vmatprep.subr.mxu0 0.0
    %4546 = vmatpush1.msra.mxu0 0.0
    %4547 = vmatprep.mubr.f32.mxu0 0.0
    %4548 = vmatmul.mubr.f32.gmra.mrb[0].mxu0 %v1332
    %v4549 = vpop.f32.mrb[0].mxu0
    %v4550 = vadd.f32 %v1329, %v4549
    %v4551 = vpop.f32.mrb[0].mxu0
    %v4552 = vadd.f32 %v1329, %v4551
    %4553 = vdwg.mxu0
    %v4554 = vadd.f32 %v4550, %v3416
    %v4555 = vadd.f32 %v4552, %v3417
    %v4556 = vrot.slane %v3986, 4
    %v4557 = vadd.f32 %v3986, %v4556
    %v4558 = vrot.slane %v4557, 2
    %v4559 = vadd.f32 %v4557, %v4558
    %v4560 = vrot.slane %v4559, 1
    %v4561 = vadd.f32 %v4559, %v4560
    %v4562 = vsel %vm1413, %v3987, 0.0
    %v4563 = vrot.slane %v4562, 4
    %v4564 = vadd.f32 %v4562, %v4563
    %v4565 = vrot.slane %v4564, 2
    %v4566 = vadd.f32 %v4564, %v4565
    %v4567 = vrot.slane %v4566, 1
    %v4568 = vadd.f32 %v4566, %v4567
    %v4569 = vrot.slane %v4554, 4
    %v4570 = vadd.f32 %v4554, %v4569
    %v4571 = vrot.slane %v4570, 2
    %v4572 = vadd.f32 %v4570, %v4571
    %v4573 = vrot.slane %v4572, 1
    %v4574 = vadd.f32 %v4572, %v4573
    %v4575 = vsel %vm1413, %v4555, 0.0
    %v4576 = vrot.slane %v4575, 4
    %v4577 = vadd.f32 %v4575, %v4576
    %v4578 = vrot.slane %v4577, 2
    %v4579 = vadd.f32 %v4577, %v4578
    %v4580 = vrot.slane %v4579, 1
    %v4581 = vadd.f32 %v4579, %v4580
    %v4582 = vadd.f32 %v4561, %v4574
    %v4583 = vadd.f32 %v4568, %v4581
    %v4584 = vmul.f32 %v4582, %v1436
    %v4585 = vmul.f32 %v4583, %v1436
    %v4586 = vsub.f32 %v3986, %v4584
    %v4587 = vsub.f32 %v3987, %v4585
    %v4588 = vmul.f32 %v4586, %v4586
    %v4589 = vmul.f32 %v4587, %v4587
    %v4590 = vrot.slane %v4588, 4
    %v4591 = vadd.f32 %v4588, %v4590
    %v4592 = vrot.slane %v4591, 2
    %v4593 = vadd.f32 %v4591, %v4592
    %v4594 = vrot.slane %v4593, 1
    %v4595 = vadd.f32 %v4593, %v4594
    %v4596 = vsel %vm1413, %v4589, 0.0
    %v4597 = vrot.slane %v4596, 4
    %v4598 = vadd.f32 %v4596, %v4597
    %v4599 = vrot.slane %v4598, 2
    %v4600 = vadd.f32 %v4598, %v4599
    %v4601 = vrot.slane %v4600, 1
    %v4602 = vadd.f32 %v4600, %v4601
    %v4603 = vsub.f32 %v4554, %v4584
    %v4604 = vsub.f32 %v4555, %v4585
    %v4605 = vmul.f32 %v4603, %v4603
    %v4606 = vmul.f32 %v4604, %v4604
    %v4607 = vrot.slane %v4605, 4
    %v4608 = vadd.f32 %v4605, %v4607
    %v4609 = vrot.slane %v4608, 2
    %v4610 = vadd.f32 %v4608, %v4609
    %v4611 = vrot.slane %v4610, 1
    %v4612 = vadd.f32 %v4610, %v4611
    %v4613 = vsel %vm1413, %v4606, 0.0
    %v4614 = vrot.slane %v4613, 4
    %v4615 = vadd.f32 %v4613, %v4614
    %v4616 = vrot.slane %v4615, 2
    %v4617 = vadd.f32 %v4615, %v4616
    %v4618 = vrot.slane %v4617, 1
    %v4619 = vadd.f32 %v4617, %v4618
    %v4620 = vadd.f32 %v4595, %v4612
    %v4621 = vadd.f32 %v4602, %v4619
    %v4622 = vmul.f32 %v4620, %v1436
    %v4623 = vmul.f32 %v4621, %v1436
    %v4624 = vadd.f32 %v4622, 1e-05
    %v4625 = vadd.f32 %v4623, 1e-05
    %v4626 = vrsqrt.pop %v4624
    %v4627 = vrsqrt.pop %v4625
    %v4628 = vmul.f32 %v4586, %v4626
    %v4629 = vmul.f32 %v4587, %v4627
    %v4630 = vmul.f32 %v4628, %v1486
    %v4631 = vmul.f32 %v4629, %v1486
    %v4632 = vadd.f32 %v4630, %v1493
    %v4633 = vadd.f32 %v4631, %v1493
    %v4634 = vmul.f32 %v4603, %v4626
    %v4635 = vmul.f32 %v4604, %v4627
    %v4636 = vmul.f32 %v4634, %v1502
    %v4637 = vmul.f32 %v4635, %v1502
    %v4638 = vadd.f32 %v4636, %v1509
    %v4639 = vadd.f32 %v4637, %v1509
    %4640 = vmatprep.subr.mxu0 %v4639
    %4641 = vmatpush1.msra.mxu0 %v4638
    %4642 = vmatprep.subr.mxu0 0.0
    %4643 = vmatpush1.msra.mxu0 0.0
    %4644 = vmatprep.subr.mxu0 0.0
    %4645 = vmatpush1.msra.mxu0 0.0
    %4646 = vmatprep.subr.mxu0 0.0
    %4647 = vmatpush1.msra.mxu0 0.0
    %4648 = vmatprep.subr.mxu0 0.0
    %4649 = vmatpush1.msra.mxu0 0.0
    %4650 = vmatprep.subr.mxu0 0.0
    %4651 = vmatpush1.msra.mxu0 0.0
    %4652 = vmatprep.subr.mxu0 0.0
    %4653 = vmatpush1.msra.mxu0 0.0
    %4654 = vmatprep.subr.mxu0 0.0
    %4655 = vmatpush1.msra.mxu0 0.0
    %4656 = vmatprep.subr.mxu0 0.0
    %4657 = vmatpush1.msra.mxu0 0.0
    %4658 = vmatprep.subr.mxu0 0.0
    %4659 = vmatpush1.msra.mxu0 0.0
    %4660 = vmatprep.subr.mxu0 0.0
    %4661 = vmatpush1.msra.mxu0 0.0
    %4662 = vmatprep.subr.mxu0 0.0
    %4663 = vmatpush1.msra.mxu0 0.0
    %4664 = vmatprep.subr.mxu0 0.0
    %4665 = vmatpush1.msra.mxu0 0.0
    %4666 = vmatprep.subr.mxu0 0.0
    %4667 = vmatpush1.msra.mxu0 0.0
    %4668 = vmatprep.subr.mxu0 0.0
    %4669 = vmatpush1.msra.mxu0 0.0
    %4670 = vmatprep.subr.mxu0 0.0
    %4671 = vmatpush1.msra.mxu0 0.0
    %4672 = vmatprep.subr.mxu0 0.0
    %4673 = vmatpush1.msra.mxu0 0.0
    %4674 = vmatprep.subr.mxu0 0.0
    %4675 = vmatpush1.msra.mxu0 0.0
    %4676 = vmatprep.subr.mxu0 0.0
    %4677 = vmatpush1.msra.mxu0 0.0
    %4678 = vmatprep.subr.mxu0 0.0
    %4679 = vmatpush1.msra.mxu0 0.0
    %4680 = vmatprep.subr.mxu0 0.0
    %4681 = vmatpush1.msra.mxu0 0.0
    %4682 = vmatprep.subr.mxu0 0.0
    %4683 = vmatpush1.msra.mxu0 0.0
    %4684 = vmatprep.subr.mxu0 0.0
    %4685 = vmatpush1.msra.mxu0 0.0
    %4686 = vmatprep.subr.mxu0 0.0
    %4687 = vmatpush1.msra.mxu0 0.0
    %4688 = vmatprep.subr.mxu0 0.0
    %4689 = vmatpush1.msra.mxu0 0.0
    %4690 = vmatprep.subr.mxu0 0.0
    %4691 = vmatpush1.msra.mxu0 0.0
    %4692 = vmatprep.subr.mxu0 0.0
    %4693 = vmatpush1.msra.mxu0 0.0
    %4694 = vmatprep.subr.mxu0 0.0
    %4695 = vmatpush1.msra.mxu0 0.0
    %4696 = vmatprep.subr.mxu0 0.0
    %4697 = vmatpush1.msra.mxu0 0.0
    %4698 = vmatprep.subr.mxu0 0.0
    %4699 = vmatpush1.msra.mxu0 0.0
    %4700 = vmatprep.subr.mxu0 0.0
    %4701 = vmatpush1.msra.mxu0 0.0
    %4702 = vmatprep.subr.mxu0 0.0
    %4703 = vmatpush1.msra.mxu0 0.0
    %4704 = vmatprep.mubr.f32.mxu0 0.0
    %4705 = vmatmul.mubr.f32.gmra.mrb[0].mxu0 %v1514
    %v4706 = vpop.f32.mrb[0].mxu0
    %v4707 = vadd.f32 0.0, %v4706
    %v4708 = vpop.f32.mrb[0].mxu0
    %v4709 = vadd.f32 0.0, %v4708
    %4710 = vdwg.mxu0
    %4711 = vmatprep.subr.mxu0 %v4633
    %4712 = vmatpush1.msra.mxu0 %v4632
    %4713 = vmatprep.subr.mxu0 0.0
    %4714 = vmatpush1.msra.mxu0 0.0
    %4715 = vmatprep.subr.mxu0 0.0
    %4716 = vmatpush1.msra.mxu0 0.0
    %4717 = vmatprep.subr.mxu0 0.0
    %4718 = vmatpush1.msra.mxu0 0.0
    %4719 = vmatprep.subr.mxu0 0.0
    %4720 = vmatpush1.msra.mxu0 0.0
    %4721 = vmatprep.subr.mxu0 0.0
    %4722 = vmatpush1.msra.mxu0 0.0
    %4723 = vmatprep.subr.mxu0 0.0
    %4724 = vmatpush1.msra.mxu0 0.0
    %4725 = vmatprep.subr.mxu0 0.0
    %4726 = vmatpush1.msra.mxu0 0.0
    %4727 = vmatprep.subr.mxu0 0.0
    %4728 = vmatpush1.msra.mxu0 0.0
    %4729 = vmatprep.subr.mxu0 0.0
    %4730 = vmatpush1.msra.mxu0 0.0
    %4731 = vmatprep.subr.mxu0 0.0
    %4732 = vmatpush1.msra.mxu0 0.0
    %4733 = vmatprep.subr.mxu0 0.0
    %4734 = vmatpush1.msra.mxu0 0.0
    %4735 = vmatprep.subr.mxu0 0.0
    %4736 = vmatpush1.msra.mxu0 0.0
    %4737 = vmatprep.subr.mxu0 0.0
    %4738 = vmatpush1.msra.mxu0 0.0
    %4739 = vmatprep.subr.mxu0 0.0
    %4740 = vmatpush1.msra.mxu0 0.0
    %4741 = vmatprep.subr.mxu0 0.0
    %4742 = vmatpush1.msra.mxu0 0.0
    %4743 = vmatprep.subr.mxu0 0.0
    %4744 = vmatpush1.msra.mxu0 0.0
    %4745 = vmatprep.subr.mxu0 0.0
    %4746 = vmatpush1.msra.mxu0 0.0
    %4747 = vmatprep.subr.mxu0 0.0
    %4748 = vmatpush1.msra.mxu0 0.0
    %4749 = vmatprep.subr.mxu0 0.0
    %4750 = vmatpush1.msra.mxu0 0.0
    %4751 = vmatprep.subr.mxu0 0.0
    %4752 = vmatpush1.msra.mxu0 0.0
    %4753 = vmatprep.subr.mxu0 0.0
    %4754 = vmatpush1.msra.mxu0 0.0
    %4755 = vmatprep.subr.mxu0 0.0
    %4756 = vmatpush1.msra.mxu0 0.0
    %4757 = vmatprep.subr.mxu0 0.0
    %4758 = vmatpush1.msra.mxu0 0.0
    %4759 = vmatprep.subr.mxu0 0.0
    %4760 = vmatpush1.msra.mxu0 0.0
    %4761 = vmatprep.subr.mxu0 0.0
    %4762 = vmatpush1.msra.mxu0 0.0
    %4763 = vmatprep.subr.mxu0 0.0
    %4764 = vmatpush1.msra.mxu0 0.0
    %4765 = vmatprep.subr.mxu0 0.0
    %4766 = vmatpush1.msra.mxu0 0.0
    %4767 = vmatprep.subr.mxu0 0.0
    %4768 = vmatpush1.msra.mxu0 0.0
    %4769 = vmatprep.subr.mxu0 0.0
    %4770 = vmatpush1.msra.mxu0 0.0
    %4771 = vmatprep.subr.mxu0 0.0
    %4772 = vmatpush1.msra.mxu0 0.0
    %4773 = vmatprep.subr.mxu0 0.0
    %4774 = vmatpush1.msra.mxu0 0.0
    %4775 = vmatprep.mubr.f32.mxu0 0.0
    %4776 = vmatmul.mubr.f32.gmra.mrb[0].mxu0 %v1588
    %v4777 = vpop.f32.mrb[0].mxu0
    %v4778 = vadd.f32 %v4707, %v4777
    %v4779 = vpop.f32.mrb[0].mxu0
    %v4780 = vadd.f32 %v4709, %v4779
    %4781 = vdwg.mxu0
    %v4782 = vadd.f32 %v4778, %v1664
    %v4783 = vadd.f32 %v4780, %v1664
    %v4784 = vadd.f32 %v4782, %v3416
    %v4785 = vadd.f32 %v4783, %v3417
    %4786 = vmatprep.subr.mxu0 %v3417
    %4787 = vmatpush1.msra.mxu0 %v3416
    %4788 = vmatprep.subr.mxu0 0.0
    %4789 = vmatpush1.msra.mxu0 0.0
    %4790 = vmatprep.subr.mxu0 0.0
    %4791 = vmatpush1.msra.mxu0 0.0
    %4792 = vmatprep.subr.mxu0 0.0
    %4793 = vmatpush1.msra.mxu0 0.0
    %4794 = vmatprep.subr.mxu0 0.0
    %4795 = vmatpush1.msra.mxu0 0.0
    %4796 = vmatprep.subr.mxu0 0.0
    %4797 = vmatpush1.msra.mxu0 0.0
    %4798 = vmatprep.subr.mxu0 0.0
    %4799 = vmatpush1.msra.mxu0 0.0
    %4800 = vmatprep.subr.mxu0 0.0
    %4801 = vmatpush1.msra.mxu0 0.0
    %4802 = vmatprep.subr.mxu0 0.0
    %4803 = vmatpush1.msra.mxu0 0.0
    %4804 = vmatprep.subr.mxu0 0.0
    %4805 = vmatpush1.msra.mxu0 0.0
    %4806 = vmatprep.subr.mxu0 0.0
    %4807 = vmatpush1.msra.mxu0 0.0
    %4808 = vmatprep.subr.mxu0 0.0
    %4809 = vmatpush1.msra.mxu0 0.0
    %4810 = vmatprep.subr.mxu0 0.0
    %4811 = vmatpush1.msra.mxu0 0.0
    %4812 = vmatprep.subr.mxu0 0.0
    %4813 = vmatpush1.msra.mxu0 0.0
    %4814 = vmatprep.subr.mxu0 0.0
    %4815 = vmatpush1.msra.mxu0 0.0
    %4816 = vmatprep.subr.mxu0 0.0
    %4817 = vmatpush1.msra.mxu0 0.0
    %4818 = vmatprep.subr.mxu0 0.0
    %4819 = vmatpush1.msra.mxu0 0.0
    %4820 = vmatprep.subr.mxu0 0.0
    %4821 = vmatpush1.msra.mxu0 0.0
    %4822 = vmatprep.subr.mxu0 0.0
    %4823 = vmatpush1.msra.mxu0 0.0
    %4824 = vmatprep.subr.mxu0 0.0
    %4825 = vmatpush1.msra.mxu0 0.0
    %4826 = vmatprep.subr.mxu0 0.0
    %4827 = vmatpush1.msra.mxu0 0.0
    %4828 = vmatprep.subr.mxu0 0.0
    %4829 = vmatpush1.msra.mxu0 0.0
    %4830 = vmatprep.subr.mxu0 0.0
    %4831 = vmatpush1.msra.mxu0 0.0
    %4832 = vmatprep.subr.mxu0 0.0
    %4833 = vmatpush1.msra.mxu0 0.0
    %4834 = vmatprep.subr.mxu0 0.0
    %4835 = vmatpush1.msra.mxu0 0.0
    %4836 = vmatprep.subr.mxu0 0.0
    %4837 = vmatpush1.msra.mxu0 0.0
    %4838 = vmatprep.subr.mxu0 0.0
    %4839 = vmatpush1.msra.mxu0 0.0
    %4840 = vmatprep.subr.mxu0 0.0
    %4841 = vmatpush1.msra.mxu0 0.0
    %4842 = vmatprep.subr.mxu0 0.0
    %4843 = vmatpush1.msra.mxu0 0.0
    %4844 = vmatprep.subr.mxu0 0.0
    %4845 = vmatpush1.msra.mxu0 0.0
    %4846 = vmatprep.subr.mxu0 0.0
    %4847 = vmatpush1.msra.mxu0 0.0
    %4848 = vmatprep.subr.mxu0 0.0
    %4849 = vmatpush1.msra.mxu0 0.0
    %4850 = vmatprep.mubr.f32.mxu0 0.0
    %4851 = vmatmul.mubr.f32.gmra.mrb[0].mxu0 %v1686
    %v4852 = vpop.f32.mrb[0].mxu0
    %v4853 = vadd.f32 %v1673, %v4852
    %v4854 = vpop.f32.mrb[0].mxu0
    %v4855 = vadd.f32 %v1673, %v4854
    %4856 = vmatprep.mubr.f32.mxu0 0.0
    %4857 = vmatmul.mubr.f32.gmra.mrb[0].mxu0 %v1689
    %v4858 = vpop.f32.mrb[0].mxu0
    %v4859 = vadd.f32 %v1678, %v4858
    %v4860 = vpop.f32.mrb[0].mxu0
    %v4861 = vadd.f32 %v1678, %v4860
    %4862 = vmatprep.mubr.f32.mxu0 0.0
    %4863 = vmatmul.mubr.f32.gmra.mrb[0].mxu0 %v1692
    %v4864 = vpop.f32.mrb[0].mxu0
    %v4865 = vadd.f32 %v1683, %v4864
    %v4866 = vpop.f32.mrb[0].mxu0
    %v4867 = vadd.f32 %v1683, %v4866
    %4868 = vdwg.mxu0
    %4872 = vrot.lane.b32.xlu0 %v4853, 121
    %v4873 = vpop.permute.xlu0 %4872
    %4874 = vrot.lane.b32.xlu0 %v4859, 121
    %v4875 = vpop.permute.xlu0 %4874
    %4876 = vrot.lane.b32.xlu0 %v4865, 121
    %v4877 = vpop.permute.xlu0 %4876
    %4881 = vrot.lane.b32.xlu0 %v4853, 114
    %v4882 = vpop.permute.xlu0 %4881
    %4883 = vrot.lane.b32.xlu0 %v4859, 114
    %v4884 = vpop.permute.xlu0 %4883
    %4885 = vrot.lane.b32.xlu0 %v4865, 114
    %v4886 = vpop.permute.xlu0 %4885
    %4890 = vrot.lane.b32.xlu0 %v4853, 107
    %v4891 = vpop.permute.xlu0 %4890
    %4892 = vrot.lane.b32.xlu0 %v4859, 107
    %v4893 = vpop.permute.xlu0 %4892
    %4894 = vrot.lane.b32.xlu0 %v4865, 107
    %v4895 = vpop.permute.xlu0 %4894
    %4899 = vrot.lane.b32.xlu0 %v4853, 100
    %v4900 = vpop.permute.xlu0 %4899
    %4901 = vrot.lane.b32.xlu0 %v4859, 100
    %v4902 = vpop.permute.xlu0 %4901
    %4903 = vrot.lane.b32.xlu0 %v4865, 100
    %v4904 = vpop.permute.xlu0 %4903
    %4908 = vrot.lane.b32.xlu0 %v4853, 93
    %v4909 = vpop.permute.xlu0 %4908
    %4910 = vrot.lane.b32.xlu0 %v4859, 93
    %v4911 = vpop.permute.xlu0 %4910
    %4912 = vrot.lane.b32.xlu0 %v4865, 93
    %v4913 = vpop.permute.xlu0 %4912
    %4917 = vrot.lane.b32.xlu0 %v4853, 86
    %v4918 = vpop.permute.xlu0 %4917
    %4919 = vrot.lane.b32.xlu0 %v4859, 86
    %v4920 = vpop.permute.xlu0 %4919
    %4921 = vrot.lane.b32.xlu0 %v4865, 86
    %v4922 = vpop.permute.xlu0 %4921
    %v4926 = vsel %vm629, %v4853, %v4873
    %v4927 = vsel %vm629, %v4859, %v4875
    %v4928 = vsel %vm629, %v4865, %v4877
    %v4929 = vsel %vm90, %v4926, %v4882
    %v4930 = vsel %vm90, %v4927, %v4884
    %v4931 = vsel %vm90, %v4928, %v4886
    %v4932 = vsel %vm1840, %v4929, %v4891
    %v4933 = vsel %vm1840, %v4930, %v4893
    %v4934 = vsel %vm1840, %v4931, %v4895
    %v4935 = vsel %vm92, %v4932, %v4900
    %v4936 = vsel %vm92, %v4933, %v4902
    %v4937 = vsel %vm92, %v4934, %v4904
    %v4938 = vsel %vm1847, %v4935, %v4909
    %v4939 = vsel %vm1847, %v4936, %v4911
    %v4940 = vsel %vm1847, %v4937, %v4913
    %v4941 = vsel %vm94, %v4938, %v4918
    %v4942 = vsel %vm94, %v4939, %v4920
    %v4943 = vsel %vm94, %v4940, %v4922
    %4944 = vxpose.xlu0.b32.start [1/16] %v4941, 128
    %4945 = vxpose.xlu0.b32.cont [2/16] 0.0, 128
    %4946 = vxpose.xlu0.b32.cont [3/16] 0.0, 128
    %4947 = vxpose.xlu0.b32.cont [4/16] 0.0, 128
    %4948 = vxpose.xlu0.b32.cont [5/16] 0.0, 128
    %4949 = vxpose.xlu0.b32.cont [6/16] 0.0, 128
    %4950 = vxpose.xlu0.b32.cont [7/16] 0.0, 128
    %4951 = vxpose.xlu0.b32.cont [8/16] 0.0, 128
    %4952 = vxpose.xlu0.b32.cont [9/16] 0.0, 128
    %4953 = vxpose.xlu0.b32.cont [10/16] 0.0, 128
    %4954 = vxpose.xlu0.b32.cont [11/16] 0.0, 128
    %4955 = vxpose.xlu0.b32.cont [12/16] 0.0, 128
    %4956 = vxpose.xlu0.b32.cont [13/16] 0.0, 128
    %4957 = vxpose.xlu0.b32.cont [14/16] 0.0, 128
    %4958 = vxpose.xlu0.b32.cont [15/16] 0.0, 128
    %4959 = vxpose.xlu0.b32.end [16/16] 0.0, 128
    %v4960 = vpop.trf.xlu0
    %v4961 = vpop.trf.xlu0
    %v4962 = vpop.trf.xlu0
    %v4963 = vpop.trf.xlu0
    %v4964 = vpop.trf.xlu0
    %v4965 = vpop.trf.xlu0
    %v4966 = vpop.trf.xlu0
    %v4967 = vpop.trf.xlu0
    %v4968 = vpop.trf.xlu0
    %v4969 = vpop.trf.xlu0
    %v4970 = vpop.trf.xlu0
    %v4971 = vpop.trf.xlu0
    %v4972 = vpop.trf.xlu0
    %v4973 = vpop.trf.xlu0
    %v4974 = vpop.trf.xlu0
    %v4975 = vpop.trf.xlu0
    %v4977 = vsel %vm271, %v4960, 0
    %v4980 = vsel %vm271, %v4961, 0
    %v4983 = vsel %vm271, %v4962, 0
    %v4986 = vsel %vm271, %v4963, 0
    %v4989 = vsel %vm271, %v4964, 0
    %v4992 = vsel %vm271, %v4965, 0
    %v4995 = vsel %vm271, %v4966, 0
    %4997 = vmatprep.subr.mxu0 0.0
    %4998 = vmatpush1.msra.mxu0 %v4942
    %4999 = vmatprep.subr.mxu0 0.0
    %5000 = vmatpush1.msra.mxu0 0.0
    %5001 = vmatprep.subr.mxu0 0.0
    %5002 = vmatpush1.msra.mxu0 0.0
    %5003 = vmatprep.subr.mxu0 0.0
    %5004 = vmatpush1.msra.mxu0 0.0
    %5005 = vmatprep.subr.mxu0 0.0
    %5006 = vmatpush1.msra.mxu0 0.0
    %5007 = vmatprep.subr.mxu0 0.0
    %5008 = vmatpush1.msra.mxu0 0.0
    %5009 = vmatprep.subr.mxu0 0.0
    %5010 = vmatpush1.msra.mxu0 0.0
    %5011 = vmatprep.subr.mxu0 0.0
    %5012 = vmatpush1.msra.mxu0 0.0
    %5013 = vmatprep.subr.mxu0 0.0
    %5014 = vmatpush1.msra.mxu0 0.0
    %5015 = vmatprep.subr.mxu0 0.0
    %5016 = vmatpush1.msra.mxu0 0.0
    %5017 = vmatprep.subr.mxu0 0.0
    %5018 = vmatpush1.msra.mxu0 0.0
    %5019 = vmatprep.subr.mxu0 0.0
    %5020 = vmatpush1.msra.mxu0 0.0
    %5021 = vmatprep.subr.mxu0 0.0
    %5022 = vmatpush1.msra.mxu0 0.0
    %5023 = vmatprep.subr.mxu0 0.0
    %5024 = vmatpush1.msra.mxu0 0.0
    %5025 = vmatprep.subr.mxu0 0.0
    %5026 = vmatpush1.msra.mxu0 0.0
    %5027 = vmatprep.subr.mxu0 0.0
    %5028 = vmatpush1.msra.mxu0 0.0
    %5029 = vmatprep.subr.mxu0 0.0
    %5030 = vmatpush1.msra.mxu0 0.0
    %5031 = vmatprep.subr.mxu0 0.0
    %5032 = vmatpush1.msra.mxu0 0.0
    %5033 = vmatprep.subr.mxu0 0.0
    %5034 = vmatpush1.msra.mxu0 0.0
    %5035 = vmatprep.subr.mxu0 0.0
    %5036 = vmatpush1.msra.mxu0 0.0
    %5037 = vmatprep.subr.mxu0 0.0
    %5038 = vmatpush1.msra.mxu0 0.0
    %5039 = vmatprep.subr.mxu0 0.0
    %5040 = vmatpush1.msra.mxu0 0.0
    %5041 = vmatprep.subr.mxu0 0.0
    %5042 = vmatpush1.msra.mxu0 0.0
    %5043 = vmatprep.subr.mxu0 0.0
    %5044 = vmatpush1.msra.mxu0 0.0
    %5045 = vmatprep.subr.mxu0 0.0
    %5046 = vmatpush1.msra.mxu0 0.0
    %5047 = vmatprep.subr.mxu0 0.0
    %5048 = vmatpush1.msra.mxu0 0.0
    %5049 = vmatprep.subr.mxu0 0.0
    %5050 = vmatpush1.msra.mxu0 0.0
    %5051 = vmatprep.subr.mxu0 0.0
    %5052 = vmatpush1.msra.mxu0 0.0
    %5053 = vmatprep.subr.mxu0 0.0
    %5054 = vmatpush1.msra.mxu0 0.0
    %5055 = vmatprep.subr.mxu0 0.0
    %5056 = vmatpush1.msra.mxu0 0.0
    %5057 = vmatprep.subr.mxu0 0.0
    %5058 = vmatpush1.msra.mxu0 0.0
    %5059 = vmatprep.subr.mxu0 0.0
    %5060 = vmatpush1.msra.mxu0 0.0
    %5061 = vmatprep.mubr.f32.mxu0 0.0
    %5062 = vmatmul.mubr.f32.gmra.mrb[0].mxu0 %v4977
    %v5063 = vpop.f32.mrb[0].mxu0
    %v5064 = vadd.f32 0.0, %v5063
    %v5065 = vpop.f32.mrb[0].mxu0
    %5066 = vmatprep.mubr.f32.mxu0 0.0
    %5067 = vmatmul.mubr.f32.gmra.mrb[0].mxu0 %v4980
    %v5068 = vpop.f32.mrb[0].mxu0
    %v5069 = vadd.f32 0.0, %v5068
    %v5070 = vpop.f32.mrb[0].mxu0
    %5071 = vmatprep.mubr.f32.mxu0 0.0
    %5072 = vmatmul.mubr.f32.gmra.mrb[0].mxu0 %v4983
    %v5073 = vpop.f32.mrb[0].mxu0
    %v5074 = vadd.f32 0.0, %v5073
    %v5075 = vpop.f32.mrb[0].mxu0
    %5076 = vmatprep.mubr.f32.mxu0 0.0
    %5077 = vmatmul.mubr.f32.gmra.mrb[0].mxu0 %v4986
    %v5078 = vpop.f32.mrb[0].mxu0
    %v5079 = vadd.f32 0.0, %v5078
    %v5080 = vpop.f32.mrb[0].mxu0
    %5081 = vmatprep.mubr.f32.mxu0 0.0
    %5082 = vmatmul.mubr.f32.gmra.mrb[0].mxu0 %v4989
    %v5083 = vpop.f32.mrb[0].mxu0
    %v5084 = vadd.f32 0.0, %v5083
    %v5085 = vpop.f32.mrb[0].mxu0
    %5086 = vmatprep.mubr.f32.mxu0 0.0
    %5087 = vmatmul.mubr.f32.gmra.mrb[0].mxu0 %v4992
    %v5088 = vpop.f32.mrb[0].mxu0
    %v5089 = vadd.f32 0.0, %v5088
    %v5090 = vpop.f32.mrb[0].mxu0
    %5091 = vmatprep.mubr.f32.mxu0 0.0
    %5092 = vmatmul.mubr.f32.gmra.mrb[0].mxu0 %v4995
    %v5093 = vpop.f32.mrb[0].mxu0
    %v5094 = vadd.f32 0.0, %v5093
    %v5095 = vpop.f32.mrb[0].mxu0
    %5096 = vdwg.mxu0
    %v5097 = vsel %vm2007, %v5064, -inf
    %5098 = vmax.xlane.f32.xlu0 %v5097
    %v5099 = vpop.xlane.xlu0 %5098
    %v5100 = vsel %vm2007, %v5069, -inf
    %5101 = vmax.xlane.f32.xlu0 %v5100
    %v5102 = vpop.xlane.xlu0 %5101
    %v5103 = vsel %vm2007, %v5074, -inf
    %5104 = vmax.xlane.f32.xlu0 %v5103
    %v5105 = vpop.xlane.xlu0 %5104
    %v5106 = vsel %vm2007, %v5079, -inf
    %5107 = vmax.xlane.f32.xlu0 %v5106
    %v5108 = vpop.xlane.xlu0 %5107
    %v5109 = vsel %vm2007, %v5084, -inf
    %5110 = vmax.xlane.f32.xlu0 %v5109
    %v5111 = vpop.xlane.xlu0 %5110
    %v5112 = vsel %vm2007, %v5089, -inf
    %5113 = vmax.xlane.f32.xlu0 %v5112
    %v5114 = vpop.xlane.xlu0 %5113
    %v5115 = vsel %vm2026, %v5094, -inf
    %5116 = vmax.xlane.f32.xlu0 %v5115
    %v5117 = vpop.xlane.xlu0 %5116
    %v5118 = vsub.f32 %v5064, %v5099
    %v5119 = vsub.f32 %v5069, %v5102
    %v5120 = vsub.f32 %v5074, %v5105
    %v5121 = vsub.f32 %v5079, %v5108
    %v5122 = vsub.f32 %v5084, %v5111
    %v5123 = vsub.f32 %v5089, %v5114
    %v5124 = vsub.f32 %v5094, %v5117
    %v5125 = vmul.f32 %v5118, 1.442695
    %v5126 = vpow.pop %v5125
    %v5127 = vmul.f32 %v5119, 1.442695
    %v5128 = vpow.pop %v5127
    %v5129 = vmul.f32 %v5120, 1.442695
    %v5130 = vpow.pop %v5129
    %v5131 = vmul.f32 %v5121, 1.442695
    %v5132 = vpow.pop %v5131
    %v5133 = vmul.f32 %v5122, 1.442695
    %v5134 = vpow.pop %v5133
    %v5135 = vmul.f32 %v5123, 1.442695
    %v5136 = vpow.pop %v5135
    %v5137 = vmul.f32 %v5124, 1.442695
    %v5138 = vpow.pop %v5137
    %v5139 = vsel %vm2007, %v5126, 0.0
    %5140 = vadd.xlane.f32.xlu0 %v5139
    %v5141 = vpop.xlane.xlu0 %5140
    %v5142 = vsel %vm2007, %v5128, 0.0
    %5143 = vadd.xlane.f32.xlu0 %v5142
    %v5144 = vpop.xlane.xlu0 %5143
    %v5145 = vsel %vm2007, %v5130, 0.0
    %5146 = vadd.xlane.f32.xlu0 %v5145
    %v5147 = vpop.xlane.xlu0 %5146
    %v5148 = vsel %vm2007, %v5132, 0.0
    %5149 = vadd.xlane.f32.xlu0 %v5148
    %v5150 = vpop.xlane.xlu0 %5149
    %v5151 = vsel %vm2007, %v5134, 0.0
    %5152 = vadd.xlane.f32.xlu0 %v5151
    %v5153 = vpop.xlane.xlu0 %5152
    %v5154 = vsel %vm2007, %v5136, 0.0
    %5155 = vadd.xlane.f32.xlu0 %v5154
    %v5156 = vpop.xlane.xlu0 %5155
    %v5157 = vsel %vm2026, %v5138, 0.0
    %5158 = vadd.xlane.f32.xlu0 %v5157
    %v5159 = vpop.xlane.xlu0 %5158
    %v5160 = vrcp.pop %v5141
    %v5161 = vmul.f32 %v5126, %v5160
    %v5162 = vrcp.pop %v5144
    %v5163 = vmul.f32 %v5128, %v5162
    %v5164 = vrcp.pop %v5147
    %v5165 = vmul.f32 %v5130, %v5164
    %v5166 = vrcp.pop %v5150
    %v5167 = vmul.f32 %v5132, %v5166
    %v5168 = vrcp.pop %v5153
    %v5169 = vmul.f32 %v5134, %v5168
    %v5170 = vrcp.pop %v5156
    %v5171 = vmul.f32 %v5136, %v5170
    %v5172 = vrcp.pop %v5159
    %v5173 = vmul.f32 %v5138, %v5172
    %v5175 = vsel %vm2007, %v4943, 0
    %v5178 = vsel %vm2007, %v5161, 0
    %v5181 = vsel %vm2007, %v5163, 0
    %v5184 = vsel %vm2007, %v5165, 0
    %v5187 = vsel %vm2007, %v5167, 0
    %v5190 = vsel %vm2007, %v5169, 0
    %v5193 = vsel %vm2007, %v5171, 0
    %v5196 = vsel %vm2007, %v5173, 0
    %5198 = vmatprep.subr.mxu0 0.0
    %5199 = vmatpush1.xpose.msra.mxu0 %v5178
    %5200 = vmatprep.subr.mxu0 0.0
    %5201 = vmatpush1.xpose.msra.mxu0 %v5181
    %5202 = vmatprep.subr.mxu0 0.0
    %5203 = vmatpush1.xpose.msra.mxu0 %v5184
    %5204 = vmatprep.subr.mxu0 0.0
    %5205 = vmatpush1.xpose.msra.mxu0 %v5187
    %5206 = vmatprep.subr.mxu0 0.0
    %5207 = vmatpush1.xpose.msra.mxu0 %v5190
    %5208 = vmatprep.subr.mxu0 0.0
    %5209 = vmatpush1.xpose.msra.mxu0 %v5193
    %5210 = vmatprep.subr.mxu0 0.0
    %5211 = vmatpush1.xpose.msra.mxu0 %v5196
    %5212 = vmatprep.subr.mxu0 0.0
    %5213 = vmatpush1.xpose.msra.mxu0 0.0
    %5214 = vmatprep.subr.mxu0 0.0
    %5215 = vmatpush1.xpose.msra.mxu0 0.0
    %5216 = vmatprep.subr.mxu0 0.0
    %5217 = vmatpush1.xpose.msra.mxu0 0.0
    %5218 = vmatprep.subr.mxu0 0.0
    %5219 = vmatpush1.xpose.msra.mxu0 0.0
    %5220 = vmatprep.subr.mxu0 0.0
    %5221 = vmatpush1.xpose.msra.mxu0 0.0
    %5222 = vmatprep.subr.mxu0 0.0
    %5223 = vmatpush1.xpose.msra.mxu0 0.0
    %5224 = vmatprep.subr.mxu0 0.0
    %5225 = vmatpush1.xpose.msra.mxu0 0.0
    %5226 = vmatprep.subr.mxu0 0.0
    %5227 = vmatpush1.xpose.msra.mxu0 0.0
    %5228 = vmatprep.subr.mxu0 0.0
    %5229 = vmatpush1.xpose.msra.mxu0 0.0
    %5230 = vmatprep.subr.mxu0 0.0
    %5231 = vmatpush1.xpose.msra.mxu0 0.0
    %5232 = vmatprep.subr.mxu0 0.0
    %5233 = vmatpush1.xpose.msra.mxu0 0.0
    %5234 = vmatprep.subr.mxu0 0.0
    %5235 = vmatpush1.xpose.msra.mxu0 0.0
    %5236 = vmatprep.subr.mxu0 0.0
    %5237 = vmatpush1.xpose.msra.mxu0 0.0
    %5238 = vmatprep.subr.mxu0 0.0
    %5239 = vmatpush1.xpose.msra.mxu0 0.0
    %5240 = vmatprep.subr.mxu0 0.0
    %5241 = vmatpush1.xpose.msra.mxu0 0.0
    %5242 = vmatprep.subr.mxu0 0.0
    %5243 = vmatpush1.xpose.msra.mxu0 0.0
    %5244 = vmatprep.subr.mxu0 0.0
    %5245 = vmatpush1.xpose.msra.mxu0 0.0
    %5246 = vmatprep.subr.mxu0 0.0
    %5247 = vmatpush1.xpose.msra.mxu0 0.0
    %5248 = vmatprep.subr.mxu0 0.0
    %5249 = vmatpush1.xpose.msra.mxu0 0.0
    %5250 = vmatprep.subr.mxu0 0.0
    %5251 = vmatpush1.xpose.msra.mxu0 0.0
    %5252 = vmatprep.subr.mxu0 0.0
    %5253 = vmatpush1.xpose.msra.mxu0 0.0
    %5254 = vmatprep.subr.mxu0 0.0
    %5255 = vmatpush1.xpose.msra.mxu0 0.0
    %5256 = vmatprep.subr.mxu0 0.0
    %5257 = vmatpush1.xpose.msra.mxu0 0.0
    %5258 = vmatprep.subr.mxu0 0.0
    %5259 = vmatpush1.xpose.msra.mxu0 0.0
    %5260 = vmatprep.subr.mxu0 0.0
    %5261 = vmatpush1.xpose.msra.mxu0 0.0
    %5262 = vmatprep.mubr.f32.mxu0 0.0
    %5263 = vmatmul.mubr.f32.gmra.mrb[0].mxu0 %v5175
    %v5264 = vpop.f32.mrb[0].mxu0
    %v5265 = vadd.f32 0.0, %v5264
    %v5266 = vpop.f32.mrb[0].mxu0
    %5267 = vdwg.mxu0
    %5268 = vrot.lane.b32.xlu0 %v4853, 79
    %v5269 = vpop.permute.xlu0 %5268
    %5270 = vrot.lane.b32.xlu0 %v4859, 79
    %v5271 = vpop.permute.xlu0 %5270
    %5272 = vrot.lane.b32.xlu0 %v4865, 79
    %v5273 = vpop.permute.xlu0 %5272
    %v5277 = vsel %vm629, %v4873, %v4882
    %v5278 = vsel %vm629, %v4875, %v4884
    %v5279 = vsel %vm629, %v4877, %v4886
    %v5280 = vsel %vm90, %v5277, %v4891
    %v5281 = vsel %vm90, %v5278, %v4893
    %v5282 = vsel %vm90, %v5279, %v4895
    %v5283 = vsel %vm1840, %v5280, %v4900
    %v5284 = vsel %vm1840, %v5281, %v4902
    %v5285 = vsel %vm1840, %v5282, %v4904
    %v5286 = vsel %vm92, %v5283, %v4909
    %v5287 = vsel %vm92, %v5284, %v4911
    %v5288 = vsel %vm92, %v5285, %v4913
    %v5289 = vsel %vm1847, %v5286, %v4918
    %v5290 = vsel %vm1847, %v5287, %v4920
    %v5291 = vsel %vm1847, %v5288, %v4922
    %v5292 = vsel %vm94, %v5289, %v5269
    %v5293 = vsel %vm94, %v5290, %v5271
    %v5294 = vsel %vm94, %v5291, %v5273
    %5295 = vxpose.xlu0.b32.start [1/16] %v5292, 128
    %5296 = vxpose.xlu0.b32.cont [2/16] 0.0, 128
    %5297 = vxpose.xlu0.b32.cont [3/16] 0.0, 128
    %5298 = vxpose.xlu0.b32.cont [4/16] 0.0, 128
    %5299 = vxpose.xlu0.b32.cont [5/16] 0.0, 128
    %5300 = vxpose.xlu0.b32.cont [6/16] 0.0, 128
    %5301 = vxpose.xlu0.b32.cont [7/16] 0.0, 128
    %5302 = vxpose.xlu0.b32.cont [8/16] 0.0, 128
    %5303 = vxpose.xlu0.b32.cont [9/16] 0.0, 128
    %5304 = vxpose.xlu0.b32.cont [10/16] 0.0, 128
    %5305 = vxpose.xlu0.b32.cont [11/16] 0.0, 128
    %5306 = vxpose.xlu0.b32.cont [12/16] 0.0, 128
    %5307 = vxpose.xlu0.b32.cont [13/16] 0.0, 128
    %5308 = vxpose.xlu0.b32.cont [14/16] 0.0, 128
    %5309 = vxpose.xlu0.b32.cont [15/16] 0.0, 128
    %5310 = vxpose.xlu0.b32.end [16/16] 0.0, 128
    %v5311 = vpop.trf.xlu0
    %v5312 = vpop.trf.xlu0
    %v5313 = vpop.trf.xlu0
    %v5314 = vpop.trf.xlu0
    %v5315 = vpop.trf.xlu0
    %v5316 = vpop.trf.xlu0
    %v5317 = vpop.trf.xlu0
    %v5318 = vpop.trf.xlu0
    %v5319 = vpop.trf.xlu0
    %v5320 = vpop.trf.xlu0
    %v5321 = vpop.trf.xlu0
    %v5322 = vpop.trf.xlu0
    %v5323 = vpop.trf.xlu0
    %v5324 = vpop.trf.xlu0
    %v5325 = vpop.trf.xlu0
    %v5326 = vpop.trf.xlu0
    %v5328 = vsel %vm271, %v5311, 0
    %v5331 = vsel %vm271, %v5312, 0
    %v5334 = vsel %vm271, %v5313, 0
    %v5337 = vsel %vm271, %v5314, 0
    %v5340 = vsel %vm271, %v5315, 0
    %v5343 = vsel %vm271, %v5316, 0
    %v5346 = vsel %vm271, %v5317, 0
    %5348 = vmatprep.subr.mxu0 0.0
    %5349 = vmatpush1.msra.mxu0 %v5293
    %5350 = vmatprep.subr.mxu0 0.0
    %5351 = vmatpush1.msra.mxu0 0.0
    %5352 = vmatprep.subr.mxu0 0.0
    %5353 = vmatpush1.msra.mxu0 0.0
    %5354 = vmatprep.subr.mxu0 0.0
    %5355 = vmatpush1.msra.mxu0 0.0
    %5356 = vmatprep.subr.mxu0 0.0
    %5357 = vmatpush1.msra.mxu0 0.0
    %5358 = vmatprep.subr.mxu0 0.0
    %5359 = vmatpush1.msra.mxu0 0.0
    %5360 = vmatprep.subr.mxu0 0.0
    %5361 = vmatpush1.msra.mxu0 0.0
    %5362 = vmatprep.subr.mxu0 0.0
    %5363 = vmatpush1.msra.mxu0 0.0
    %5364 = vmatprep.subr.mxu0 0.0
    %5365 = vmatpush1.msra.mxu0 0.0
    %5366 = vmatprep.subr.mxu0 0.0
    %5367 = vmatpush1.msra.mxu0 0.0
    %5368 = vmatprep.subr.mxu0 0.0
    %5369 = vmatpush1.msra.mxu0 0.0
    %5370 = vmatprep.subr.mxu0 0.0
    %5371 = vmatpush1.msra.mxu0 0.0
    %5372 = vmatprep.subr.mxu0 0.0
    %5373 = vmatpush1.msra.mxu0 0.0
    %5374 = vmatprep.subr.mxu0 0.0
    %5375 = vmatpush1.msra.mxu0 0.0
    %5376 = vmatprep.subr.mxu0 0.0
    %5377 = vmatpush1.msra.mxu0 0.0
    %5378 = vmatprep.subr.mxu0 0.0
    %5379 = vmatpush1.msra.mxu0 0.0
    %5380 = vmatprep.subr.mxu0 0.0
    %5381 = vmatpush1.msra.mxu0 0.0
    %5382 = vmatprep.subr.mxu0 0.0
    %5383 = vmatpush1.msra.mxu0 0.0
    %5384 = vmatprep.subr.mxu0 0.0
    %5385 = vmatpush1.msra.mxu0 0.0
    %5386 = vmatprep.subr.mxu0 0.0
    %5387 = vmatpush1.msra.mxu0 0.0
    %5388 = vmatprep.subr.mxu0 0.0
    %5389 = vmatpush1.msra.mxu0 0.0
    %5390 = vmatprep.subr.mxu0 0.0
    %5391 = vmatpush1.msra.mxu0 0.0
    %5392 = vmatprep.subr.mxu0 0.0
    %5393 = vmatpush1.msra.mxu0 0.0
    %5394 = vmatprep.subr.mxu0 0.0
    %5395 = vmatpush1.msra.mxu0 0.0
    %5396 = vmatprep.subr.mxu0 0.0
    %5397 = vmatpush1.msra.mxu0 0.0
    %5398 = vmatprep.subr.mxu0 0.0
    %5399 = vmatpush1.msra.mxu0 0.0
    %5400 = vmatprep.subr.mxu0 0.0
    %5401 = vmatpush1.msra.mxu0 0.0
    %5402 = vmatprep.subr.mxu0 0.0
    %5403 = vmatpush1.msra.mxu0 0.0
    %5404 = vmatprep.subr.mxu0 0.0
    %5405 = vmatpush1.msra.mxu0 0.0
    %5406 = vmatprep.subr.mxu0 0.0
    %5407 = vmatpush1.msra.mxu0 0.0
    %5408 = vmatprep.subr.mxu0 0.0
    %5409 = vmatpush1.msra.mxu0 0.0
    %5410 = vmatprep.subr.mxu0 0.0
    %5411 = vmatpush1.msra.mxu0 0.0
    %5412 = vmatprep.mubr.f32.mxu0 0.0
    %5413 = vmatmul.mubr.f32.gmra.mrb[0].mxu0 %v5328
    %v5414 = vpop.f32.mrb[0].mxu0
    %v5415 = vadd.f32 0.0, %v5414
    %v5416 = vpop.f32.mrb[0].mxu0
    %5417 = vmatprep.mubr.f32.mxu0 0.0
    %5418 = vmatmul.mubr.f32.gmra.mrb[0].mxu0 %v5331
    %v5419 = vpop.f32.mrb[0].mxu0
    %v5420 = vadd.f32 0.0, %v5419
    %v5421 = vpop.f32.mrb[0].mxu0
    %5422 = vmatprep.mubr.f32.mxu0 0.0
    %5423 = vmatmul.mubr.f32.gmra.mrb[0].mxu0 %v5334
    %v5424 = vpop.f32.mrb[0].mxu0
    %v5425 = vadd.f32 0.0, %v5424
    %v5426 = vpop.f32.mrb[0].mxu0
    %5427 = vmatprep.mubr.f32.mxu0 0.0
    %5428 = vmatmul.mubr.f32.gmra.mrb[0].mxu0 %v5337
    %v5429 = vpop.f32.mrb[0].mxu0
    %v5430 = vadd.f32 0.0, %v5429
    %v5431 = vpop.f32.mrb[0].mxu0
    %5432 = vmatprep.mubr.f32.mxu0 0.0
    %5433 = vmatmul.mubr.f32.gmra.mrb[0].mxu0 %v5340
    %v5434 = vpop.f32.mrb[0].mxu0
    %v5435 = vadd.f32 0.0, %v5434
    %v5436 = vpop.f32.mrb[0].mxu0
    %5437 = vmatprep.mubr.f32.mxu0 0.0
    %5438 = vmatmul.mubr.f32.gmra.mrb[0].mxu0 %v5343
    %v5439 = vpop.f32.mrb[0].mxu0
    %v5440 = vadd.f32 0.0, %v5439
    %v5441 = vpop.f32.mrb[0].mxu0
    %5442 = vmatprep.mubr.f32.mxu0 0.0
    %5443 = vmatmul.mubr.f32.gmra.mrb[0].mxu0 %v5346
    %v5444 = vpop.f32.mrb[0].mxu0
    %v5445 = vadd.f32 0.0, %v5444
    %v5446 = vpop.f32.mrb[0].mxu0
    %5447 = vdwg.mxu0
    %v5448 = vsel %vm2007, %v5415, -inf
    %5449 = vmax.xlane.f32.xlu0 %v5448
    %v5450 = vpop.xlane.xlu0 %5449
    %v5451 = vsel %vm2007, %v5420, -inf
    %5452 = vmax.xlane.f32.xlu0 %v5451
    %v5453 = vpop.xlane.xlu0 %5452
    %v5454 = vsel %vm2007, %v5425, -inf
    %5455 = vmax.xlane.f32.xlu0 %v5454
    %v5456 = vpop.xlane.xlu0 %5455
    %v5457 = vsel %vm2007, %v5430, -inf
    %5458 = vmax.xlane.f32.xlu0 %v5457
    %v5459 = vpop.xlane.xlu0 %5458
    %v5460 = vsel %vm2007, %v5435, -inf
    %5461 = vmax.xlane.f32.xlu0 %v5460
    %v5462 = vpop.xlane.xlu0 %5461
    %v5463 = vsel %vm2007, %v5440, -inf
    %5464 = vmax.xlane.f32.xlu0 %v5463
    %v5465 = vpop.xlane.xlu0 %5464
    %v5466 = vsel %vm2026, %v5445, -inf
    %5467 = vmax.xlane.f32.xlu0 %v5466
    %v5468 = vpop.xlane.xlu0 %5467
    %v5469 = vsub.f32 %v5415, %v5450
    %v5470 = vsub.f32 %v5420, %v5453
    %v5471 = vsub.f32 %v5425, %v5456
    %v5472 = vsub.f32 %v5430, %v5459
    %v5473 = vsub.f32 %v5435, %v5462
    %v5474 = vsub.f32 %v5440, %v5465
    %v5475 = vsub.f32 %v5445, %v5468
    %v5476 = vmul.f32 %v5469, 1.442695
    %v5477 = vpow.pop %v5476
    %v5478 = vmul.f32 %v5470, 1.442695
    %v5479 = vpow.pop %v5478
    %v5480 = vmul.f32 %v5471, 1.442695
    %v5481 = vpow.pop %v5480
    %v5482 = vmul.f32 %v5472, 1.442695
    %v5483 = vpow.pop %v5482
    %v5484 = vmul.f32 %v5473, 1.442695
    %v5485 = vpow.pop %v5484
    %v5486 = vmul.f32 %v5474, 1.442695
    %v5487 = vpow.pop %v5486
    %v5488 = vmul.f32 %v5475, 1.442695
    %v5489 = vpow.pop %v5488
    %v5490 = vsel %vm2007, %v5477, 0.0
    %5491 = vadd.xlane.f32.xlu0 %v5490
    %v5492 = vpop.xlane.xlu0 %5491
    %v5493 = vsel %vm2007, %v5479, 0.0
    %5494 = vadd.xlane.f32.xlu0 %v5493
    %v5495 = vpop.xlane.xlu0 %5494
    %v5496 = vsel %vm2007, %v5481, 0.0
    %5497 = vadd.xlane.f32.xlu0 %v5496
    %v5498 = vpop.xlane.xlu0 %5497
    %v5499 = vsel %vm2007, %v5483, 0.0
    %5500 = vadd.xlane.f32.xlu0 %v5499
    %v5501 = vpop.xlane.xlu0 %5500
    %v5502 = vsel %vm2007, %v5485, 0.0
    %5503 = vadd.xlane.f32.xlu0 %v5502
    %v5504 = vpop.xlane.xlu0 %5503
    %v5505 = vsel %vm2007, %v5487, 0.0
    %5506 = vadd.xlane.f32.xlu0 %v5505
    %v5507 = vpop.xlane.xlu0 %5506
    %v5508 = vsel %vm2026, %v5489, 0.0
    %5509 = vadd.xlane.f32.xlu0 %v5508
    %v5510 = vpop.xlane.xlu0 %5509
    %v5511 = vrcp.pop %v5492
    %v5512 = vmul.f32 %v5477, %v5511
    %v5513 = vrcp.pop %v5495
    %v5514 = vmul.f32 %v5479, %v5513
    %v5515 = vrcp.pop %v5498
    %v5516 = vmul.f32 %v5481, %v5515
    %v5517 = vrcp.pop %v5501
    %v5518 = vmul.f32 %v5483, %v5517
    %v5519 = vrcp.pop %v5504
    %v5520 = vmul.f32 %v5485, %v5519
    %v5521 = vrcp.pop %v5507
    %v5522 = vmul.f32 %v5487, %v5521
    %v5523 = vrcp.pop %v5510
    %v5524 = vmul.f32 %v5489, %v5523
    %v5526 = vsel %vm2007, %v5294, 0
    %v5529 = vsel %vm2007, %v5512, 0
    %v5532 = vsel %vm2007, %v5514, 0
    %v5535 = vsel %vm2007, %v5516, 0
    %v5538 = vsel %vm2007, %v5518, 0
    %v5541 = vsel %vm2007, %v5520, 0
    %v5544 = vsel %vm2007, %v5522, 0
    %v5547 = vsel %vm2007, %v5524, 0
    %5549 = vmatprep.subr.mxu0 0.0
    %5550 = vmatpush1.xpose.msra.mxu0 %v5529
    %5551 = vmatprep.subr.mxu0 0.0
    %5552 = vmatpush1.xpose.msra.mxu0 %v5532
    %5553 = vmatprep.subr.mxu0 0.0
    %5554 = vmatpush1.xpose.msra.mxu0 %v5535
    %5555 = vmatprep.subr.mxu0 0.0
    %5556 = vmatpush1.xpose.msra.mxu0 %v5538
    %5557 = vmatprep.subr.mxu0 0.0
    %5558 = vmatpush1.xpose.msra.mxu0 %v5541
    %5559 = vmatprep.subr.mxu0 0.0
    %5560 = vmatpush1.xpose.msra.mxu0 %v5544
    %5561 = vmatprep.subr.mxu0 0.0
    %5562 = vmatpush1.xpose.msra.mxu0 %v5547
    %5563 = vmatprep.subr.mxu0 0.0
    %5564 = vmatpush1.xpose.msra.mxu0 0.0
    %5565 = vmatprep.subr.mxu0 0.0
    %5566 = vmatpush1.xpose.msra.mxu0 0.0
    %5567 = vmatprep.subr.mxu0 0.0
    %5568 = vmatpush1.xpose.msra.mxu0 0.0
    %5569 = vmatprep.subr.mxu0 0.0
    %5570 = vmatpush1.xpose.msra.mxu0 0.0
    %5571 = vmatprep.subr.mxu0 0.0
    %5572 = vmatpush1.xpose.msra.mxu0 0.0
    %5573 = vmatprep.subr.mxu0 0.0
    %5574 = vmatpush1.xpose.msra.mxu0 0.0
    %5575 = vmatprep.subr.mxu0 0.0
    %5576 = vmatpush1.xpose.msra.mxu0 0.0
    %5577 = vmatprep.subr.mxu0 0.0
    %5578 = vmatpush1.xpose.msra.mxu0 0.0
    %5579 = vmatprep.subr.mxu0 0.0
    %5580 = vmatpush1.xpose.msra.mxu0 0.0
    %5581 = vmatprep.subr.mxu0 0.0
    %5582 = vmatpush1.xpose.msra.mxu0 0.0
    %5583 = vmatprep.subr.mxu0 0.0
    %5584 = vmatpush1.xpose.msra.mxu0 0.0
    %5585 = vmatprep.subr.mxu0 0.0
    %5586 = vmatpush1.xpose.msra.mxu0 0.0
    %5587 = vmatprep.subr.mxu0 0.0
    %5588 = vmatpush1.xpose.msra.mxu0 0.0
    %5589 = vmatprep.subr.mxu0 0.0
    %5590 = vmatpush1.xpose.msra.mxu0 0.0
    %5591 = vmatprep.subr.mxu0 0.0
    %5592 = vmatpush1.xpose.msra.mxu0 0.0
    %5593 = vmatprep.subr.mxu0 0.0
    %5594 = vmatpush1.xpose.msra.mxu0 0.0
    %5595 = vmatprep.subr.mxu0 0.0
    %5596 = vmatpush1.xpose.msra.mxu0 0.0
    %5597 = vmatprep.subr.mxu0 0.0
    %5598 = vmatpush1.xpose.msra.mxu0 0.0
    %5599 = vmatprep.subr.mxu0 0.0
    %5600 = vmatpush1.xpose.msra.mxu0 0.0
    %5601 = vmatprep.subr.mxu0 0.0
    %5602 = vmatpush1.xpose.msra.mxu0 0.0
    %5603 = vmatprep.subr.mxu0 0.0
    %5604 = vmatpush1.xpose.msra.mxu0 0.0
    %5605 = vmatprep.subr.mxu0 0.0
    %5606 = vmatpush1.xpose.msra.mxu0 0.0
    %5607 = vmatprep.subr.mxu0 0.0
    %5608 = vmatpush1.xpose.msra.mxu0 0.0
    %5609 = vmatprep.subr.mxu0 0.0
    %5610 = vmatpush1.xpose.msra.mxu0 0.0
    %5611 = vmatprep.subr.mxu0 0.0
    %5612 = vmatpush1.xpose.msra.mxu0 0.0
    %5613 = vmatprep.mubr.f32.mxu0 0.0
    %5614 = vmatmul.mubr.f32.gmra.mrb[0].mxu0 %v5526
    %v5615 = vpop.f32.mrb[0].mxu0
    %v5616 = vadd.f32 0.0, %v5615
    %v5617 = vpop.f32.mrb[0].mxu0
    %5618 = vdwg.mxu0
    %5619 = vrot.lane.b32.xlu0 %v4853, 30
    %v5620 = vpop.permute.xlu0 %5619
    %5621 = vrot.lane.b32.xlu0 %v4859, 30
    %v5622 = vpop.permute.xlu0 %5621
    %5623 = vrot.lane.b32.xlu0 %v4865, 30
    %v5624 = vpop.permute.xlu0 %5623
    %5628 = vrot.lane.b32.xlu0 %v4853, 23
    %v5629 = vpop.permute.xlu0 %5628
    %5630 = vrot.lane.b32.xlu0 %v4859, 23
    %v5631 = vpop.permute.xlu0 %5630
    %5632 = vrot.lane.b32.xlu0 %v4865, 23
    %v5633 = vpop.permute.xlu0 %5632
    %5640 = vrot.lane.b32.xlu0 %v4853, 16
    %v5641 = vpop.permute.xlu0 %5640
    %5642 = vrot.lane.b32.xlu0 %v4855, 16
    %v5643 = vpop.permute.xlu0 %5642
    %5644 = vrot.lane.b32.xlu0 %v4859, 16
    %v5645 = vpop.permute.xlu0 %5644
    %5646 = vrot.lane.b32.xlu0 %v4861, 16
    %v5647 = vpop.permute.xlu0 %5646
    %5648 = vrot.lane.b32.xlu0 %v4865, 16
    %v5649 = vpop.permute.xlu0 %5648
    %5650 = vrot.lane.b32.xlu0 %v4867, 16
    %v5651 = vpop.permute.xlu0 %5650
    %v5652 = vsel %vm227, %v5641, %v5643
    %v5653 = vsel %vm227, %v5645, %v5647
    %v5654 = vsel %vm227, %v5649, %v5651
    %5658 = vrot.lane.b32.xlu0 %v4855, 9
    %v5659 = vpop.permute.xlu0 %5658
    %5660 = vrot.lane.b32.xlu0 %v4861, 9
    %v5661 = vpop.permute.xlu0 %5660
    %5662 = vrot.lane.b32.xlu0 %v4867, 9
    %v5663 = vpop.permute.xlu0 %5662
    %5667 = vrot.lane.b32.xlu0 %v4855, 2
    %v5668 = vpop.permute.xlu0 %5667
    %5669 = vrot.lane.b32.xlu0 %v4861, 2
    %v5670 = vpop.permute.xlu0 %5669
    %5671 = vrot.lane.b32.xlu0 %v4867, 2
    %v5672 = vpop.permute.xlu0 %5671
    %5676 = vrot.lane.b32.xlu0 %v4855, 123
    %v5677 = vpop.permute.xlu0 %5676
    %5678 = vrot.lane.b32.xlu0 %v4861, 123
    %v5679 = vpop.permute.xlu0 %5678
    %5680 = vrot.lane.b32.xlu0 %v4867, 123
    %v5681 = vpop.permute.xlu0 %5680
    %5685 = vrot.lane.b32.xlu0 %v4855, 116
    %v5686 = vpop.permute.xlu0 %5685
    %5687 = vrot.lane.b32.xlu0 %v4861, 116
    %v5688 = vpop.permute.xlu0 %5687
    %5689 = vrot.lane.b32.xlu0 %v4867, 116
    %v5690 = vpop.permute.xlu0 %5689
    %v5694 = vsel %vm629, %v5620, %v5629
    %v5695 = vsel %vm629, %v5622, %v5631
    %v5696 = vsel %vm629, %v5624, %v5633
    %v5697 = vsel %vm90, %v5694, %v5652
    %v5698 = vsel %vm90, %v5695, %v5653
    %v5699 = vsel %vm90, %v5696, %v5654
    %v5700 = vsel %vm1840, %v5697, %v5659
    %v5701 = vsel %vm1840, %v5698, %v5661
    %v5702 = vsel %vm1840, %v5699, %v5663
    %v5703 = vsel %vm92, %v5700, %v5668
    %v5704 = vsel %vm92, %v5701, %v5670
    %v5705 = vsel %vm92, %v5702, %v5672
    %v5706 = vsel %vm1847, %v5703, %v5677
    %v5707 = vsel %vm1847, %v5704, %v5679
    %v5708 = vsel %vm1847, %v5705, %v5681
    %v5709 = vsel %vm94, %v5706, %v5686
    %v5710 = vsel %vm94, %v5707, %v5688
    %v5711 = vsel %vm94, %v5708, %v5690
    %5712 = vxpose.xlu0.b32.start [1/16] %v5709, 128
    %5713 = vxpose.xlu0.b32.cont [2/16] 0.0, 128
    %5714 = vxpose.xlu0.b32.cont [3/16] 0.0, 128
    %5715 = vxpose.xlu0.b32.cont [4/16] 0.0, 128
    %5716 = vxpose.xlu0.b32.cont [5/16] 0.0, 128
    %5717 = vxpose.xlu0.b32.cont [6/16] 0.0, 128
    %5718 = vxpose.xlu0.b32.cont [7/16] 0.0, 128
    %5719 = vxpose.xlu0.b32.cont [8/16] 0.0, 128
    %5720 = vxpose.xlu0.b32.cont [9/16] 0.0, 128
    %5721 = vxpose.xlu0.b32.cont [10/16] 0.0, 128
    %5722 = vxpose.xlu0.b32.cont [11/16] 0.0, 128
    %5723 = vxpose.xlu0.b32.cont [12/16] 0.0, 128
    %5724 = vxpose.xlu0.b32.cont [13/16] 0.0, 128
    %5725 = vxpose.xlu0.b32.cont [14/16] 0.0, 128
    %5726 = vxpose.xlu0.b32.cont [15/16] 0.0, 128
    %5727 = vxpose.xlu0.b32.end [16/16] 0.0, 128
    %v5728 = vpop.trf.xlu0
    %v5729 = vpop.trf.xlu0
    %v5730 = vpop.trf.xlu0
    %v5731 = vpop.trf.xlu0
    %v5732 = vpop.trf.xlu0
    %v5733 = vpop.trf.xlu0
    %v5734 = vpop.trf.xlu0
    %v5735 = vpop.trf.xlu0
    %v5736 = vpop.trf.xlu0
    %v5737 = vpop.trf.xlu0
    %v5738 = vpop.trf.xlu0
    %v5739 = vpop.trf.xlu0
    %v5740 = vpop.trf.xlu0
    %v5741 = vpop.trf.xlu0
    %v5742 = vpop.trf.xlu0
    %v5743 = vpop.trf.xlu0
    %v5745 = vsel %vm271, %v5728, 0
    %v5748 = vsel %vm271, %v5729, 0
    %v5751 = vsel %vm271, %v5730, 0
    %v5754 = vsel %vm271, %v5731, 0
    %v5757 = vsel %vm271, %v5732, 0
    %v5760 = vsel %vm271, %v5733, 0
    %v5763 = vsel %vm271, %v5734, 0
    %5765 = vmatprep.subr.mxu0 0.0
    %5766 = vmatpush1.msra.mxu0 %v5710
    %5767 = vmatprep.subr.mxu0 0.0
    %5768 = vmatpush1.msra.mxu0 0.0
    %5769 = vmatprep.subr.mxu0 0.0
    %5770 = vmatpush1.msra.mxu0 0.0
    %5771 = vmatprep.subr.mxu0 0.0
    %5772 = vmatpush1.msra.mxu0 0.0
    %5773 = vmatprep.subr.mxu0 0.0
    %5774 = vmatpush1.msra.mxu0 0.0
    %5775 = vmatprep.subr.mxu0 0.0
    %5776 = vmatpush1.msra.mxu0 0.0
    %5777 = vmatprep.subr.mxu0 0.0
    %5778 = vmatpush1.msra.mxu0 0.0
    %5779 = vmatprep.subr.mxu0 0.0
    %5780 = vmatpush1.msra.mxu0 0.0
    %5781 = vmatprep.subr.mxu0 0.0
    %5782 = vmatpush1.msra.mxu0 0.0
    %5783 = vmatprep.subr.mxu0 0.0
    %5784 = vmatpush1.msra.mxu0 0.0
    %5785 = vmatprep.subr.mxu0 0.0
    %5786 = vmatpush1.msra.mxu0 0.0
    %5787 = vmatprep.subr.mxu0 0.0
    %5788 = vmatpush1.msra.mxu0 0.0
    %5789 = vmatprep.subr.mxu0 0.0
    %5790 = vmatpush1.msra.mxu0 0.0
    %5791 = vmatprep.subr.mxu0 0.0
    %5792 = vmatpush1.msra.mxu0 0.0
    %5793 = vmatprep.subr.mxu0 0.0
    %5794 = vmatpush1.msra.mxu0 0.0
    %5795 = vmatprep.subr.mxu0 0.0
    %5796 = vmatpush1.msra.mxu0 0.0
    %5797 = vmatprep.subr.mxu0 0.0
    %5798 = vmatpush1.msra.mxu0 0.0
    %5799 = vmatprep.subr.mxu0 0.0
    %5800 = vmatpush1.msra.mxu0 0.0
    %5801 = vmatprep.subr.mxu0 0.0
    %5802 = vmatpush1.msra.mxu0 0.0
    %5803 = vmatprep.subr.mxu0 0.0
    %5804 = vmatpush1.msra.mxu0 0.0
    %5805 = vmatprep.subr.mxu0 0.0
    %5806 = vmatpush1.msra.mxu0 0.0
    %5807 = vmatprep.subr.mxu0 0.0
    %5808 = vmatpush1.msra.mxu0 0.0
    %5809 = vmatprep.subr.mxu0 0.0
    %5810 = vmatpush1.msra.mxu0 0.0
    %5811 = vmatprep.subr.mxu0 0.0
    %5812 = vmatpush1.msra.mxu0 0.0
    %5813 = vmatprep.subr.mxu0 0.0
    %5814 = vmatpush1.msra.mxu0 0.0
    %5815 = vmatprep.subr.mxu0 0.0
    %5816 = vmatpush1.msra.mxu0 0.0
    %5817 = vmatprep.subr.mxu0 0.0
    %5818 = vmatpush1.msra.mxu0 0.0
    %5819 = vmatprep.subr.mxu0 0.0
    %5820 = vmatpush1.msra.mxu0 0.0
    %5821 = vmatprep.subr.mxu0 0.0
    %5822 = vmatpush1.msra.mxu0 0.0
    %5823 = vmatprep.subr.mxu0 0.0
    %5824 = vmatpush1.msra.mxu0 0.0
    %5825 = vmatprep.subr.mxu0 0.0
    %5826 = vmatpush1.msra.mxu0 0.0
    %5827 = vmatprep.subr.mxu0 0.0
    %5828 = vmatpush1.msra.mxu0 0.0
    %5829 = vmatprep.mubr.f32.mxu0 0.0
    %5830 = vmatmul.mubr.f32.gmra.mrb[0].mxu0 %v5745
    %v5831 = vpop.f32.mrb[0].mxu0
    %v5832 = vadd.f32 0.0, %v5831
    %v5833 = vpop.f32.mrb[0].mxu0
    %5834 = vmatprep.mubr.f32.mxu0 0.0
    %5835 = vmatmul.mubr.f32.gmra.mrb[0].mxu0 %v5748
    %v5836 = vpop.f32.mrb[0].mxu0
    %v5837 = vadd.f32 0.0, %v5836
    %v5838 = vpop.f32.mrb[0].mxu0
    %5839 = vmatprep.mubr.f32.mxu0 0.0
    %5840 = vmatmul.mubr.f32.gmra.mrb[0].mxu0 %v5751
    %v5841 = vpop.f32.mrb[0].mxu0
    %v5842 = vadd.f32 0.0, %v5841
    %v5843 = vpop.f32.mrb[0].mxu0
    %5844 = vmatprep.mubr.f32.mxu0 0.0
    %5845 = vmatmul.mubr.f32.gmra.mrb[0].mxu0 %v5754
    %v5846 = vpop.f32.mrb[0].mxu0
    %v5847 = vadd.f32 0.0, %v5846
    %v5848 = vpop.f32.mrb[0].mxu0
    %5849 = vmatprep.mubr.f32.mxu0 0.0
    %5850 = vmatmul.mubr.f32.gmra.mrb[0].mxu0 %v5757
    %v5851 = vpop.f32.mrb[0].mxu0
    %v5852 = vadd.f32 0.0, %v5851
    %v5853 = vpop.f32.mrb[0].mxu0
    %5854 = vmatprep.mubr.f32.mxu0 0.0
    %5855 = vmatmul.mubr.f32.gmra.mrb[0].mxu0 %v5760
    %v5856 = vpop.f32.mrb[0].mxu0
    %v5857 = vadd.f32 0.0, %v5856
    %v5858 = vpop.f32.mrb[0].mxu0
    %5859 = vmatprep.mubr.f32.mxu0 0.0
    %5860 = vmatmul.mubr.f32.gmra.mrb[0].mxu0 %v5763
    %v5861 = vpop.f32.mrb[0].mxu0
    %v5862 = vadd.f32 0.0, %v5861
    %v5863 = vpop.f32.mrb[0].mxu0
    %5864 = vdwg.mxu0
    %v5865 = vsel %vm2007, %v5832, -inf
    %5866 = vmax.xlane.f32.xlu0 %v5865
    %v5867 = vpop.xlane.xlu0 %5866
    %v5868 = vsel %vm2007, %v5837, -inf
    %5869 = vmax.xlane.f32.xlu0 %v5868
    %v5870 = vpop.xlane.xlu0 %5869
    %v5871 = vsel %vm2007, %v5842, -inf
    %5872 = vmax.xlane.f32.xlu0 %v5871
    %v5873 = vpop.xlane.xlu0 %5872
    %v5874 = vsel %vm2007, %v5847, -inf
    %5875 = vmax.xlane.f32.xlu0 %v5874
    %v5876 = vpop.xlane.xlu0 %5875
    %v5877 = vsel %vm2007, %v5852, -inf
    %5878 = vmax.xlane.f32.xlu0 %v5877
    %v5879 = vpop.xlane.xlu0 %5878
    %v5880 = vsel %vm2007, %v5857, -inf
    %5881 = vmax.xlane.f32.xlu0 %v5880
    %v5882 = vpop.xlane.xlu0 %5881
    %v5883 = vsel %vm2026, %v5862, -inf
    %5884 = vmax.xlane.f32.xlu0 %v5883
    %v5885 = vpop.xlane.xlu0 %5884
    %v5886 = vsub.f32 %v5832, %v5867
    %v5887 = vsub.f32 %v5837, %v5870
    %v5888 = vsub.f32 %v5842, %v5873
    %v5889 = vsub.f32 %v5847, %v5876
    %v5890 = vsub.f32 %v5852, %v5879
    %v5891 = vsub.f32 %v5857, %v5882
    %v5892 = vsub.f32 %v5862, %v5885
    %v5893 = vmul.f32 %v5886, 1.442695
    %v5894 = vpow.pop %v5893
    %v5895 = vmul.f32 %v5887, 1.442695
    %v5896 = vpow.pop %v5895
    %v5897 = vmul.f32 %v5888, 1.442695
    %v5898 = vpow.pop %v5897
    %v5899 = vmul.f32 %v5889, 1.442695
    %v5900 = vpow.pop %v5899
    %v5901 = vmul.f32 %v5890, 1.442695
    %v5902 = vpow.pop %v5901
    %v5903 = vmul.f32 %v5891, 1.442695
    %v5904 = vpow.pop %v5903
    %v5905 = vmul.f32 %v5892, 1.442695
    %v5906 = vpow.pop %v5905
    %v5907 = vsel %vm2007, %v5894, 0.0
    %5908 = vadd.xlane.f32.xlu0 %v5907
    %v5909 = vpop.xlane.xlu0 %5908
    %v5910 = vsel %vm2007, %v5896, 0.0
    %5911 = vadd.xlane.f32.xlu0 %v5910
    %v5912 = vpop.xlane.xlu0 %5911
    %v5913 = vsel %vm2007, %v5898, 0.0
    %5914 = vadd.xlane.f32.xlu0 %v5913
    %v5915 = vpop.xlane.xlu0 %5914
    %v5916 = vsel %vm2007, %v5900, 0.0
    %5917 = vadd.xlane.f32.xlu0 %v5916
    %v5918 = vpop.xlane.xlu0 %5917
    %v5919 = vsel %vm2007, %v5902, 0.0
    %5920 = vadd.xlane.f32.xlu0 %v5919
    %v5921 = vpop.xlane.xlu0 %5920
    %v5922 = vsel %vm2007, %v5904, 0.0
    %5923 = vadd.xlane.f32.xlu0 %v5922
    %v5924 = vpop.xlane.xlu0 %5923
    %v5925 = vsel %vm2026, %v5906, 0.0
    %5926 = vadd.xlane.f32.xlu0 %v5925
    %v5927 = vpop.xlane.xlu0 %5926
    %v5928 = vrcp.pop %v5909
    %v5929 = vmul.f32 %v5894, %v5928
    %v5930 = vrcp.pop %v5912
    %v5931 = vmul.f32 %v5896, %v5930
    %v5932 = vrcp.pop %v5915
    %v5933 = vmul.f32 %v5898, %v5932
    %v5934 = vrcp.pop %v5918
    %v5935 = vmul.f32 %v5900, %v5934
    %v5936 = vrcp.pop %v5921
    %v5937 = vmul.f32 %v5902, %v5936
    %v5938 = vrcp.pop %v5924
    %v5939 = vmul.f32 %v5904, %v5938
    %v5940 = vrcp.pop %v5927
    %v5941 = vmul.f32 %v5906, %v5940
    %v5943 = vsel %vm2007, %v5711, 0
    %v5946 = vsel %vm2007, %v5929, 0
    %v5949 = vsel %vm2007, %v5931, 0
    %v5952 = vsel %vm2007, %v5933, 0
    %v5955 = vsel %vm2007, %v5935, 0
    %v5958 = vsel %vm2007, %v5937, 0
    %v5961 = vsel %vm2007, %v5939, 0
    %v5964 = vsel %vm2007, %v5941, 0
    %5966 = vmatprep.subr.mxu0 0.0
    %5967 = vmatpush1.xpose.msra.mxu0 %v5946
    %5968 = vmatprep.subr.mxu0 0.0
    %5969 = vmatpush1.xpose.msra.mxu0 %v5949
    %5970 = vmatprep.subr.mxu0 0.0
    %5971 = vmatpush1.xpose.msra.mxu0 %v5952
    %5972 = vmatprep.subr.mxu0 0.0
    %5973 = vmatpush1.xpose.msra.mxu0 %v5955
    %5974 = vmatprep.subr.mxu0 0.0
    %5975 = vmatpush1.xpose.msra.mxu0 %v5958
    %5976 = vmatprep.subr.mxu0 0.0
    %5977 = vmatpush1.xpose.msra.mxu0 %v5961
    %5978 = vmatprep.subr.mxu0 0.0
    %5979 = vmatpush1.xpose.msra.mxu0 %v5964
    %5980 = vmatprep.subr.mxu0 0.0
    %5981 = vmatpush1.xpose.msra.mxu0 0.0
    %5982 = vmatprep.subr.mxu0 0.0
    %5983 = vmatpush1.xpose.msra.mxu0 0.0
    %5984 = vmatprep.subr.mxu0 0.0
    %5985 = vmatpush1.xpose.msra.mxu0 0.0
    %5986 = vmatprep.subr.mxu0 0.0
    %5987 = vmatpush1.xpose.msra.mxu0 0.0
    %5988 = vmatprep.subr.mxu0 0.0
    %5989 = vmatpush1.xpose.msra.mxu0 0.0
    %5990 = vmatprep.subr.mxu0 0.0
    %5991 = vmatpush1.xpose.msra.mxu0 0.0
    %5992 = vmatprep.subr.mxu0 0.0
    %5993 = vmatpush1.xpose.msra.mxu0 0.0
    %5994 = vmatprep.subr.mxu0 0.0
    %5995 = vmatpush1.xpose.msra.mxu0 0.0
    %5996 = vmatprep.subr.mxu0 0.0
    %5997 = vmatpush1.xpose.msra.mxu0 0.0
    %5998 = vmatprep.subr.mxu0 0.0
    %5999 = vmatpush1.xpose.msra.mxu0 0.0
    %6000 = vmatprep.subr.mxu0 0.0
    %6001 = vmatpush1.xpose.msra.mxu0 0.0
    %6002 = vmatprep.subr.mxu0 0.0
    %6003 = vmatpush1.xpose.msra.mxu0 0.0
    %6004 = vmatprep.subr.mxu0 0.0
    %6005 = vmatpush1.xpose.msra.mxu0 0.0
    %6006 = vmatprep.subr.mxu0 0.0
    %6007 = vmatpush1.xpose.msra.mxu0 0.0
    %6008 = vmatprep.subr.mxu0 0.0
    %6009 = vmatpush1.xpose.msra.mxu0 0.0
    %6010 = vmatprep.subr.mxu0 0.0
    %6011 = vmatpush1.xpose.msra.mxu0 0.0
    %6012 = vmatprep.subr.mxu0 0.0
    %6013 = vmatpush1.xpose.msra.mxu0 0.0
    %6014 = vmatprep.subr.mxu0 0.0
    %6015 = vmatpush1.xpose.msra.mxu0 0.0
    %6016 = vmatprep.subr.mxu0 0.0
    %6017 = vmatpush1.xpose.msra.mxu0 0.0
    %6018 = vmatprep.subr.mxu0 0.0
    %6019 = vmatpush1.xpose.msra.mxu0 0.0
    %6020 = vmatprep.subr.mxu0 0.0
    %6021 = vmatpush1.xpose.msra.mxu0 0.0
    %6022 = vmatprep.subr.mxu0 0.0
    %6023 = vmatpush1.xpose.msra.mxu0 0.0
    %6024 = vmatprep.subr.mxu0 0.0
    %6025 = vmatpush1.xpose.msra.mxu0 0.0
    %6026 = vmatprep.subr.mxu0 0.0
    %6027 = vmatpush1.xpose.msra.mxu0 0.0
    %6028 = vmatprep.subr.mxu0 0.0
    %6029 = vmatpush1.xpose.msra.mxu0 0.0
    %6030 = vmatprep.mubr.f32.mxu0 0.0
    %6031 = vmatmul.mubr.f32.gmra.mrb[0].mxu0 %v5943
    %v6032 = vpop.f32.mrb[0].mxu0
    %v6033 = vadd.f32 0.0, %v6032
    %v6034 = vpop.f32.mrb[0].mxu0
    %6035 = vdwg.mxu0
    %6039 = vrot.lane.b32.xlu0 %v4855, 109
    %v6040 = vpop.permute.xlu0 %6039
    %6041 = vrot.lane.b32.xlu0 %v4861, 109
    %v6042 = vpop.permute.xlu0 %6041
    %6043 = vrot.lane.b32.xlu0 %v4867, 109
    %v6044 = vpop.permute.xlu0 %6043
    %v6048 = vsel %vm629, %v5629, %v5641
    %v6049 = vsel %vm629, %v5631, %v5645
    %v6050 = vsel %vm629, %v5633, %v5649
    %v6051 = vsel %vm90, %v6048, %v5659
    %v6052 = vsel %vm90, %v6049, %v5661
    %v6053 = vsel %vm90, %v6050, %v5663
    %v6054 = vsel %vm1840, %v6051, %v5668
    %v6055 = vsel %vm1840, %v6052, %v5670
    %v6056 = vsel %vm1840, %v6053, %v5672
    %v6057 = vsel %vm92, %v6054, %v5677
    %v6058 = vsel %vm92, %v6055, %v5679
    %v6059 = vsel %vm92, %v6056, %v5681
    %v6060 = vsel %vm1847, %v6057, %v5686
    %v6061 = vsel %vm1847, %v6058, %v5688
    %v6062 = vsel %vm1847, %v6059, %v5690
    %v6063 = vsel %vm94, %v6060, %v6040
    %v6064 = vsel %vm94, %v6061, %v6042
    %v6065 = vsel %vm94, %v6062, %v6044
    %6066 = vxpose.xlu0.b32.start [1/16] %v6063, 128
    %6067 = vxpose.xlu0.b32.cont [2/16] 0.0, 128
    %6068 = vxpose.xlu0.b32.cont [3/16] 0.0, 128
    %6069 = vxpose.xlu0.b32.cont [4/16] 0.0, 128
    %6070 = vxpose.xlu0.b32.cont [5/16] 0.0, 128
    %6071 = vxpose.xlu0.b32.cont [6/16] 0.0, 128
    %6072 = vxpose.xlu0.b32.cont [7/16] 0.0, 128
    %6073 = vxpose.xlu0.b32.cont [8/16] 0.0, 128
    %6074 = vxpose.xlu0.b32.cont [9/16] 0.0, 128
    %6075 = vxpose.xlu0.b32.cont [10/16] 0.0, 128
    %6076 = vxpose.xlu0.b32.cont [11/16] 0.0, 128
    %6077 = vxpose.xlu0.b32.cont [12/16] 0.0, 128
    %6078 = vxpose.xlu0.b32.cont [13/16] 0.0, 128
    %6079 = vxpose.xlu0.b32.cont [14/16] 0.0, 128
    %6080 = vxpose.xlu0.b32.cont [15/16] 0.0, 128
    %6081 = vxpose.xlu0.b32.end [16/16] 0.0, 128
    %v6082 = vpop.trf.xlu0
    %v6083 = vpop.trf.xlu0
    %v6084 = vpop.trf.xlu0
    %v6085 = vpop.trf.xlu0
    %v6086 = vpop.trf.xlu0
    %v6087 = vpop.trf.xlu0
    %v6088 = vpop.trf.xlu0
    %v6089 = vpop.trf.xlu0
    %v6090 = vpop.trf.xlu0
    %v6091 = vpop.trf.xlu0
    %v6092 = vpop.trf.xlu0
    %v6093 = vpop.trf.xlu0
    %v6094 = vpop.trf.xlu0
    %v6095 = vpop.trf.xlu0
    %v6096 = vpop.trf.xlu0
    %v6097 = vpop.trf.xlu0
    %v6099 = vsel %vm271, %v6082, 0
    %v6102 = vsel %vm271, %v6083, 0
    %v6105 = vsel %vm271, %v6084, 0
    %v6108 = vsel %vm271, %v6085, 0
    %v6111 = vsel %vm271, %v6086, 0
    %v6114 = vsel %vm271, %v6087, 0
    %v6117 = vsel %vm271, %v6088, 0
    %6119 = vmatprep.subr.mxu0 0.0
    %6120 = vmatpush1.msra.mxu0 %v6064
    %6121 = vmatprep.subr.mxu0 0.0
    %6122 = vmatpush1.msra.mxu0 0.0
    %6123 = vmatprep.subr.mxu0 0.0
    %6124 = vmatpush1.msra.mxu0 0.0
    %6125 = vmatprep.subr.mxu0 0.0
    %6126 = vmatpush1.msra.mxu0 0.0
    %6127 = vmatprep.subr.mxu0 0.0
    %6128 = vmatpush1.msra.mxu0 0.0
    %6129 = vmatprep.subr.mxu0 0.0
    %6130 = vmatpush1.msra.mxu0 0.0
    %6131 = vmatprep.subr.mxu0 0.0
    %6132 = vmatpush1.msra.mxu0 0.0
    %6133 = vmatprep.subr.mxu0 0.0
    %6134 = vmatpush1.msra.mxu0 0.0
    %6135 = vmatprep.subr.mxu0 0.0
    %6136 = vmatpush1.msra.mxu0 0.0
    %6137 = vmatprep.subr.mxu0 0.0
    %6138 = vmatpush1.msra.mxu0 0.0
    %6139 = vmatprep.subr.mxu0 0.0
    %6140 = vmatpush1.msra.mxu0 0.0
    %6141 = vmatprep.subr.mxu0 0.0
    %6142 = vmatpush1.msra.mxu0 0.0
    %6143 = vmatprep.subr.mxu0 0.0
    %6144 = vmatpush1.msra.mxu0 0.0
    %6145 = vmatprep.subr.mxu0 0.0
    %6146 = vmatpush1.msra.mxu0 0.0
    %6147 = vmatprep.subr.mxu0 0.0
    %6148 = vmatpush1.msra.mxu0 0.0
    %6149 = vmatprep.subr.mxu0 0.0
    %6150 = vmatpush1.msra.mxu0 0.0
    %6151 = vmatprep.subr.mxu0 0.0
    %6152 = vmatpush1.msra.mxu0 0.0
    %6153 = vmatprep.subr.mxu0 0.0
    %6154 = vmatpush1.msra.mxu0 0.0
    %6155 = vmatprep.subr.mxu0 0.0
    %6156 = vmatpush1.msra.mxu0 0.0
    %6157 = vmatprep.subr.mxu0 0.0
    %6158 = vmatpush1.msra.mxu0 0.0
    %6159 = vmatprep.subr.mxu0 0.0
    %6160 = vmatpush1.msra.mxu0 0.0
    %6161 = vmatprep.subr.mxu0 0.0
    %6162 = vmatpush1.msra.mxu0 0.0
    %6163 = vmatprep.subr.mxu0 0.0
    %6164 = vmatpush1.msra.mxu0 0.0
    %6165 = vmatprep.subr.mxu0 0.0
    %6166 = vmatpush1.msra.mxu0 0.0
    %6167 = vmatprep.subr.mxu0 0.0
    %6168 = vmatpush1.msra.mxu0 0.0
    %6169 = vmatprep.subr.mxu0 0.0
    %6170 = vmatpush1.msra.mxu0 0.0
    %6171 = vmatprep.subr.mxu0 0.0
    %6172 = vmatpush1.msra.mxu0 0.0
    %6173 = vmatprep.subr.mxu0 0.0
    %6174 = vmatpush1.msra.mxu0 0.0
    %6175 = vmatprep.subr.mxu0 0.0
    %6176 = vmatpush1.msra.mxu0 0.0
    %6177 = vmatprep.subr.mxu0 0.0
    %6178 = vmatpush1.msra.mxu0 0.0
    %6179 = vmatprep.subr.mxu0 0.0
    %6180 = vmatpush1.msra.mxu0 0.0
    %6181 = vmatprep.subr.mxu0 0.0
    %6182 = vmatpush1.msra.mxu0 0.0
    %6183 = vmatprep.mubr.f32.mxu0 0.0
    %6184 = vmatmul.mubr.f32.gmra.mrb[0].mxu0 %v6099
    %v6185 = vpop.f32.mrb[0].mxu0
    %v6186 = vadd.f32 0.0, %v6185
    %v6187 = vpop.f32.mrb[0].mxu0
    %6188 = vmatprep.mubr.f32.mxu0 0.0
    %6189 = vmatmul.mubr.f32.gmra.mrb[0].mxu0 %v6102
    %v6190 = vpop.f32.mrb[0].mxu0
    %v6191 = vadd.f32 0.0, %v6190
    %v6192 = vpop.f32.mrb[0].mxu0
    %6193 = vmatprep.mubr.f32.mxu0 0.0
    %6194 = vmatmul.mubr.f32.gmra.mrb[0].mxu0 %v6105
    %v6195 = vpop.f32.mrb[0].mxu0
    %v6196 = vadd.f32 0.0, %v6195
    %v6197 = vpop.f32.mrb[0].mxu0
    %6198 = vmatprep.mubr.f32.mxu0 0.0
    %6199 = vmatmul.mubr.f32.gmra.mrb[0].mxu0 %v6108
    %v6200 = vpop.f32.mrb[0].mxu0
    %v6201 = vadd.f32 0.0, %v6200
    %v6202 = vpop.f32.mrb[0].mxu0
    %6203 = vmatprep.mubr.f32.mxu0 0.0
    %6204 = vmatmul.mubr.f32.gmra.mrb[0].mxu0 %v6111
    %v6205 = vpop.f32.mrb[0].mxu0
    %v6206 = vadd.f32 0.0, %v6205
    %v6207 = vpop.f32.mrb[0].mxu0
    %6208 = vmatprep.mubr.f32.mxu0 0.0
    %6209 = vmatmul.mubr.f32.gmra.mrb[0].mxu0 %v6114
    %v6210 = vpop.f32.mrb[0].mxu0
    %v6211 = vadd.f32 0.0, %v6210
    %v6212 = vpop.f32.mrb[0].mxu0
    %6213 = vmatprep.mubr.f32.mxu0 0.0
    %6214 = vmatmul.mubr.f32.gmra.mrb[0].mxu0 %v6117
    %v6215 = vpop.f32.mrb[0].mxu0
    %v6216 = vadd.f32 0.0, %v6215
    %v6217 = vpop.f32.mrb[0].mxu0
    %6218 = vdwg.mxu0
    %v6219 = vsel %vm2007, %v6186, -inf
    %6220 = vmax.xlane.f32.xlu0 %v6219
    %v6221 = vpop.xlane.xlu0 %6220
    %v6222 = vsel %vm2007, %v6191, -inf
    %6223 = vmax.xlane.f32.xlu0 %v6222
    %v6224 = vpop.xlane.xlu0 %6223
    %v6225 = vsel %vm2007, %v6196, -inf
    %6226 = vmax.xlane.f32.xlu0 %v6225
    %v6227 = vpop.xlane.xlu0 %6226
    %v6228 = vsel %vm2007, %v6201, -inf
    %6229 = vmax.xlane.f32.xlu0 %v6228
    %v6230 = vpop.xlane.xlu0 %6229
    %v6231 = vsel %vm2007, %v6206, -inf
    %6232 = vmax.xlane.f32.xlu0 %v6231
    %v6233 = vpop.xlane.xlu0 %6232
    %v6234 = vsel %vm2007, %v6211, -inf
    %6235 = vmax.xlane.f32.xlu0 %v6234
    %v6236 = vpop.xlane.xlu0 %6235
    %v6237 = vsel %vm2026, %v6216, -inf
    %6238 = vmax.xlane.f32.xlu0 %v6237
    %v6239 = vpop.xlane.xlu0 %6238
    %v6240 = vsub.f32 %v6186, %v6221
    %v6241 = vsub.f32 %v6191, %v6224
    %v6242 = vsub.f32 %v6196, %v6227
    %v6243 = vsub.f32 %v6201, %v6230
    %v6244 = vsub.f32 %v6206, %v6233
    %v6245 = vsub.f32 %v6211, %v6236
    %v6246 = vsub.f32 %v6216, %v6239
    %v6247 = vmul.f32 %v6240, 1.442695
    %v6248 = vpow.pop %v6247
    %v6249 = vmul.f32 %v6241, 1.442695
    %v6250 = vpow.pop %v6249
    %v6251 = vmul.f32 %v6242, 1.442695
    %v6252 = vpow.pop %v6251
    %v6253 = vmul.f32 %v6243, 1.442695
    %v6254 = vpow.pop %v6253
    %v6255 = vmul.f32 %v6244, 1.442695
    %v6256 = vpow.pop %v6255
    %v6257 = vmul.f32 %v6245, 1.442695
    %v6258 = vpow.pop %v6257
    %v6259 = vmul.f32 %v6246, 1.442695
    %v6260 = vpow.pop %v6259
    %v6261 = vsel %vm2007, %v6248, 0.0
    %6262 = vadd.xlane.f32.xlu0 %v6261
    %v6263 = vpop.xlane.xlu0 %6262
    %v6264 = vsel %vm2007, %v6250, 0.0
    %6265 = vadd.xlane.f32.xlu0 %v6264
    %v6266 = vpop.xlane.xlu0 %6265
    %v6267 = vsel %vm2007, %v6252, 0.0
    %6268 = vadd.xlane.f32.xlu0 %v6267
    %v6269 = vpop.xlane.xlu0 %6268
    %v6270 = vsel %vm2007, %v6254, 0.0
    %6271 = vadd.xlane.f32.xlu0 %v6270
    %v6272 = vpop.xlane.xlu0 %6271
    %v6273 = vsel %vm2007, %v6256, 0.0
    %6274 = vadd.xlane.f32.xlu0 %v6273
    %v6275 = vpop.xlane.xlu0 %6274
    %v6276 = vsel %vm2007, %v6258, 0.0
    %6277 = vadd.xlane.f32.xlu0 %v6276
    %v6278 = vpop.xlane.xlu0 %6277
    %v6279 = vsel %vm2026, %v6260, 0.0
    %6280 = vadd.xlane.f32.xlu0 %v6279
    %v6281 = vpop.xlane.xlu0 %6280
    %v6282 = vrcp.pop %v6263
    %v6283 = vmul.f32 %v6248, %v6282
    %v6284 = vrcp.pop %v6266
    %v6285 = vmul.f32 %v6250, %v6284
    %v6286 = vrcp.pop %v6269
    %v6287 = vmul.f32 %v6252, %v6286
    %v6288 = vrcp.pop %v6272
    %v6289 = vmul.f32 %v6254, %v6288
    %v6290 = vrcp.pop %v6275
    %v6291 = vmul.f32 %v6256, %v6290
    %v6292 = vrcp.pop %v6278
    %v6293 = vmul.f32 %v6258, %v6292
    %v6294 = vrcp.pop %v6281
    %v6295 = vmul.f32 %v6260, %v6294
    %v6297 = vsel %vm2007, %v6065, 0
    %v6300 = vsel %vm2007, %v6283, 0
    %v6303 = vsel %vm2007, %v6285, 0
    %v6306 = vsel %vm2007, %v6287, 0
    %v6309 = vsel %vm2007, %v6289, 0
    %v6312 = vsel %vm2007, %v6291, 0
    %v6315 = vsel %vm2007, %v6293, 0
    %v6318 = vsel %vm2007, %v6295, 0
    %6320 = vmatprep.subr.mxu0 0.0
    %6321 = vmatpush1.xpose.msra.mxu0 %v6300
    %6322 = vmatprep.subr.mxu0 0.0
    %6323 = vmatpush1.xpose.msra.mxu0 %v6303
    %6324 = vmatprep.subr.mxu0 0.0
    %6325 = vmatpush1.xpose.msra.mxu0 %v6306
    %6326 = vmatprep.subr.mxu0 0.0
    %6327 = vmatpush1.xpose.msra.mxu0 %v6309
    %6328 = vmatprep.subr.mxu0 0.0
    %6329 = vmatpush1.xpose.msra.mxu0 %v6312
    %6330 = vmatprep.subr.mxu0 0.0
    %6331 = vmatpush1.xpose.msra.mxu0 %v6315
    %6332 = vmatprep.subr.mxu0 0.0
    %6333 = vmatpush1.xpose.msra.mxu0 %v6318
    %6334 = vmatprep.subr.mxu0 0.0
    %6335 = vmatpush1.xpose.msra.mxu0 0.0
    %6336 = vmatprep.subr.mxu0 0.0
    %6337 = vmatpush1.xpose.msra.mxu0 0.0
    %6338 = vmatprep.subr.mxu0 0.0
    %6339 = vmatpush1.xpose.msra.mxu0 0.0
    %6340 = vmatprep.subr.mxu0 0.0
    %6341 = vmatpush1.xpose.msra.mxu0 0.0
    %6342 = vmatprep.subr.mxu0 0.0
    %6343 = vmatpush1.xpose.msra.mxu0 0.0
    %6344 = vmatprep.subr.mxu0 0.0
    %6345 = vmatpush1.xpose.msra.mxu0 0.0
    %6346 = vmatprep.subr.mxu0 0.0
    %6347 = vmatpush1.xpose.msra.mxu0 0.0
    %6348 = vmatprep.subr.mxu0 0.0
    %6349 = vmatpush1.xpose.msra.mxu0 0.0
    %6350 = vmatprep.subr.mxu0 0.0
    %6351 = vmatpush1.xpose.msra.mxu0 0.0
    %6352 = vmatprep.subr.mxu0 0.0
    %6353 = vmatpush1.xpose.msra.mxu0 0.0
    %6354 = vmatprep.subr.mxu0 0.0
    %6355 = vmatpush1.xpose.msra.mxu0 0.0
    %6356 = vmatprep.subr.mxu0 0.0
    %6357 = vmatpush1.xpose.msra.mxu0 0.0
    %6358 = vmatprep.subr.mxu0 0.0
    %6359 = vmatpush1.xpose.msra.mxu0 0.0
    %6360 = vmatprep.subr.mxu0 0.0
    %6361 = vmatpush1.xpose.msra.mxu0 0.0
    %6362 = vmatprep.subr.mxu0 0.0
    %6363 = vmatpush1.xpose.msra.mxu0 0.0
    %6364 = vmatprep.subr.mxu0 0.0
    %6365 = vmatpush1.xpose.msra.mxu0 0.0
    %6366 = vmatprep.subr.mxu0 0.0
    %6367 = vmatpush1.xpose.msra.mxu0 0.0
    %6368 = vmatprep.subr.mxu0 0.0
    %6369 = vmatpush1.xpose.msra.mxu0 0.0
    %6370 = vmatprep.subr.mxu0 0.0
    %6371 = vmatpush1.xpose.msra.mxu0 0.0
    %6372 = vmatprep.subr.mxu0 0.0
    %6373 = vmatpush1.xpose.msra.mxu0 0.0
    %6374 = vmatprep.subr.mxu0 0.0
    %6375 = vmatpush1.xpose.msra.mxu0 0.0
    %6376 = vmatprep.subr.mxu0 0.0
    %6377 = vmatpush1.xpose.msra.mxu0 0.0
    %6378 = vmatprep.subr.mxu0 0.0
    %6379 = vmatpush1.xpose.msra.mxu0 0.0
    %6380 = vmatprep.subr.mxu0 0.0
    %6381 = vmatpush1.xpose.msra.mxu0 0.0
    %6382 = vmatprep.subr.mxu0 0.0
    %6383 = vmatpush1.xpose.msra.mxu0 0.0
    %6384 = vmatprep.mubr.f32.mxu0 0.0
    %6385 = vmatmul.mubr.f32.gmra.mrb[0].mxu0 %v6297
    %v6386 = vpop.f32.mrb[0].mxu0
    %v6387 = vadd.f32 0.0, %v6386
    %v6388 = vpop.f32.mrb[0].mxu0
    %6389 = vdwg.mxu0
    %6391 = vrot.lane.b32.xlu0 %v5616, 7
    %v6392 = vpop.permute.xlu0 %6391
    %6395 = vrot.lane.b32.xlu0 %v5265, 7
    %v6396 = vpop.permute.xlu0 %6395
    %6398 = vrot.lane.b32.xlu0 %v5616, 14
    %v6399 = vpop.permute.xlu0 %6398
    %6401 = vrot.lane.b32.xlu0 %v5265, 14
    %v6402 = vpop.permute.xlu0 %6401
    %6404 = vrot.lane.b32.xlu0 %v5616, 21
    %v6405 = vpop.permute.xlu0 %6404
    %6407 = vrot.lane.b32.xlu0 %v5265, 21
    %v6408 = vpop.permute.xlu0 %6407
    %6410 = vrot.lane.b32.xlu0 %v5616, 28
    %v6411 = vpop.permute.xlu0 %6410
    %6413 = vrot.lane.b32.xlu0 %v5265, 28
    %v6414 = vpop.permute.xlu0 %6413
    %6416 = vrot.lane.b32.xlu0 %v5616, 35
    %v6417 = vpop.permute.xlu0 %6416
    %6419 = vrot.lane.b32.xlu0 %v5265, 35
    %v6420 = vpop.permute.xlu0 %6419
    %6422 = vrot.lane.b32.xlu0 %v5616, 42
    %v6423 = vpop.permute.xlu0 %6422
    %6425 = vrot.lane.b32.xlu0 %v5265, 42
    %v6426 = vpop.permute.xlu0 %6425
    %6428 = vrot.lane.b32.xlu0 %v5616, 49
    %v6429 = vpop.permute.xlu0 %6428
    %6432 = vrot.lane.b32.xlu0 %v6033, 98
    %v6433 = vpop.permute.xlu0 %6432
    %6436 = vrot.lane.b32.xlu0 %v6387, 105
    %v6437 = vpop.permute.xlu0 %6436
    %v6439 = vsel %vm629, %v5265, %v6392
    %v6440 = vsel %vm90, %v6439, %v6396
    %v6441 = vsel %vm1840, %v6440, %v6399
    %v6442 = vsel %vm92, %v6441, %v6402
    %v6443 = vsel %vm1847, %v6442, %v6405
    %v6444 = vsel %vm94, %v6443, %v6408
    %v6445 = vsel %vm2007, %v6444, %v6411
    %v6446 = vsel %vm96, %v6445, %v6414
    %v6447 = vsel %vm963, %v6446, %v6417
    %v6448 = vsel %vm98, %v6447, %v6420
    %v6449 = vsel %vm3361, %v6448, %v6423
    %v6450 = vsel %vm100, %v6449, %v6426
    %v6451 = vsel %vm3364, %v6450, %v6429
    %v6452 = vsel %vm102, %v6451, %v6433
    %v6453 = vsel %vm3367, %v6452, %v6437
    %6454 = vrot.lane.b32.xlu0 %v6033, 121
    %v6455 = vpop.permute.xlu0 %6454
    %6457 = vrot.lane.b32.xlu0 %v6387, 7
    %v6458 = vpop.permute.xlu0 %6457
    %6460 = vrot.lane.b32.xlu0 %v6033, 7
    %v6461 = vpop.permute.xlu0 %6460
    %6463 = vrot.lane.b32.xlu0 %v6387, 14
    %v6464 = vpop.permute.xlu0 %6463
    %6466 = vrot.lane.b32.xlu0 %v6033, 14
    %v6467 = vpop.permute.xlu0 %6466
    %6469 = vrot.lane.b32.xlu0 %v6387, 21
    %v6470 = vpop.permute.xlu0 %6469
    %6472 = vrot.lane.b32.xlu0 %v6033, 21
    %v6473 = vpop.permute.xlu0 %6472
    %6475 = vrot.lane.b32.xlu0 %v6387, 28
    %v6476 = vpop.permute.xlu0 %6475
    %6478 = vrot.lane.b32.xlu0 %v6033, 28
    %v6479 = vpop.permute.xlu0 %6478
    %6481 = vrot.lane.b32.xlu0 %v6387, 35
    %v6482 = vpop.permute.xlu0 %6481
    %v6484 = vsel %vm629, %v6455, %v6387
    %v6485 = vsel %vm90, %v6484, %v6033
    %v6486 = vsel %vm1840, %v6485, %v6458
    %v6487 = vsel %vm92, %v6486, %v6461
    %v6488 = vsel %vm1847, %v6487, %v6464
    %v6489 = vsel %vm94, %v6488, %v6467
    %v6490 = vsel %vm2007, %v6489, %v6470
    %v6491 = vsel %vm96, %v6490, %v6473
    %v6492 = vsel %vm963, %v6491, %v6476
    %v6493 = vsel %vm98, %v6492, %v6479
    %v6494 = vsel %vm3361, %v6493, %v6482
    %6496 = vrot.lane.b32.xlu0 %v6494, 112
    %v6497 = vpop.permute.xlu0 %6496
    %v6499 = vsel %vm104, %v6453, %v6497
    %v6500 = vsel %vm1413, %v3412, 0.0
    %v6501 = vadd.f32 %v3414, %v6500
    %6502 = vadd.xlane.f32.xlu0 %v6501
    %v6503 = vpop.xlane.xlu0 %6502
    %v6504 = vadd.f32 %v6503, 0.0
    %v6505 = vsel %vm1413, %v6497, 0.0
    %v6506 = vadd.f32 %v6499, %v6505
    %6507 = vadd.xlane.f32.xlu0 %v6506
    %v6508 = vpop.xlane.xlu0 %6507
    %v6509 = vadd.f32 %v6504, %v6508
    %v6510 = vmul.f32 %v6509, 0.0025510204
    %v6511 = vsub.f32 %v3414, %v6510
    %v6512 = vsub.f32 %v3412, %v6510
    %v6513 = vmul.f32 %v6511, %v6511
    %v6514 = vmul.f32 %v6512, %v6512
    %v6515 = vsel %vm1413, %v6514, 0.0
    %v6516 = vadd.f32 %v6513, %v6515
    %6517 = vadd.xlane.f32.xlu0 %v6516
    %v6518 = vpop.xlane.xlu0 %6517
    %v6519 = vadd.f32 %v6518, 0.0
    %v6520 = vsub.f32 %v6499, %v6510
    %v6521 = vsub.f32 %v6497, %v6510
    %v6522 = vmul.f32 %v6520, %v6520
    %v6523 = vmul.f32 %v6521, %v6521
    %v6524 = vsel %vm1413, %v6523, 0.0
    %v6525 = vadd.f32 %v6522, %v6524
    %6526 = vadd.xlane.f32.xlu0 %v6525
    %v6527 = vpop.xlane.xlu0 %6526
    %v6528 = vadd.f32 %v6519, %v6527
    %v6529 = vmul.f32 %v6528, 0.0025510204
    %v6530 = vadd.f32 %v6529, 1e-05
    %v6531 = vrsqrt.pop %v6530
    %v6532 = vmul.f32 %v6511, %v6531
    %v6533 = vmul.f32 %v6512, %v6531
    %6535 = vset.pattern.permute.xlu0 0
    %6536 = vperm.xlu0 %6535, %v151
    %v6537 = vpop.permute.xlu0 %6536
    %v6539 = vmul.f32 %v6532, %v6537
    %v6540 = vmul.f32 %v6533, %v6537
    %6542 = vset.pattern.permute.xlu0 0
    %6543 = vperm.xlu0 %6542, %v153
    %v6544 = vpop.permute.xlu0 %6543
    %v6546 = vadd.f32 %v6539, %v6544
    %v6547 = vadd.f32 %v6540, %v6544
    %v6548 = vmax.f32 %v6546, 0.0
    %v6549 = vmax.f32 %v6547, 0.0
    %v6550 = vmul.f32 %v6520, %v6531
    %v6551 = vmul.f32 %v6521, %v6531
    %v6552 = vmul.f32 %v6550, %v6537
    %v6553 = vmul.f32 %v6551, %v6537
    %v6554 = vadd.f32 %v6552, %v6544
    %v6555 = vadd.f32 %v6553, %v6544
    %v6556 = vmax.f32 %v6554, 0.0
    %v6557 = vmax.f32 %v6555, 0.0
    %v6558 = vsel %vm1413, %v6549, 0.0
    %v6559 = vadd.f32 %v6548, %v6558
    %6560 = vadd.xlane.f32.xlu0 %v6559
    %v6561 = vpop.xlane.xlu0 %6560
    %v6562 = vadd.f32 %v6561, 0.0
    %v6563 = vsel %vm1413, %v6557, 0.0
    %v6564 = vadd.f32 %v6556, %v6563
    %6565 = vadd.xlane.f32.xlu0 %v6564
    %v6566 = vpop.xlane.xlu0 %6565
    %v6567 = vadd.f32 %v6562, %v6566
    %v6568 = vmul.f32 %v6567, 0.0025510204
    %v6569 = vsub.f32 %v6548, %v6568
    %v6570 = vsub.f32 %v6549, %v6568
    %v6571 = vmul.f32 %v6569, %v6569
    %v6572 = vmul.f32 %v6570, %v6570
    %v6573 = vsel %vm1413, %v6572, 0.0
    %v6574 = vadd.f32 %v6571, %v6573
    %6575 = vadd.xlane.f32.xlu0 %v6574
    %v6576 = vpop.xlane.xlu0 %6575
    %v6577 = vadd.f32 %v6576, 0.0
    %v6578 = vsub.f32 %v6556, %v6568
    %v6579 = vsub.f32 %v6557, %v6568
    %v6580 = vmul.f32 %v6578, %v6578
    %v6581 = vmul.f32 %v6579, %v6579
    %v6582 = vsel %vm1413, %v6581, 0.0
    %v6583 = vadd.f32 %v6580, %v6582
    %6584 = vadd.xlane.f32.xlu0 %v6583
    %v6585 = vpop.xlane.xlu0 %6584
    %v6586 = vadd.f32 %v6577, %v6585
    %v6587 = vmul.f32 %v6586, 0.0025510204
    %v6588 = vadd.f32 %v6587, 1e-05
    %v6589 = vrsqrt.pop %v6588
    %v6590 = vmul.f32 %v6569, %v6589
    %v6591 = vmul.f32 %v6570, %v6589
    %6593 = vset.pattern.permute.xlu0 0
    %6594 = vperm.xlu0 %6593, %v155
    %v6595 = vpop.permute.xlu0 %6594
    %v6597 = vmul.f32 %v6590, %v6595
    %v6598 = vmul.f32 %v6591, %v6595
    %6600 = vset.pattern.permute.xlu0 0
    %6601 = vperm.xlu0 %6600, %v157
    %v6602 = vpop.permute.xlu0 %6601
    %v6604 = vadd.f32 %v6597, %v6602
    %v6605 = vadd.f32 %v6598, %v6602
    %v6607 = vsel %vm271, %v130, 0
    %6609 = vmatprep.subr.mxu0 %v6605
    %6610 = vmatpush1.msra.mxu0 %v6604
    %6611 = vmatprep.subr.mxu0 0.0
    %6612 = vmatpush1.msra.mxu0 0.0
    %6613 = vmatprep.subr.mxu0 0.0
    %6614 = vmatpush1.msra.mxu0 0.0
    %6615 = vmatprep.subr.mxu0 0.0
    %6616 = vmatpush1.msra.mxu0 0.0
    %6617 = vmatprep.subr.mxu0 0.0
    %6618 = vmatpush1.msra.mxu0 0.0
    %6619 = vmatprep.subr.mxu0 0.0
    %6620 = vmatpush1.msra.mxu0 0.0
    %6621 = vmatprep.subr.mxu0 0.0
    %6622 = vmatpush1.msra.mxu0 0.0
    %6623 = vmatprep.subr.mxu0 0.0
    %6624 = vmatpush1.msra.mxu0 0.0
    %6625 = vmatprep.subr.mxu0 0.0
    %6626 = vmatpush1.msra.mxu0 0.0
    %6627 = vmatprep.subr.mxu0 0.0
    %6628 = vmatpush1.msra.mxu0 0.0
    %6629 = vmatprep.subr.mxu0 0.0
    %6630 = vmatpush1.msra.mxu0 0.0
    %6631 = vmatprep.subr.mxu0 0.0
    %6632 = vmatpush1.msra.mxu0 0.0
    %6633 = vmatprep.subr.mxu0 0.0
    %6634 = vmatpush1.msra.mxu0 0.0
    %6635 = vmatprep.subr.mxu0 0.0
    %6636 = vmatpush1.msra.mxu0 0.0
    %6637 = vmatprep.subr.mxu0 0.0
    %6638 = vmatpush1.msra.mxu0 0.0
    %6639 = vmatprep.subr.mxu0 0.0
    %6640 = vmatpush1.msra.mxu0 0.0
    %6641 = vmatprep.subr.mxu0 0.0
    %6642 = vmatpush1.msra.mxu0 0.0
    %6643 = vmatprep.subr.mxu0 0.0
    %6644 = vmatpush1.msra.mxu0 0.0
    %6645 = vmatprep.subr.mxu0 0.0
    %6646 = vmatpush1.msra.mxu0 0.0
    %6647 = vmatprep.subr.mxu0 0.0
    %6648 = vmatpush1.msra.mxu0 0.0
    %6649 = vmatprep.subr.mxu0 0.0
    %6650 = vmatpush1.msra.mxu0 0.0
    %6651 = vmatprep.subr.mxu0 0.0
    %6652 = vmatpush1.msra.mxu0 0.0
    %6653 = vmatprep.subr.mxu0 0.0
    %6654 = vmatpush1.msra.mxu0 0.0
    %6655 = vmatprep.subr.mxu0 0.0
    %6656 = vmatpush1.msra.mxu0 0.0
    %6657 = vmatprep.subr.mxu0 0.0
    %6658 = vmatpush1.msra.mxu0 0.0
    %6659 = vmatprep.subr.mxu0 0.0
    %6660 = vmatpush1.msra.mxu0 0.0
    %6661 = vmatprep.subr.mxu0 0.0
    %6662 = vmatpush1.msra.mxu0 0.0
    %6663 = vmatprep.subr.mxu0 0.0
    %6664 = vmatpush1.msra.mxu0 0.0
    %6665 = vmatprep.subr.mxu0 0.0
    %6666 = vmatpush1.msra.mxu0 0.0
    %6667 = vmatprep.subr.mxu0 0.0
    %6668 = vmatpush1.msra.mxu0 0.0
    %6669 = vmatprep.subr.mxu0 0.0
    %6670 = vmatpush1.msra.mxu0 0.0
    %6671 = vmatprep.subr.mxu0 0.0
    %6672 = vmatpush1.msra.mxu0 0.0
    %6673 = vmatprep.mubr.f32.mxu0 0.0
    %6674 = vmatmul.mubr.f32.gmra.mrb[0].mxu0 %v6607
    %v6675 = vpop.f32.mrb[0].mxu0
    %v6676 = vadd.f32 0.0, %v6675
    %v6677 = vpop.f32.mrb[0].mxu0
    %v6678 = vadd.f32 0.0, %v6677
    %6679 = vdwg.mxu0
    %v6681 = vsel %vm271, %v128, 0
    %6683 = vmatprep.subr.mxu0 %v1669
    %6684 = vmatpush1.msra.mxu0 %v1668
    %6685 = vmatprep.subr.mxu0 0.0
    %6686 = vmatpush1.msra.mxu0 0.0
    %6687 = vmatprep.subr.mxu0 0.0
    %6688 = vmatpush1.msra.mxu0 0.0
    %6689 = vmatprep.subr.mxu0 0.0
    %6690 = vmatpush1.msra.mxu0 0.0
    %6691 = vmatprep.subr.mxu0 0.0
    %6692 = vmatpush1.msra.mxu0 0.0
    %6693 = vmatprep.subr.mxu0 0.0
    %6694 = vmatpush1.msra.mxu0 0.0
    %6695 = vmatprep.subr.mxu0 0.0
    %6696 = vmatpush1.msra.mxu0 0.0
    %6697 = vmatprep.subr.mxu0 0.0
    %6698 = vmatpush1.msra.mxu0 0.0
    %6699 = vmatprep.subr.mxu0 0.0
    %6700 = vmatpush1.msra.mxu0 0.0
    %6701 = vmatprep.subr.mxu0 0.0
    %6702 = vmatpush1.msra.mxu0 0.0
    %6703 = vmatprep.subr.mxu0 0.0
    %6704 = vmatpush1.msra.mxu0 0.0
    %6705 = vmatprep.subr.mxu0 0.0
    %6706 = vmatpush1.msra.mxu0 0.0
    %6707 = vmatprep.subr.mxu0 0.0
    %6708 = vmatpush1.msra.mxu0 0.0
    %6709 = vmatprep.subr.mxu0 0.0
    %6710 = vmatpush1.msra.mxu0 0.0
    %6711 = vmatprep.subr.mxu0 0.0
    %6712 = vmatpush1.msra.mxu0 0.0
    %6713 = vmatprep.subr.mxu0 0.0
    %6714 = vmatpush1.msra.mxu0 0.0
    %6715 = vmatprep.subr.mxu0 0.0
    %6716 = vmatpush1.msra.mxu0 0.0
    %6717 = vmatprep.subr.mxu0 0.0
    %6718 = vmatpush1.msra.mxu0 0.0
    %6719 = vmatprep.subr.mxu0 0.0
    %6720 = vmatpush1.msra.mxu0 0.0
    %6721 = vmatprep.subr.mxu0 0.0
    %6722 = vmatpush1.msra.mxu0 0.0
    %6723 = vmatprep.subr.mxu0 0.0
    %6724 = vmatpush1.msra.mxu0 0.0
    %6725 = vmatprep.subr.mxu0 0.0
    %6726 = vmatpush1.msra.mxu0 0.0
    %6727 = vmatprep.subr.mxu0 0.0
    %6728 = vmatpush1.msra.mxu0 0.0
    %6729 = vmatprep.subr.mxu0 0.0
    %6730 = vmatpush1.msra.mxu0 0.0
    %6731 = vmatprep.subr.mxu0 0.0
    %6732 = vmatpush1.msra.mxu0 0.0
    %6733 = vmatprep.subr.mxu0 0.0
    %6734 = vmatpush1.msra.mxu0 0.0
    %6735 = vmatprep.subr.mxu0 0.0
    %6736 = vmatpush1.msra.mxu0 0.0
    %6737 = vmatprep.subr.mxu0 0.0
    %6738 = vmatpush1.msra.mxu0 0.0
    %6739 = vmatprep.subr.mxu0 0.0
    %6740 = vmatpush1.msra.mxu0 0.0
    %6741 = vmatprep.subr.mxu0 0.0
    %6742 = vmatpush1.msra.mxu0 0.0
    %6743 = vmatprep.subr.mxu0 0.0
    %6744 = vmatpush1.msra.mxu0 0.0
    %6745 = vmatprep.subr.mxu0 0.0
    %6746 = vmatpush1.msra.mxu0 0.0
    %6747 = vmatprep.mubr.f32.mxu0 0.0
    %6748 = vmatmul.mubr.f32.gmra.mrb[0].mxu0 %v6681
    %v6749 = vpop.f32.mrb[0].mxu0
    %v6750 = vadd.f32 %v6676, %v6749
    %v6751 = vpop.f32.mrb[0].mxu0
    %v6752 = vadd.f32 %v6678, %v6751
    %6753 = vdwg.mxu0
    %6755 = vset.pattern.permute.xlu0 0
    %6756 = vperm.xlu0 %6755, %v141
    %v6757 = vpop.permute.xlu0 %6756
    %v6759 = vadd.f32 %v6750, %v6757
    %v6760 = vadd.f32 %v6752, %v6757
    %6761 = vst [vmem:[#allocation8] sm:$0xff] %v6759
    %6762 = vst.msk [vmem:[#allocation8 + $0x8] sm:$0xff] %vm1413, %v6760
    %v6763 = vmul.f32 %v6578, %v6589
    %v6764 = vmul.f32 %v6579, %v6589
    %v6765 = vmul.f32 %v6763, %v6595
    %v6766 = vmul.f32 %v6764, %v6595
    %v6767 = vadd.f32 %v6765, %v6602
    %v6768 = vadd.f32 %v6766, %v6602
    %6769 = vmatprep.subr.mxu0 %v6768
    %6770 = vmatpush1.msra.mxu0 %v6767
    %6771 = vmatprep.subr.mxu0 0.0
    %6772 = vmatpush1.msra.mxu0 0.0
    %6773 = vmatprep.subr.mxu0 0.0
    %6774 = vmatpush1.msra.mxu0 0.0
    %6775 = vmatprep.subr.mxu0 0.0
    %6776 = vmatpush1.msra.mxu0 0.0
    %6777 = vmatprep.subr.mxu0 0.0
    %6778 = vmatpush1.msra.mxu0 0.0
    %6779 = vmatprep.subr.mxu0 0.0
    %6780 = vmatpush1.msra.mxu0 0.0
    %6781 = vmatprep.subr.mxu0 0.0
    %6782 = vmatpush1.msra.mxu0 0.0
    %6783 = vmatprep.subr.mxu0 0.0
    %6784 = vmatpush1.msra.mxu0 0.0
    %6785 = vmatprep.subr.mxu0 0.0
    %6786 = vmatpush1.msra.mxu0 0.0
    %6787 = vmatprep.subr.mxu0 0.0
    %6788 = vmatpush1.msra.mxu0 0.0
    %6789 = vmatprep.subr.mxu0 0.0
    %6790 = vmatpush1.msra.mxu0 0.0
    %6791 = vmatprep.subr.mxu0 0.0
    %6792 = vmatpush1.msra.mxu0 0.0
    %6793 = vmatprep.subr.mxu0 0.0
    %6794 = vmatpush1.msra.mxu0 0.0
    %6795 = vmatprep.subr.mxu0 0.0
    %6796 = vmatpush1.msra.mxu0 0.0
    %6797 = vmatprep.subr.mxu0 0.0
    %6798 = vmatpush1.msra.mxu0 0.0
    %6799 = vmatprep.subr.mxu0 0.0
    %6800 = vmatpush1.msra.mxu0 0.0
    %6801 = vmatprep.subr.mxu0 0.0
    %6802 = vmatpush1.msra.mxu0 0.0
    %6803 = vmatprep.subr.mxu0 0.0
    %6804 = vmatpush1.msra.mxu0 0.0
    %6805 = vmatprep.subr.mxu0 0.0
    %6806 = vmatpush1.msra.mxu0 0.0
    %6807 = vmatprep.subr.mxu0 0.0
    %6808 = vmatpush1.msra.mxu0 0.0
    %6809 = vmatprep.subr.mxu0 0.0
    %6810 = vmatpush1.msra.mxu0 0.0
    %6811 = vmatprep.subr.mxu0 0.0
    %6812 = vmatpush1.msra.mxu0 0.0
    %6813 = vmatprep.subr.mxu0 0.0
    %6814 = vmatpush1.msra.mxu0 0.0
    %6815 = vmatprep.subr.mxu0 0.0
    %6816 = vmatpush1.msra.mxu0 0.0
    %6817 = vmatprep.subr.mxu0 0.0
    %6818 = vmatpush1.msra.mxu0 0.0
    %6819 = vmatprep.subr.mxu0 0.0
    %6820 = vmatpush1.msra.mxu0 0.0
    %6821 = vmatprep.subr.mxu0 0.0
    %6822 = vmatpush1.msra.mxu0 0.0
    %6823 = vmatprep.subr.mxu0 0.0
    %6824 = vmatpush1.msra.mxu0 0.0
    %6825 = vmatprep.subr.mxu0 0.0
    %6826 = vmatpush1.msra.mxu0 0.0
    %6827 = vmatprep.subr.mxu0 0.0
    %6828 = vmatpush1.msra.mxu0 0.0
    %6829 = vmatprep.subr.mxu0 0.0
    %6830 = vmatpush1.msra.mxu0 0.0
    %6831 = vmatprep.subr.mxu0 0.0
    %6832 = vmatpush1.msra.mxu0 0.0
    %6833 = vmatprep.mubr.f32.mxu0 0.0
    %6834 = vmatmul.mubr.f32.gmra.mrb[0].mxu0 %v6607
    %v6835 = vpop.f32.mrb[0].mxu0
    %v6836 = vadd.f32 0.0, %v6835
    %v6837 = vpop.f32.mrb[0].mxu0
    %v6838 = vadd.f32 0.0, %v6837
    %6839 = vdwg.mxu0
    %6840 = vmatprep.subr.mxu0 %v4785
    %6841 = vmatpush1.msra.mxu0 %v4784
    %6842 = vmatprep.subr.mxu0 0.0
    %6843 = vmatpush1.msra.mxu0 0.0
    %6844 = vmatprep.subr.mxu0 0.0
    %6845 = vmatpush1.msra.mxu0 0.0
    %6846 = vmatprep.subr.mxu0 0.0
    %6847 = vmatpush1.msra.mxu0 0.0
    %6848 = vmatprep.subr.mxu0 0.0
    %6849 = vmatpush1.msra.mxu0 0.0
    %6850 = vmatprep.subr.mxu0 0.0
    %6851 = vmatpush1.msra.mxu0 0.0
    %6852 = vmatprep.subr.mxu0 0.0
    %6853 = vmatpush1.msra.mxu0 0.0
    %6854 = vmatprep.subr.mxu0 0.0
    %6855 = vmatpush1.msra.mxu0 0.0
    %6856 = vmatprep.subr.mxu0 0.0
    %6857 = vmatpush1.msra.mxu0 0.0
    %6858 = vmatprep.subr.mxu0 0.0
    %6859 = vmatpush1.msra.mxu0 0.0
    %6860 = vmatprep.subr.mxu0 0.0
    %6861 = vmatpush1.msra.mxu0 0.0
    %6862 = vmatprep.subr.mxu0 0.0
    %6863 = vmatpush1.msra.mxu0 0.0
    %6864 = vmatprep.subr.mxu0 0.0
    %6865 = vmatpush1.msra.mxu0 0.0
    %6866 = vmatprep.subr.mxu0 0.0
    %6867 = vmatpush1.msra.mxu0 0.0
    %6868 = vmatprep.subr.mxu0 0.0
    %6869 = vmatpush1.msra.mxu0 0.0
    %6870 = vmatprep.subr.mxu0 0.0
    %6871 = vmatpush1.msra.mxu0 0.0
    %6872 = vmatprep.subr.mxu0 0.0
    %6873 = vmatpush1.msra.mxu0 0.0
    %6874 = vmatprep.subr.mxu0 0.0
    %6875 = vmatpush1.msra.mxu0 0.0
    %6876 = vmatprep.subr.mxu0 0.0
    %6877 = vmatpush1.msra.mxu0 0.0
    %6878 = vmatprep.subr.mxu0 0.0
    %6879 = vmatpush1.msra.mxu0 0.0
    %6880 = vmatprep.subr.mxu0 0.0
    %6881 = vmatpush1.msra.mxu0 0.0
    %6882 = vmatprep.subr.mxu0 0.0
    %6883 = vmatpush1.msra.mxu0 0.0
    %6884 = vmatprep.subr.mxu0 0.0
    %6885 = vmatpush1.msra.mxu0 0.0
    %6886 = vmatprep.subr.mxu0 0.0
    %6887 = vmatpush1.msra.mxu0 0.0
    %6888 = vmatprep.subr.mxu0 0.0
    %6889 = vmatpush1.msra.mxu0 0.0
    %6890 = vmatprep.subr.mxu0 0.0
    %6891 = vmatpush1.msra.mxu0 0.0
    %6892 = vmatprep.subr.mxu0 0.0
    %6893 = vmatpush1.msra.mxu0 0.0
    %6894 = vmatprep.subr.mxu0 0.0
    %6895 = vmatpush1.msra.mxu0 0.0
    %6896 = vmatprep.subr.mxu0 0.0
    %6897 = vmatpush1.msra.mxu0 0.0
    %6898 = vmatprep.subr.mxu0 0.0
    %6899 = vmatpush1.msra.mxu0 0.0
    %6900 = vmatprep.subr.mxu0 0.0
    %6901 = vmatpush1.msra.mxu0 0.0
    %6902 = vmatprep.subr.mxu0 0.0
    %6903 = vmatpush1.msra.mxu0 0.0
    %6904 = vmatprep.mubr.f32.mxu0 0.0
    %6905 = vmatmul.mubr.f32.gmra.mrb[0].mxu0 %v6681
    %v6906 = vpop.f32.mrb[0].mxu0
    %v6907 = vadd.f32 %v6836, %v6906
    %v6908 = vpop.f32.mrb[0].mxu0
    %v6909 = vadd.f32 %v6838, %v6908
    %6910 = vdwg.mxu0
    %v6911 = vadd.f32 %v6907, %v6757
    %v6912 = vadd.f32 %v6909, %v6757
    %s6913 = scalar_lea.vmem [#allocation8], 16
    %6914 = vst [vmem:[%s6913] sm:$0xff] %v6911
    %6915 = vst.msk [vmem:[%s6913 + $0x8] sm:$0xff] %vm1413, %v6912
    // Predicated region
    $region34: #{_lambda_.1} parent=1 // pred_check
      _
    $region35: #{_lambda_.1} parent=1 // pred_check_branch
      %6917 = sbr.rel (0) target = $region37
    $region36: #{_lambda_.1} parent=1 // pred_region
      %s6919 = ssub.s32 512, 512
      %6920 = vsyncadd [#allocation4], %s6919
      %s6921 = sshll.u32 [#allocation8], 4
      %s6922 = int_to_ptr.vmem [resolvable:$true] %s6921
      %6927 = dma.vmem_to_hbm [thread:$0]  %s6922, 512, %s5, [#allocation4], 256, 256, 16
    $region37: #{_lambda_.1} parent=1 // pred_fallthru
      _
    // Predicated region
    $region38: #{_lambda_.1} parent=1 // pred_check
      _
    $region39: #{_lambda_.1} parent=1 // pred_check_branch
      %6929 = sbr.rel (0) target = $region41
    $region40: #{_lambda_.1} parent=1 // pred_region
      %6930 = dma.done [#allocation4], 512
    $region41: #{_lambda_.1} parent=1 // pred_fallthru
      _
    %6931 = vsyncpa [#allocation3], 1
    %6932 = vsyncpa [#allocation6], 1
    %6933 = vsyncpa [#allocation4], 1

</llo_original>
